<compile_context>
chip_gen: v7x
topology: tpu7x:2x2x1
jax: 0.10.0
libtpu: 0.0.40
codegen_flags: <defaults>
</compile_context>

<pallas_src>
import functools

import jax
import jax.numpy as jnp
from jax.experimental import pallas as pl
from jax.experimental.pallas import tpu as pltpu

# Small, hardware-friendly shapes consistent with the module's forward.
N, CIN, H, W = 2, 4, 16, 16      # batch, in-channels, spatial
K = 3                            # conv kernel size (padding=1, "same")
CMID = 8                         # conv output channels
LATENT = 128                     # small stand-in for latent_dim=4096
NUM_CLASSES = 10

LANE = 128                       # lane-dense padding target for channel dims
KKC = K * K * CIN                # 36 (im2col contraction, reference only)
HW = H * W                       # 256
NHW = N * HW                     # 512
HP, WP = H + 2, W + 2            # spatially padded grid (18, 18)
NP = N * HP * WP                 # 648 rows of the padded-grid activation
SHIFT_PAD = WP + 1               # 19 halo rows so every conv tap is a slice
NFLAT = NP + 2 * SHIFT_PAD       # 686 rows of the flattened input buffer


# ---------------------------------------------------------------------------
# Kernels: conv (9 shifted matmuls) + bias + ReLU + pool-matmul + proj + head
# ---------------------------------------------------------------------------
def _encode(x_ref, wc_ref, bc_ref, pool_ref, wp_ref, bp_ref, acc_ref):
    """Shared encoder body: returns z = relu(pool(relu(conv(x))) @ Wp + bp)."""
    # Conv as 9 shifted matmul-accumulates on the MXU.  x_ref is the zero-
    # haloed, channels-last, flattened image: x_ref[p + dh*WP + dw] is the
    # (dh, dw) tap for padded-grid row p.  Rows at padded positions produce
    # garbage that the pool matrix zeroes out.
    acc_ref[...] = jnp.zeros_like(acc_ref)
    for t in range(K * K):
        dh, dw = divmod(t, K)
        start = dh * WP + dw
        xs = x_ref[start:start + NP, :]                       # (NP, CIN)
        acc_ref[...] += jnp.dot(xs, wc_ref[t],
                                preferred_element_type=jnp.float32)

    y = jnp.maximum(acc_ref[...] + bc_ref[...], 0.0)          # (NP, LANE)

    # Global average pool as an MXU matmul with a precomputed (N, NP) matrix
    # (1/HW folded in; only the HW valid rows per image are selected).
    pooled = jnp.dot(pool_ref[...], y,
                     preferred_element_type=jnp.float32)      # (N, LANE)

    # Encoder tail: Linear(CMID -> LATENT) + ReLU (rows >= CMID of Wp are 0).
    z = jnp.dot(pooled, wp_ref[...],
                preferred_element_type=jnp.float32) + bp_ref[...]
    return jnp.maximum(z, 0.0)                                # (N, LATENT)


def feature_kernel(x_ref, wc_ref, bc_ref, pool_ref, wp_ref, bp_ref,
                   feat_ref, acc_ref):
    feat_ref[...] = _encode(x_ref, wc_ref, bc_ref, pool_ref, wp_ref, bp_ref,
                            acc_ref)


def logits_kernel(x_ref, wc_ref, bc_ref, pool_ref, wp_ref, bp_ref,
                  wh_ref, bh_ref, logits_ref, acc_ref):
    z = _encode(x_ref, wc_ref, bc_ref, pool_ref, wp_ref, bp_ref, acc_ref)
    logits = jnp.dot(z, wh_ref[...],
                     preferred_element_type=jnp.float32) + bh_ref[...]
    logits_ref[...] = logits[:, :NUM_CLASSES]                 # (N, NUM_CLASSES)


# ---------------------------------------------------------------------------
# Glue: parameter init, constant prep (lane padding + pool matrix), wrapper
# ---------------------------------------------------------------------------
def init_params(key):
    ks = jax.random.split(key, 6)
    return {
        "w_conv": jax.random.normal(ks[0], (KKC, CMID), jnp.float32) * 0.1,
        "b_conv": jax.random.normal(ks[1], (1, CMID), jnp.float32) * 0.01,
        "w_proj": jax.random.normal(ks[2], (CMID, LATENT), jnp.float32) * 0.1,
        "b_proj": jax.random.normal(ks[3], (1, LATENT), jnp.float32) * 0.01,
        "w_head": jax.random.normal(ks[4], (LATENT, NUM_CLASSES), jnp.float32) * 0.1,
        "b_head": jax.random.normal(ks[5], (1, NUM_CLASSES), jnp.float32) * 0.01,
    }


def prep_params(p):
    """One-time prep outside the hot path: lane padding + pool constant."""
    # Per-tap conv weights, rows ordered (dh, dw, cin), cout padded to 128.
    w_conv = jnp.pad(p["w_conv"], ((0, 0), (0, LANE - CMID)))      # (36, 128)

    # Pool matrix over the padded-grid rows: selects the HW valid rows of each
    # image with weight 1/HW (mean); padded/garbage rows get weight 0.
    pvec = jnp.arange(NP)
    n_of_p = pvec // (HP * WP)
    ip = (pvec // WP) % HP
    jp = pvec % WP
    valid = (ip >= 1) & (ip <= H) & (jp >= 1) & (jp <= W)
    pool = jnp.where(
        (n_of_p[None, :] == jnp.arange(N)[:, None]) & valid[None, :],
        1.0 / HW, 0.0).astype(jnp.float32)                         # (N, NP)

    return {
        "w_conv": w_conv.reshape(K * K, CIN, LANE),                # (9, 4, 128)
        "b_conv": jnp.pad(p["b_conv"], ((0, 0), (0, LANE - CMID))),
        "pool": pool,
        "w_proj": jnp.pad(p["w_proj"], ((0, LANE - CMID), (0, 0))),  # (128, 128)
        "b_proj": p["b_proj"],
        "w_head": jnp.pad(p["w_head"], ((0, 0), (0, LANE - NUM_CLASSES))),
        "b_head": jnp.pad(p["b_head"], ((0, 0), (0, LANE - NUM_CLASSES))),
    }


@functools.partial(jax.jit, static_argnames=("return_feature",))
def fmcib_enc_forward(pp, x_nchw, return_feature=False):
    # NCHW -> channels-last, spatially zero-padded, flattened with halo rows so
    # every conv tap is a plain sublane slice inside the kernel (~11 KB).
    x_sp = jnp.pad(jnp.transpose(x_nchw, (0, 2, 3, 1)),
                   ((0, 0), (1, 1), (1, 1), (0, 0)))               # (N, HP, WP, CIN)
    x_flat = jnp.pad(x_sp.reshape(NP, CIN),
                     ((SHIFT_PAD, SHIFT_PAD), (0, 0)))             # (NFLAT, CIN)

    enc_args = (x_flat, pp["w_conv"], pp["b_conv"], pp["pool"],
                pp["w_proj"], pp["b_proj"])
    scratch = [pltpu.VMEM((NP, LANE), jnp.float32)]                # conv accumulator

    if return_feature:
        # Feature path: skip head weights, head matmul and logits store.
        feat = pl.pallas_call(
            feature_kernel,
            out_shape=jax.ShapeDtypeStruct((N, LATENT), jnp.float32),
            scratch_shapes=scratch,
        )(*enc_args)
        return feat, feat

    logits = pl.pallas_call(
        logits_kernel,
        out_shape=jax.ShapeDtypeStruct((N, NUM_CLASSES), jnp.float32),
        scratch_shapes=scratch,
    )(*enc_args, pp["w_head"], pp["b_head"])
    return logits


# Pure-JAX reference for correctness checking (unpadded params).
def _reference(params, x_nchw):
    xt = jnp.transpose(x_nchw, (0, 2, 3, 1))                       # (N, H, W, CIN)
    xp = jnp.pad(xt, ((0, 0), (1, 1), (1, 1), (0, 0)))
    pieces = [xp[:, di:di + H, dj:dj + W, :]
              for di in range(K) for dj in range(K)]
    patches = jnp.stack(pieces, axis=3).reshape(NHW, KKC)          # (512, 36)
    y = jnp.maximum(patches @ params["w_conv"] + params["b_conv"], 0.0)
    pooled = jnp.mean(y.reshape(N, HW, CMID), axis=1)              # (N, CMID)
    z = jnp.maximum(pooled @ params["w_proj"] + params["b_proj"], 0.0)
    return z @ params["w_head"] + params["b_head"], z


if __name__ == "__main__":
    key = jax.random.PRNGKey(0)
    k_params, k_x = jax.random.split(key)
    params = init_params(k_params)
    prepped = prep_params(params)
    x = jax.random.normal(k_x, (N, CIN, H, W), jnp.float32)        # NCHW like PyTorch

    logits = jax.block_until_ready(fmcib_enc_forward(prepped, x))
    ref_logits, ref_z = _reference(params, x)
    assert logits.shape == (N, NUM_CLASSES)
    assert jnp.allclose(logits, ref_logits, atol=1e-4, rtol=1e-4)

    # also exercise the return_feature path
    z1, z2 = fmcib_enc_forward(prepped, x, return_feature=True)
    jax.block_until_ready(z1)
    assert z1.shape == (N, LATENT)
    assert jnp.allclose(z1, z2)
    assert jnp.allclose(z1, ref_z, atol=1e-4, rtol=1e-4)

    print("KERNEL_OK")
</pallas_src>

<mosaic_0001>
module attributes {stable_mosaic.version = 11 : i64} {
  func.func @logits_kernel(%arg0: memref<686x4xf32, #tpu.memory_space<vmem>>, %arg1: memref<9x4x128xf32, #tpu.memory_space<vmem>>, %arg2: memref<1x128xf32, #tpu.memory_space<vmem>>, %arg3: memref<2x648xf32, #tpu.memory_space<vmem>>, %arg4: memref<128x128xf32, #tpu.memory_space<vmem>>, %arg5: memref<1x128xf32, #tpu.memory_space<vmem>>, %arg6: memref<128x128xf32, #tpu.memory_space<vmem>>, %arg7: memref<1x128xf32, #tpu.memory_space<vmem>>, %arg8: memref<2x10xf32, #tpu.memory_space<vmem>>, %arg9: memref<648x128xf32, #tpu.memory_space<vmem>>) attributes {dimension_semantics = [], scalar_prefetch = 0 : i64, scratch_operands = 1 : i64, tpu.core_type = #tpu.core_type<tc>} {
    %cst = arith.constant 0.000000e+00 : f32
    %0 = vector.broadcast %cst : f32 to vector<648x128xf32>
    %c0 = arith.constant 0 : index
    %c0_0 = arith.constant 0 : index
    %1 = vector.load %arg9[%c0, %c0_0] : memref<648x128xf32, #tpu.memory_space<vmem>>, vector<648x128xf32>
    tpu.vector_store %arg9[%c0, %c0_0], %0 {strides = array<i32>} : memref<648x128xf32, #tpu.memory_space<vmem>>, vector<648x128xf32>,
    %c0_1 = arith.constant 0 : index
    %c0_2 = arith.constant 0 : index
    %2 = vector.load %arg0[%c0_1, %c0_2] : memref<686x4xf32, #tpu.memory_space<vmem>>, vector<648x4xf32>
    %c0_3 = arith.constant 0 : index
    %c0_4 = arith.constant 0 : index
    %3 = vector.load %arg9[%c0_3, %c0_4] : memref<648x128xf32, #tpu.memory_space<vmem>>, vector<648x128xf32>
    %c0_5 = arith.constant 0 : index
    %c0_6 = arith.constant 0 : index
    %c0_7 = arith.constant 0 : index
    %4 = vector.load %arg1[%c0_5, %c0_6, %c0_7] : memref<9x4x128xf32, #tpu.memory_space<vmem>>, vector<1x4x128xf32>
    %5 = vector.shape_cast %4 : vector<1x4x128xf32> to vector<4x128xf32>
    %cst_8 = arith.constant dense<0.000000e+00> : vector<648x128xf32>
    %6 = tpu.matmul %2, %5, %cst_8 {dimension_numbers = #tpu.dot_dimension_numbers<[1], [0], [0], [1], [0, 0, 1, 1], [], []>} : vector<648x4xf32>, vector<4x128xf32>, vector<648x128xf32> -> vector<648x128xf32>
    %7 = arith.addf %3, %6 : vector<648x128xf32>
    %c0_9 = arith.constant 0 : index
    %c0_10 = arith.constant 0 : index
    %8 = vector.load %arg9[%c0_9, %c0_10] : memref<648x128xf32, #tpu.memory_space<vmem>>, vector<648x128xf32>
    tpu.vector_store %arg9[%c0_9, %c0_10], %7 {strides = array<i32>} : memref<648x128xf32, #tpu.memory_space<vmem>>, vector<648x128xf32>,
    %c1 = arith.constant 1 : index
    %c0_11 = arith.constant 0 : index
    %9 = vector.load %arg0[%c1, %c0_11] : memref<686x4xf32, #tpu.memory_space<vmem>>, vector<648x4xf32>
    %c0_12 = arith.constant 0 : index
    %c0_13 = arith.constant 0 : index
    %10 = vector.load %arg9[%c0_12, %c0_13] : memref<648x128xf32, #tpu.memory_space<vmem>>, vector<648x128xf32>
    %c1_14 = arith.constant 1 : index
    %c0_15 = arith.constant 0 : index
    %c0_16 = arith.constant 0 : index
    %11 = vector.load %arg1[%c1_14, %c0_15, %c0_16] : memref<9x4x128xf32, #tpu.memory_space<vmem>>, vector<1x4x128xf32>
    %12 = vector.shape_cast %11 : vector<1x4x128xf32> to vector<4x128xf32>
    %cst_17 = arith.constant dense<0.000000e+00> : vector<648x128xf32>
    %13 = tpu.matmul %9, %12, %cst_17 {dimension_numbers = #tpu.dot_dimension_numbers<[1], [0], [0], [1], [0, 0, 1, 1], [], []>} : vector<648x4xf32>, vector<4x128xf32>, vector<648x128xf32> -> vector<648x128xf32>
    %14 = arith.addf %10, %13 : vector<648x128xf32>
    %c0_18 = arith.constant 0 : index
    %c0_19 = arith.constant 0 : index
    %15 = vector.load %arg9[%c0_18, %c0_19] : memref<648x128xf32, #tpu.memory_space<vmem>>, vector<648x128xf32>
    tpu.vector_store %arg9[%c0_18, %c0_19], %14 {strides = array<i32>} : memref<648x128xf32, #tpu.memory_space<vmem>>, vector<648x128xf32>,
    %c2 = arith.constant 2 : index
    %c0_20 = arith.constant 0 : index
    %16 = vector.load %arg0[%c2, %c0_20] : memref<686x4xf32, #tpu.memory_space<vmem>>, vector<648x4xf32>
    %c0_21 = arith.constant 0 : index
    %c0_22 = arith.constant 0 : index
    %17 = vector.load %arg9[%c0_21, %c0_22] : memref<648x128xf32, #tpu.memory_space<vmem>>, vector<648x128xf32>
    %c2_23 = arith.constant 2 : index
    %c0_24 = arith.constant 0 : index
    %c0_25 = arith.constant 0 : index
    %18 = vector.load %arg1[%c2_23, %c0_24, %c0_25] : memref<9x4x128xf32, #tpu.memory_space<vmem>>, vector<1x4x128xf32>
    %19 = vector.shape_cast %18 : vector<1x4x128xf32> to vector<4x128xf32>
    %cst_26 = arith.constant dense<0.000000e+00> : vector<648x128xf32>
    %20 = tpu.matmul %16, %19, %cst_26 {dimension_numbers = #tpu.dot_dimension_numbers<[1], [0], [0], [1], [0, 0, 1, 1], [], []>} : vector<648x4xf32>, vector<4x128xf32>, vector<648x128xf32> -> vector<648x128xf32>
    %21 = arith.addf %17, %20 : vector<648x128xf32>
    %c0_27 = arith.constant 0 : index
    %c0_28 = arith.constant 0 : index
    %22 = vector.load %arg9[%c0_27, %c0_28] : memref<648x128xf32, #tpu.memory_space<vmem>>, vector<648x128xf32>
    tpu.vector_store %arg9[%c0_27, %c0_28], %21 {strides = array<i32>} : memref<648x128xf32, #tpu.memory_space<vmem>>, vector<648x128xf32>,
    %c18 = arith.constant 18 : index
    %c0_29 = arith.constant 0 : index
    %23 = vector.load %arg0[%c18, %c0_29] : memref<686x4xf32, #tpu.memory_space<vmem>>, vector<648x4xf32>
    %c0_30 = arith.constant 0 : index
    %c0_31 = arith.constant 0 : index
    %24 = vector.load %arg9[%c0_30, %c0_31] : memref<648x128xf32, #tpu.memory_space<vmem>>, vector<648x128xf32>
    %c3 = arith.constant 3 : index
    %c0_32 = arith.constant 0 : index
    %c0_33 = arith.constant 0 : index
    %25 = vector.load %arg1[%c3, %c0_32, %c0_33] : memref<9x4x128xf32, #tpu.memory_space<vmem>>, vector<1x4x128xf32>
    %26 = vector.shape_cast %25 : vector<1x4x128xf32> to vector<4x128xf32>
    %cst_34 = arith.constant dense<0.000000e+00> : vector<648x128xf32>
    %27 = tpu.matmul %23, %26, %cst_34 {dimension_numbers = #tpu.dot_dimension_numbers<[1], [0], [0], [1], [0, 0, 1, 1], [], []>} : vector<648x4xf32>, vector<4x128xf32>, vector<648x128xf32> -> vector<648x128xf32>
    %28 = arith.addf %24, %27 : vector<648x128xf32>
    %c0_35 = arith.constant 0 : index
    %c0_36 = arith.constant 0 : index
    %29 = vector.load %arg9[%c0_35, %c0_36] : memref<648x128xf32, #tpu.memory_space<vmem>>, vector<648x128xf32>
    tpu.vector_store %arg9[%c0_35, %c0_36], %28 {strides = array<i32>} : memref<648x128xf32, #tpu.memory_space<vmem>>, vector<648x128xf32>,
    %c19 = arith.constant 19 : index
    %c0_37 = arith.constant 0 : index
    %30 = vector.load %arg0[%c19, %c0_37] : memref<686x4xf32, #tpu.memory_space<vmem>>, vector<648x4xf32>
    %c0_38 = arith.constant 0 : index
    %c0_39 = arith.constant 0 : index
    %31 = vector.load %arg9[%c0_38, %c0_39] : memref<648x128xf32, #tpu.memory_space<vmem>>, vector<648x128xf32>
    %c4 = arith.constant 4 : index
    %c0_40 = arith.constant 0 : index
    %c0_41 = arith.constant 0 : index
    %32 = vector.load %arg1[%c4, %c0_40, %c0_41] : memref<9x4x128xf32, #tpu.memory_space<vmem>>, vector<1x4x128xf32>
    %33 = vector.shape_cast %32 : vector<1x4x128xf32> to vector<4x128xf32>
    %cst_42 = arith.constant dense<0.000000e+00> : vector<648x128xf32>
    %34 = tpu.matmul %30, %33, %cst_42 {dimension_numbers = #tpu.dot_dimension_numbers<[1], [0], [0], [1], [0, 0, 1, 1], [], []>} : vector<648x4xf32>, vector<4x128xf32>, vector<648x128xf32> -> vector<648x128xf32>
    %35 = arith.addf %31, %34 : vector<648x128xf32>
    %c0_43 = arith.constant 0 : index
    %c0_44 = arith.constant 0 : index
    %36 = vector.load %arg9[%c0_43, %c0_44] : memref<648x128xf32, #tpu.memory_space<vmem>>, vector<648x128xf32>
    tpu.vector_store %arg9[%c0_43, %c0_44], %35 {strides = array<i32>} : memref<648x128xf32, #tpu.memory_space<vmem>>, vector<648x128xf32>,
    %c20 = arith.constant 20 : index
    %c0_45 = arith.constant 0 : index
    %37 = vector.load %arg0[%c20, %c0_45] : memref<686x4xf32, #tpu.memory_space<vmem>>, vector<648x4xf32>
    %c0_46 = arith.constant 0 : index
    %c0_47 = arith.constant 0 : index
    %38 = vector.load %arg9[%c0_46, %c0_47] : memref<648x128xf32, #tpu.memory_space<vmem>>, vector<648x128xf32>
    %c5 = arith.constant 5 : index
    %c0_48 = arith.constant 0 : index
    %c0_49 = arith.constant 0 : index
    %39 = vector.load %arg1[%c5, %c0_48, %c0_49] : memref<9x4x128xf32, #tpu.memory_space<vmem>>, vector<1x4x128xf32>
    %40 = vector.shape_cast %39 : vector<1x4x128xf32> to vector<4x128xf32>
    %cst_50 = arith.constant dense<0.000000e+00> : vector<648x128xf32>
    %41 = tpu.matmul %37, %40, %cst_50 {dimension_numbers = #tpu.dot_dimension_numbers<[1], [0], [0], [1], [0, 0, 1, 1], [], []>} : vector<648x4xf32>, vector<4x128xf32>, vector<648x128xf32> -> vector<648x128xf32>
    %42 = arith.addf %38, %41 : vector<648x128xf32>
    %c0_51 = arith.constant 0 : index
    %c0_52 = arith.constant 0 : index
    %43 = vector.load %arg9[%c0_51, %c0_52] : memref<648x128xf32, #tpu.memory_space<vmem>>, vector<648x128xf32>
    tpu.vector_store %arg9[%c0_51, %c0_52], %42 {strides = array<i32>} : memref<648x128xf32, #tpu.memory_space<vmem>>, vector<648x128xf32>,
    %c36 = arith.constant 36 : index
    %c0_53 = arith.constant 0 : index
    %44 = vector.load %arg0[%c36, %c0_53] : memref<686x4xf32, #tpu.memory_space<vmem>>, vector<648x4xf32>
    %c0_54 = arith.constant 0 : index
    %c0_55 = arith.constant 0 : index
    %45 = vector.load %arg9[%c0_54, %c0_55] : memref<648x128xf32, #tpu.memory_space<vmem>>, vector<648x128xf32>
    %c6 = arith.constant 6 : index
    %c0_56 = arith.constant 0 : index
    %c0_57 = arith.constant 0 : index
    %46 = vector.load %arg1[%c6, %c0_56, %c0_57] : memref<9x4x128xf32, #tpu.memory_space<vmem>>, vector<1x4x128xf32>
    %47 = vector.shape_cast %46 : vector<1x4x128xf32> to vector<4x128xf32>
    %cst_58 = arith.constant dense<0.000000e+00> : vector<648x128xf32>
    %48 = tpu.matmul %44, %47, %cst_58 {dimension_numbers = #tpu.dot_dimension_numbers<[1], [0], [0], [1], [0, 0, 1, 1], [], []>} : vector<648x4xf32>, vector<4x128xf32>, vector<648x128xf32> -> vector<648x128xf32>
    %49 = arith.addf %45, %48 : vector<648x128xf32>
    %c0_59 = arith.constant 0 : index
    %c0_60 = arith.constant 0 : index
    %50 = vector.load %arg9[%c0_59, %c0_60] : memref<648x128xf32, #tpu.memory_space<vmem>>, vector<648x128xf32>
    tpu.vector_store %arg9[%c0_59, %c0_60], %49 {strides = array<i32>} : memref<648x128xf32, #tpu.memory_space<vmem>>, vector<648x128xf32>,
    %c37 = arith.constant 37 : index
    %c0_61 = arith.constant 0 : index
    %51 = vector.load %arg0[%c37, %c0_61] : memref<686x4xf32, #tpu.memory_space<vmem>>, vector<648x4xf32>
    %c0_62 = arith.constant 0 : index
    %c0_63 = arith.constant 0 : index
    %52 = vector.load %arg9[%c0_62, %c0_63] : memref<648x128xf32, #tpu.memory_space<vmem>>, vector<648x128xf32>
    %c7 = arith.constant 7 : index
    %c0_64 = arith.constant 0 : index
    %c0_65 = arith.constant 0 : index
    %53 = vector.load %arg1[%c7, %c0_64, %c0_65] : memref<9x4x128xf32, #tpu.memory_space<vmem>>, vector<1x4x128xf32>
    %54 = vector.shape_cast %53 : vector<1x4x128xf32> to vector<4x128xf32>
    %cst_66 = arith.constant dense<0.000000e+00> : vector<648x128xf32>
    %55 = tpu.matmul %51, %54, %cst_66 {dimension_numbers = #tpu.dot_dimension_numbers<[1], [0], [0], [1], [0, 0, 1, 1], [], []>} : vector<648x4xf32>, vector<4x128xf32>, vector<648x128xf32> -> vector<648x128xf32>
    %56 = arith.addf %52, %55 : vector<648x128xf32>
    %c0_67 = arith.constant 0 : index
    %c0_68 = arith.constant 0 : index
    %57 = vector.load %arg9[%c0_67, %c0_68] : memref<648x128xf32, #tpu.memory_space<vmem>>, vector<648x128xf32>
    tpu.vector_store %arg9[%c0_67, %c0_68], %56 {strides = array<i32>} : memref<648x128xf32, #tpu.memory_space<vmem>>, vector<648x128xf32>,
    %c38 = arith.constant 38 : index
    %c0_69 = arith.constant 0 : index
    %58 = vector.load %arg0[%c38, %c0_69] : memref<686x4xf32, #tpu.memory_space<vmem>>, vector<648x4xf32>
    %c0_70 = arith.constant 0 : index
    %c0_71 = arith.constant 0 : index
    %59 = vector.load %arg9[%c0_70, %c0_71] : memref<648x128xf32, #tpu.memory_space<vmem>>, vector<648x128xf32>
    %c8 = arith.constant 8 : index
    %c0_72 = arith.constant 0 : index
    %c0_73 = arith.constant 0 : index
    %60 = vector.load %arg1[%c8, %c0_72, %c0_73] : memref<9x4x128xf32, #tpu.memory_space<vmem>>, vector<1x4x128xf32>
    %61 = vector.shape_cast %60 : vector<1x4x128xf32> to vector<4x128xf32>
    %cst_74 = arith.constant dense<0.000000e+00> : vector<648x128xf32>
    %62 = tpu.matmul %58, %61, %cst_74 {dimension_numbers = #tpu.dot_dimension_numbers<[1], [0], [0], [1], [0, 0, 1, 1], [], []>} : vector<648x4xf32>, vector<4x128xf32>, vector<648x128xf32> -> vector<648x128xf32>
    %63 = arith.addf %59, %62 : vector<648x128xf32>
    %c0_75 = arith.constant 0 : index
    %c0_76 = arith.constant 0 : index
    %64 = vector.load %arg9[%c0_75, %c0_76] : memref<648x128xf32, #tpu.memory_space<vmem>>, vector<648x128xf32>
    tpu.vector_store %arg9[%c0_75, %c0_76], %63 {strides = array<i32>} : memref<648x128xf32, #tpu.memory_space<vmem>>, vector<648x128xf32>,
    %c0_77 = arith.constant 0 : index
    %c0_78 = arith.constant 0 : index
    %65 = vector.load %arg9[%c0_77, %c0_78] : memref<648x128xf32, #tpu.memory_space<vmem>>, vector<648x128xf32>
    %c0_79 = arith.constant 0 : index
    %c0_80 = arith.constant 0 : index
    %66 = vector.load %arg2[%c0_79, %c0_80] : memref<1x128xf32, #tpu.memory_space<vmem>>, vector<1x128xf32>
    %67 = vector.broadcast %66 : vector<1x128xf32> to vector<648x128xf32>
    %68 = arith.addf %65, %67 : vector<648x128xf32>
    %cst_81 = arith.constant 0.000000e+00 : f32
    %69 = vector.broadcast %cst_81 : f32 to vector<648x128xf32>
    %70 = arith.maximumf %68, %69 : vector<648x128xf32>
    %c0_82 = arith.constant 0 : index
    %c0_83 = arith.constant 0 : index
    %71 = vector.load %arg3[%c0_82, %c0_83] : memref<2x648xf32, #tpu.memory_space<vmem>>, vector<2x648xf32>
    %cst_84 = arith.constant dense<0.000000e+00> : vector<2x128xf32>
    %72 = tpu.matmul %71, %70, %cst_84 {dimension_numbers = #tpu.dot_dimension_numbers<[1], [0], [0], [1], [0, 0, 1, 1], [], []>} : vector<2x648xf32>, vector<648x128xf32>, vector<2x128xf32> -> vector<2x128xf32>
    %c0_85 = arith.constant 0 : index
    %c0_86 = arith.constant 0 : index
    %73 = vector.load %arg4[%c0_85, %c0_86] : memref<128x128xf32, #tpu.memory_space<vmem>>, vector<128x128xf32>
    %cst_87 = arith.constant dense<0.000000e+00> : vector<2x128xf32>
    %74 = tpu.matmul %72, %73, %cst_87 {dimension_numbers = #tpu.dot_dimension_numbers<[1], [0], [0], [1], [0, 0, 1, 1], [], []>} : vector<2x128xf32>, vector<128x128xf32>, vector<2x128xf32> -> vector<2x128xf32>
    %c0_88 = arith.constant 0 : index
    %c0_89 = arith.constant 0 : index
    %75 = vector.load %arg5[%c0_88, %c0_89] : memref<1x128xf32, #tpu.memory_space<vmem>>, vector<1x128xf32>
    %76 = vector.broadcast %75 : vector<1x128xf32> to vector<2x128xf32>
    %77 = arith.addf %74, %76 : vector<2x128xf32>
    %cst_90 = arith.constant 0.000000e+00 : f32
    %78 = vector.broadcast %cst_90 : f32 to vector<2x128xf32>
    %79 = arith.maximumf %77, %78 : vector<2x128xf32>
    %c0_91 = arith.constant 0 : index
    %c0_92 = arith.constant 0 : index
    %80 = vector.load %arg6[%c0_91, %c0_92] : memref<128x128xf32, #tpu.memory_space<vmem>>, vector<128x128xf32>
    %cst_93 = arith.constant dense<0.000000e+00> : vector<2x128xf32>
    %81 = tpu.matmul %79, %80, %cst_93 {dimension_numbers = #tpu.dot_dimension_numbers<[1], [0], [0], [1], [0, 0, 1, 1], [], []>} : vector<2x128xf32>, vector<128x128xf32>, vector<2x128xf32> -> vector<2x128xf32>
    %c0_94 = arith.constant 0 : index
    %c0_95 = arith.constant 0 : index
    %82 = vector.load %arg7[%c0_94, %c0_95] : memref<1x128xf32, #tpu.memory_space<vmem>>, vector<1x128xf32>
    %83 = vector.broadcast %82 : vector<1x128xf32> to vector<2x128xf32>
    %84 = arith.addf %81, %83 : vector<2x128xf32>
    %85 = vector.extract_strided_slice %84 {offsets = [0, 0], sizes = [2, 10], strides = [1, 1]} : vector<2x128xf32> to vector<2x10xf32>
    %c0_96 = arith.constant 0 : index
    %c0_97 = arith.constant 0 : index
    %86 = vector.load %arg8[%c0_96, %c0_97] : memref<2x10xf32, #tpu.memory_space<vmem>>, vector<2x10xf32>
    tpu.vector_store %arg8[%c0_96, %c0_97], %85 {strides = array<i32>} : memref<2x10xf32, #tpu.memory_space<vmem>>, vector<2x10xf32>,
    return
  }
}

</mosaic_0001>

<llo_original>
// kernel: fmcib_enc_forward.1
$region0: #{fmcib_enc_forward.1}
  #allocation0 [shape = 'u32[]', space=smem, size = 0x4, offset = 0x4, fixed_abs, tag = 'smem constant byte address 0x4 - core index']
  #allocation1 [shape = 'u32[144,128]{1,0:T(1,128)}', space=vmem, size = 0x12000, scoped, tag = 'internal scratch']
  #allocation2 [shape = 'f32[648,128]{1,0:T(8,128)}', space=vmem, size = 0x51000, scoped, tag = 'scratch operand']
  %s0 = inlined_call_operand.vmem [shape: f32[686,4], index: 0, kind: input, shape index: {}]
  %s1 = inlined_call_operand.vmem [shape: f32[9,4,128], index: 1, kind: input, shape index: {}]
  %s2 = inlined_call_operand.vmem [shape: f32[1,128], index: 2, kind: input, shape index: {}]
  %s3 = inlined_call_operand.vmem [shape: f32[2,648], index: 3, kind: input, shape index: {}]
  %s4 = inlined_call_operand.vmem [shape: f32[128,128], index: 4, kind: input, shape index: {}]
  %s5 = inlined_call_operand.vmem [shape: f32[1,128], index: 5, kind: input, shape index: {}]
  %s6 = inlined_call_operand.vmem [shape: f32[128,128], index: 6, kind: input, shape index: {}]
  %s7 = inlined_call_operand.vmem [shape: f32[1,128], index: 7, kind: input, shape index: {}]
  %s8 = inlined_call_operand.hbm [shape: f32[2,10], index: 8, kind: output, shape index: {}]
  %s9 = sld [smem:[#allocation0]]
  $region42: #{fmcib_enc_forward.1} parent=0
    _
  %s11 = ssub.s32 1, %s9
  %s12 = scalar_select 0, %s11, %s9
  $region1: #{fmcib_enc_forward.1} parent=0
    #allocation3 [shape = 'u8[1024]{0}', space=vmem, size = 0x400, scoped, tag = 'output window, operand 0, single buffered']
    #allocation4 [shape = 's32[1]{0}', space=sflag, size = 0x4, scoped, tag = 'scoped memory for fmcib_enc_forward.1']
    %13 = vsyncpa [#allocation4], 0
    // Predicated region
    $region2: #{fmcib_enc_forward.1} parent=1 // pred_check
      _
    $region3: #{fmcib_enc_forward.1} parent=1 // pred_check_branch
      %15 = sbr.rel (0) target = $region5
    $region4: #{fmcib_enc_forward.1} parent=1 // pred_region
      _
    $region5: #{fmcib_enc_forward.1} parent=1 // pred_fallthru
      _
    // Predicated region
    $region6: #{fmcib_enc_forward.1} parent=1 // pred_check
      _
    $region7: #{fmcib_enc_forward.1} parent=1 // pred_check_branch
      %17 = sbr.rel (0) target = $region9
    $region8: #{fmcib_enc_forward.1} parent=1 // pred_region
      _
    $region9: #{fmcib_enc_forward.1} parent=1 // pred_fallthru
      _
    // Predicated region
    $region10: #{fmcib_enc_forward.1} parent=1 // pred_check
      _
    $region11: #{fmcib_enc_forward.1} parent=1 // pred_check_branch
      %19 = sbr.rel (0) target = $region13
    $region12: #{fmcib_enc_forward.1} parent=1 // pred_region
      _
    $region13: #{fmcib_enc_forward.1} parent=1 // pred_fallthru
      _
    // Predicated region
    $region14: #{fmcib_enc_forward.1} parent=1 // pred_check
      _
    $region15: #{fmcib_enc_forward.1} parent=1 // pred_check_branch
      %21 = sbr.rel (0) target = $region17
    $region16: #{fmcib_enc_forward.1} parent=1 // pred_region
      _
    $region17: #{fmcib_enc_forward.1} parent=1 // pred_fallthru
      _
    // Predicated region
    $region18: #{fmcib_enc_forward.1} parent=1 // pred_check
      _
    $region19: #{fmcib_enc_forward.1} parent=1 // pred_check_branch
      %23 = sbr.rel (0) target = $region21
    $region20: #{fmcib_enc_forward.1} parent=1 // pred_region
      _
    $region21: #{fmcib_enc_forward.1} parent=1 // pred_fallthru
      _
    // Predicated region
    $region22: #{fmcib_enc_forward.1} parent=1 // pred_check
      _
    $region23: #{fmcib_enc_forward.1} parent=1 // pred_check_branch
      %25 = sbr.rel (0) target = $region25
    $region24: #{fmcib_enc_forward.1} parent=1 // pred_region
      _
    $region25: #{fmcib_enc_forward.1} parent=1 // pred_fallthru
      _
    // Predicated region
    $region26: #{fmcib_enc_forward.1} parent=1 // pred_check
      _
    $region27: #{fmcib_enc_forward.1} parent=1 // pred_check_branch
      %27 = sbr.rel (0) target = $region29
    $region28: #{fmcib_enc_forward.1} parent=1 // pred_region
      _
    $region29: #{fmcib_enc_forward.1} parent=1 // pred_fallthru
      _
    // Predicated region
    $region30: #{fmcib_enc_forward.1} parent=1 // pred_check
      _
    $region31: #{fmcib_enc_forward.1} parent=1 // pred_check_branch
      %29 = sbr.rel (0) target = $region33
    $region32: #{fmcib_enc_forward.1} parent=1 // pred_region
      _
    $region33: #{fmcib_enc_forward.1} parent=1 // pred_fallthru
      _
    %30 = vst [vmem:[#allocation2] sm:$0xff] 0.0
    %31 = vst [vmem:[#allocation2 + $0x8] sm:$0xff] 0.0
    %32 = vst [vmem:[#allocation2 + $0x10] sm:$0xff] 0.0
    %33 = vst [vmem:[#allocation2 + $0x18] sm:$0xff] 0.0
    %34 = vst [vmem:[#allocation2 + $0x20] sm:$0xff] 0.0
    %35 = vst [vmem:[#allocation2 + $0x28] sm:$0xff] 0.0
    %36 = vst [vmem:[#allocation2 + $0x30] sm:$0xff] 0.0
    %37 = vst [vmem:[#allocation2 + $0x38] sm:$0xff] 0.0
    %38 = vst [vmem:[#allocation2 + $0x40] sm:$0xff] 0.0
    %39 = vst [vmem:[#allocation2 + $0x48] sm:$0xff] 0.0
    %40 = vst [vmem:[#allocation2 + $0x50] sm:$0xff] 0.0
    %41 = vst [vmem:[#allocation2 + $0x58] sm:$0xff] 0.0
    %42 = vst [vmem:[#allocation2 + $0x60] sm:$0xff] 0.0
    %43 = vst [vmem:[#allocation2 + $0x68] sm:$0xff] 0.0
    %44 = vst [vmem:[#allocation2 + $0x70] sm:$0xff] 0.0
    %45 = vst [vmem:[#allocation2 + $0x78] sm:$0xff] 0.0
    %46 = vst [vmem:[#allocation2 + $0x80] sm:$0xff] 0.0
    %47 = vst [vmem:[#allocation2 + $0x88] sm:$0xff] 0.0
    %48 = vst [vmem:[#allocation2 + $0x90] sm:$0xff] 0.0
    %49 = vst [vmem:[#allocation2 + $0x98] sm:$0xff] 0.0
    %50 = vst [vmem:[#allocation2 + $0xa0] sm:$0xff] 0.0
    %51 = vst [vmem:[#allocation2 + $0xa8] sm:$0xff] 0.0
    %52 = vst [vmem:[#allocation2 + $0xb0] sm:$0xff] 0.0
    %53 = vst [vmem:[#allocation2 + $0xb8] sm:$0xff] 0.0
    %54 = vst [vmem:[#allocation2 + $0xc0] sm:$0xff] 0.0
    %55 = vst [vmem:[#allocation2 + $0xc8] sm:$0xff] 0.0
    %56 = vst [vmem:[#allocation2 + $0xd0] sm:$0xff] 0.0
    %57 = vst [vmem:[#allocation2 + $0xd8] sm:$0xff] 0.0
    %58 = vst [vmem:[#allocation2 + $0xe0] sm:$0xff] 0.0
    %59 = vst [vmem:[#allocation2 + $0xe8] sm:$0xff] 0.0
    %60 = vst [vmem:[#allocation2 + $0xf0] sm:$0xff] 0.0
    %61 = vst [vmem:[#allocation2 + $0xf8] sm:$0xff] 0.0
    %62 = vst [vmem:[#allocation2 + $0x100] sm:$0xff] 0.0
    %63 = vst [vmem:[#allocation2 + $0x108] sm:$0xff] 0.0
    %64 = vst [vmem:[#allocation2 + $0x110] sm:$0xff] 0.0
    %65 = vst [vmem:[#allocation2 + $0x118] sm:$0xff] 0.0
    %66 = vst [vmem:[#allocation2 + $0x120] sm:$0xff] 0.0
    %67 = vst [vmem:[#allocation2 + $0x128] sm:$0xff] 0.0
    %68 = vst [vmem:[#allocation2 + $0x130] sm:$0xff] 0.0
    %69 = vst [vmem:[#allocation2 + $0x138] sm:$0xff] 0.0
    %70 = vst [vmem:[#allocation2 + $0x140] sm:$0xff] 0.0
    %71 = vst [vmem:[#allocation2 + $0x148] sm:$0xff] 0.0
    %72 = vst [vmem:[#allocation2 + $0x150] sm:$0xff] 0.0
    %73 = vst [vmem:[#allocation2 + $0x158] sm:$0xff] 0.0
    %74 = vst [vmem:[#allocation2 + $0x160] sm:$0xff] 0.0
    %75 = vst [vmem:[#allocation2 + $0x168] sm:$0xff] 0.0
    %76 = vst [vmem:[#allocation2 + $0x170] sm:$0xff] 0.0
    %77 = vst [vmem:[#allocation2 + $0x178] sm:$0xff] 0.0
    %78 = vst [vmem:[#allocation2 + $0x180] sm:$0xff] 0.0
    %79 = vst [vmem:[#allocation2 + $0x188] sm:$0xff] 0.0
    %80 = vst [vmem:[#allocation2 + $0x190] sm:$0xff] 0.0
    %81 = vst [vmem:[#allocation2 + $0x198] sm:$0xff] 0.0
    %82 = vst [vmem:[#allocation2 + $0x1a0] sm:$0xff] 0.0
    %83 = vst [vmem:[#allocation2 + $0x1a8] sm:$0xff] 0.0
    %84 = vst [vmem:[#allocation2 + $0x1b0] sm:$0xff] 0.0
    %85 = vst [vmem:[#allocation2 + $0x1b8] sm:$0xff] 0.0
    %86 = vst [vmem:[#allocation2 + $0x1c0] sm:$0xff] 0.0
    %87 = vst [vmem:[#allocation2 + $0x1c8] sm:$0xff] 0.0
    %88 = vst [vmem:[#allocation2 + $0x1d0] sm:$0xff] 0.0
    %89 = vst [vmem:[#allocation2 + $0x1d8] sm:$0xff] 0.0
    %90 = vst [vmem:[#allocation2 + $0x1e0] sm:$0xff] 0.0
    %91 = vst [vmem:[#allocation2 + $0x1e8] sm:$0xff] 0.0
    %92 = vst [vmem:[#allocation2 + $0x1f0] sm:$0xff] 0.0
    %93 = vst [vmem:[#allocation2 + $0x1f8] sm:$0xff] 0.0
    %94 = vst [vmem:[#allocation2 + $0x200] sm:$0xff] 0.0
    %95 = vst [vmem:[#allocation2 + $0x208] sm:$0xff] 0.0
    %96 = vst [vmem:[#allocation2 + $0x210] sm:$0xff] 0.0
    %97 = vst [vmem:[#allocation2 + $0x218] sm:$0xff] 0.0
    %98 = vst [vmem:[#allocation2 + $0x220] sm:$0xff] 0.0
    %99 = vst [vmem:[#allocation2 + $0x228] sm:$0xff] 0.0
    %100 = vst [vmem:[#allocation2 + $0x230] sm:$0xff] 0.0
    %101 = vst [vmem:[#allocation2 + $0x238] sm:$0xff] 0.0
    %102 = vst [vmem:[#allocation2 + $0x240] sm:$0xff] 0.0
    %103 = vst [vmem:[#allocation2 + $0x248] sm:$0xff] 0.0
    %104 = vst [vmem:[#allocation2 + $0x250] sm:$0xff] 0.0
    %105 = vst [vmem:[#allocation2 + $0x258] sm:$0xff] 0.0
    %106 = vst [vmem:[#allocation2 + $0x260] sm:$0xff] 0.0
    %107 = vst [vmem:[#allocation2 + $0x268] sm:$0xff] 0.0
    %108 = vst [vmem:[#allocation2 + $0x270] sm:$0xff] 0.0
    %109 = vst [vmem:[#allocation2 + $0x278] sm:$0xff] 0.0
    %110 = vst [vmem:[#allocation2 + $0x280] sm:$0xff] 0.0
    %v111 = vld [vmem:[%s0] sm:$0xff]
    %v112 = vld [vmem:[%s0 + $0x8] sm:$0xff]
    %v113 = vld [vmem:[%s0 + $0x10] sm:$0xff]
    %v114 = vld [vmem:[%s0 + $0x18] sm:$0xff]
    %v115 = vld [vmem:[%s0 + $0x20] sm:$0xff]
    %v116 = vld [vmem:[%s0 + $0x28] sm:$0xff]
    %v117 = vld [vmem:[%s0 + $0x30] sm:$0xff]
    %v118 = vld [vmem:[%s0 + $0x38] sm:$0xff]
    %v119 = vld [vmem:[%s0 + $0x40] sm:$0xff]
    %v120 = vld [vmem:[%s0 + $0x48] sm:$0xff]
    %v121 = vld [vmem:[%s0 + $0x50] sm:$0xff]
    %v122 = vld [vmem:[%s0 + $0x58] sm:$0xff]
    %v123 = vld [vmem:[%s0 + $0x60] sm:$0xff]
    %v124 = vld [vmem:[%s0 + $0x68] sm:$0xff]
    %v125 = vld [vmem:[%s0 + $0x70] sm:$0xff]
    %v126 = vld [vmem:[%s0 + $0x78] sm:$0xff]
    %v127 = vld [vmem:[%s0 + $0x80] sm:$0xff]
    %v128 = vld [vmem:[%s0 + $0x88] sm:$0xff]
    %v129 = vld [vmem:[%s0 + $0x90] sm:$0xff]
    %v130 = vld [vmem:[%s0 + $0x98] sm:$0xff]
    %v131 = vld [vmem:[%s0 + $0xa0] sm:$0xff]
    %v132 = vld [vmem:[%s0 + $0xa8] sm:$0xff]
    %v133 = vld [vmem:[%s0 + $0xb0] sm:$0xff]
    %v134 = vld [vmem:[%s0 + $0xb8] sm:$0xff]
    %v135 = vld [vmem:[%s0 + $0xc0] sm:$0xff]
    %v136 = vld [vmem:[%s0 + $0xc8] sm:$0xff]
    %v137 = vld [vmem:[%s0 + $0xd0] sm:$0xff]
    %v138 = vld [vmem:[%s0 + $0xd8] sm:$0xff]
    %v139 = vld [vmem:[%s0 + $0xe0] sm:$0xff]
    %v140 = vld [vmem:[%s0 + $0xe8] sm:$0xff]
    %v141 = vld [vmem:[%s0 + $0xf0] sm:$0xff]
    %v142 = vld [vmem:[%s0 + $0xf8] sm:$0xff]
    %v143 = vld [vmem:[%s0 + $0x100] sm:$0xff]
    %v144 = vld [vmem:[%s0 + $0x108] sm:$0xff]
    %v145 = vld [vmem:[%s0 + $0x110] sm:$0xff]
    %v146 = vld [vmem:[%s0 + $0x118] sm:$0xff]
    %v147 = vld [vmem:[%s0 + $0x120] sm:$0xff]
    %v148 = vld [vmem:[%s0 + $0x128] sm:$0xff]
    %v149 = vld [vmem:[%s0 + $0x130] sm:$0xff]
    %v150 = vld [vmem:[%s0 + $0x138] sm:$0xff]
    %v151 = vld [vmem:[%s0 + $0x140] sm:$0xff]
    %v152 = vld [vmem:[%s0 + $0x148] sm:$0xff]
    %v153 = vld [vmem:[%s0 + $0x150] sm:$0xff]
    %v154 = vld [vmem:[%s0 + $0x158] sm:$0xff]
    %v155 = vld [vmem:[%s0 + $0x160] sm:$0xff]
    %v156 = vld [vmem:[%s0 + $0x168] sm:$0xff]
    %v157 = vld [vmem:[%s0 + $0x170] sm:$0xff]
    %v158 = vld [vmem:[%s0 + $0x178] sm:$0xff]
    %v159 = vld [vmem:[%s0 + $0x180] sm:$0xff]
    %v160 = vld [vmem:[%s0 + $0x188] sm:$0xff]
    %v161 = vld [vmem:[%s0 + $0x190] sm:$0xff]
    %v162 = vld [vmem:[%s0 + $0x198] sm:$0xff]
    %v163 = vld [vmem:[%s0 + $0x1a0] sm:$0xff]
    %v164 = vld [vmem:[%s0 + $0x1a8] sm:$0xff]
    %v165 = vld [vmem:[%s0 + $0x1b0] sm:$0xff]
    %v166 = vld [vmem:[%s0 + $0x1b8] sm:$0xff]
    %v167 = vld [vmem:[%s0 + $0x1c0] sm:$0xff]
    %v168 = vld [vmem:[%s0 + $0x1c8] sm:$0xff]
    %v169 = vld [vmem:[%s0 + $0x1d0] sm:$0xff]
    %v170 = vld [vmem:[%s0 + $0x1d8] sm:$0xff]
    %v171 = vld [vmem:[%s0 + $0x1e0] sm:$0xff]
    %v172 = vld [vmem:[%s0 + $0x1e8] sm:$0xff]
    %v173 = vld [vmem:[%s0 + $0x1f0] sm:$0xff]
    %v174 = vld [vmem:[%s0 + $0x1f8] sm:$0xff]
    %v175 = vld [vmem:[%s0 + $0x200] sm:$0xff]
    %v176 = vld [vmem:[%s0 + $0x208] sm:$0xff]
    %v177 = vld [vmem:[%s0 + $0x210] sm:$0xff]
    %v178 = vld [vmem:[%s0 + $0x218] sm:$0xff]
    %v179 = vld [vmem:[%s0 + $0x220] sm:$0xff]
    %v180 = vld [vmem:[%s0 + $0x228] sm:$0xff]
    %v181 = vld [vmem:[%s0 + $0x230] sm:$0xff]
    %v182 = vld [vmem:[%s0 + $0x238] sm:$0xff]
    %v183 = vld [vmem:[%s0 + $0x240] sm:$0xff]
    %v184 = vld [vmem:[%s0 + $0x248] sm:$0xff]
    %v185 = vld [vmem:[%s0 + $0x250] sm:$0xff]
    %v186 = vld [vmem:[%s0 + $0x258] sm:$0xff]
    %v187 = vld [vmem:[%s0 + $0x260] sm:$0xff]
    %v188 = vld [vmem:[%s0 + $0x268] sm:$0xff]
    %v189 = vld [vmem:[%s0 + $0x270] sm:$0xff]
    %v190 = vld [vmem:[%s0 + $0x278] sm:$0xff]
    %v191 = vld [vmem:[%s0 + $0x280] sm:$0xff]
    %v192 = vld [vmem:[#allocation2] sm:$0xff]
    %v193 = vld [vmem:[#allocation2 + $0x8] sm:$0xff]
    %v194 = vld [vmem:[#allocation2 + $0x10] sm:$0xff]
    %v195 = vld [vmem:[#allocation2 + $0x18] sm:$0xff]
    %v196 = vld [vmem:[#allocation2 + $0x20] sm:$0xff]
    %v197 = vld [vmem:[#allocation2 + $0x28] sm:$0xff]
    %v198 = vld [vmem:[#allocation2 + $0x30] sm:$0xff]
    %v199 = vld [vmem:[#allocation2 + $0x38] sm:$0xff]
    %v200 = vld [vmem:[#allocation2 + $0x40] sm:$0xff]
    %v201 = vld [vmem:[#allocation2 + $0x48] sm:$0xff]
    %v202 = vld [vmem:[#allocation2 + $0x50] sm:$0xff]
    %v203 = vld [vmem:[#allocation2 + $0x58] sm:$0xff]
    %v204 = vld [vmem:[#allocation2 + $0x60] sm:$0xff]
    %v205 = vld [vmem:[#allocation2 + $0x68] sm:$0xff]
    %v206 = vld [vmem:[#allocation2 + $0x70] sm:$0xff]
    %v207 = vld [vmem:[#allocation2 + $0x78] sm:$0xff]
    %v208 = vld [vmem:[#allocation2 + $0x80] sm:$0xff]
    %v209 = vld [vmem:[#allocation2 + $0x88] sm:$0xff]
    %v210 = vld [vmem:[#allocation2 + $0x90] sm:$0xff]
    %v211 = vld [vmem:[#allocation2 + $0x98] sm:$0xff]
    %v212 = vld [vmem:[#allocation2 + $0xa0] sm:$0xff]
    %v213 = vld [vmem:[#allocation2 + $0xa8] sm:$0xff]
    %v214 = vld [vmem:[#allocation2 + $0xb0] sm:$0xff]
    %v215 = vld [vmem:[#allocation2 + $0xb8] sm:$0xff]
    %v216 = vld [vmem:[#allocation2 + $0xc0] sm:$0xff]
    %v217 = vld [vmem:[#allocation2 + $0xc8] sm:$0xff]
    %v218 = vld [vmem:[#allocation2 + $0xd0] sm:$0xff]
    %v219 = vld [vmem:[#allocation2 + $0xd8] sm:$0xff]
    %v220 = vld [vmem:[#allocation2 + $0xe0] sm:$0xff]
    %v221 = vld [vmem:[#allocation2 + $0xe8] sm:$0xff]
    %v222 = vld [vmem:[#allocation2 + $0xf0] sm:$0xff]
    %v223 = vld [vmem:[#allocation2 + $0xf8] sm:$0xff]
    %v224 = vld [vmem:[#allocation2 + $0x100] sm:$0xff]
    %v225 = vld [vmem:[#allocation2 + $0x108] sm:$0xff]
    %v226 = vld [vmem:[#allocation2 + $0x110] sm:$0xff]
    %v227 = vld [vmem:[#allocation2 + $0x118] sm:$0xff]
    %v228 = vld [vmem:[#allocation2 + $0x120] sm:$0xff]
    %v229 = vld [vmem:[#allocation2 + $0x128] sm:$0xff]
    %v230 = vld [vmem:[#allocation2 + $0x130] sm:$0xff]
    %v231 = vld [vmem:[#allocation2 + $0x138] sm:$0xff]
    %v232 = vld [vmem:[#allocation2 + $0x140] sm:$0xff]
    %v233 = vld [vmem:[#allocation2 + $0x148] sm:$0xff]
    %v234 = vld [vmem:[#allocation2 + $0x150] sm:$0xff]
    %v235 = vld [vmem:[#allocation2 + $0x158] sm:$0xff]
    %v236 = vld [vmem:[#allocation2 + $0x160] sm:$0xff]
    %v237 = vld [vmem:[#allocation2 + $0x168] sm:$0xff]
    %v238 = vld [vmem:[#allocation2 + $0x170] sm:$0xff]
    %v239 = vld [vmem:[#allocation2 + $0x178] sm:$0xff]
    %v240 = vld [vmem:[#allocation2 + $0x180] sm:$0xff]
    %v241 = vld [vmem:[#allocation2 + $0x188] sm:$0xff]
    %v242 = vld [vmem:[#allocation2 + $0x190] sm:$0xff]
    %v243 = vld [vmem:[#allocation2 + $0x198] sm:$0xff]
    %v244 = vld [vmem:[#allocation2 + $0x1a0] sm:$0xff]
    %v245 = vld [vmem:[#allocation2 + $0x1a8] sm:$0xff]
    %v246 = vld [vmem:[#allocation2 + $0x1b0] sm:$0xff]
    %v247 = vld [vmem:[#allocation2 + $0x1b8] sm:$0xff]
    %v248 = vld [vmem:[#allocation2 + $0x1c0] sm:$0xff]
    %v249 = vld [vmem:[#allocation2 + $0x1c8] sm:$0xff]
    %v250 = vld [vmem:[#allocation2 + $0x1d0] sm:$0xff]
    %v251 = vld [vmem:[#allocation2 + $0x1d8] sm:$0xff]
    %v252 = vld [vmem:[#allocation2 + $0x1e0] sm:$0xff]
    %v253 = vld [vmem:[#allocation2 + $0x1e8] sm:$0xff]
    %v254 = vld [vmem:[#allocation2 + $0x1f0] sm:$0xff]
    %v255 = vld [vmem:[#allocation2 + $0x1f8] sm:$0xff]
    %v256 = vld [vmem:[#allocation2 + $0x200] sm:$0xff]
    %v257 = vld [vmem:[#allocation2 + $0x208] sm:$0xff]
    %v258 = vld [vmem:[#allocation2 + $0x210] sm:$0xff]
    %v259 = vld [vmem:[#allocation2 + $0x218] sm:$0xff]
    %v260 = vld [vmem:[#allocation2 + $0x220] sm:$0xff]
    %v261 = vld [vmem:[#allocation2 + $0x228] sm:$0xff]
    %v262 = vld [vmem:[#allocation2 + $0x230] sm:$0xff]
    %v263 = vld [vmem:[#allocation2 + $0x238] sm:$0xff]
    %v264 = vld [vmem:[#allocation2 + $0x240] sm:$0xff]
    %v265 = vld [vmem:[#allocation2 + $0x248] sm:$0xff]
    %v266 = vld [vmem:[#allocation2 + $0x250] sm:$0xff]
    %v267 = vld [vmem:[#allocation2 + $0x258] sm:$0xff]
    %v268 = vld [vmem:[#allocation2 + $0x260] sm:$0xff]
    %v269 = vld [vmem:[#allocation2 + $0x268] sm:$0xff]
    %v270 = vld [vmem:[#allocation2 + $0x270] sm:$0xff]
    %v271 = vld [vmem:[#allocation2 + $0x278] sm:$0xff]
    %v272 = vld [vmem:[#allocation2 + $0x280] sm:$0xff]
    %v273 = vld [vmem:[%s1] sm:$0xf]
    %vm274 = vcmask 31744
    %v276 = vsel %vm274, %v111, 0
    %v279 = vsel %vm274, %v112, 0
    %v282 = vsel %vm274, %v113, 0
    %v285 = vsel %vm274, %v114, 0
    %v288 = vsel %vm274, %v115, 0
    %v291 = vsel %vm274, %v116, 0
    %v294 = vsel %vm274, %v117, 0
    %v297 = vsel %vm274, %v118, 0
    %v300 = vsel %vm274, %v119, 0
    %v303 = vsel %vm274, %v120, 0
    %v306 = vsel %vm274, %v121, 0
    %v309 = vsel %vm274, %v122, 0
    %v312 = vsel %vm274, %v123, 0
    %v315 = vsel %vm274, %v124, 0
    %v318 = vsel %vm274, %v125, 0
    %v321 = vsel %vm274, %v126, 0
    %v324 = vsel %vm274, %v127, 0
    %v327 = vsel %vm274, %v128, 0
    %v330 = vsel %vm274, %v129, 0
    %v333 = vsel %vm274, %v130, 0
    %v336 = vsel %vm274, %v131, 0
    %v339 = vsel %vm274, %v132, 0
    %v342 = vsel %vm274, %v133, 0
    %v345 = vsel %vm274, %v134, 0
    %v348 = vsel %vm274, %v135, 0
    %v351 = vsel %vm274, %v136, 0
    %v354 = vsel %vm274, %v137, 0
    %v357 = vsel %vm274, %v138, 0
    %v360 = vsel %vm274, %v139, 0
    %v363 = vsel %vm274, %v140, 0
    %v366 = vsel %vm274, %v141, 0
    %v369 = vsel %vm274, %v142, 0
    %v372 = vsel %vm274, %v143, 0
    %v375 = vsel %vm274, %v144, 0
    %v378 = vsel %vm274, %v145, 0
    %v381 = vsel %vm274, %v146, 0
    %v384 = vsel %vm274, %v147, 0
    %v387 = vsel %vm274, %v148, 0
    %v390 = vsel %vm274, %v149, 0
    %v393 = vsel %vm274, %v150, 0
    %v396 = vsel %vm274, %v151, 0
    %v399 = vsel %vm274, %v152, 0
    %v402 = vsel %vm274, %v153, 0
    %v405 = vsel %vm274, %v154, 0
    %v408 = vsel %vm274, %v155, 0
    %v411 = vsel %vm274, %v156, 0
    %v414 = vsel %vm274, %v157, 0
    %v417 = vsel %vm274, %v158, 0
    %v420 = vsel %vm274, %v159, 0
    %v423 = vsel %vm274, %v160, 0
    %v426 = vsel %vm274, %v161, 0
    %v429 = vsel %vm274, %v162, 0
    %v432 = vsel %vm274, %v163, 0
    %v435 = vsel %vm274, %v164, 0
    %v438 = vsel %vm274, %v165, 0
    %v441 = vsel %vm274, %v166, 0
    %v444 = vsel %vm274, %v167, 0
    %v447 = vsel %vm274, %v168, 0
    %v450 = vsel %vm274, %v169, 0
    %v453 = vsel %vm274, %v170, 0
    %v456 = vsel %vm274, %v171, 0
    %v459 = vsel %vm274, %v172, 0
    %v462 = vsel %vm274, %v173, 0
    %v465 = vsel %vm274, %v174, 0
    %v468 = vsel %vm274, %v175, 0
    %v471 = vsel %vm274, %v176, 0
    %v474 = vsel %vm274, %v177, 0
    %v477 = vsel %vm274, %v178, 0
    %v480 = vsel %vm274, %v179, 0
    %v483 = vsel %vm274, %v180, 0
    %v486 = vsel %vm274, %v181, 0
    %v489 = vsel %vm274, %v182, 0
    %v492 = vsel %vm274, %v183, 0
    %v495 = vsel %vm274, %v184, 0
    %v498 = vsel %vm274, %v185, 0
    %v501 = vsel %vm274, %v186, 0
    %v504 = vsel %vm274, %v187, 0
    %v507 = vsel %vm274, %v188, 0
    %v510 = vsel %vm274, %v189, 0
    %v513 = vsel %vm274, %v190, 0
    %v516 = vsel %vm274, %v191, 0
    %vm518 = vcmask 1043456
    %v520 = vsel %vm518, %v273, 0
    %522 = vmatprep.subr.mxu0 0.0
    %523 = vmatpush1.msra.mxu0 %v520
    %524 = vmatprep.subr.mxu0 0.0
    %525 = vmatpush1.msra.mxu0 0.0
    %526 = vmatprep.subr.mxu0 0.0
    %527 = vmatpush1.msra.mxu0 0.0
    %528 = vmatprep.subr.mxu0 0.0
    %529 = vmatpush1.msra.mxu0 0.0
    %530 = vmatprep.subr.mxu0 0.0
    %531 = vmatpush1.msra.mxu0 0.0
    %532 = vmatprep.subr.mxu0 0.0
    %533 = vmatpush1.msra.mxu0 0.0
    %534 = vmatprep.subr.mxu0 0.0
    %535 = vmatpush1.msra.mxu0 0.0
    %536 = vmatprep.subr.mxu0 0.0
    %537 = vmatpush1.msra.mxu0 0.0
    %538 = vmatprep.subr.mxu0 0.0
    %539 = vmatpush1.msra.mxu0 0.0
    %540 = vmatprep.subr.mxu0 0.0
    %541 = vmatpush1.msra.mxu0 0.0
    %542 = vmatprep.subr.mxu0 0.0
    %543 = vmatpush1.msra.mxu0 0.0
    %544 = vmatprep.subr.mxu0 0.0
    %545 = vmatpush1.msra.mxu0 0.0
    %546 = vmatprep.subr.mxu0 0.0
    %547 = vmatpush1.msra.mxu0 0.0
    %548 = vmatprep.subr.mxu0 0.0
    %549 = vmatpush1.msra.mxu0 0.0
    %550 = vmatprep.subr.mxu0 0.0
    %551 = vmatpush1.msra.mxu0 0.0
    %552 = vmatprep.subr.mxu0 0.0
    %553 = vmatpush1.msra.mxu0 0.0
    %554 = vmatprep.subr.mxu0 0.0
    %555 = vmatpush1.msra.mxu0 0.0
    %556 = vmatprep.subr.mxu0 0.0
    %557 = vmatpush1.msra.mxu0 0.0
    %558 = vmatprep.subr.mxu0 0.0
    %559 = vmatpush1.msra.mxu0 0.0
    %560 = vmatprep.subr.mxu0 0.0
    %561 = vmatpush1.msra.mxu0 0.0
    %562 = vmatprep.subr.mxu0 0.0
    %563 = vmatpush1.msra.mxu0 0.0
    %564 = vmatprep.subr.mxu0 0.0
    %565 = vmatpush1.msra.mxu0 0.0
    %566 = vmatprep.subr.mxu0 0.0
    %567 = vmatpush1.msra.mxu0 0.0
    %568 = vmatprep.subr.mxu0 0.0
    %569 = vmatpush1.msra.mxu0 0.0
    %570 = vmatprep.subr.mxu0 0.0
    %571 = vmatpush1.msra.mxu0 0.0
    %572 = vmatprep.subr.mxu0 0.0
    %573 = vmatpush1.msra.mxu0 0.0
    %574 = vmatprep.subr.mxu0 0.0
    %575 = vmatpush1.msra.mxu0 0.0
    %576 = vmatprep.subr.mxu0 0.0
    %577 = vmatpush1.msra.mxu0 0.0
    %578 = vmatprep.subr.mxu0 0.0
    %579 = vmatpush1.msra.mxu0 0.0
    %580 = vmatprep.subr.mxu0 0.0
    %581 = vmatpush1.msra.mxu0 0.0
    %582 = vmatprep.subr.mxu0 0.0
    %583 = vmatpush1.msra.mxu0 0.0
    %584 = vmatprep.subr.mxu0 0.0
    %585 = vmatpush1.msra.mxu0 0.0
    %586 = vmatprep.mubr.f32.mxu0 0.0
    %587 = vmatmul.mubr.f32.gmra.mrb[0].mxu0 %v276
    %v588 = vpop.f32.mrb[0].mxu0
    %v589 = vadd.f32 0.0, %v588
    %v590 = vpop.f32.mrb[0].mxu0
    %591 = vmatprep.mubr.f32.mxu0 0.0
    %592 = vmatmul.mubr.f32.gmra.mrb[0].mxu0 %v279
    %v593 = vpop.f32.mrb[0].mxu0
    %v594 = vadd.f32 0.0, %v593
    %v595 = vpop.f32.mrb[0].mxu0
    %596 = vmatprep.mubr.f32.mxu0 0.0
    %597 = vmatmul.mubr.f32.gmra.mrb[0].mxu0 %v282
    %v598 = vpop.f32.mrb[0].mxu0
    %v599 = vadd.f32 0.0, %v598
    %v600 = vpop.f32.mrb[0].mxu0
    %601 = vmatprep.mubr.f32.mxu0 0.0
    %602 = vmatmul.mubr.f32.gmra.mrb[0].mxu0 %v285
    %v603 = vpop.f32.mrb[0].mxu0
    %v604 = vadd.f32 0.0, %v603
    %v605 = vpop.f32.mrb[0].mxu0
    %606 = vmatprep.mubr.f32.mxu0 0.0
    %607 = vmatmul.mubr.f32.gmra.mrb[0].mxu0 %v288
    %v608 = vpop.f32.mrb[0].mxu0
    %v609 = vadd.f32 0.0, %v608
    %v610 = vpop.f32.mrb[0].mxu0
    %611 = vmatprep.mubr.f32.mxu0 0.0
    %612 = vmatmul.mubr.f32.gmra.mrb[0].mxu0 %v291
    %v613 = vpop.f32.mrb[0].mxu0
    %v614 = vadd.f32 0.0, %v613
    %v615 = vpop.f32.mrb[0].mxu0
    %616 = vmatprep.mubr.f32.mxu0 0.0
    %617 = vmatmul.mubr.f32.gmra.mrb[0].mxu0 %v294
    %v618 = vpop.f32.mrb[0].mxu0
    %v619 = vadd.f32 0.0, %v618
    %v620 = vpop.f32.mrb[0].mxu0
    %621 = vmatprep.mubr.f32.mxu0 0.0
    %622 = vmatmul.mubr.f32.gmra.mrb[0].mxu0 %v297
    %v623 = vpop.f32.mrb[0].mxu0
    %v624 = vadd.f32 0.0, %v623
    %v625 = vpop.f32.mrb[0].mxu0
    %626 = vmatprep.mubr.f32.mxu0 0.0
    %627 = vmatmul.mubr.f32.gmra.mrb[0].mxu0 %v300
    %v628 = vpop.f32.mrb[0].mxu0
    %v629 = vadd.f32 0.0, %v628
    %v630 = vpop.f32.mrb[0].mxu0
    %631 = vmatprep.mubr.f32.mxu0 0.0
    %632 = vmatmul.mubr.f32.gmra.mrb[0].mxu0 %v303
    %v633 = vpop.f32.mrb[0].mxu0
    %v634 = vadd.f32 0.0, %v633
    %v635 = vpop.f32.mrb[0].mxu0
    %636 = vmatprep.mubr.f32.mxu0 0.0
    %637 = vmatmul.mubr.f32.gmra.mrb[0].mxu0 %v306
    %v638 = vpop.f32.mrb[0].mxu0
    %v639 = vadd.f32 0.0, %v638
    %v640 = vpop.f32.mrb[0].mxu0
    %641 = vmatprep.mubr.f32.mxu0 0.0
    %642 = vmatmul.mubr.f32.gmra.mrb[0].mxu0 %v309
    %v643 = vpop.f32.mrb[0].mxu0
    %v644 = vadd.f32 0.0, %v643
    %v645 = vpop.f32.mrb[0].mxu0
    %646 = vmatprep.mubr.f32.mxu0 0.0
    %647 = vmatmul.mubr.f32.gmra.mrb[0].mxu0 %v312
    %v648 = vpop.f32.mrb[0].mxu0
    %v649 = vadd.f32 0.0, %v648
    %v650 = vpop.f32.mrb[0].mxu0
    %651 = vmatprep.mubr.f32.mxu0 0.0
    %652 = vmatmul.mubr.f32.gmra.mrb[0].mxu0 %v315
    %v653 = vpop.f32.mrb[0].mxu0
    %v654 = vadd.f32 0.0, %v653
    %v655 = vpop.f32.mrb[0].mxu0
    %656 = vmatprep.mubr.f32.mxu0 0.0
    %657 = vmatmul.mubr.f32.gmra.mrb[0].mxu0 %v318
    %v658 = vpop.f32.mrb[0].mxu0
    %v659 = vadd.f32 0.0, %v658
    %v660 = vpop.f32.mrb[0].mxu0
    %661 = vmatprep.mubr.f32.mxu0 0.0
    %662 = vmatmul.mubr.f32.gmra.mrb[0].mxu0 %v321
    %v663 = vpop.f32.mrb[0].mxu0
    %v664 = vadd.f32 0.0, %v663
    %v665 = vpop.f32.mrb[0].mxu0
    %666 = vmatprep.mubr.f32.mxu0 0.0
    %667 = vmatmul.mubr.f32.gmra.mrb[0].mxu0 %v324
    %v668 = vpop.f32.mrb[0].mxu0
    %v669 = vadd.f32 0.0, %v668
    %v670 = vpop.f32.mrb[0].mxu0
    %671 = vmatprep.mubr.f32.mxu0 0.0
    %672 = vmatmul.mubr.f32.gmra.mrb[0].mxu0 %v327
    %v673 = vpop.f32.mrb[0].mxu0
    %v674 = vadd.f32 0.0, %v673
    %v675 = vpop.f32.mrb[0].mxu0
    %676 = vmatprep.mubr.f32.mxu0 0.0
    %677 = vmatmul.mubr.f32.gmra.mrb[0].mxu0 %v330
    %v678 = vpop.f32.mrb[0].mxu0
    %v679 = vadd.f32 0.0, %v678
    %v680 = vpop.f32.mrb[0].mxu0
    %681 = vmatprep.mubr.f32.mxu0 0.0
    %682 = vmatmul.mubr.f32.gmra.mrb[0].mxu0 %v333
    %v683 = vpop.f32.mrb[0].mxu0
    %v684 = vadd.f32 0.0, %v683
    %v685 = vpop.f32.mrb[0].mxu0
    %686 = vmatprep.mubr.f32.mxu0 0.0
    %687 = vmatmul.mubr.f32.gmra.mrb[0].mxu0 %v336
    %v688 = vpop.f32.mrb[0].mxu0
    %v689 = vadd.f32 0.0, %v688
    %v690 = vpop.f32.mrb[0].mxu0
    %691 = vmatprep.mubr.f32.mxu0 0.0
    %692 = vmatmul.mubr.f32.gmra.mrb[0].mxu0 %v339
    %v693 = vpop.f32.mrb[0].mxu0
    %v694 = vadd.f32 0.0, %v693
    %v695 = vpop.f32.mrb[0].mxu0
    %696 = vmatprep.mubr.f32.mxu0 0.0
    %697 = vmatmul.mubr.f32.gmra.mrb[0].mxu0 %v342
    %v698 = vpop.f32.mrb[0].mxu0
    %v699 = vadd.f32 0.0, %v698
    %v700 = vpop.f32.mrb[0].mxu0
    %701 = vmatprep.mubr.f32.mxu0 0.0
    %702 = vmatmul.mubr.f32.gmra.mrb[0].mxu0 %v345
    %v703 = vpop.f32.mrb[0].mxu0
    %v704 = vadd.f32 0.0, %v703
    %v705 = vpop.f32.mrb[0].mxu0
    %706 = vmatprep.mubr.f32.mxu0 0.0
    %707 = vmatmul.mubr.f32.gmra.mrb[0].mxu0 %v348
    %v708 = vpop.f32.mrb[0].mxu0
    %v709 = vadd.f32 0.0, %v708
    %v710 = vpop.f32.mrb[0].mxu0
    %711 = vmatprep.mubr.f32.mxu0 0.0
    %712 = vmatmul.mubr.f32.gmra.mrb[0].mxu0 %v351
    %v713 = vpop.f32.mrb[0].mxu0
    %v714 = vadd.f32 0.0, %v713
    %v715 = vpop.f32.mrb[0].mxu0
    %716 = vmatprep.mubr.f32.mxu0 0.0
    %717 = vmatmul.mubr.f32.gmra.mrb[0].mxu0 %v354
    %v718 = vpop.f32.mrb[0].mxu0
    %v719 = vadd.f32 0.0, %v718
    %v720 = vpop.f32.mrb[0].mxu0
    %721 = vmatprep.mubr.f32.mxu0 0.0
    %722 = vmatmul.mubr.f32.gmra.mrb[0].mxu0 %v357
    %v723 = vpop.f32.mrb[0].mxu0
    %v724 = vadd.f32 0.0, %v723
    %v725 = vpop.f32.mrb[0].mxu0
    %726 = vmatprep.mubr.f32.mxu0 0.0
    %727 = vmatmul.mubr.f32.gmra.mrb[0].mxu0 %v360
    %v728 = vpop.f32.mrb[0].mxu0
    %v729 = vadd.f32 0.0, %v728
    %v730 = vpop.f32.mrb[0].mxu0
    %731 = vmatprep.mubr.f32.mxu0 0.0
    %732 = vmatmul.mubr.f32.gmra.mrb[0].mxu0 %v363
    %v733 = vpop.f32.mrb[0].mxu0
    %v734 = vadd.f32 0.0, %v733
    %v735 = vpop.f32.mrb[0].mxu0
    %736 = vmatprep.mubr.f32.mxu0 0.0
    %737 = vmatmul.mubr.f32.gmra.mrb[0].mxu0 %v366
    %v738 = vpop.f32.mrb[0].mxu0
    %v739 = vadd.f32 0.0, %v738
    %v740 = vpop.f32.mrb[0].mxu0
    %741 = vmatprep.mubr.f32.mxu0 0.0
    %742 = vmatmul.mubr.f32.gmra.mrb[0].mxu0 %v369
    %v743 = vpop.f32.mrb[0].mxu0
    %v744 = vadd.f32 0.0, %v743
    %v745 = vpop.f32.mrb[0].mxu0
    %746 = vmatprep.mubr.f32.mxu0 0.0
    %747 = vmatmul.mubr.f32.gmra.mrb[0].mxu0 %v372
    %v748 = vpop.f32.mrb[0].mxu0
    %v749 = vadd.f32 0.0, %v748
    %v750 = vpop.f32.mrb[0].mxu0
    %751 = vmatprep.mubr.f32.mxu0 0.0
    %752 = vmatmul.mubr.f32.gmra.mrb[0].mxu0 %v375
    %v753 = vpop.f32.mrb[0].mxu0
    %v754 = vadd.f32 0.0, %v753
    %v755 = vpop.f32.mrb[0].mxu0
    %756 = vmatprep.mubr.f32.mxu0 0.0
    %757 = vmatmul.mubr.f32.gmra.mrb[0].mxu0 %v378
    %v758 = vpop.f32.mrb[0].mxu0
    %v759 = vadd.f32 0.0, %v758
    %v760 = vpop.f32.mrb[0].mxu0
    %761 = vmatprep.mubr.f32.mxu0 0.0
    %762 = vmatmul.mubr.f32.gmra.mrb[0].mxu0 %v381
    %v763 = vpop.f32.mrb[0].mxu0
    %v764 = vadd.f32 0.0, %v763
    %v765 = vpop.f32.mrb[0].mxu0
    %766 = vmatprep.mubr.f32.mxu0 0.0
    %767 = vmatmul.mubr.f32.gmra.mrb[0].mxu0 %v384
    %v768 = vpop.f32.mrb[0].mxu0
    %v769 = vadd.f32 0.0, %v768
    %v770 = vpop.f32.mrb[0].mxu0
    %771 = vmatprep.mubr.f32.mxu0 0.0
    %772 = vmatmul.mubr.f32.gmra.mrb[0].mxu0 %v387
    %v773 = vpop.f32.mrb[0].mxu0
    %v774 = vadd.f32 0.0, %v773
    %v775 = vpop.f32.mrb[0].mxu0
    %776 = vmatprep.mubr.f32.mxu0 0.0
    %777 = vmatmul.mubr.f32.gmra.mrb[0].mxu0 %v390
    %v778 = vpop.f32.mrb[0].mxu0
    %v779 = vadd.f32 0.0, %v778
    %v780 = vpop.f32.mrb[0].mxu0
    %781 = vmatprep.mubr.f32.mxu0 0.0
    %782 = vmatmul.mubr.f32.gmra.mrb[0].mxu0 %v393
    %v783 = vpop.f32.mrb[0].mxu0
    %v784 = vadd.f32 0.0, %v783
    %v785 = vpop.f32.mrb[0].mxu0
    %786 = vmatprep.mubr.f32.mxu0 0.0
    %787 = vmatmul.mubr.f32.gmra.mrb[0].mxu0 %v396
    %v788 = vpop.f32.mrb[0].mxu0
    %v789 = vadd.f32 0.0, %v788
    %v790 = vpop.f32.mrb[0].mxu0
    %791 = vmatprep.mubr.f32.mxu0 0.0
    %792 = vmatmul.mubr.f32.gmra.mrb[0].mxu0 %v399
    %v793 = vpop.f32.mrb[0].mxu0
    %v794 = vadd.f32 0.0, %v793
    %v795 = vpop.f32.mrb[0].mxu0
    %796 = vmatprep.mubr.f32.mxu0 0.0
    %797 = vmatmul.mubr.f32.gmra.mrb[0].mxu0 %v402
    %v798 = vpop.f32.mrb[0].mxu0
    %v799 = vadd.f32 0.0, %v798
    %v800 = vpop.f32.mrb[0].mxu0
    %801 = vmatprep.mubr.f32.mxu0 0.0
    %802 = vmatmul.mubr.f32.gmra.mrb[0].mxu0 %v405
    %v803 = vpop.f32.mrb[0].mxu0
    %v804 = vadd.f32 0.0, %v803
    %v805 = vpop.f32.mrb[0].mxu0
    %806 = vmatprep.mubr.f32.mxu0 0.0
    %807 = vmatmul.mubr.f32.gmra.mrb[0].mxu0 %v408
    %v808 = vpop.f32.mrb[0].mxu0
    %v809 = vadd.f32 0.0, %v808
    %v810 = vpop.f32.mrb[0].mxu0
    %811 = vmatprep.mubr.f32.mxu0 0.0
    %812 = vmatmul.mubr.f32.gmra.mrb[0].mxu0 %v411
    %v813 = vpop.f32.mrb[0].mxu0
    %v814 = vadd.f32 0.0, %v813
    %v815 = vpop.f32.mrb[0].mxu0
    %816 = vmatprep.mubr.f32.mxu0 0.0
    %817 = vmatmul.mubr.f32.gmra.mrb[0].mxu0 %v414
    %v818 = vpop.f32.mrb[0].mxu0
    %v819 = vadd.f32 0.0, %v818
    %v820 = vpop.f32.mrb[0].mxu0
    %821 = vmatprep.mubr.f32.mxu0 0.0
    %822 = vmatmul.mubr.f32.gmra.mrb[0].mxu0 %v417
    %v823 = vpop.f32.mrb[0].mxu0
    %v824 = vadd.f32 0.0, %v823
    %v825 = vpop.f32.mrb[0].mxu0
    %826 = vmatprep.mubr.f32.mxu0 0.0
    %827 = vmatmul.mubr.f32.gmra.mrb[0].mxu0 %v420
    %v828 = vpop.f32.mrb[0].mxu0
    %v829 = vadd.f32 0.0, %v828
    %v830 = vpop.f32.mrb[0].mxu0
    %831 = vmatprep.mubr.f32.mxu0 0.0
    %832 = vmatmul.mubr.f32.gmra.mrb[0].mxu0 %v423
    %v833 = vpop.f32.mrb[0].mxu0
    %v834 = vadd.f32 0.0, %v833
    %v835 = vpop.f32.mrb[0].mxu0
    %836 = vmatprep.mubr.f32.mxu0 0.0
    %837 = vmatmul.mubr.f32.gmra.mrb[0].mxu0 %v426
    %v838 = vpop.f32.mrb[0].mxu0
    %v839 = vadd.f32 0.0, %v838
    %v840 = vpop.f32.mrb[0].mxu0
    %841 = vmatprep.mubr.f32.mxu0 0.0
    %842 = vmatmul.mubr.f32.gmra.mrb[0].mxu0 %v429
    %v843 = vpop.f32.mrb[0].mxu0
    %v844 = vadd.f32 0.0, %v843
    %v845 = vpop.f32.mrb[0].mxu0
    %846 = vmatprep.mubr.f32.mxu0 0.0
    %847 = vmatmul.mubr.f32.gmra.mrb[0].mxu0 %v432
    %v848 = vpop.f32.mrb[0].mxu0
    %v849 = vadd.f32 0.0, %v848
    %v850 = vpop.f32.mrb[0].mxu0
    %851 = vmatprep.mubr.f32.mxu0 0.0
    %852 = vmatmul.mubr.f32.gmra.mrb[0].mxu0 %v435
    %v853 = vpop.f32.mrb[0].mxu0
    %v854 = vadd.f32 0.0, %v853
    %v855 = vpop.f32.mrb[0].mxu0
    %856 = vmatprep.mubr.f32.mxu0 0.0
    %857 = vmatmul.mubr.f32.gmra.mrb[0].mxu0 %v438
    %v858 = vpop.f32.mrb[0].mxu0
    %v859 = vadd.f32 0.0, %v858
    %v860 = vpop.f32.mrb[0].mxu0
    %861 = vmatprep.mubr.f32.mxu0 0.0
    %862 = vmatmul.mubr.f32.gmra.mrb[0].mxu0 %v441
    %v863 = vpop.f32.mrb[0].mxu0
    %v864 = vadd.f32 0.0, %v863
    %v865 = vpop.f32.mrb[0].mxu0
    %866 = vmatprep.mubr.f32.mxu0 0.0
    %867 = vmatmul.mubr.f32.gmra.mrb[0].mxu0 %v444
    %v868 = vpop.f32.mrb[0].mxu0
    %v869 = vadd.f32 0.0, %v868
    %v870 = vpop.f32.mrb[0].mxu0
    %871 = vmatprep.mubr.f32.mxu0 0.0
    %872 = vmatmul.mubr.f32.gmra.mrb[0].mxu0 %v447
    %v873 = vpop.f32.mrb[0].mxu0
    %v874 = vadd.f32 0.0, %v873
    %v875 = vpop.f32.mrb[0].mxu0
    %876 = vmatprep.mubr.f32.mxu0 0.0
    %877 = vmatmul.mubr.f32.gmra.mrb[0].mxu0 %v450
    %v878 = vpop.f32.mrb[0].mxu0
    %v879 = vadd.f32 0.0, %v878
    %v880 = vpop.f32.mrb[0].mxu0
    %881 = vmatprep.mubr.f32.mxu0 0.0
    %882 = vmatmul.mubr.f32.gmra.mrb[0].mxu0 %v453
    %v883 = vpop.f32.mrb[0].mxu0
    %v884 = vadd.f32 0.0, %v883
    %v885 = vpop.f32.mrb[0].mxu0
    %886 = vmatprep.mubr.f32.mxu0 0.0
    %887 = vmatmul.mubr.f32.gmra.mrb[0].mxu0 %v456
    %v888 = vpop.f32.mrb[0].mxu0
    %v889 = vadd.f32 0.0, %v888
    %v890 = vpop.f32.mrb[0].mxu0
    %891 = vmatprep.mubr.f32.mxu0 0.0
    %892 = vmatmul.mubr.f32.gmra.mrb[0].mxu0 %v459
    %v893 = vpop.f32.mrb[0].mxu0
    %v894 = vadd.f32 0.0, %v893
    %v895 = vpop.f32.mrb[0].mxu0
    %896 = vmatprep.mubr.f32.mxu0 0.0
    %897 = vmatmul.mubr.f32.gmra.mrb[0].mxu0 %v462
    %v898 = vpop.f32.mrb[0].mxu0
    %v899 = vadd.f32 0.0, %v898
    %v900 = vpop.f32.mrb[0].mxu0
    %901 = vmatprep.mubr.f32.mxu0 0.0
    %902 = vmatmul.mubr.f32.gmra.mrb[0].mxu0 %v465
    %v903 = vpop.f32.mrb[0].mxu0
    %v904 = vadd.f32 0.0, %v903
    %v905 = vpop.f32.mrb[0].mxu0
    %906 = vmatprep.mubr.f32.mxu0 0.0
    %907 = vmatmul.mubr.f32.gmra.mrb[0].mxu0 %v468
    %v908 = vpop.f32.mrb[0].mxu0
    %v909 = vadd.f32 0.0, %v908
    %v910 = vpop.f32.mrb[0].mxu0
    %911 = vmatprep.mubr.f32.mxu0 0.0
    %912 = vmatmul.mubr.f32.gmra.mrb[0].mxu0 %v471
    %v913 = vpop.f32.mrb[0].mxu0
    %v914 = vadd.f32 0.0, %v913
    %v915 = vpop.f32.mrb[0].mxu0
    %916 = vmatprep.mubr.f32.mxu0 0.0
    %917 = vmatmul.mubr.f32.gmra.mrb[0].mxu0 %v474
    %v918 = vpop.f32.mrb[0].mxu0
    %v919 = vadd.f32 0.0, %v918
    %v920 = vpop.f32.mrb[0].mxu0
    %921 = vmatprep.mubr.f32.mxu0 0.0
    %922 = vmatmul.mubr.f32.gmra.mrb[0].mxu0 %v477
    %v923 = vpop.f32.mrb[0].mxu0
    %v924 = vadd.f32 0.0, %v923
    %v925 = vpop.f32.mrb[0].mxu0
    %926 = vmatprep.mubr.f32.mxu0 0.0
    %927 = vmatmul.mubr.f32.gmra.mrb[0].mxu0 %v480
    %v928 = vpop.f32.mrb[0].mxu0
    %v929 = vadd.f32 0.0, %v928
    %v930 = vpop.f32.mrb[0].mxu0
    %931 = vmatprep.mubr.f32.mxu0 0.0
    %932 = vmatmul.mubr.f32.gmra.mrb[0].mxu0 %v483
    %v933 = vpop.f32.mrb[0].mxu0
    %v934 = vadd.f32 0.0, %v933
    %v935 = vpop.f32.mrb[0].mxu0
    %936 = vmatprep.mubr.f32.mxu0 0.0
    %937 = vmatmul.mubr.f32.gmra.mrb[0].mxu0 %v486
    %v938 = vpop.f32.mrb[0].mxu0
    %v939 = vadd.f32 0.0, %v938
    %v940 = vpop.f32.mrb[0].mxu0
    %941 = vmatprep.mubr.f32.mxu0 0.0
    %942 = vmatmul.mubr.f32.gmra.mrb[0].mxu0 %v489
    %v943 = vpop.f32.mrb[0].mxu0
    %v944 = vadd.f32 0.0, %v943
    %v945 = vpop.f32.mrb[0].mxu0
    %946 = vmatprep.mubr.f32.mxu0 0.0
    %947 = vmatmul.mubr.f32.gmra.mrb[0].mxu0 %v492
    %v948 = vpop.f32.mrb[0].mxu0
    %v949 = vadd.f32 0.0, %v948
    %v950 = vpop.f32.mrb[0].mxu0
    %951 = vmatprep.mubr.f32.mxu0 0.0
    %952 = vmatmul.mubr.f32.gmra.mrb[0].mxu0 %v495
    %v953 = vpop.f32.mrb[0].mxu0
    %v954 = vadd.f32 0.0, %v953
    %v955 = vpop.f32.mrb[0].mxu0
    %956 = vmatprep.mubr.f32.mxu0 0.0
    %957 = vmatmul.mubr.f32.gmra.mrb[0].mxu0 %v498
    %v958 = vpop.f32.mrb[0].mxu0
    %v959 = vadd.f32 0.0, %v958
    %v960 = vpop.f32.mrb[0].mxu0
    %961 = vmatprep.mubr.f32.mxu0 0.0
    %962 = vmatmul.mubr.f32.gmra.mrb[0].mxu0 %v501
    %v963 = vpop.f32.mrb[0].mxu0
    %v964 = vadd.f32 0.0, %v963
    %v965 = vpop.f32.mrb[0].mxu0
    %966 = vmatprep.mubr.f32.mxu0 0.0
    %967 = vmatmul.mubr.f32.gmra.mrb[0].mxu0 %v504
    %v968 = vpop.f32.mrb[0].mxu0
    %v969 = vadd.f32 0.0, %v968
    %v970 = vpop.f32.mrb[0].mxu0
    %971 = vmatprep.mubr.f32.mxu0 0.0
    %972 = vmatmul.mubr.f32.gmra.mrb[0].mxu0 %v507
    %v973 = vpop.f32.mrb[0].mxu0
    %v974 = vadd.f32 0.0, %v973
    %v975 = vpop.f32.mrb[0].mxu0
    %976 = vmatprep.mubr.f32.mxu0 0.0
    %977 = vmatmul.mubr.f32.gmra.mrb[0].mxu0 %v510
    %v978 = vpop.f32.mrb[0].mxu0
    %v979 = vadd.f32 0.0, %v978
    %v980 = vpop.f32.mrb[0].mxu0
    %981 = vmatprep.mubr.f32.mxu0 0.0
    %982 = vmatmul.mubr.f32.gmra.mrb[0].mxu0 %v513
    %v983 = vpop.f32.mrb[0].mxu0
    %v984 = vadd.f32 0.0, %v983
    %v985 = vpop.f32.mrb[0].mxu0
    %986 = vmatprep.mubr.f32.mxu0 0.0
    %987 = vmatmul.mubr.f32.gmra.mrb[0].mxu0 %v516
    %v988 = vpop.f32.mrb[0].mxu0
    %v989 = vadd.f32 0.0, %v988
    %v990 = vpop.f32.mrb[0].mxu0
    %991 = vdwg.mxu0
    %v992 = vadd.f32 %v192, %v589
    %v993 = vadd.f32 %v193, %v594
    %v994 = vadd.f32 %v194, %v599
    %v995 = vadd.f32 %v195, %v604
    %v996 = vadd.f32 %v196, %v609
    %v997 = vadd.f32 %v197, %v614
    %v998 = vadd.f32 %v198, %v619
    %v999 = vadd.f32 %v199, %v624
    %v1000 = vadd.f32 %v200, %v629
    %v1001 = vadd.f32 %v201, %v634
    %v1002 = vadd.f32 %v202, %v639
    %v1003 = vadd.f32 %v203, %v644
    %v1004 = vadd.f32 %v204, %v649
    %v1005 = vadd.f32 %v205, %v654
    %v1006 = vadd.f32 %v206, %v659
    %v1007 = vadd.f32 %v207, %v664
    %v1008 = vadd.f32 %v208, %v669
    %v1009 = vadd.f32 %v209, %v674
    %v1010 = vadd.f32 %v210, %v679
    %v1011 = vadd.f32 %v211, %v684
    %v1012 = vadd.f32 %v212, %v689
    %v1013 = vadd.f32 %v213, %v694
    %v1014 = vadd.f32 %v214, %v699
    %v1015 = vadd.f32 %v215, %v704
    %v1016 = vadd.f32 %v216, %v709
    %v1017 = vadd.f32 %v217, %v714
    %v1018 = vadd.f32 %v218, %v719
    %v1019 = vadd.f32 %v219, %v724
    %v1020 = vadd.f32 %v220, %v729
    %v1021 = vadd.f32 %v221, %v734
    %v1022 = vadd.f32 %v222, %v739
    %v1023 = vadd.f32 %v223, %v744
    %v1024 = vadd.f32 %v224, %v749
    %v1025 = vadd.f32 %v225, %v754
    %v1026 = vadd.f32 %v226, %v759
    %v1027 = vadd.f32 %v227, %v764
    %v1028 = vadd.f32 %v228, %v769
    %v1029 = vadd.f32 %v229, %v774
    %v1030 = vadd.f32 %v230, %v779
    %v1031 = vadd.f32 %v231, %v784
    %v1032 = vadd.f32 %v232, %v789
    %v1033 = vadd.f32 %v233, %v794
    %v1034 = vadd.f32 %v234, %v799
    %v1035 = vadd.f32 %v235, %v804
    %v1036 = vadd.f32 %v236, %v809
    %v1037 = vadd.f32 %v237, %v814
    %v1038 = vadd.f32 %v238, %v819
    %v1039 = vadd.f32 %v239, %v824
    %v1040 = vadd.f32 %v240, %v829
    %v1041 = vadd.f32 %v241, %v834
    %v1042 = vadd.f32 %v242, %v839
    %v1043 = vadd.f32 %v243, %v844
    %v1044 = vadd.f32 %v244, %v849
    %v1045 = vadd.f32 %v245, %v854
    %v1046 = vadd.f32 %v246, %v859
    %v1047 = vadd.f32 %v247, %v864
    %v1048 = vadd.f32 %v248, %v869
    %v1049 = vadd.f32 %v249, %v874
    %v1050 = vadd.f32 %v250, %v879
    %v1051 = vadd.f32 %v251, %v884
    %v1052 = vadd.f32 %v252, %v889
    %v1053 = vadd.f32 %v253, %v894
    %v1054 = vadd.f32 %v254, %v899
    %v1055 = vadd.f32 %v255, %v904
    %v1056 = vadd.f32 %v256, %v909
    %v1057 = vadd.f32 %v257, %v914
    %v1058 = vadd.f32 %v258, %v919
    %v1059 = vadd.f32 %v259, %v924
    %v1060 = vadd.f32 %v260, %v929
    %v1061 = vadd.f32 %v261, %v934
    %v1062 = vadd.f32 %v262, %v939
    %v1063 = vadd.f32 %v263, %v944
    %v1064 = vadd.f32 %v264, %v949
    %v1065 = vadd.f32 %v265, %v954
    %v1066 = vadd.f32 %v266, %v959
    %v1067 = vadd.f32 %v267, %v964
    %v1068 = vadd.f32 %v268, %v969
    %v1069 = vadd.f32 %v269, %v974
    %v1070 = vadd.f32 %v270, %v979
    %v1071 = vadd.f32 %v271, %v984
    %v1072 = vadd.f32 %v272, %v989
    %1073 = vst [vmem:[#allocation2] sm:$0xff] %v992
    %1074 = vst [vmem:[#allocation2 + $0x8] sm:$0xff] %v993
    %1075 = vst [vmem:[#allocation2 + $0x10] sm:$0xff] %v994
    %1076 = vst [vmem:[#allocation2 + $0x18] sm:$0xff] %v995
    %1077 = vst [vmem:[#allocation2 + $0x20] sm:$0xff] %v996
    %1078 = vst [vmem:[#allocation2 + $0x28] sm:$0xff] %v997
    %1079 = vst [vmem:[#allocation2 + $0x30] sm:$0xff] %v998
    %1080 = vst [vmem:[#allocation2 + $0x38] sm:$0xff] %v999
    %1081 = vst [vmem:[#allocation2 + $0x40] sm:$0xff] %v1000
    %1082 = vst [vmem:[#allocation2 + $0x48] sm:$0xff] %v1001
    %1083 = vst [vmem:[#allocation2 + $0x50] sm:$0xff] %v1002
    %1084 = vst [vmem:[#allocation2 + $0x58] sm:$0xff] %v1003
    %1085 = vst [vmem:[#allocation2 + $0x60] sm:$0xff] %v1004
    %1086 = vst [vmem:[#allocation2 + $0x68] sm:$0xff] %v1005
    %1087 = vst [vmem:[#allocation2 + $0x70] sm:$0xff] %v1006
    %1088 = vst [vmem:[#allocation2 + $0x78] sm:$0xff] %v1007
    %1089 = vst [vmem:[#allocation2 + $0x80] sm:$0xff] %v1008
    %1090 = vst [vmem:[#allocation2 + $0x88] sm:$0xff] %v1009
    %1091 = vst [vmem:[#allocation2 + $0x90] sm:$0xff] %v1010
    %1092 = vst [vmem:[#allocation2 + $0x98] sm:$0xff] %v1011
    %1093 = vst [vmem:[#allocation2 + $0xa0] sm:$0xff] %v1012
    %1094 = vst [vmem:[#allocation2 + $0xa8] sm:$0xff] %v1013
    %1095 = vst [vmem:[#allocation2 + $0xb0] sm:$0xff] %v1014
    %1096 = vst [vmem:[#allocation2 + $0xb8] sm:$0xff] %v1015
    %1097 = vst [vmem:[#allocation2 + $0xc0] sm:$0xff] %v1016
    %1098 = vst [vmem:[#allocation2 + $0xc8] sm:$0xff] %v1017
    %1099 = vst [vmem:[#allocation2 + $0xd0] sm:$0xff] %v1018
    %1100 = vst [vmem:[#allocation2 + $0xd8] sm:$0xff] %v1019
    %1101 = vst [vmem:[#allocation2 + $0xe0] sm:$0xff] %v1020
    %1102 = vst [vmem:[#allocation2 + $0xe8] sm:$0xff] %v1021
    %1103 = vst [vmem:[#allocation2 + $0xf0] sm:$0xff] %v1022
    %1104 = vst [vmem:[#allocation2 + $0xf8] sm:$0xff] %v1023
    %1105 = vst [vmem:[#allocation2 + $0x100] sm:$0xff] %v1024
    %1106 = vst [vmem:[#allocation2 + $0x108] sm:$0xff] %v1025
    %1107 = vst [vmem:[#allocation2 + $0x110] sm:$0xff] %v1026
    %1108 = vst [vmem:[#allocation2 + $0x118] sm:$0xff] %v1027
    %1109 = vst [vmem:[#allocation2 + $0x120] sm:$0xff] %v1028
    %1110 = vst [vmem:[#allocation2 + $0x128] sm:$0xff] %v1029
    %1111 = vst [vmem:[#allocation2 + $0x130] sm:$0xff] %v1030
    %1112 = vst [vmem:[#allocation2 + $0x138] sm:$0xff] %v1031
    %1113 = vst [vmem:[#allocation2 + $0x140] sm:$0xff] %v1032
    %1114 = vst [vmem:[#allocation2 + $0x148] sm:$0xff] %v1033
    %1115 = vst [vmem:[#allocation2 + $0x150] sm:$0xff] %v1034
    %1116 = vst [vmem:[#allocation2 + $0x158] sm:$0xff] %v1035
    %1117 = vst [vmem:[#allocation2 + $0x160] sm:$0xff] %v1036
    %1118 = vst [vmem:[#allocation2 + $0x168] sm:$0xff] %v1037
    %1119 = vst [vmem:[#allocation2 + $0x170] sm:$0xff] %v1038
    %1120 = vst [vmem:[#allocation2 + $0x178] sm:$0xff] %v1039
    %1121 = vst [vmem:[#allocation2 + $0x180] sm:$0xff] %v1040
    %1122 = vst [vmem:[#allocation2 + $0x188] sm:$0xff] %v1041
    %1123 = vst [vmem:[#allocation2 + $0x190] sm:$0xff] %v1042
    %1124 = vst [vmem:[#allocation2 + $0x198] sm:$0xff] %v1043
    %1125 = vst [vmem:[#allocation2 + $0x1a0] sm:$0xff] %v1044
    %1126 = vst [vmem:[#allocation2 + $0x1a8] sm:$0xff] %v1045
    %1127 = vst [vmem:[#allocation2 + $0x1b0] sm:$0xff] %v1046
    %1128 = vst [vmem:[#allocation2 + $0x1b8] sm:$0xff] %v1047
    %1129 = vst [vmem:[#allocation2 + $0x1c0] sm:$0xff] %v1048
    %1130 = vst [vmem:[#allocation2 + $0x1c8] sm:$0xff] %v1049
    %1131 = vst [vmem:[#allocation2 + $0x1d0] sm:$0xff] %v1050
    %1132 = vst [vmem:[#allocation2 + $0x1d8] sm:$0xff] %v1051
    %1133 = vst [vmem:[#allocation2 + $0x1e0] sm:$0xff] %v1052
    %1134 = vst [vmem:[#allocation2 + $0x1e8] sm:$0xff] %v1053
    %1135 = vst [vmem:[#allocation2 + $0x1f0] sm:$0xff] %v1054
    %1136 = vst [vmem:[#allocation2 + $0x1f8] sm:$0xff] %v1055
    %1137 = vst [vmem:[#allocation2 + $0x200] sm:$0xff] %v1056
    %1138 = vst [vmem:[#allocation2 + $0x208] sm:$0xff] %v1057
    %1139 = vst [vmem:[#allocation2 + $0x210] sm:$0xff] %v1058
    %1140 = vst [vmem:[#allocation2 + $0x218] sm:$0xff] %v1059
    %1141 = vst [vmem:[#allocation2 + $0x220] sm:$0xff] %v1060
    %1142 = vst [vmem:[#allocation2 + $0x228] sm:$0xff] %v1061
    %1143 = vst [vmem:[#allocation2 + $0x230] sm:$0xff] %v1062
    %1144 = vst [vmem:[#allocation2 + $0x238] sm:$0xff] %v1063
    %1145 = vst [vmem:[#allocation2 + $0x240] sm:$0xff] %v1064
    %1146 = vst [vmem:[#allocation2 + $0x248] sm:$0xff] %v1065
    %1147 = vst [vmem:[#allocation2 + $0x250] sm:$0xff] %v1066
    %1148 = vst [vmem:[#allocation2 + $0x258] sm:$0xff] %v1067
    %1149 = vst [vmem:[#allocation2 + $0x260] sm:$0xff] %v1068
    %1150 = vst [vmem:[#allocation2 + $0x268] sm:$0xff] %v1069
    %1151 = vst [vmem:[#allocation2 + $0x270] sm:$0xff] %v1070
    %1152 = vst [vmem:[#allocation2 + $0x278] sm:$0xff] %v1071
    %1153 = vst [vmem:[#allocation2 + $0x280] sm:$0xff] %v1072
    %v1154 = vld [vmem:[%s0 + $0x1] sm:$0xff]
    %v1155 = vld [vmem:[%s0 + $0x9] sm:$0xff]
    %v1156 = vld [vmem:[%s0 + $0x11] sm:$0xff]
    %v1157 = vld [vmem:[%s0 + $0x19] sm:$0xff]
    %v1158 = vld [vmem:[%s0 + $0x21] sm:$0xff]
    %v1159 = vld [vmem:[%s0 + $0x29] sm:$0xff]
    %v1160 = vld [vmem:[%s0 + $0x31] sm:$0xff]
    %v1161 = vld [vmem:[%s0 + $0x39] sm:$0xff]
    %v1162 = vld [vmem:[%s0 + $0x41] sm:$0xff]
    %v1163 = vld [vmem:[%s0 + $0x49] sm:$0xff]
    %v1164 = vld [vmem:[%s0 + $0x51] sm:$0xff]
    %v1165 = vld [vmem:[%s0 + $0x59] sm:$0xff]
    %v1166 = vld [vmem:[%s0 + $0x61] sm:$0xff]
    %v1167 = vld [vmem:[%s0 + $0x69] sm:$0xff]
    %v1168 = vld [vmem:[%s0 + $0x71] sm:$0xff]
    %v1169 = vld [vmem:[%s0 + $0x79] sm:$0xff]
    %v1170 = vld [vmem:[%s0 + $0x81] sm:$0xff]
    %v1171 = vld [vmem:[%s0 + $0x89] sm:$0xff]
    %v1172 = vld [vmem:[%s0 + $0x91] sm:$0xff]
    %v1173 = vld [vmem:[%s0 + $0x99] sm:$0xff]
    %v1174 = vld [vmem:[%s0 + $0xa1] sm:$0xff]
    %v1175 = vld [vmem:[%s0 + $0xa9] sm:$0xff]
    %v1176 = vld [vmem:[%s0 + $0xb1] sm:$0xff]
    %v1177 = vld [vmem:[%s0 + $0xb9] sm:$0xff]
    %v1178 = vld [vmem:[%s0 + $0xc1] sm:$0xff]
    %v1179 = vld [vmem:[%s0 + $0xc9] sm:$0xff]
    %v1180 = vld [vmem:[%s0 + $0xd1] sm:$0xff]
    %v1181 = vld [vmem:[%s0 + $0xd9] sm:$0xff]
    %v1182 = vld [vmem:[%s0 + $0xe1] sm:$0xff]
    %v1183 = vld [vmem:[%s0 + $0xe9] sm:$0xff]
    %v1184 = vld [vmem:[%s0 + $0xf1] sm:$0xff]
    %v1185 = vld [vmem:[%s0 + $0xf9] sm:$0xff]
    %v1186 = vld [vmem:[%s0 + $0x101] sm:$0xff]
    %v1187 = vld [vmem:[%s0 + $0x109] sm:$0xff]
    %v1188 = vld [vmem:[%s0 + $0x111] sm:$0xff]
    %v1189 = vld [vmem:[%s0 + $0x119] sm:$0xff]
    %v1190 = vld [vmem:[%s0 + $0x121] sm:$0xff]
    %v1191 = vld [vmem:[%s0 + $0x129] sm:$0xff]
    %v1192 = vld [vmem:[%s0 + $0x131] sm:$0xff]
    %v1193 = vld [vmem:[%s0 + $0x139] sm:$0xff]
    %v1194 = vld [vmem:[%s0 + $0x141] sm:$0xff]
    %v1195 = vld [vmem:[%s0 + $0x149] sm:$0xff]
    %v1196 = vld [vmem:[%s0 + $0x151] sm:$0xff]
    %v1197 = vld [vmem:[%s0 + $0x159] sm:$0xff]
    %v1198 = vld [vmem:[%s0 + $0x161] sm:$0xff]
    %v1199 = vld [vmem:[%s0 + $0x169] sm:$0xff]
    %v1200 = vld [vmem:[%s0 + $0x171] sm:$0xff]
    %v1201 = vld [vmem:[%s0 + $0x179] sm:$0xff]
    %v1202 = vld [vmem:[%s0 + $0x181] sm:$0xff]
    %v1203 = vld [vmem:[%s0 + $0x189] sm:$0xff]
    %v1204 = vld [vmem:[%s0 + $0x191] sm:$0xff]
    %v1205 = vld [vmem:[%s0 + $0x199] sm:$0xff]
    %v1206 = vld [vmem:[%s0 + $0x1a1] sm:$0xff]
    %v1207 = vld [vmem:[%s0 + $0x1a9] sm:$0xff]
    %v1208 = vld [vmem:[%s0 + $0x1b1] sm:$0xff]
    %v1209 = vld [vmem:[%s0 + $0x1b9] sm:$0xff]
    %v1210 = vld [vmem:[%s0 + $0x1c1] sm:$0xff]
    %v1211 = vld [vmem:[%s0 + $0x1c9] sm:$0xff]
    %v1212 = vld [vmem:[%s0 + $0x1d1] sm:$0xff]
    %v1213 = vld [vmem:[%s0 + $0x1d9] sm:$0xff]
    %v1214 = vld [vmem:[%s0 + $0x1e1] sm:$0xff]
    %v1215 = vld [vmem:[%s0 + $0x1e9] sm:$0xff]
    %v1216 = vld [vmem:[%s0 + $0x1f1] sm:$0xff]
    %v1217 = vld [vmem:[%s0 + $0x1f9] sm:$0xff]
    %v1218 = vld [vmem:[%s0 + $0x201] sm:$0xff]
    %v1219 = vld [vmem:[%s0 + $0x209] sm:$0xff]
    %v1220 = vld [vmem:[%s0 + $0x211] sm:$0xff]
    %v1221 = vld [vmem:[%s0 + $0x219] sm:$0xff]
    %v1222 = vld [vmem:[%s0 + $0x221] sm:$0xff]
    %v1223 = vld [vmem:[%s0 + $0x229] sm:$0xff]
    %v1224 = vld [vmem:[%s0 + $0x231] sm:$0xff]
    %v1225 = vld [vmem:[%s0 + $0x239] sm:$0xff]
    %v1226 = vld [vmem:[%s0 + $0x241] sm:$0xff]
    %v1227 = vld [vmem:[%s0 + $0x249] sm:$0xff]
    %v1228 = vld [vmem:[%s0 + $0x251] sm:$0xff]
    %v1229 = vld [vmem:[%s0 + $0x259] sm:$0xff]
    %v1230 = vld [vmem:[%s0 + $0x261] sm:$0xff]
    %v1231 = vld [vmem:[%s0 + $0x269] sm:$0xff]
    %v1232 = vld [vmem:[%s0 + $0x271] sm:$0xff]
    %v1233 = vld [vmem:[%s0 + $0x279] sm:$0xff]
    %v1234 = vld [vmem:[%s0 + $0x281] sm:$0xff]
    %v1235 = vld [vmem:[#allocation2] sm:$0xff]
    %v1236 = vld [vmem:[#allocation2 + $0x8] sm:$0xff]
    %v1237 = vld [vmem:[#allocation2 + $0x10] sm:$0xff]
    %v1238 = vld [vmem:[#allocation2 + $0x18] sm:$0xff]
    %v1239 = vld [vmem:[#allocation2 + $0x20] sm:$0xff]
    %v1240 = vld [vmem:[#allocation2 + $0x28] sm:$0xff]
    %v1241 = vld [vmem:[#allocation2 + $0x30] sm:$0xff]
    %v1242 = vld [vmem:[#allocation2 + $0x38] sm:$0xff]
    %v1243 = vld [vmem:[#allocation2 + $0x40] sm:$0xff]
    %v1244 = vld [vmem:[#allocation2 + $0x48] sm:$0xff]
    %v1245 = vld [vmem:[#allocation2 + $0x50] sm:$0xff]
    %v1246 = vld [vmem:[#allocation2 + $0x58] sm:$0xff]
    %v1247 = vld [vmem:[#allocation2 + $0x60] sm:$0xff]
    %v1248 = vld [vmem:[#allocation2 + $0x68] sm:$0xff]
    %v1249 = vld [vmem:[#allocation2 + $0x70] sm:$0xff]
    %v1250 = vld [vmem:[#allocation2 + $0x78] sm:$0xff]
    %v1251 = vld [vmem:[#allocation2 + $0x80] sm:$0xff]
    %v1252 = vld [vmem:[#allocation2 + $0x88] sm:$0xff]
    %v1253 = vld [vmem:[#allocation2 + $0x90] sm:$0xff]
    %v1254 = vld [vmem:[#allocation2 + $0x98] sm:$0xff]
    %v1255 = vld [vmem:[#allocation2 + $0xa0] sm:$0xff]
    %v1256 = vld [vmem:[#allocation2 + $0xa8] sm:$0xff]
    %v1257 = vld [vmem:[#allocation2 + $0xb0] sm:$0xff]
    %v1258 = vld [vmem:[#allocation2 + $0xb8] sm:$0xff]
    %v1259 = vld [vmem:[#allocation2 + $0xc0] sm:$0xff]
    %v1260 = vld [vmem:[#allocation2 + $0xc8] sm:$0xff]
    %v1261 = vld [vmem:[#allocation2 + $0xd0] sm:$0xff]
    %v1262 = vld [vmem:[#allocation2 + $0xd8] sm:$0xff]
    %v1263 = vld [vmem:[#allocation2 + $0xe0] sm:$0xff]
    %v1264 = vld [vmem:[#allocation2 + $0xe8] sm:$0xff]
    %v1265 = vld [vmem:[#allocation2 + $0xf0] sm:$0xff]
    %v1266 = vld [vmem:[#allocation2 + $0xf8] sm:$0xff]
    %v1267 = vld [vmem:[#allocation2 + $0x100] sm:$0xff]
    %v1268 = vld [vmem:[#allocation2 + $0x108] sm:$0xff]
    %v1269 = vld [vmem:[#allocation2 + $0x110] sm:$0xff]
    %v1270 = vld [vmem:[#allocation2 + $0x118] sm:$0xff]
    %v1271 = vld [vmem:[#allocation2 + $0x120] sm:$0xff]
    %v1272 = vld [vmem:[#allocation2 + $0x128] sm:$0xff]
    %v1273 = vld [vmem:[#allocation2 + $0x130] sm:$0xff]
    %v1274 = vld [vmem:[#allocation2 + $0x138] sm:$0xff]
    %v1275 = vld [vmem:[#allocation2 + $0x140] sm:$0xff]
    %v1276 = vld [vmem:[#allocation2 + $0x148] sm:$0xff]
    %v1277 = vld [vmem:[#allocation2 + $0x150] sm:$0xff]
    %v1278 = vld [vmem:[#allocation2 + $0x158] sm:$0xff]
    %v1279 = vld [vmem:[#allocation2 + $0x160] sm:$0xff]
    %v1280 = vld [vmem:[#allocation2 + $0x168] sm:$0xff]
    %v1281 = vld [vmem:[#allocation2 + $0x170] sm:$0xff]
    %v1282 = vld [vmem:[#allocation2 + $0x178] sm:$0xff]
    %v1283 = vld [vmem:[#allocation2 + $0x180] sm:$0xff]
    %v1284 = vld [vmem:[#allocation2 + $0x188] sm:$0xff]
    %v1285 = vld [vmem:[#allocation2 + $0x190] sm:$0xff]
    %v1286 = vld [vmem:[#allocation2 + $0x198] sm:$0xff]
    %v1287 = vld [vmem:[#allocation2 + $0x1a0] sm:$0xff]
    %v1288 = vld [vmem:[#allocation2 + $0x1a8] sm:$0xff]
    %v1289 = vld [vmem:[#allocation2 + $0x1b0] sm:$0xff]
    %v1290 = vld [vmem:[#allocation2 + $0x1b8] sm:$0xff]
    %v1291 = vld [vmem:[#allocation2 + $0x1c0] sm:$0xff]
    %v1292 = vld [vmem:[#allocation2 + $0x1c8] sm:$0xff]
    %v1293 = vld [vmem:[#allocation2 + $0x1d0] sm:$0xff]
    %v1294 = vld [vmem:[#allocation2 + $0x1d8] sm:$0xff]
    %v1295 = vld [vmem:[#allocation2 + $0x1e0] sm:$0xff]
    %v1296 = vld [vmem:[#allocation2 + $0x1e8] sm:$0xff]
    %v1297 = vld [vmem:[#allocation2 + $0x1f0] sm:$0xff]
    %v1298 = vld [vmem:[#allocation2 + $0x1f8] sm:$0xff]
    %v1299 = vld [vmem:[#allocation2 + $0x200] sm:$0xff]
    %v1300 = vld [vmem:[#allocation2 + $0x208] sm:$0xff]
    %v1301 = vld [vmem:[#allocation2 + $0x210] sm:$0xff]
    %v1302 = vld [vmem:[#allocation2 + $0x218] sm:$0xff]
    %v1303 = vld [vmem:[#allocation2 + $0x220] sm:$0xff]
    %v1304 = vld [vmem:[#allocation2 + $0x228] sm:$0xff]
    %v1305 = vld [vmem:[#allocation2 + $0x230] sm:$0xff]
    %v1306 = vld [vmem:[#allocation2 + $0x238] sm:$0xff]
    %v1307 = vld [vmem:[#allocation2 + $0x240] sm:$0xff]
    %v1308 = vld [vmem:[#allocation2 + $0x248] sm:$0xff]
    %v1309 = vld [vmem:[#allocation2 + $0x250] sm:$0xff]
    %v1310 = vld [vmem:[#allocation2 + $0x258] sm:$0xff]
    %v1311 = vld [vmem:[#allocation2 + $0x260] sm:$0xff]
    %v1312 = vld [vmem:[#allocation2 + $0x268] sm:$0xff]
    %v1313 = vld [vmem:[#allocation2 + $0x270] sm:$0xff]
    %v1314 = vld [vmem:[#allocation2 + $0x278] sm:$0xff]
    %v1315 = vld [vmem:[#allocation2 + $0x280] sm:$0xff]
    %s1316 = scalar_lea.vmem %s1, 4
    %v1317 = vld [vmem:[%s1316] sm:$0xf]
    %v1319 = vsel %vm274, %v1154, 0
    %v1322 = vsel %vm274, %v1155, 0
    %v1325 = vsel %vm274, %v1156, 0
    %v1328 = vsel %vm274, %v1157, 0
    %v1331 = vsel %vm274, %v1158, 0
    %v1334 = vsel %vm274, %v1159, 0
    %v1337 = vsel %vm274, %v1160, 0
    %v1340 = vsel %vm274, %v1161, 0
    %v1343 = vsel %vm274, %v1162, 0
    %v1346 = vsel %vm274, %v1163, 0
    %v1349 = vsel %vm274, %v1164, 0
    %v1352 = vsel %vm274, %v1165, 0
    %v1355 = vsel %vm274, %v1166, 0
    %v1358 = vsel %vm274, %v1167, 0
    %v1361 = vsel %vm274, %v1168, 0
    %v1364 = vsel %vm274, %v1169, 0
    %v1367 = vsel %vm274, %v1170, 0
    %v1370 = vsel %vm274, %v1171, 0
    %v1373 = vsel %vm274, %v1172, 0
    %v1376 = vsel %vm274, %v1173, 0
    %v1379 = vsel %vm274, %v1174, 0
    %v1382 = vsel %vm274, %v1175, 0
    %v1385 = vsel %vm274, %v1176, 0
    %v1388 = vsel %vm274, %v1177, 0
    %v1391 = vsel %vm274, %v1178, 0
    %v1394 = vsel %vm274, %v1179, 0
    %v1397 = vsel %vm274, %v1180, 0
    %v1400 = vsel %vm274, %v1181, 0
    %v1403 = vsel %vm274, %v1182, 0
    %v1406 = vsel %vm274, %v1183, 0
    %v1409 = vsel %vm274, %v1184, 0
    %v1412 = vsel %vm274, %v1185, 0
    %v1415 = vsel %vm274, %v1186, 0
    %v1418 = vsel %vm274, %v1187, 0
    %v1421 = vsel %vm274, %v1188, 0
    %v1424 = vsel %vm274, %v1189, 0
    %v1427 = vsel %vm274, %v1190, 0
    %v1430 = vsel %vm274, %v1191, 0
    %v1433 = vsel %vm274, %v1192, 0
    %v1436 = vsel %vm274, %v1193, 0
    %v1439 = vsel %vm274, %v1194, 0
    %v1442 = vsel %vm274, %v1195, 0
    %v1445 = vsel %vm274, %v1196, 0
    %v1448 = vsel %vm274, %v1197, 0
    %v1451 = vsel %vm274, %v1198, 0
    %v1454 = vsel %vm274, %v1199, 0
    %v1457 = vsel %vm274, %v1200, 0
    %v1460 = vsel %vm274, %v1201, 0
    %v1463 = vsel %vm274, %v1202, 0
    %v1466 = vsel %vm274, %v1203, 0
    %v1469 = vsel %vm274, %v1204, 0
    %v1472 = vsel %vm274, %v1205, 0
    %v1475 = vsel %vm274, %v1206, 0
    %v1478 = vsel %vm274, %v1207, 0
    %v1481 = vsel %vm274, %v1208, 0
    %v1484 = vsel %vm274, %v1209, 0
    %v1487 = vsel %vm274, %v1210, 0
    %v1490 = vsel %vm274, %v1211, 0
    %v1493 = vsel %vm274, %v1212, 0
    %v1496 = vsel %vm274, %v1213, 0
    %v1499 = vsel %vm274, %v1214, 0
    %v1502 = vsel %vm274, %v1215, 0
    %v1505 = vsel %vm274, %v1216, 0
    %v1508 = vsel %vm274, %v1217, 0
    %v1511 = vsel %vm274, %v1218, 0
    %v1514 = vsel %vm274, %v1219, 0
    %v1517 = vsel %vm274, %v1220, 0
    %v1520 = vsel %vm274, %v1221, 0
    %v1523 = vsel %vm274, %v1222, 0
    %v1526 = vsel %vm274, %v1223, 0
    %v1529 = vsel %vm274, %v1224, 0
    %v1532 = vsel %vm274, %v1225, 0
    %v1535 = vsel %vm274, %v1226, 0
    %v1538 = vsel %vm274, %v1227, 0
    %v1541 = vsel %vm274, %v1228, 0
    %v1544 = vsel %vm274, %v1229, 0
    %v1547 = vsel %vm274, %v1230, 0
    %v1550 = vsel %vm274, %v1231, 0
    %v1553 = vsel %vm274, %v1232, 0
    %v1556 = vsel %vm274, %v1233, 0
    %v1559 = vsel %vm274, %v1234, 0
    %v1562 = vsel %vm518, %v1317, 0
    %1564 = vmatprep.subr.mxu0 0.0
    %1565 = vmatpush1.msra.mxu0 %v1562
    %1566 = vmatprep.subr.mxu0 0.0
    %1567 = vmatpush1.msra.mxu0 0.0
    %1568 = vmatprep.subr.mxu0 0.0
    %1569 = vmatpush1.msra.mxu0 0.0
    %1570 = vmatprep.subr.mxu0 0.0
    %1571 = vmatpush1.msra.mxu0 0.0
    %1572 = vmatprep.subr.mxu0 0.0
    %1573 = vmatpush1.msra.mxu0 0.0
    %1574 = vmatprep.subr.mxu0 0.0
    %1575 = vmatpush1.msra.mxu0 0.0
    %1576 = vmatprep.subr.mxu0 0.0
    %1577 = vmatpush1.msra.mxu0 0.0
    %1578 = vmatprep.subr.mxu0 0.0
    %1579 = vmatpush1.msra.mxu0 0.0
    %1580 = vmatprep.subr.mxu0 0.0
    %1581 = vmatpush1.msra.mxu0 0.0
    %1582 = vmatprep.subr.mxu0 0.0
    %1583 = vmatpush1.msra.mxu0 0.0
    %1584 = vmatprep.subr.mxu0 0.0
    %1585 = vmatpush1.msra.mxu0 0.0
    %1586 = vmatprep.subr.mxu0 0.0
    %1587 = vmatpush1.msra.mxu0 0.0
    %1588 = vmatprep.subr.mxu0 0.0
    %1589 = vmatpush1.msra.mxu0 0.0
    %1590 = vmatprep.subr.mxu0 0.0
    %1591 = vmatpush1.msra.mxu0 0.0
    %1592 = vmatprep.subr.mxu0 0.0
    %1593 = vmatpush1.msra.mxu0 0.0
    %1594 = vmatprep.subr.mxu0 0.0
    %1595 = vmatpush1.msra.mxu0 0.0
    %1596 = vmatprep.subr.mxu0 0.0
    %1597 = vmatpush1.msra.mxu0 0.0
    %1598 = vmatprep.subr.mxu0 0.0
    %1599 = vmatpush1.msra.mxu0 0.0
    %1600 = vmatprep.subr.mxu0 0.0
    %1601 = vmatpush1.msra.mxu0 0.0
    %1602 = vmatprep.subr.mxu0 0.0
    %1603 = vmatpush1.msra.mxu0 0.0
    %1604 = vmatprep.subr.mxu0 0.0
    %1605 = vmatpush1.msra.mxu0 0.0
    %1606 = vmatprep.subr.mxu0 0.0
    %1607 = vmatpush1.msra.mxu0 0.0
    %1608 = vmatprep.subr.mxu0 0.0
    %1609 = vmatpush1.msra.mxu0 0.0
    %1610 = vmatprep.subr.mxu0 0.0
    %1611 = vmatpush1.msra.mxu0 0.0
    %1612 = vmatprep.subr.mxu0 0.0
    %1613 = vmatpush1.msra.mxu0 0.0
    %1614 = vmatprep.subr.mxu0 0.0
    %1615 = vmatpush1.msra.mxu0 0.0
    %1616 = vmatprep.subr.mxu0 0.0
    %1617 = vmatpush1.msra.mxu0 0.0
    %1618 = vmatprep.subr.mxu0 0.0
    %1619 = vmatpush1.msra.mxu0 0.0
    %1620 = vmatprep.subr.mxu0 0.0
    %1621 = vmatpush1.msra.mxu0 0.0
    %1622 = vmatprep.subr.mxu0 0.0
    %1623 = vmatpush1.msra.mxu0 0.0
    %1624 = vmatprep.subr.mxu0 0.0
    %1625 = vmatpush1.msra.mxu0 0.0
    %1626 = vmatprep.subr.mxu0 0.0
    %1627 = vmatpush1.msra.mxu0 0.0
    %1628 = vmatprep.mubr.f32.mxu0 0.0
    %1629 = vmatmul.mubr.f32.gmra.mrb[0].mxu0 %v1319
    %v1630 = vpop.f32.mrb[0].mxu0
    %v1631 = vadd.f32 0.0, %v1630
    %v1632 = vpop.f32.mrb[0].mxu0
    %1633 = vmatprep.mubr.f32.mxu0 0.0
    %1634 = vmatmul.mubr.f32.gmra.mrb[0].mxu0 %v1322
    %v1635 = vpop.f32.mrb[0].mxu0
    %v1636 = vadd.f32 0.0, %v1635
    %v1637 = vpop.f32.mrb[0].mxu0
    %1638 = vmatprep.mubr.f32.mxu0 0.0
    %1639 = vmatmul.mubr.f32.gmra.mrb[0].mxu0 %v1325
    %v1640 = vpop.f32.mrb[0].mxu0
    %v1641 = vadd.f32 0.0, %v1640
    %v1642 = vpop.f32.mrb[0].mxu0
    %1643 = vmatprep.mubr.f32.mxu0 0.0
    %1644 = vmatmul.mubr.f32.gmra.mrb[0].mxu0 %v1328
    %v1645 = vpop.f32.mrb[0].mxu0
    %v1646 = vadd.f32 0.0, %v1645
    %v1647 = vpop.f32.mrb[0].mxu0
    %1648 = vmatprep.mubr.f32.mxu0 0.0
    %1649 = vmatmul.mubr.f32.gmra.mrb[0].mxu0 %v1331
    %v1650 = vpop.f32.mrb[0].mxu0
    %v1651 = vadd.f32 0.0, %v1650
    %v1652 = vpop.f32.mrb[0].mxu0
    %1653 = vmatprep.mubr.f32.mxu0 0.0
    %1654 = vmatmul.mubr.f32.gmra.mrb[0].mxu0 %v1334
    %v1655 = vpop.f32.mrb[0].mxu0
    %v1656 = vadd.f32 0.0, %v1655
    %v1657 = vpop.f32.mrb[0].mxu0
    %1658 = vmatprep.mubr.f32.mxu0 0.0
    %1659 = vmatmul.mubr.f32.gmra.mrb[0].mxu0 %v1337
    %v1660 = vpop.f32.mrb[0].mxu0
    %v1661 = vadd.f32 0.0, %v1660
    %v1662 = vpop.f32.mrb[0].mxu0
    %1663 = vmatprep.mubr.f32.mxu0 0.0
    %1664 = vmatmul.mubr.f32.gmra.mrb[0].mxu0 %v1340
    %v1665 = vpop.f32.mrb[0].mxu0
    %v1666 = vadd.f32 0.0, %v1665
    %v1667 = vpop.f32.mrb[0].mxu0
    %1668 = vmatprep.mubr.f32.mxu0 0.0
    %1669 = vmatmul.mubr.f32.gmra.mrb[0].mxu0 %v1343
    %v1670 = vpop.f32.mrb[0].mxu0
    %v1671 = vadd.f32 0.0, %v1670
    %v1672 = vpop.f32.mrb[0].mxu0
    %1673 = vmatprep.mubr.f32.mxu0 0.0
    %1674 = vmatmul.mubr.f32.gmra.mrb[0].mxu0 %v1346
    %v1675 = vpop.f32.mrb[0].mxu0
    %v1676 = vadd.f32 0.0, %v1675
    %v1677 = vpop.f32.mrb[0].mxu0
    %1678 = vmatprep.mubr.f32.mxu0 0.0
    %1679 = vmatmul.mubr.f32.gmra.mrb[0].mxu0 %v1349
    %v1680 = vpop.f32.mrb[0].mxu0
    %v1681 = vadd.f32 0.0, %v1680
    %v1682 = vpop.f32.mrb[0].mxu0
    %1683 = vmatprep.mubr.f32.mxu0 0.0
    %1684 = vmatmul.mubr.f32.gmra.mrb[0].mxu0 %v1352
    %v1685 = vpop.f32.mrb[0].mxu0
    %v1686 = vadd.f32 0.0, %v1685
    %v1687 = vpop.f32.mrb[0].mxu0
    %1688 = vmatprep.mubr.f32.mxu0 0.0
    %1689 = vmatmul.mubr.f32.gmra.mrb[0].mxu0 %v1355
    %v1690 = vpop.f32.mrb[0].mxu0
    %v1691 = vadd.f32 0.0, %v1690
    %v1692 = vpop.f32.mrb[0].mxu0
    %1693 = vmatprep.mubr.f32.mxu0 0.0
    %1694 = vmatmul.mubr.f32.gmra.mrb[0].mxu0 %v1358
    %v1695 = vpop.f32.mrb[0].mxu0
    %v1696 = vadd.f32 0.0, %v1695
    %v1697 = vpop.f32.mrb[0].mxu0
    %1698 = vmatprep.mubr.f32.mxu0 0.0
    %1699 = vmatmul.mubr.f32.gmra.mrb[0].mxu0 %v1361
    %v1700 = vpop.f32.mrb[0].mxu0
    %v1701 = vadd.f32 0.0, %v1700
    %v1702 = vpop.f32.mrb[0].mxu0
    %1703 = vmatprep.mubr.f32.mxu0 0.0
    %1704 = vmatmul.mubr.f32.gmra.mrb[0].mxu0 %v1364
    %v1705 = vpop.f32.mrb[0].mxu0
    %v1706 = vadd.f32 0.0, %v1705
    %v1707 = vpop.f32.mrb[0].mxu0
    %1708 = vmatprep.mubr.f32.mxu0 0.0
    %1709 = vmatmul.mubr.f32.gmra.mrb[0].mxu0 %v1367
    %v1710 = vpop.f32.mrb[0].mxu0
    %v1711 = vadd.f32 0.0, %v1710
    %v1712 = vpop.f32.mrb[0].mxu0
    %1713 = vmatprep.mubr.f32.mxu0 0.0
    %1714 = vmatmul.mubr.f32.gmra.mrb[0].mxu0 %v1370
    %v1715 = vpop.f32.mrb[0].mxu0
    %v1716 = vadd.f32 0.0, %v1715
    %v1717 = vpop.f32.mrb[0].mxu0
    %1718 = vmatprep.mubr.f32.mxu0 0.0
    %1719 = vmatmul.mubr.f32.gmra.mrb[0].mxu0 %v1373
    %v1720 = vpop.f32.mrb[0].mxu0
    %v1721 = vadd.f32 0.0, %v1720
    %v1722 = vpop.f32.mrb[0].mxu0
    %1723 = vmatprep.mubr.f32.mxu0 0.0
    %1724 = vmatmul.mubr.f32.gmra.mrb[0].mxu0 %v1376
    %v1725 = vpop.f32.mrb[0].mxu0
    %v1726 = vadd.f32 0.0, %v1725
    %v1727 = vpop.f32.mrb[0].mxu0
    %1728 = vmatprep.mubr.f32.mxu0 0.0
    %1729 = vmatmul.mubr.f32.gmra.mrb[0].mxu0 %v1379
    %v1730 = vpop.f32.mrb[0].mxu0
    %v1731 = vadd.f32 0.0, %v1730
    %v1732 = vpop.f32.mrb[0].mxu0
    %1733 = vmatprep.mubr.f32.mxu0 0.0
    %1734 = vmatmul.mubr.f32.gmra.mrb[0].mxu0 %v1382
    %v1735 = vpop.f32.mrb[0].mxu0
    %v1736 = vadd.f32 0.0, %v1735
    %v1737 = vpop.f32.mrb[0].mxu0
    %1738 = vmatprep.mubr.f32.mxu0 0.0
    %1739 = vmatmul.mubr.f32.gmra.mrb[0].mxu0 %v1385
    %v1740 = vpop.f32.mrb[0].mxu0
    %v1741 = vadd.f32 0.0, %v1740
    %v1742 = vpop.f32.mrb[0].mxu0
    %1743 = vmatprep.mubr.f32.mxu0 0.0
    %1744 = vmatmul.mubr.f32.gmra.mrb[0].mxu0 %v1388
    %v1745 = vpop.f32.mrb[0].mxu0
    %v1746 = vadd.f32 0.0, %v1745
    %v1747 = vpop.f32.mrb[0].mxu0
    %1748 = vmatprep.mubr.f32.mxu0 0.0
    %1749 = vmatmul.mubr.f32.gmra.mrb[0].mxu0 %v1391
    %v1750 = vpop.f32.mrb[0].mxu0
    %v1751 = vadd.f32 0.0, %v1750
    %v1752 = vpop.f32.mrb[0].mxu0
    %1753 = vmatprep.mubr.f32.mxu0 0.0
    %1754 = vmatmul.mubr.f32.gmra.mrb[0].mxu0 %v1394
    %v1755 = vpop.f32.mrb[0].mxu0
    %v1756 = vadd.f32 0.0, %v1755
    %v1757 = vpop.f32.mrb[0].mxu0
    %1758 = vmatprep.mubr.f32.mxu0 0.0
    %1759 = vmatmul.mubr.f32.gmra.mrb[0].mxu0 %v1397
    %v1760 = vpop.f32.mrb[0].mxu0
    %v1761 = vadd.f32 0.0, %v1760
    %v1762 = vpop.f32.mrb[0].mxu0
    %1763 = vmatprep.mubr.f32.mxu0 0.0
    %1764 = vmatmul.mubr.f32.gmra.mrb[0].mxu0 %v1400
    %v1765 = vpop.f32.mrb[0].mxu0
    %v1766 = vadd.f32 0.0, %v1765
    %v1767 = vpop.f32.mrb[0].mxu0
    %1768 = vmatprep.mubr.f32.mxu0 0.0
    %1769 = vmatmul.mubr.f32.gmra.mrb[0].mxu0 %v1403
    %v1770 = vpop.f32.mrb[0].mxu0
    %v1771 = vadd.f32 0.0, %v1770
    %v1772 = vpop.f32.mrb[0].mxu0
    %1773 = vmatprep.mubr.f32.mxu0 0.0
    %1774 = vmatmul.mubr.f32.gmra.mrb[0].mxu0 %v1406
    %v1775 = vpop.f32.mrb[0].mxu0
    %v1776 = vadd.f32 0.0, %v1775
    %v1777 = vpop.f32.mrb[0].mxu0
    %1778 = vmatprep.mubr.f32.mxu0 0.0
    %1779 = vmatmul.mubr.f32.gmra.mrb[0].mxu0 %v1409
    %v1780 = vpop.f32.mrb[0].mxu0
    %v1781 = vadd.f32 0.0, %v1780
    %v1782 = vpop.f32.mrb[0].mxu0
    %1783 = vmatprep.mubr.f32.mxu0 0.0
    %1784 = vmatmul.mubr.f32.gmra.mrb[0].mxu0 %v1412
    %v1785 = vpop.f32.mrb[0].mxu0
    %v1786 = vadd.f32 0.0, %v1785
    %v1787 = vpop.f32.mrb[0].mxu0
    %1788 = vmatprep.mubr.f32.mxu0 0.0
    %1789 = vmatmul.mubr.f32.gmra.mrb[0].mxu0 %v1415
    %v1790 = vpop.f32.mrb[0].mxu0
    %v1791 = vadd.f32 0.0, %v1790
    %v1792 = vpop.f32.mrb[0].mxu0
    %1793 = vmatprep.mubr.f32.mxu0 0.0
    %1794 = vmatmul.mubr.f32.gmra.mrb[0].mxu0 %v1418
    %v1795 = vpop.f32.mrb[0].mxu0
    %v1796 = vadd.f32 0.0, %v1795
    %v1797 = vpop.f32.mrb[0].mxu0
    %1798 = vmatprep.mubr.f32.mxu0 0.0
    %1799 = vmatmul.mubr.f32.gmra.mrb[0].mxu0 %v1421
    %v1800 = vpop.f32.mrb[0].mxu0
    %v1801 = vadd.f32 0.0, %v1800
    %v1802 = vpop.f32.mrb[0].mxu0
    %1803 = vmatprep.mubr.f32.mxu0 0.0
    %1804 = vmatmul.mubr.f32.gmra.mrb[0].mxu0 %v1424
    %v1805 = vpop.f32.mrb[0].mxu0
    %v1806 = vadd.f32 0.0, %v1805
    %v1807 = vpop.f32.mrb[0].mxu0
    %1808 = vmatprep.mubr.f32.mxu0 0.0
    %1809 = vmatmul.mubr.f32.gmra.mrb[0].mxu0 %v1427
    %v1810 = vpop.f32.mrb[0].mxu0
    %v1811 = vadd.f32 0.0, %v1810
    %v1812 = vpop.f32.mrb[0].mxu0
    %1813 = vmatprep.mubr.f32.mxu0 0.0
    %1814 = vmatmul.mubr.f32.gmra.mrb[0].mxu0 %v1430
    %v1815 = vpop.f32.mrb[0].mxu0
    %v1816 = vadd.f32 0.0, %v1815
    %v1817 = vpop.f32.mrb[0].mxu0
    %1818 = vmatprep.mubr.f32.mxu0 0.0
    %1819 = vmatmul.mubr.f32.gmra.mrb[0].mxu0 %v1433
    %v1820 = vpop.f32.mrb[0].mxu0
    %v1821 = vadd.f32 0.0, %v1820
    %v1822 = vpop.f32.mrb[0].mxu0
    %1823 = vmatprep.mubr.f32.mxu0 0.0
    %1824 = vmatmul.mubr.f32.gmra.mrb[0].mxu0 %v1436
    %v1825 = vpop.f32.mrb[0].mxu0
    %v1826 = vadd.f32 0.0, %v1825
    %v1827 = vpop.f32.mrb[0].mxu0
    %1828 = vmatprep.mubr.f32.mxu0 0.0
    %1829 = vmatmul.mubr.f32.gmra.mrb[0].mxu0 %v1439
    %v1830 = vpop.f32.mrb[0].mxu0
    %v1831 = vadd.f32 0.0, %v1830
    %v1832 = vpop.f32.mrb[0].mxu0
    %1833 = vmatprep.mubr.f32.mxu0 0.0
    %1834 = vmatmul.mubr.f32.gmra.mrb[0].mxu0 %v1442
    %v1835 = vpop.f32.mrb[0].mxu0
    %v1836 = vadd.f32 0.0, %v1835
    %v1837 = vpop.f32.mrb[0].mxu0
    %1838 = vmatprep.mubr.f32.mxu0 0.0
    %1839 = vmatmul.mubr.f32.gmra.mrb[0].mxu0 %v1445
    %v1840 = vpop.f32.mrb[0].mxu0
    %v1841 = vadd.f32 0.0, %v1840
    %v1842 = vpop.f32.mrb[0].mxu0
    %1843 = vmatprep.mubr.f32.mxu0 0.0
    %1844 = vmatmul.mubr.f32.gmra.mrb[0].mxu0 %v1448
    %v1845 = vpop.f32.mrb[0].mxu0
    %v1846 = vadd.f32 0.0, %v1845
    %v1847 = vpop.f32.mrb[0].mxu0
    %1848 = vmatprep.mubr.f32.mxu0 0.0
    %1849 = vmatmul.mubr.f32.gmra.mrb[0].mxu0 %v1451
    %v1850 = vpop.f32.mrb[0].mxu0
    %v1851 = vadd.f32 0.0, %v1850
    %v1852 = vpop.f32.mrb[0].mxu0
    %1853 = vmatprep.mubr.f32.mxu0 0.0
    %1854 = vmatmul.mubr.f32.gmra.mrb[0].mxu0 %v1454
    %v1855 = vpop.f32.mrb[0].mxu0
    %v1856 = vadd.f32 0.0, %v1855
    %v1857 = vpop.f32.mrb[0].mxu0
    %1858 = vmatprep.mubr.f32.mxu0 0.0
    %1859 = vmatmul.mubr.f32.gmra.mrb[0].mxu0 %v1457
    %v1860 = vpop.f32.mrb[0].mxu0
    %v1861 = vadd.f32 0.0, %v1860
    %v1862 = vpop.f32.mrb[0].mxu0
    %1863 = vmatprep.mubr.f32.mxu0 0.0
    %1864 = vmatmul.mubr.f32.gmra.mrb[0].mxu0 %v1460
    %v1865 = vpop.f32.mrb[0].mxu0
    %v1866 = vadd.f32 0.0, %v1865
    %v1867 = vpop.f32.mrb[0].mxu0
    %1868 = vmatprep.mubr.f32.mxu0 0.0
    %1869 = vmatmul.mubr.f32.gmra.mrb[0].mxu0 %v1463
    %v1870 = vpop.f32.mrb[0].mxu0
    %v1871 = vadd.f32 0.0, %v1870
    %v1872 = vpop.f32.mrb[0].mxu0
    %1873 = vmatprep.mubr.f32.mxu0 0.0
    %1874 = vmatmul.mubr.f32.gmra.mrb[0].mxu0 %v1466
    %v1875 = vpop.f32.mrb[0].mxu0
    %v1876 = vadd.f32 0.0, %v1875
    %v1877 = vpop.f32.mrb[0].mxu0
    %1878 = vmatprep.mubr.f32.mxu0 0.0
    %1879 = vmatmul.mubr.f32.gmra.mrb[0].mxu0 %v1469
    %v1880 = vpop.f32.mrb[0].mxu0
    %v1881 = vadd.f32 0.0, %v1880
    %v1882 = vpop.f32.mrb[0].mxu0
    %1883 = vmatprep.mubr.f32.mxu0 0.0
    %1884 = vmatmul.mubr.f32.gmra.mrb[0].mxu0 %v1472
    %v1885 = vpop.f32.mrb[0].mxu0
    %v1886 = vadd.f32 0.0, %v1885
    %v1887 = vpop.f32.mrb[0].mxu0
    %1888 = vmatprep.mubr.f32.mxu0 0.0
    %1889 = vmatmul.mubr.f32.gmra.mrb[0].mxu0 %v1475
    %v1890 = vpop.f32.mrb[0].mxu0
    %v1891 = vadd.f32 0.0, %v1890
    %v1892 = vpop.f32.mrb[0].mxu0
    %1893 = vmatprep.mubr.f32.mxu0 0.0
    %1894 = vmatmul.mubr.f32.gmra.mrb[0].mxu0 %v1478
    %v1895 = vpop.f32.mrb[0].mxu0
    %v1896 = vadd.f32 0.0, %v1895
    %v1897 = vpop.f32.mrb[0].mxu0
    %1898 = vmatprep.mubr.f32.mxu0 0.0
    %1899 = vmatmul.mubr.f32.gmra.mrb[0].mxu0 %v1481
    %v1900 = vpop.f32.mrb[0].mxu0
    %v1901 = vadd.f32 0.0, %v1900
    %v1902 = vpop.f32.mrb[0].mxu0
    %1903 = vmatprep.mubr.f32.mxu0 0.0
    %1904 = vmatmul.mubr.f32.gmra.mrb[0].mxu0 %v1484
    %v1905 = vpop.f32.mrb[0].mxu0
    %v1906 = vadd.f32 0.0, %v1905
    %v1907 = vpop.f32.mrb[0].mxu0
    %1908 = vmatprep.mubr.f32.mxu0 0.0
    %1909 = vmatmul.mubr.f32.gmra.mrb[0].mxu0 %v1487
    %v1910 = vpop.f32.mrb[0].mxu0
    %v1911 = vadd.f32 0.0, %v1910
    %v1912 = vpop.f32.mrb[0].mxu0
    %1913 = vmatprep.mubr.f32.mxu0 0.0
    %1914 = vmatmul.mubr.f32.gmra.mrb[0].mxu0 %v1490
    %v1915 = vpop.f32.mrb[0].mxu0
    %v1916 = vadd.f32 0.0, %v1915
    %v1917 = vpop.f32.mrb[0].mxu0
    %1918 = vmatprep.mubr.f32.mxu0 0.0
    %1919 = vmatmul.mubr.f32.gmra.mrb[0].mxu0 %v1493
    %v1920 = vpop.f32.mrb[0].mxu0
    %v1921 = vadd.f32 0.0, %v1920
    %v1922 = vpop.f32.mrb[0].mxu0
    %1923 = vmatprep.mubr.f32.mxu0 0.0
    %1924 = vmatmul.mubr.f32.gmra.mrb[0].mxu0 %v1496
    %v1925 = vpop.f32.mrb[0].mxu0
    %v1926 = vadd.f32 0.0, %v1925
    %v1927 = vpop.f32.mrb[0].mxu0
    %1928 = vmatprep.mubr.f32.mxu0 0.0
    %1929 = vmatmul.mubr.f32.gmra.mrb[0].mxu0 %v1499
    %v1930 = vpop.f32.mrb[0].mxu0
    %v1931 = vadd.f32 0.0, %v1930
    %v1932 = vpop.f32.mrb[0].mxu0
    %1933 = vmatprep.mubr.f32.mxu0 0.0
    %1934 = vmatmul.mubr.f32.gmra.mrb[0].mxu0 %v1502
    %v1935 = vpop.f32.mrb[0].mxu0
    %v1936 = vadd.f32 0.0, %v1935
    %v1937 = vpop.f32.mrb[0].mxu0
    %1938 = vmatprep.mubr.f32.mxu0 0.0
    %1939 = vmatmul.mubr.f32.gmra.mrb[0].mxu0 %v1505
    %v1940 = vpop.f32.mrb[0].mxu0
    %v1941 = vadd.f32 0.0, %v1940
    %v1942 = vpop.f32.mrb[0].mxu0
    %1943 = vmatprep.mubr.f32.mxu0 0.0
    %1944 = vmatmul.mubr.f32.gmra.mrb[0].mxu0 %v1508
    %v1945 = vpop.f32.mrb[0].mxu0
    %v1946 = vadd.f32 0.0, %v1945
    %v1947 = vpop.f32.mrb[0].mxu0
    %1948 = vmatprep.mubr.f32.mxu0 0.0
    %1949 = vmatmul.mubr.f32.gmra.mrb[0].mxu0 %v1511
    %v1950 = vpop.f32.mrb[0].mxu0
    %v1951 = vadd.f32 0.0, %v1950
    %v1952 = vpop.f32.mrb[0].mxu0
    %1953 = vmatprep.mubr.f32.mxu0 0.0
    %1954 = vmatmul.mubr.f32.gmra.mrb[0].mxu0 %v1514
    %v1955 = vpop.f32.mrb[0].mxu0
    %v1956 = vadd.f32 0.0, %v1955
    %v1957 = vpop.f32.mrb[0].mxu0
    %1958 = vmatprep.mubr.f32.mxu0 0.0
    %1959 = vmatmul.mubr.f32.gmra.mrb[0].mxu0 %v1517
    %v1960 = vpop.f32.mrb[0].mxu0
    %v1961 = vadd.f32 0.0, %v1960
    %v1962 = vpop.f32.mrb[0].mxu0
    %1963 = vmatprep.mubr.f32.mxu0 0.0
    %1964 = vmatmul.mubr.f32.gmra.mrb[0].mxu0 %v1520
    %v1965 = vpop.f32.mrb[0].mxu0
    %v1966 = vadd.f32 0.0, %v1965
    %v1967 = vpop.f32.mrb[0].mxu0
    %1968 = vmatprep.mubr.f32.mxu0 0.0
    %1969 = vmatmul.mubr.f32.gmra.mrb[0].mxu0 %v1523
    %v1970 = vpop.f32.mrb[0].mxu0
    %v1971 = vadd.f32 0.0, %v1970
    %v1972 = vpop.f32.mrb[0].mxu0
    %1973 = vmatprep.mubr.f32.mxu0 0.0
    %1974 = vmatmul.mubr.f32.gmra.mrb[0].mxu0 %v1526
    %v1975 = vpop.f32.mrb[0].mxu0
    %v1976 = vadd.f32 0.0, %v1975
    %v1977 = vpop.f32.mrb[0].mxu0
    %1978 = vmatprep.mubr.f32.mxu0 0.0
    %1979 = vmatmul.mubr.f32.gmra.mrb[0].mxu0 %v1529
    %v1980 = vpop.f32.mrb[0].mxu0
    %v1981 = vadd.f32 0.0, %v1980
    %v1982 = vpop.f32.mrb[0].mxu0
    %1983 = vmatprep.mubr.f32.mxu0 0.0
    %1984 = vmatmul.mubr.f32.gmra.mrb[0].mxu0 %v1532
    %v1985 = vpop.f32.mrb[0].mxu0
    %v1986 = vadd.f32 0.0, %v1985
    %v1987 = vpop.f32.mrb[0].mxu0
    %1988 = vmatprep.mubr.f32.mxu0 0.0
    %1989 = vmatmul.mubr.f32.gmra.mrb[0].mxu0 %v1535
    %v1990 = vpop.f32.mrb[0].mxu0
    %v1991 = vadd.f32 0.0, %v1990
    %v1992 = vpop.f32.mrb[0].mxu0
    %1993 = vmatprep.mubr.f32.mxu0 0.0
    %1994 = vmatmul.mubr.f32.gmra.mrb[0].mxu0 %v1538
    %v1995 = vpop.f32.mrb[0].mxu0
    %v1996 = vadd.f32 0.0, %v1995
    %v1997 = vpop.f32.mrb[0].mxu0
    %1998 = vmatprep.mubr.f32.mxu0 0.0
    %1999 = vmatmul.mubr.f32.gmra.mrb[0].mxu0 %v1541
    %v2000 = vpop.f32.mrb[0].mxu0
    %v2001 = vadd.f32 0.0, %v2000
    %v2002 = vpop.f32.mrb[0].mxu0
    %2003 = vmatprep.mubr.f32.mxu0 0.0
    %2004 = vmatmul.mubr.f32.gmra.mrb[0].mxu0 %v1544
    %v2005 = vpop.f32.mrb[0].mxu0
    %v2006 = vadd.f32 0.0, %v2005
    %v2007 = vpop.f32.mrb[0].mxu0
    %2008 = vmatprep.mubr.f32.mxu0 0.0
    %2009 = vmatmul.mubr.f32.gmra.mrb[0].mxu0 %v1547
    %v2010 = vpop.f32.mrb[0].mxu0
    %v2011 = vadd.f32 0.0, %v2010
    %v2012 = vpop.f32.mrb[0].mxu0
    %2013 = vmatprep.mubr.f32.mxu0 0.0
    %2014 = vmatmul.mubr.f32.gmra.mrb[0].mxu0 %v1550
    %v2015 = vpop.f32.mrb[0].mxu0
    %v2016 = vadd.f32 0.0, %v2015
    %v2017 = vpop.f32.mrb[0].mxu0
    %2018 = vmatprep.mubr.f32.mxu0 0.0
    %2019 = vmatmul.mubr.f32.gmra.mrb[0].mxu0 %v1553
    %v2020 = vpop.f32.mrb[0].mxu0
    %v2021 = vadd.f32 0.0, %v2020
    %v2022 = vpop.f32.mrb[0].mxu0
    %2023 = vmatprep.mubr.f32.mxu0 0.0
    %2024 = vmatmul.mubr.f32.gmra.mrb[0].mxu0 %v1556
    %v2025 = vpop.f32.mrb[0].mxu0
    %v2026 = vadd.f32 0.0, %v2025
    %v2027 = vpop.f32.mrb[0].mxu0
    %2028 = vmatprep.mubr.f32.mxu0 0.0
    %2029 = vmatmul.mubr.f32.gmra.mrb[0].mxu0 %v1559
    %v2030 = vpop.f32.mrb[0].mxu0
    %v2031 = vadd.f32 0.0, %v2030
    %v2032 = vpop.f32.mrb[0].mxu0
    %2033 = vdwg.mxu0
    %v2034 = vadd.f32 %v1235, %v1631
    %v2035 = vadd.f32 %v1236, %v1636
    %v2036 = vadd.f32 %v1237, %v1641
    %v2037 = vadd.f32 %v1238, %v1646
    %v2038 = vadd.f32 %v1239, %v1651
    %v2039 = vadd.f32 %v1240, %v1656
    %v2040 = vadd.f32 %v1241, %v1661
    %v2041 = vadd.f32 %v1242, %v1666
    %v2042 = vadd.f32 %v1243, %v1671
    %v2043 = vadd.f32 %v1244, %v1676
    %v2044 = vadd.f32 %v1245, %v1681
    %v2045 = vadd.f32 %v1246, %v1686
    %v2046 = vadd.f32 %v1247, %v1691
    %v2047 = vadd.f32 %v1248, %v1696
    %v2048 = vadd.f32 %v1249, %v1701
    %v2049 = vadd.f32 %v1250, %v1706
    %v2050 = vadd.f32 %v1251, %v1711
    %v2051 = vadd.f32 %v1252, %v1716
    %v2052 = vadd.f32 %v1253, %v1721
    %v2053 = vadd.f32 %v1254, %v1726
    %v2054 = vadd.f32 %v1255, %v1731
    %v2055 = vadd.f32 %v1256, %v1736
    %v2056 = vadd.f32 %v1257, %v1741
    %v2057 = vadd.f32 %v1258, %v1746
    %v2058 = vadd.f32 %v1259, %v1751
    %v2059 = vadd.f32 %v1260, %v1756
    %v2060 = vadd.f32 %v1261, %v1761
    %v2061 = vadd.f32 %v1262, %v1766
    %v2062 = vadd.f32 %v1263, %v1771
    %v2063 = vadd.f32 %v1264, %v1776
    %v2064 = vadd.f32 %v1265, %v1781
    %v2065 = vadd.f32 %v1266, %v1786
    %v2066 = vadd.f32 %v1267, %v1791
    %v2067 = vadd.f32 %v1268, %v1796
    %v2068 = vadd.f32 %v1269, %v1801
    %v2069 = vadd.f32 %v1270, %v1806
    %v2070 = vadd.f32 %v1271, %v1811
    %v2071 = vadd.f32 %v1272, %v1816
    %v2072 = vadd.f32 %v1273, %v1821
    %v2073 = vadd.f32 %v1274, %v1826
    %v2074 = vadd.f32 %v1275, %v1831
    %v2075 = vadd.f32 %v1276, %v1836
    %v2076 = vadd.f32 %v1277, %v1841
    %v2077 = vadd.f32 %v1278, %v1846
    %v2078 = vadd.f32 %v1279, %v1851
    %v2079 = vadd.f32 %v1280, %v1856
    %v2080 = vadd.f32 %v1281, %v1861
    %v2081 = vadd.f32 %v1282, %v1866
    %v2082 = vadd.f32 %v1283, %v1871
    %v2083 = vadd.f32 %v1284, %v1876
    %v2084 = vadd.f32 %v1285, %v1881
    %v2085 = vadd.f32 %v1286, %v1886
    %v2086 = vadd.f32 %v1287, %v1891
    %v2087 = vadd.f32 %v1288, %v1896
    %v2088 = vadd.f32 %v1289, %v1901
    %v2089 = vadd.f32 %v1290, %v1906
    %v2090 = vadd.f32 %v1291, %v1911
    %v2091 = vadd.f32 %v1292, %v1916
    %v2092 = vadd.f32 %v1293, %v1921
    %v2093 = vadd.f32 %v1294, %v1926
    %v2094 = vadd.f32 %v1295, %v1931
    %v2095 = vadd.f32 %v1296, %v1936
    %v2096 = vadd.f32 %v1297, %v1941
    %v2097 = vadd.f32 %v1298, %v1946
    %v2098 = vadd.f32 %v1299, %v1951
    %v2099 = vadd.f32 %v1300, %v1956
    %v2100 = vadd.f32 %v1301, %v1961
    %v2101 = vadd.f32 %v1302, %v1966
    %v2102 = vadd.f32 %v1303, %v1971
    %v2103 = vadd.f32 %v1304, %v1976
    %v2104 = vadd.f32 %v1305, %v1981
    %v2105 = vadd.f32 %v1306, %v1986
    %v2106 = vadd.f32 %v1307, %v1991
    %v2107 = vadd.f32 %v1308, %v1996
    %v2108 = vadd.f32 %v1309, %v2001
    %v2109 = vadd.f32 %v1310, %v2006
    %v2110 = vadd.f32 %v1311, %v2011
    %v2111 = vadd.f32 %v1312, %v2016
    %v2112 = vadd.f32 %v1313, %v2021
    %v2113 = vadd.f32 %v1314, %v2026
    %v2114 = vadd.f32 %v1315, %v2031
    %2115 = vst [vmem:[#allocation2] sm:$0xff] %v2034
    %2116 = vst [vmem:[#allocation2 + $0x8] sm:$0xff] %v2035
    %2117 = vst [vmem:[#allocation2 + $0x10] sm:$0xff] %v2036
    %2118 = vst [vmem:[#allocation2 + $0x18] sm:$0xff] %v2037
    %2119 = vst [vmem:[#allocation2 + $0x20] sm:$0xff] %v2038
    %2120 = vst [vmem:[#allocation2 + $0x28] sm:$0xff] %v2039
    %2121 = vst [vmem:[#allocation2 + $0x30] sm:$0xff] %v2040
    %2122 = vst [vmem:[#allocation2 + $0x38] sm:$0xff] %v2041
    %2123 = vst [vmem:[#allocation2 + $0x40] sm:$0xff] %v2042
    %2124 = vst [vmem:[#allocation2 + $0x48] sm:$0xff] %v2043
    %2125 = vst [vmem:[#allocation2 + $0x50] sm:$0xff] %v2044
    %2126 = vst [vmem:[#allocation2 + $0x58] sm:$0xff] %v2045
    %2127 = vst [vmem:[#allocation2 + $0x60] sm:$0xff] %v2046
    %2128 = vst [vmem:[#allocation2 + $0x68] sm:$0xff] %v2047
    %2129 = vst [vmem:[#allocation2 + $0x70] sm:$0xff] %v2048
    %2130 = vst [vmem:[#allocation2 + $0x78] sm:$0xff] %v2049
    %2131 = vst [vmem:[#allocation2 + $0x80] sm:$0xff] %v2050
    %2132 = vst [vmem:[#allocation2 + $0x88] sm:$0xff] %v2051
    %2133 = vst [vmem:[#allocation2 + $0x90] sm:$0xff] %v2052
    %2134 = vst [vmem:[#allocation2 + $0x98] sm:$0xff] %v2053
    %2135 = vst [vmem:[#allocation2 + $0xa0] sm:$0xff] %v2054
    %2136 = vst [vmem:[#allocation2 + $0xa8] sm:$0xff] %v2055
    %2137 = vst [vmem:[#allocation2 + $0xb0] sm:$0xff] %v2056
    %2138 = vst [vmem:[#allocation2 + $0xb8] sm:$0xff] %v2057
    %2139 = vst [vmem:[#allocation2 + $0xc0] sm:$0xff] %v2058
    %2140 = vst [vmem:[#allocation2 + $0xc8] sm:$0xff] %v2059
    %2141 = vst [vmem:[#allocation2 + $0xd0] sm:$0xff] %v2060
    %2142 = vst [vmem:[#allocation2 + $0xd8] sm:$0xff] %v2061
    %2143 = vst [vmem:[#allocation2 + $0xe0] sm:$0xff] %v2062
    %2144 = vst [vmem:[#allocation2 + $0xe8] sm:$0xff] %v2063
    %2145 = vst [vmem:[#allocation2 + $0xf0] sm:$0xff] %v2064
    %2146 = vst [vmem:[#allocation2 + $0xf8] sm:$0xff] %v2065
    %2147 = vst [vmem:[#allocation2 + $0x100] sm:$0xff] %v2066
    %2148 = vst [vmem:[#allocation2 + $0x108] sm:$0xff] %v2067
    %2149 = vst [vmem:[#allocation2 + $0x110] sm:$0xff] %v2068
    %2150 = vst [vmem:[#allocation2 + $0x118] sm:$0xff] %v2069
    %2151 = vst [vmem:[#allocation2 + $0x120] sm:$0xff] %v2070
    %2152 = vst [vmem:[#allocation2 + $0x128] sm:$0xff] %v2071
    %2153 = vst [vmem:[#allocation2 + $0x130] sm:$0xff] %v2072
    %2154 = vst [vmem:[#allocation2 + $0x138] sm:$0xff] %v2073
    %2155 = vst [vmem:[#allocation2 + $0x140] sm:$0xff] %v2074
    %2156 = vst [vmem:[#allocation2 + $0x148] sm:$0xff] %v2075
    %2157 = vst [vmem:[#allocation2 + $0x150] sm:$0xff] %v2076
    %2158 = vst [vmem:[#allocation2 + $0x158] sm:$0xff] %v2077
    %2159 = vst [vmem:[#allocation2 + $0x160] sm:$0xff] %v2078
    %2160 = vst [vmem:[#allocation2 + $0x168] sm:$0xff] %v2079
    %2161 = vst [vmem:[#allocation2 + $0x170] sm:$0xff] %v2080
    %2162 = vst [vmem:[#allocation2 + $0x178] sm:$0xff] %v2081
    %2163 = vst [vmem:[#allocation2 + $0x180] sm:$0xff] %v2082
    %2164 = vst [vmem:[#allocation2 + $0x188] sm:$0xff] %v2083
    %2165 = vst [vmem:[#allocation2 + $0x190] sm:$0xff] %v2084
    %2166 = vst [vmem:[#allocation2 + $0x198] sm:$0xff] %v2085
    %2167 = vst [vmem:[#allocation2 + $0x1a0] sm:$0xff] %v2086
    %2168 = vst [vmem:[#allocation2 + $0x1a8] sm:$0xff] %v2087
    %2169 = vst [vmem:[#allocation2 + $0x1b0] sm:$0xff] %v2088
    %2170 = vst [vmem:[#allocation2 + $0x1b8] sm:$0xff] %v2089
    %2171 = vst [vmem:[#allocation2 + $0x1c0] sm:$0xff] %v2090
    %2172 = vst [vmem:[#allocation2 + $0x1c8] sm:$0xff] %v2091
    %2173 = vst [vmem:[#allocation2 + $0x1d0] sm:$0xff] %v2092
    %2174 = vst [vmem:[#allocation2 + $0x1d8] sm:$0xff] %v2093
    %2175 = vst [vmem:[#allocation2 + $0x1e0] sm:$0xff] %v2094
    %2176 = vst [vmem:[#allocation2 + $0x1e8] sm:$0xff] %v2095
    %2177 = vst [vmem:[#allocation2 + $0x1f0] sm:$0xff] %v2096
    %2178 = vst [vmem:[#allocation2 + $0x1f8] sm:$0xff] %v2097
    %2179 = vst [vmem:[#allocation2 + $0x200] sm:$0xff] %v2098
    %2180 = vst [vmem:[#allocation2 + $0x208] sm:$0xff] %v2099
    %2181 = vst [vmem:[#allocation2 + $0x210] sm:$0xff] %v2100
    %2182 = vst [vmem:[#allocation2 + $0x218] sm:$0xff] %v2101
    %2183 = vst [vmem:[#allocation2 + $0x220] sm:$0xff] %v2102
    %2184 = vst [vmem:[#allocation2 + $0x228] sm:$0xff] %v2103
    %2185 = vst [vmem:[#allocation2 + $0x230] sm:$0xff] %v2104
    %2186 = vst [vmem:[#allocation2 + $0x238] sm:$0xff] %v2105
    %2187 = vst [vmem:[#allocation2 + $0x240] sm:$0xff] %v2106
    %2188 = vst [vmem:[#allocation2 + $0x248] sm:$0xff] %v2107
    %2189 = vst [vmem:[#allocation2 + $0x250] sm:$0xff] %v2108
    %2190 = vst [vmem:[#allocation2 + $0x258] sm:$0xff] %v2109
    %2191 = vst [vmem:[#allocation2 + $0x260] sm:$0xff] %v2110
    %2192 = vst [vmem:[#allocation2 + $0x268] sm:$0xff] %v2111
    %2193 = vst [vmem:[#allocation2 + $0x270] sm:$0xff] %v2112
    %2194 = vst [vmem:[#allocation2 + $0x278] sm:$0xff] %v2113
    %2195 = vst [vmem:[#allocation2 + $0x280] sm:$0xff] %v2114
    %v2196 = vld [vmem:[%s0 + $0x2] sm:$0xff]
    %v2197 = vld [vmem:[%s0 + $0xa] sm:$0xff]
    %v2198 = vld [vmem:[%s0 + $0x12] sm:$0xff]
    %v2199 = vld [vmem:[%s0 + $0x1a] sm:$0xff]
    %v2200 = vld [vmem:[%s0 + $0x22] sm:$0xff]
    %v2201 = vld [vmem:[%s0 + $0x2a] sm:$0xff]
    %v2202 = vld [vmem:[%s0 + $0x32] sm:$0xff]
    %v2203 = vld [vmem:[%s0 + $0x3a] sm:$0xff]
    %v2204 = vld [vmem:[%s0 + $0x42] sm:$0xff]
    %v2205 = vld [vmem:[%s0 + $0x4a] sm:$0xff]
    %v2206 = vld [vmem:[%s0 + $0x52] sm:$0xff]
    %v2207 = vld [vmem:[%s0 + $0x5a] sm:$0xff]
    %v2208 = vld [vmem:[%s0 + $0x62] sm:$0xff]
    %v2209 = vld [vmem:[%s0 + $0x6a] sm:$0xff]
    %v2210 = vld [vmem:[%s0 + $0x72] sm:$0xff]
    %v2211 = vld [vmem:[%s0 + $0x7a] sm:$0xff]
    %v2212 = vld [vmem:[%s0 + $0x82] sm:$0xff]
    %v2213 = vld [vmem:[%s0 + $0x8a] sm:$0xff]
    %v2214 = vld [vmem:[%s0 + $0x92] sm:$0xff]
    %v2215 = vld [vmem:[%s0 + $0x9a] sm:$0xff]
    %v2216 = vld [vmem:[%s0 + $0xa2] sm:$0xff]
    %v2217 = vld [vmem:[%s0 + $0xaa] sm:$0xff]
    %v2218 = vld [vmem:[%s0 + $0xb2] sm:$0xff]
    %v2219 = vld [vmem:[%s0 + $0xba] sm:$0xff]
    %v2220 = vld [vmem:[%s0 + $0xc2] sm:$0xff]
    %v2221 = vld [vmem:[%s0 + $0xca] sm:$0xff]
    %v2222 = vld [vmem:[%s0 + $0xd2] sm:$0xff]
    %v2223 = vld [vmem:[%s0 + $0xda] sm:$0xff]
    %v2224 = vld [vmem:[%s0 + $0xe2] sm:$0xff]
    %v2225 = vld [vmem:[%s0 + $0xea] sm:$0xff]
    %v2226 = vld [vmem:[%s0 + $0xf2] sm:$0xff]
    %v2227 = vld [vmem:[%s0 + $0xfa] sm:$0xff]
    %v2228 = vld [vmem:[%s0 + $0x102] sm:$0xff]
    %v2229 = vld [vmem:[%s0 + $0x10a] sm:$0xff]
    %v2230 = vld [vmem:[%s0 + $0x112] sm:$0xff]
    %v2231 = vld [vmem:[%s0 + $0x11a] sm:$0xff]
    %v2232 = vld [vmem:[%s0 + $0x122] sm:$0xff]
    %v2233 = vld [vmem:[%s0 + $0x12a] sm:$0xff]
    %v2234 = vld [vmem:[%s0 + $0x132] sm:$0xff]
    %v2235 = vld [vmem:[%s0 + $0x13a] sm:$0xff]
    %v2236 = vld [vmem:[%s0 + $0x142] sm:$0xff]
    %v2237 = vld [vmem:[%s0 + $0x14a] sm:$0xff]
    %v2238 = vld [vmem:[%s0 + $0x152] sm:$0xff]
    %v2239 = vld [vmem:[%s0 + $0x15a] sm:$0xff]
    %v2240 = vld [vmem:[%s0 + $0x162] sm:$0xff]
    %v2241 = vld [vmem:[%s0 + $0x16a] sm:$0xff]
    %v2242 = vld [vmem:[%s0 + $0x172] sm:$0xff]
    %v2243 = vld [vmem:[%s0 + $0x17a] sm:$0xff]
    %v2244 = vld [vmem:[%s0 + $0x182] sm:$0xff]
    %v2245 = vld [vmem:[%s0 + $0x18a] sm:$0xff]
    %v2246 = vld [vmem:[%s0 + $0x192] sm:$0xff]
    %v2247 = vld [vmem:[%s0 + $0x19a] sm:$0xff]
    %v2248 = vld [vmem:[%s0 + $0x1a2] sm:$0xff]
    %v2249 = vld [vmem:[%s0 + $0x1aa] sm:$0xff]
    %v2250 = vld [vmem:[%s0 + $0x1b2] sm:$0xff]
    %v2251 = vld [vmem:[%s0 + $0x1ba] sm:$0xff]
    %v2252 = vld [vmem:[%s0 + $0x1c2] sm:$0xff]
    %v2253 = vld [vmem:[%s0 + $0x1ca] sm:$0xff]
    %v2254 = vld [vmem:[%s0 + $0x1d2] sm:$0xff]
    %v2255 = vld [vmem:[%s0 + $0x1da] sm:$0xff]
    %v2256 = vld [vmem:[%s0 + $0x1e2] sm:$0xff]
    %v2257 = vld [vmem:[%s0 + $0x1ea] sm:$0xff]
    %v2258 = vld [vmem:[%s0 + $0x1f2] sm:$0xff]
    %v2259 = vld [vmem:[%s0 + $0x1fa] sm:$0xff]
    %v2260 = vld [vmem:[%s0 + $0x202] sm:$0xff]
    %v2261 = vld [vmem:[%s0 + $0x20a] sm:$0xff]
    %v2262 = vld [vmem:[%s0 + $0x212] sm:$0xff]
    %v2263 = vld [vmem:[%s0 + $0x21a] sm:$0xff]
    %v2264 = vld [vmem:[%s0 + $0x222] sm:$0xff]
    %v2265 = vld [vmem:[%s0 + $0x22a] sm:$0xff]
    %v2266 = vld [vmem:[%s0 + $0x232] sm:$0xff]
    %v2267 = vld [vmem:[%s0 + $0x23a] sm:$0xff]
    %v2268 = vld [vmem:[%s0 + $0x242] sm:$0xff]
    %v2269 = vld [vmem:[%s0 + $0x24a] sm:$0xff]
    %v2270 = vld [vmem:[%s0 + $0x252] sm:$0xff]
    %v2271 = vld [vmem:[%s0 + $0x25a] sm:$0xff]
    %v2272 = vld [vmem:[%s0 + $0x262] sm:$0xff]
    %v2273 = vld [vmem:[%s0 + $0x26a] sm:$0xff]
    %v2274 = vld [vmem:[%s0 + $0x272] sm:$0xff]
    %v2275 = vld [vmem:[%s0 + $0x27a] sm:$0xff]
    %v2276 = vld [vmem:[%s0 + $0x282] sm:$0xff]
    %v2277 = vld [vmem:[#allocation2] sm:$0xff]
    %v2278 = vld [vmem:[#allocation2 + $0x8] sm:$0xff]
    %v2279 = vld [vmem:[#allocation2 + $0x10] sm:$0xff]
    %v2280 = vld [vmem:[#allocation2 + $0x18] sm:$0xff]
    %v2281 = vld [vmem:[#allocation2 + $0x20] sm:$0xff]
    %v2282 = vld [vmem:[#allocation2 + $0x28] sm:$0xff]
    %v2283 = vld [vmem:[#allocation2 + $0x30] sm:$0xff]
    %v2284 = vld [vmem:[#allocation2 + $0x38] sm:$0xff]
    %v2285 = vld [vmem:[#allocation2 + $0x40] sm:$0xff]
    %v2286 = vld [vmem:[#allocation2 + $0x48] sm:$0xff]
    %v2287 = vld [vmem:[#allocation2 + $0x50] sm:$0xff]
    %v2288 = vld [vmem:[#allocation2 + $0x58] sm:$0xff]
    %v2289 = vld [vmem:[#allocation2 + $0x60] sm:$0xff]
    %v2290 = vld [vmem:[#allocation2 + $0x68] sm:$0xff]
    %v2291 = vld [vmem:[#allocation2 + $0x70] sm:$0xff]
    %v2292 = vld [vmem:[#allocation2 + $0x78] sm:$0xff]
    %v2293 = vld [vmem:[#allocation2 + $0x80] sm:$0xff]
    %v2294 = vld [vmem:[#allocation2 + $0x88] sm:$0xff]
    %v2295 = vld [vmem:[#allocation2 + $0x90] sm:$0xff]
    %v2296 = vld [vmem:[#allocation2 + $0x98] sm:$0xff]
    %v2297 = vld [vmem:[#allocation2 + $0xa0] sm:$0xff]
    %v2298 = vld [vmem:[#allocation2 + $0xa8] sm:$0xff]
    %v2299 = vld [vmem:[#allocation2 + $0xb0] sm:$0xff]
    %v2300 = vld [vmem:[#allocation2 + $0xb8] sm:$0xff]
    %v2301 = vld [vmem:[#allocation2 + $0xc0] sm:$0xff]
    %v2302 = vld [vmem:[#allocation2 + $0xc8] sm:$0xff]
    %v2303 = vld [vmem:[#allocation2 + $0xd0] sm:$0xff]
    %v2304 = vld [vmem:[#allocation2 + $0xd8] sm:$0xff]
    %v2305 = vld [vmem:[#allocation2 + $0xe0] sm:$0xff]
    %v2306 = vld [vmem:[#allocation2 + $0xe8] sm:$0xff]
    %v2307 = vld [vmem:[#allocation2 + $0xf0] sm:$0xff]
    %v2308 = vld [vmem:[#allocation2 + $0xf8] sm:$0xff]
    %v2309 = vld [vmem:[#allocation2 + $0x100] sm:$0xff]
    %v2310 = vld [vmem:[#allocation2 + $0x108] sm:$0xff]
    %v2311 = vld [vmem:[#allocation2 + $0x110] sm:$0xff]
    %v2312 = vld [vmem:[#allocation2 + $0x118] sm:$0xff]
    %v2313 = vld [vmem:[#allocation2 + $0x120] sm:$0xff]
    %v2314 = vld [vmem:[#allocation2 + $0x128] sm:$0xff]
    %v2315 = vld [vmem:[#allocation2 + $0x130] sm:$0xff]
    %v2316 = vld [vmem:[#allocation2 + $0x138] sm:$0xff]
    %v2317 = vld [vmem:[#allocation2 + $0x140] sm:$0xff]
    %v2318 = vld [vmem:[#allocation2 + $0x148] sm:$0xff]
    %v2319 = vld [vmem:[#allocation2 + $0x150] sm:$0xff]
    %v2320 = vld [vmem:[#allocation2 + $0x158] sm:$0xff]
    %v2321 = vld [vmem:[#allocation2 + $0x160] sm:$0xff]
    %v2322 = vld [vmem:[#allocation2 + $0x168] sm:$0xff]
    %v2323 = vld [vmem:[#allocation2 + $0x170] sm:$0xff]
    %v2324 = vld [vmem:[#allocation2 + $0x178] sm:$0xff]
    %v2325 = vld [vmem:[#allocation2 + $0x180] sm:$0xff]
    %v2326 = vld [vmem:[#allocation2 + $0x188] sm:$0xff]
    %v2327 = vld [vmem:[#allocation2 + $0x190] sm:$0xff]
    %v2328 = vld [vmem:[#allocation2 + $0x198] sm:$0xff]
    %v2329 = vld [vmem:[#allocation2 + $0x1a0] sm:$0xff]
    %v2330 = vld [vmem:[#allocation2 + $0x1a8] sm:$0xff]
    %v2331 = vld [vmem:[#allocation2 + $0x1b0] sm:$0xff]
    %v2332 = vld [vmem:[#allocation2 + $0x1b8] sm:$0xff]
    %v2333 = vld [vmem:[#allocation2 + $0x1c0] sm:$0xff]
    %v2334 = vld [vmem:[#allocation2 + $0x1c8] sm:$0xff]
    %v2335 = vld [vmem:[#allocation2 + $0x1d0] sm:$0xff]
    %v2336 = vld [vmem:[#allocation2 + $0x1d8] sm:$0xff]
    %v2337 = vld [vmem:[#allocation2 + $0x1e0] sm:$0xff]
    %v2338 = vld [vmem:[#allocation2 + $0x1e8] sm:$0xff]
    %v2339 = vld [vmem:[#allocation2 + $0x1f0] sm:$0xff]
    %v2340 = vld [vmem:[#allocation2 + $0x1f8] sm:$0xff]
    %v2341 = vld [vmem:[#allocation2 + $0x200] sm:$0xff]
    %v2342 = vld [vmem:[#allocation2 + $0x208] sm:$0xff]
    %v2343 = vld [vmem:[#allocation2 + $0x210] sm:$0xff]
    %v2344 = vld [vmem:[#allocation2 + $0x218] sm:$0xff]
    %v2345 = vld [vmem:[#allocation2 + $0x220] sm:$0xff]
    %v2346 = vld [vmem:[#allocation2 + $0x228] sm:$0xff]
    %v2347 = vld [vmem:[#allocation2 + $0x230] sm:$0xff]
    %v2348 = vld [vmem:[#allocation2 + $0x238] sm:$0xff]
    %v2349 = vld [vmem:[#allocation2 + $0x240] sm:$0xff]
    %v2350 = vld [vmem:[#allocation2 + $0x248] sm:$0xff]
    %v2351 = vld [vmem:[#allocation2 + $0x250] sm:$0xff]
    %v2352 = vld [vmem:[#allocation2 + $0x258] sm:$0xff]
    %v2353 = vld [vmem:[#allocation2 + $0x260] sm:$0xff]
    %v2354 = vld [vmem:[#allocation2 + $0x268] sm:$0xff]
    %v2355 = vld [vmem:[#allocation2 + $0x270] sm:$0xff]
    %v2356 = vld [vmem:[#allocation2 + $0x278] sm:$0xff]
    %v2357 = vld [vmem:[#allocation2 + $0x280] sm:$0xff]
    %s2358 = scalar_lea.vmem %s1, 8
    %v2359 = vld [vmem:[%s2358] sm:$0xf]
    %v2361 = vsel %vm274, %v2196, 0
    %v2364 = vsel %vm274, %v2197, 0
    %v2367 = vsel %vm274, %v2198, 0
    %v2370 = vsel %vm274, %v2199, 0
    %v2373 = vsel %vm274, %v2200, 0
    %v2376 = vsel %vm274, %v2201, 0
    %v2379 = vsel %vm274, %v2202, 0
    %v2382 = vsel %vm274, %v2203, 0
    %v2385 = vsel %vm274, %v2204, 0
    %v2388 = vsel %vm274, %v2205, 0
    %v2391 = vsel %vm274, %v2206, 0
    %v2394 = vsel %vm274, %v2207, 0
    %v2397 = vsel %vm274, %v2208, 0
    %v2400 = vsel %vm274, %v2209, 0
    %v2403 = vsel %vm274, %v2210, 0
    %v2406 = vsel %vm274, %v2211, 0
    %v2409 = vsel %vm274, %v2212, 0
    %v2412 = vsel %vm274, %v2213, 0
    %v2415 = vsel %vm274, %v2214, 0
    %v2418 = vsel %vm274, %v2215, 0
    %v2421 = vsel %vm274, %v2216, 0
    %v2424 = vsel %vm274, %v2217, 0
    %v2427 = vsel %vm274, %v2218, 0
    %v2430 = vsel %vm274, %v2219, 0
    %v2433 = vsel %vm274, %v2220, 0
    %v2436 = vsel %vm274, %v2221, 0
    %v2439 = vsel %vm274, %v2222, 0
    %v2442 = vsel %vm274, %v2223, 0
    %v2445 = vsel %vm274, %v2224, 0
    %v2448 = vsel %vm274, %v2225, 0
    %v2451 = vsel %vm274, %v2226, 0
    %v2454 = vsel %vm274, %v2227, 0
    %v2457 = vsel %vm274, %v2228, 0
    %v2460 = vsel %vm274, %v2229, 0
    %v2463 = vsel %vm274, %v2230, 0
    %v2466 = vsel %vm274, %v2231, 0
    %v2469 = vsel %vm274, %v2232, 0
    %v2472 = vsel %vm274, %v2233, 0
    %v2475 = vsel %vm274, %v2234, 0
    %v2478 = vsel %vm274, %v2235, 0
    %v2481 = vsel %vm274, %v2236, 0
    %v2484 = vsel %vm274, %v2237, 0
    %v2487 = vsel %vm274, %v2238, 0
    %v2490 = vsel %vm274, %v2239, 0
    %v2493 = vsel %vm274, %v2240, 0
    %v2496 = vsel %vm274, %v2241, 0
    %v2499 = vsel %vm274, %v2242, 0
    %v2502 = vsel %vm274, %v2243, 0
    %v2505 = vsel %vm274, %v2244, 0
    %v2508 = vsel %vm274, %v2245, 0
    %v2511 = vsel %vm274, %v2246, 0
    %v2514 = vsel %vm274, %v2247, 0
    %v2517 = vsel %vm274, %v2248, 0
    %v2520 = vsel %vm274, %v2249, 0
    %v2523 = vsel %vm274, %v2250, 0
    %v2526 = vsel %vm274, %v2251, 0
    %v2529 = vsel %vm274, %v2252, 0
    %v2532 = vsel %vm274, %v2253, 0
    %v2535 = vsel %vm274, %v2254, 0
    %v2538 = vsel %vm274, %v2255, 0
    %v2541 = vsel %vm274, %v2256, 0
    %v2544 = vsel %vm274, %v2257, 0
    %v2547 = vsel %vm274, %v2258, 0
    %v2550 = vsel %vm274, %v2259, 0
    %v2553 = vsel %vm274, %v2260, 0
    %v2556 = vsel %vm274, %v2261, 0
    %v2559 = vsel %vm274, %v2262, 0
    %v2562 = vsel %vm274, %v2263, 0
    %v2565 = vsel %vm274, %v2264, 0
    %v2568 = vsel %vm274, %v2265, 0
    %v2571 = vsel %vm274, %v2266, 0
    %v2574 = vsel %vm274, %v2267, 0
    %v2577 = vsel %vm274, %v2268, 0
    %v2580 = vsel %vm274, %v2269, 0
    %v2583 = vsel %vm274, %v2270, 0
    %v2586 = vsel %vm274, %v2271, 0
    %v2589 = vsel %vm274, %v2272, 0
    %v2592 = vsel %vm274, %v2273, 0
    %v2595 = vsel %vm274, %v2274, 0
    %v2598 = vsel %vm274, %v2275, 0
    %v2601 = vsel %vm274, %v2276, 0
    %v2604 = vsel %vm518, %v2359, 0
    %2606 = vmatprep.subr.mxu0 0.0
    %2607 = vmatpush1.msra.mxu0 %v2604
    %2608 = vmatprep.subr.mxu0 0.0
    %2609 = vmatpush1.msra.mxu0 0.0
    %2610 = vmatprep.subr.mxu0 0.0
    %2611 = vmatpush1.msra.mxu0 0.0
    %2612 = vmatprep.subr.mxu0 0.0
    %2613 = vmatpush1.msra.mxu0 0.0
    %2614 = vmatprep.subr.mxu0 0.0
    %2615 = vmatpush1.msra.mxu0 0.0
    %2616 = vmatprep.subr.mxu0 0.0
    %2617 = vmatpush1.msra.mxu0 0.0
    %2618 = vmatprep.subr.mxu0 0.0
    %2619 = vmatpush1.msra.mxu0 0.0
    %2620 = vmatprep.subr.mxu0 0.0
    %2621 = vmatpush1.msra.mxu0 0.0
    %2622 = vmatprep.subr.mxu0 0.0
    %2623 = vmatpush1.msra.mxu0 0.0
    %2624 = vmatprep.subr.mxu0 0.0
    %2625 = vmatpush1.msra.mxu0 0.0
    %2626 = vmatprep.subr.mxu0 0.0
    %2627 = vmatpush1.msra.mxu0 0.0
    %2628 = vmatprep.subr.mxu0 0.0
    %2629 = vmatpush1.msra.mxu0 0.0
    %2630 = vmatprep.subr.mxu0 0.0
    %2631 = vmatpush1.msra.mxu0 0.0
    %2632 = vmatprep.subr.mxu0 0.0
    %2633 = vmatpush1.msra.mxu0 0.0
    %2634 = vmatprep.subr.mxu0 0.0
    %2635 = vmatpush1.msra.mxu0 0.0
    %2636 = vmatprep.subr.mxu0 0.0
    %2637 = vmatpush1.msra.mxu0 0.0
    %2638 = vmatprep.subr.mxu0 0.0
    %2639 = vmatpush1.msra.mxu0 0.0
    %2640 = vmatprep.subr.mxu0 0.0
    %2641 = vmatpush1.msra.mxu0 0.0
    %2642 = vmatprep.subr.mxu0 0.0
    %2643 = vmatpush1.msra.mxu0 0.0
    %2644 = vmatprep.subr.mxu0 0.0
    %2645 = vmatpush1.msra.mxu0 0.0
    %2646 = vmatprep.subr.mxu0 0.0
    %2647 = vmatpush1.msra.mxu0 0.0
    %2648 = vmatprep.subr.mxu0 0.0
    %2649 = vmatpush1.msra.mxu0 0.0
    %2650 = vmatprep.subr.mxu0 0.0
    %2651 = vmatpush1.msra.mxu0 0.0
    %2652 = vmatprep.subr.mxu0 0.0
    %2653 = vmatpush1.msra.mxu0 0.0
    %2654 = vmatprep.subr.mxu0 0.0
    %2655 = vmatpush1.msra.mxu0 0.0
    %2656 = vmatprep.subr.mxu0 0.0
    %2657 = vmatpush1.msra.mxu0 0.0
    %2658 = vmatprep.subr.mxu0 0.0
    %2659 = vmatpush1.msra.mxu0 0.0
    %2660 = vmatprep.subr.mxu0 0.0
    %2661 = vmatpush1.msra.mxu0 0.0
    %2662 = vmatprep.subr.mxu0 0.0
    %2663 = vmatpush1.msra.mxu0 0.0
    %2664 = vmatprep.subr.mxu0 0.0
    %2665 = vmatpush1.msra.mxu0 0.0
    %2666 = vmatprep.subr.mxu0 0.0
    %2667 = vmatpush1.msra.mxu0 0.0
    %2668 = vmatprep.subr.mxu0 0.0
    %2669 = vmatpush1.msra.mxu0 0.0
    %2670 = vmatprep.mubr.f32.mxu0 0.0
    %2671 = vmatmul.mubr.f32.gmra.mrb[0].mxu0 %v2361
    %v2672 = vpop.f32.mrb[0].mxu0
    %v2673 = vadd.f32 0.0, %v2672
    %v2674 = vpop.f32.mrb[0].mxu0
    %2675 = vmatprep.mubr.f32.mxu0 0.0
    %2676 = vmatmul.mubr.f32.gmra.mrb[0].mxu0 %v2364
    %v2677 = vpop.f32.mrb[0].mxu0
    %v2678 = vadd.f32 0.0, %v2677
    %v2679 = vpop.f32.mrb[0].mxu0
    %2680 = vmatprep.mubr.f32.mxu0 0.0
    %2681 = vmatmul.mubr.f32.gmra.mrb[0].mxu0 %v2367
    %v2682 = vpop.f32.mrb[0].mxu0
    %v2683 = vadd.f32 0.0, %v2682
    %v2684 = vpop.f32.mrb[0].mxu0
    %2685 = vmatprep.mubr.f32.mxu0 0.0
    %2686 = vmatmul.mubr.f32.gmra.mrb[0].mxu0 %v2370
    %v2687 = vpop.f32.mrb[0].mxu0
    %v2688 = vadd.f32 0.0, %v2687
    %v2689 = vpop.f32.mrb[0].mxu0
    %2690 = vmatprep.mubr.f32.mxu0 0.0
    %2691 = vmatmul.mubr.f32.gmra.mrb[0].mxu0 %v2373
    %v2692 = vpop.f32.mrb[0].mxu0
    %v2693 = vadd.f32 0.0, %v2692
    %v2694 = vpop.f32.mrb[0].mxu0
    %2695 = vmatprep.mubr.f32.mxu0 0.0
    %2696 = vmatmul.mubr.f32.gmra.mrb[0].mxu0 %v2376
    %v2697 = vpop.f32.mrb[0].mxu0
    %v2698 = vadd.f32 0.0, %v2697
    %v2699 = vpop.f32.mrb[0].mxu0
    %2700 = vmatprep.mubr.f32.mxu0 0.0
    %2701 = vmatmul.mubr.f32.gmra.mrb[0].mxu0 %v2379
    %v2702 = vpop.f32.mrb[0].mxu0
    %v2703 = vadd.f32 0.0, %v2702
    %v2704 = vpop.f32.mrb[0].mxu0
    %2705 = vmatprep.mubr.f32.mxu0 0.0
    %2706 = vmatmul.mubr.f32.gmra.mrb[0].mxu0 %v2382
    %v2707 = vpop.f32.mrb[0].mxu0
    %v2708 = vadd.f32 0.0, %v2707
    %v2709 = vpop.f32.mrb[0].mxu0
    %2710 = vmatprep.mubr.f32.mxu0 0.0
    %2711 = vmatmul.mubr.f32.gmra.mrb[0].mxu0 %v2385
    %v2712 = vpop.f32.mrb[0].mxu0
    %v2713 = vadd.f32 0.0, %v2712
    %v2714 = vpop.f32.mrb[0].mxu0
    %2715 = vmatprep.mubr.f32.mxu0 0.0
    %2716 = vmatmul.mubr.f32.gmra.mrb[0].mxu0 %v2388
    %v2717 = vpop.f32.mrb[0].mxu0
    %v2718 = vadd.f32 0.0, %v2717
    %v2719 = vpop.f32.mrb[0].mxu0
    %2720 = vmatprep.mubr.f32.mxu0 0.0
    %2721 = vmatmul.mubr.f32.gmra.mrb[0].mxu0 %v2391
    %v2722 = vpop.f32.mrb[0].mxu0
    %v2723 = vadd.f32 0.0, %v2722
    %v2724 = vpop.f32.mrb[0].mxu0
    %2725 = vmatprep.mubr.f32.mxu0 0.0
    %2726 = vmatmul.mubr.f32.gmra.mrb[0].mxu0 %v2394
    %v2727 = vpop.f32.mrb[0].mxu0
    %v2728 = vadd.f32 0.0, %v2727
    %v2729 = vpop.f32.mrb[0].mxu0
    %2730 = vmatprep.mubr.f32.mxu0 0.0
    %2731 = vmatmul.mubr.f32.gmra.mrb[0].mxu0 %v2397
    %v2732 = vpop.f32.mrb[0].mxu0
    %v2733 = vadd.f32 0.0, %v2732
    %v2734 = vpop.f32.mrb[0].mxu0
    %2735 = vmatprep.mubr.f32.mxu0 0.0
    %2736 = vmatmul.mubr.f32.gmra.mrb[0].mxu0 %v2400
    %v2737 = vpop.f32.mrb[0].mxu0
    %v2738 = vadd.f32 0.0, %v2737
    %v2739 = vpop.f32.mrb[0].mxu0
    %2740 = vmatprep.mubr.f32.mxu0 0.0
    %2741 = vmatmul.mubr.f32.gmra.mrb[0].mxu0 %v2403
    %v2742 = vpop.f32.mrb[0].mxu0
    %v2743 = vadd.f32 0.0, %v2742
    %v2744 = vpop.f32.mrb[0].mxu0
    %2745 = vmatprep.mubr.f32.mxu0 0.0
    %2746 = vmatmul.mubr.f32.gmra.mrb[0].mxu0 %v2406
    %v2747 = vpop.f32.mrb[0].mxu0
    %v2748 = vadd.f32 0.0, %v2747
    %v2749 = vpop.f32.mrb[0].mxu0
    %2750 = vmatprep.mubr.f32.mxu0 0.0
    %2751 = vmatmul.mubr.f32.gmra.mrb[0].mxu0 %v2409
    %v2752 = vpop.f32.mrb[0].mxu0
    %v2753 = vadd.f32 0.0, %v2752
    %v2754 = vpop.f32.mrb[0].mxu0
    %2755 = vmatprep.mubr.f32.mxu0 0.0
    %2756 = vmatmul.mubr.f32.gmra.mrb[0].mxu0 %v2412
    %v2757 = vpop.f32.mrb[0].mxu0
    %v2758 = vadd.f32 0.0, %v2757
    %v2759 = vpop.f32.mrb[0].mxu0
    %2760 = vmatprep.mubr.f32.mxu0 0.0
    %2761 = vmatmul.mubr.f32.gmra.mrb[0].mxu0 %v2415
    %v2762 = vpop.f32.mrb[0].mxu0
    %v2763 = vadd.f32 0.0, %v2762
    %v2764 = vpop.f32.mrb[0].mxu0
    %2765 = vmatprep.mubr.f32.mxu0 0.0
    %2766 = vmatmul.mubr.f32.gmra.mrb[0].mxu0 %v2418
    %v2767 = vpop.f32.mrb[0].mxu0
    %v2768 = vadd.f32 0.0, %v2767
    %v2769 = vpop.f32.mrb[0].mxu0
    %2770 = vmatprep.mubr.f32.mxu0 0.0
    %2771 = vmatmul.mubr.f32.gmra.mrb[0].mxu0 %v2421
    %v2772 = vpop.f32.mrb[0].mxu0
    %v2773 = vadd.f32 0.0, %v2772
    %v2774 = vpop.f32.mrb[0].mxu0
    %2775 = vmatprep.mubr.f32.mxu0 0.0
    %2776 = vmatmul.mubr.f32.gmra.mrb[0].mxu0 %v2424
    %v2777 = vpop.f32.mrb[0].mxu0
    %v2778 = vadd.f32 0.0, %v2777
    %v2779 = vpop.f32.mrb[0].mxu0
    %2780 = vmatprep.mubr.f32.mxu0 0.0
    %2781 = vmatmul.mubr.f32.gmra.mrb[0].mxu0 %v2427
    %v2782 = vpop.f32.mrb[0].mxu0
    %v2783 = vadd.f32 0.0, %v2782
    %v2784 = vpop.f32.mrb[0].mxu0
    %2785 = vmatprep.mubr.f32.mxu0 0.0
    %2786 = vmatmul.mubr.f32.gmra.mrb[0].mxu0 %v2430
    %v2787 = vpop.f32.mrb[0].mxu0
    %v2788 = vadd.f32 0.0, %v2787
    %v2789 = vpop.f32.mrb[0].mxu0
    %2790 = vmatprep.mubr.f32.mxu0 0.0
    %2791 = vmatmul.mubr.f32.gmra.mrb[0].mxu0 %v2433
    %v2792 = vpop.f32.mrb[0].mxu0
    %v2793 = vadd.f32 0.0, %v2792
    %v2794 = vpop.f32.mrb[0].mxu0
    %2795 = vmatprep.mubr.f32.mxu0 0.0
    %2796 = vmatmul.mubr.f32.gmra.mrb[0].mxu0 %v2436
    %v2797 = vpop.f32.mrb[0].mxu0
    %v2798 = vadd.f32 0.0, %v2797
    %v2799 = vpop.f32.mrb[0].mxu0
    %2800 = vmatprep.mubr.f32.mxu0 0.0
    %2801 = vmatmul.mubr.f32.gmra.mrb[0].mxu0 %v2439
    %v2802 = vpop.f32.mrb[0].mxu0
    %v2803 = vadd.f32 0.0, %v2802
    %v2804 = vpop.f32.mrb[0].mxu0
    %2805 = vmatprep.mubr.f32.mxu0 0.0
    %2806 = vmatmul.mubr.f32.gmra.mrb[0].mxu0 %v2442
    %v2807 = vpop.f32.mrb[0].mxu0
    %v2808 = vadd.f32 0.0, %v2807
    %v2809 = vpop.f32.mrb[0].mxu0
    %2810 = vmatprep.mubr.f32.mxu0 0.0
    %2811 = vmatmul.mubr.f32.gmra.mrb[0].mxu0 %v2445
    %v2812 = vpop.f32.mrb[0].mxu0
    %v2813 = vadd.f32 0.0, %v2812
    %v2814 = vpop.f32.mrb[0].mxu0
    %2815 = vmatprep.mubr.f32.mxu0 0.0
    %2816 = vmatmul.mubr.f32.gmra.mrb[0].mxu0 %v2448
    %v2817 = vpop.f32.mrb[0].mxu0
    %v2818 = vadd.f32 0.0, %v2817
    %v2819 = vpop.f32.mrb[0].mxu0
    %2820 = vmatprep.mubr.f32.mxu0 0.0
    %2821 = vmatmul.mubr.f32.gmra.mrb[0].mxu0 %v2451
    %v2822 = vpop.f32.mrb[0].mxu0
    %v2823 = vadd.f32 0.0, %v2822
    %v2824 = vpop.f32.mrb[0].mxu0
    %2825 = vmatprep.mubr.f32.mxu0 0.0
    %2826 = vmatmul.mubr.f32.gmra.mrb[0].mxu0 %v2454
    %v2827 = vpop.f32.mrb[0].mxu0
    %v2828 = vadd.f32 0.0, %v2827
    %v2829 = vpop.f32.mrb[0].mxu0
    %2830 = vmatprep.mubr.f32.mxu0 0.0
    %2831 = vmatmul.mubr.f32.gmra.mrb[0].mxu0 %v2457
    %v2832 = vpop.f32.mrb[0].mxu0
    %v2833 = vadd.f32 0.0, %v2832
    %v2834 = vpop.f32.mrb[0].mxu0
    %2835 = vmatprep.mubr.f32.mxu0 0.0
    %2836 = vmatmul.mubr.f32.gmra.mrb[0].mxu0 %v2460
    %v2837 = vpop.f32.mrb[0].mxu0
    %v2838 = vadd.f32 0.0, %v2837
    %v2839 = vpop.f32.mrb[0].mxu0
    %2840 = vmatprep.mubr.f32.mxu0 0.0
    %2841 = vmatmul.mubr.f32.gmra.mrb[0].mxu0 %v2463
    %v2842 = vpop.f32.mrb[0].mxu0
    %v2843 = vadd.f32 0.0, %v2842
    %v2844 = vpop.f32.mrb[0].mxu0
    %2845 = vmatprep.mubr.f32.mxu0 0.0
    %2846 = vmatmul.mubr.f32.gmra.mrb[0].mxu0 %v2466
    %v2847 = vpop.f32.mrb[0].mxu0
    %v2848 = vadd.f32 0.0, %v2847
    %v2849 = vpop.f32.mrb[0].mxu0
    %2850 = vmatprep.mubr.f32.mxu0 0.0
    %2851 = vmatmul.mubr.f32.gmra.mrb[0].mxu0 %v2469
    %v2852 = vpop.f32.mrb[0].mxu0
    %v2853 = vadd.f32 0.0, %v2852
    %v2854 = vpop.f32.mrb[0].mxu0
    %2855 = vmatprep.mubr.f32.mxu0 0.0
    %2856 = vmatmul.mubr.f32.gmra.mrb[0].mxu0 %v2472
    %v2857 = vpop.f32.mrb[0].mxu0
    %v2858 = vadd.f32 0.0, %v2857
    %v2859 = vpop.f32.mrb[0].mxu0
    %2860 = vmatprep.mubr.f32.mxu0 0.0
    %2861 = vmatmul.mubr.f32.gmra.mrb[0].mxu0 %v2475
    %v2862 = vpop.f32.mrb[0].mxu0
    %v2863 = vadd.f32 0.0, %v2862
    %v2864 = vpop.f32.mrb[0].mxu0
    %2865 = vmatprep.mubr.f32.mxu0 0.0
    %2866 = vmatmul.mubr.f32.gmra.mrb[0].mxu0 %v2478
    %v2867 = vpop.f32.mrb[0].mxu0
    %v2868 = vadd.f32 0.0, %v2867
    %v2869 = vpop.f32.mrb[0].mxu0
    %2870 = vmatprep.mubr.f32.mxu0 0.0
    %2871 = vmatmul.mubr.f32.gmra.mrb[0].mxu0 %v2481
    %v2872 = vpop.f32.mrb[0].mxu0
    %v2873 = vadd.f32 0.0, %v2872
    %v2874 = vpop.f32.mrb[0].mxu0
    %2875 = vmatprep.mubr.f32.mxu0 0.0
    %2876 = vmatmul.mubr.f32.gmra.mrb[0].mxu0 %v2484
    %v2877 = vpop.f32.mrb[0].mxu0
    %v2878 = vadd.f32 0.0, %v2877
    %v2879 = vpop.f32.mrb[0].mxu0
    %2880 = vmatprep.mubr.f32.mxu0 0.0
    %2881 = vmatmul.mubr.f32.gmra.mrb[0].mxu0 %v2487
    %v2882 = vpop.f32.mrb[0].mxu0
    %v2883 = vadd.f32 0.0, %v2882
    %v2884 = vpop.f32.mrb[0].mxu0
    %2885 = vmatprep.mubr.f32.mxu0 0.0
    %2886 = vmatmul.mubr.f32.gmra.mrb[0].mxu0 %v2490
    %v2887 = vpop.f32.mrb[0].mxu0
    %v2888 = vadd.f32 0.0, %v2887
    %v2889 = vpop.f32.mrb[0].mxu0
    %2890 = vmatprep.mubr.f32.mxu0 0.0
    %2891 = vmatmul.mubr.f32.gmra.mrb[0].mxu0 %v2493
    %v2892 = vpop.f32.mrb[0].mxu0
    %v2893 = vadd.f32 0.0, %v2892
    %v2894 = vpop.f32.mrb[0].mxu0
    %2895 = vmatprep.mubr.f32.mxu0 0.0
    %2896 = vmatmul.mubr.f32.gmra.mrb[0].mxu0 %v2496
    %v2897 = vpop.f32.mrb[0].mxu0
    %v2898 = vadd.f32 0.0, %v2897
    %v2899 = vpop.f32.mrb[0].mxu0
    %2900 = vmatprep.mubr.f32.mxu0 0.0
    %2901 = vmatmul.mubr.f32.gmra.mrb[0].mxu0 %v2499
    %v2902 = vpop.f32.mrb[0].mxu0
    %v2903 = vadd.f32 0.0, %v2902
    %v2904 = vpop.f32.mrb[0].mxu0
    %2905 = vmatprep.mubr.f32.mxu0 0.0
    %2906 = vmatmul.mubr.f32.gmra.mrb[0].mxu0 %v2502
    %v2907 = vpop.f32.mrb[0].mxu0
    %v2908 = vadd.f32 0.0, %v2907
    %v2909 = vpop.f32.mrb[0].mxu0
    %2910 = vmatprep.mubr.f32.mxu0 0.0
    %2911 = vmatmul.mubr.f32.gmra.mrb[0].mxu0 %v2505
    %v2912 = vpop.f32.mrb[0].mxu0
    %v2913 = vadd.f32 0.0, %v2912
    %v2914 = vpop.f32.mrb[0].mxu0
    %2915 = vmatprep.mubr.f32.mxu0 0.0
    %2916 = vmatmul.mubr.f32.gmra.mrb[0].mxu0 %v2508
    %v2917 = vpop.f32.mrb[0].mxu0
    %v2918 = vadd.f32 0.0, %v2917
    %v2919 = vpop.f32.mrb[0].mxu0
    %2920 = vmatprep.mubr.f32.mxu0 0.0
    %2921 = vmatmul.mubr.f32.gmra.mrb[0].mxu0 %v2511
    %v2922 = vpop.f32.mrb[0].mxu0
    %v2923 = vadd.f32 0.0, %v2922
    %v2924 = vpop.f32.mrb[0].mxu0
    %2925 = vmatprep.mubr.f32.mxu0 0.0
    %2926 = vmatmul.mubr.f32.gmra.mrb[0].mxu0 %v2514
    %v2927 = vpop.f32.mrb[0].mxu0
    %v2928 = vadd.f32 0.0, %v2927
    %v2929 = vpop.f32.mrb[0].mxu0
    %2930 = vmatprep.mubr.f32.mxu0 0.0
    %2931 = vmatmul.mubr.f32.gmra.mrb[0].mxu0 %v2517
    %v2932 = vpop.f32.mrb[0].mxu0
    %v2933 = vadd.f32 0.0, %v2932
    %v2934 = vpop.f32.mrb[0].mxu0
    %2935 = vmatprep.mubr.f32.mxu0 0.0
    %2936 = vmatmul.mubr.f32.gmra.mrb[0].mxu0 %v2520
    %v2937 = vpop.f32.mrb[0].mxu0
    %v2938 = vadd.f32 0.0, %v2937
    %v2939 = vpop.f32.mrb[0].mxu0
    %2940 = vmatprep.mubr.f32.mxu0 0.0
    %2941 = vmatmul.mubr.f32.gmra.mrb[0].mxu0 %v2523
    %v2942 = vpop.f32.mrb[0].mxu0
    %v2943 = vadd.f32 0.0, %v2942
    %v2944 = vpop.f32.mrb[0].mxu0
    %2945 = vmatprep.mubr.f32.mxu0 0.0
    %2946 = vmatmul.mubr.f32.gmra.mrb[0].mxu0 %v2526
    %v2947 = vpop.f32.mrb[0].mxu0
    %v2948 = vadd.f32 0.0, %v2947
    %v2949 = vpop.f32.mrb[0].mxu0
    %2950 = vmatprep.mubr.f32.mxu0 0.0
    %2951 = vmatmul.mubr.f32.gmra.mrb[0].mxu0 %v2529
    %v2952 = vpop.f32.mrb[0].mxu0
    %v2953 = vadd.f32 0.0, %v2952
    %v2954 = vpop.f32.mrb[0].mxu0
    %2955 = vmatprep.mubr.f32.mxu0 0.0
    %2956 = vmatmul.mubr.f32.gmra.mrb[0].mxu0 %v2532
    %v2957 = vpop.f32.mrb[0].mxu0
    %v2958 = vadd.f32 0.0, %v2957
    %v2959 = vpop.f32.mrb[0].mxu0
    %2960 = vmatprep.mubr.f32.mxu0 0.0
    %2961 = vmatmul.mubr.f32.gmra.mrb[0].mxu0 %v2535
    %v2962 = vpop.f32.mrb[0].mxu0
    %v2963 = vadd.f32 0.0, %v2962
    %v2964 = vpop.f32.mrb[0].mxu0
    %2965 = vmatprep.mubr.f32.mxu0 0.0
    %2966 = vmatmul.mubr.f32.gmra.mrb[0].mxu0 %v2538
    %v2967 = vpop.f32.mrb[0].mxu0
    %v2968 = vadd.f32 0.0, %v2967
    %v2969 = vpop.f32.mrb[0].mxu0
    %2970 = vmatprep.mubr.f32.mxu0 0.0
    %2971 = vmatmul.mubr.f32.gmra.mrb[0].mxu0 %v2541
    %v2972 = vpop.f32.mrb[0].mxu0
    %v2973 = vadd.f32 0.0, %v2972
    %v2974 = vpop.f32.mrb[0].mxu0
    %2975 = vmatprep.mubr.f32.mxu0 0.0
    %2976 = vmatmul.mubr.f32.gmra.mrb[0].mxu0 %v2544
    %v2977 = vpop.f32.mrb[0].mxu0
    %v2978 = vadd.f32 0.0, %v2977
    %v2979 = vpop.f32.mrb[0].mxu0
    %2980 = vmatprep.mubr.f32.mxu0 0.0
    %2981 = vmatmul.mubr.f32.gmra.mrb[0].mxu0 %v2547
    %v2982 = vpop.f32.mrb[0].mxu0
    %v2983 = vadd.f32 0.0, %v2982
    %v2984 = vpop.f32.mrb[0].mxu0
    %2985 = vmatprep.mubr.f32.mxu0 0.0
    %2986 = vmatmul.mubr.f32.gmra.mrb[0].mxu0 %v2550
    %v2987 = vpop.f32.mrb[0].mxu0
    %v2988 = vadd.f32 0.0, %v2987
    %v2989 = vpop.f32.mrb[0].mxu0
    %2990 = vmatprep.mubr.f32.mxu0 0.0
    %2991 = vmatmul.mubr.f32.gmra.mrb[0].mxu0 %v2553
    %v2992 = vpop.f32.mrb[0].mxu0
    %v2993 = vadd.f32 0.0, %v2992
    %v2994 = vpop.f32.mrb[0].mxu0
    %2995 = vmatprep.mubr.f32.mxu0 0.0
    %2996 = vmatmul.mubr.f32.gmra.mrb[0].mxu0 %v2556
    %v2997 = vpop.f32.mrb[0].mxu0
    %v2998 = vadd.f32 0.0, %v2997
    %v2999 = vpop.f32.mrb[0].mxu0
    %3000 = vmatprep.mubr.f32.mxu0 0.0
    %3001 = vmatmul.mubr.f32.gmra.mrb[0].mxu0 %v2559
    %v3002 = vpop.f32.mrb[0].mxu0
    %v3003 = vadd.f32 0.0, %v3002
    %v3004 = vpop.f32.mrb[0].mxu0
    %3005 = vmatprep.mubr.f32.mxu0 0.0
    %3006 = vmatmul.mubr.f32.gmra.mrb[0].mxu0 %v2562
    %v3007 = vpop.f32.mrb[0].mxu0
    %v3008 = vadd.f32 0.0, %v3007
    %v3009 = vpop.f32.mrb[0].mxu0
    %3010 = vmatprep.mubr.f32.mxu0 0.0
    %3011 = vmatmul.mubr.f32.gmra.mrb[0].mxu0 %v2565
    %v3012 = vpop.f32.mrb[0].mxu0
    %v3013 = vadd.f32 0.0, %v3012
    %v3014 = vpop.f32.mrb[0].mxu0
    %3015 = vmatprep.mubr.f32.mxu0 0.0
    %3016 = vmatmul.mubr.f32.gmra.mrb[0].mxu0 %v2568
    %v3017 = vpop.f32.mrb[0].mxu0
    %v3018 = vadd.f32 0.0, %v3017
    %v3019 = vpop.f32.mrb[0].mxu0
    %3020 = vmatprep.mubr.f32.mxu0 0.0
    %3021 = vmatmul.mubr.f32.gmra.mrb[0].mxu0 %v2571
    %v3022 = vpop.f32.mrb[0].mxu0
    %v3023 = vadd.f32 0.0, %v3022
    %v3024 = vpop.f32.mrb[0].mxu0
    %3025 = vmatprep.mubr.f32.mxu0 0.0
    %3026 = vmatmul.mubr.f32.gmra.mrb[0].mxu0 %v2574
    %v3027 = vpop.f32.mrb[0].mxu0
    %v3028 = vadd.f32 0.0, %v3027
    %v3029 = vpop.f32.mrb[0].mxu0
    %3030 = vmatprep.mubr.f32.mxu0 0.0
    %3031 = vmatmul.mubr.f32.gmra.mrb[0].mxu0 %v2577
    %v3032 = vpop.f32.mrb[0].mxu0
    %v3033 = vadd.f32 0.0, %v3032
    %v3034 = vpop.f32.mrb[0].mxu0
    %3035 = vmatprep.mubr.f32.mxu0 0.0
    %3036 = vmatmul.mubr.f32.gmra.mrb[0].mxu0 %v2580
    %v3037 = vpop.f32.mrb[0].mxu0
    %v3038 = vadd.f32 0.0, %v3037
    %v3039 = vpop.f32.mrb[0].mxu0
    %3040 = vmatprep.mubr.f32.mxu0 0.0
    %3041 = vmatmul.mubr.f32.gmra.mrb[0].mxu0 %v2583
    %v3042 = vpop.f32.mrb[0].mxu0
    %v3043 = vadd.f32 0.0, %v3042
    %v3044 = vpop.f32.mrb[0].mxu0
    %3045 = vmatprep.mubr.f32.mxu0 0.0
    %3046 = vmatmul.mubr.f32.gmra.mrb[0].mxu0 %v2586
    %v3047 = vpop.f32.mrb[0].mxu0
    %v3048 = vadd.f32 0.0, %v3047
    %v3049 = vpop.f32.mrb[0].mxu0
    %3050 = vmatprep.mubr.f32.mxu0 0.0
    %3051 = vmatmul.mubr.f32.gmra.mrb[0].mxu0 %v2589
    %v3052 = vpop.f32.mrb[0].mxu0
    %v3053 = vadd.f32 0.0, %v3052
    %v3054 = vpop.f32.mrb[0].mxu0
    %3055 = vmatprep.mubr.f32.mxu0 0.0
    %3056 = vmatmul.mubr.f32.gmra.mrb[0].mxu0 %v2592
    %v3057 = vpop.f32.mrb[0].mxu0
    %v3058 = vadd.f32 0.0, %v3057
    %v3059 = vpop.f32.mrb[0].mxu0
    %3060 = vmatprep.mubr.f32.mxu0 0.0
    %3061 = vmatmul.mubr.f32.gmra.mrb[0].mxu0 %v2595
    %v3062 = vpop.f32.mrb[0].mxu0
    %v3063 = vadd.f32 0.0, %v3062
    %v3064 = vpop.f32.mrb[0].mxu0
    %3065 = vmatprep.mubr.f32.mxu0 0.0
    %3066 = vmatmul.mubr.f32.gmra.mrb[0].mxu0 %v2598
    %v3067 = vpop.f32.mrb[0].mxu0
    %v3068 = vadd.f32 0.0, %v3067
    %v3069 = vpop.f32.mrb[0].mxu0
    %3070 = vmatprep.mubr.f32.mxu0 0.0
    %3071 = vmatmul.mubr.f32.gmra.mrb[0].mxu0 %v2601
    %v3072 = vpop.f32.mrb[0].mxu0
    %v3073 = vadd.f32 0.0, %v3072
    %v3074 = vpop.f32.mrb[0].mxu0
    %3075 = vdwg.mxu0
    %v3076 = vadd.f32 %v2277, %v2673
    %v3077 = vadd.f32 %v2278, %v2678
    %v3078 = vadd.f32 %v2279, %v2683
    %v3079 = vadd.f32 %v2280, %v2688
    %v3080 = vadd.f32 %v2281, %v2693
    %v3081 = vadd.f32 %v2282, %v2698
    %v3082 = vadd.f32 %v2283, %v2703
    %v3083 = vadd.f32 %v2284, %v2708
    %v3084 = vadd.f32 %v2285, %v2713
    %v3085 = vadd.f32 %v2286, %v2718
    %v3086 = vadd.f32 %v2287, %v2723
    %v3087 = vadd.f32 %v2288, %v2728
    %v3088 = vadd.f32 %v2289, %v2733
    %v3089 = vadd.f32 %v2290, %v2738
    %v3090 = vadd.f32 %v2291, %v2743
    %v3091 = vadd.f32 %v2292, %v2748
    %v3092 = vadd.f32 %v2293, %v2753
    %v3093 = vadd.f32 %v2294, %v2758
    %v3094 = vadd.f32 %v2295, %v2763
    %v3095 = vadd.f32 %v2296, %v2768
    %v3096 = vadd.f32 %v2297, %v2773
    %v3097 = vadd.f32 %v2298, %v2778
    %v3098 = vadd.f32 %v2299, %v2783
    %v3099 = vadd.f32 %v2300, %v2788
    %v3100 = vadd.f32 %v2301, %v2793
    %v3101 = vadd.f32 %v2302, %v2798
    %v3102 = vadd.f32 %v2303, %v2803
    %v3103 = vadd.f32 %v2304, %v2808
    %v3104 = vadd.f32 %v2305, %v2813
    %v3105 = vadd.f32 %v2306, %v2818
    %v3106 = vadd.f32 %v2307, %v2823
    %v3107 = vadd.f32 %v2308, %v2828
    %v3108 = vadd.f32 %v2309, %v2833
    %v3109 = vadd.f32 %v2310, %v2838
    %v3110 = vadd.f32 %v2311, %v2843
    %v3111 = vadd.f32 %v2312, %v2848
    %v3112 = vadd.f32 %v2313, %v2853
    %v3113 = vadd.f32 %v2314, %v2858
    %v3114 = vadd.f32 %v2315, %v2863
    %v3115 = vadd.f32 %v2316, %v2868
    %v3116 = vadd.f32 %v2317, %v2873
    %v3117 = vadd.f32 %v2318, %v2878
    %v3118 = vadd.f32 %v2319, %v2883
    %v3119 = vadd.f32 %v2320, %v2888
    %v3120 = vadd.f32 %v2321, %v2893
    %v3121 = vadd.f32 %v2322, %v2898
    %v3122 = vadd.f32 %v2323, %v2903
    %v3123 = vadd.f32 %v2324, %v2908
    %v3124 = vadd.f32 %v2325, %v2913
    %v3125 = vadd.f32 %v2326, %v2918
    %v3126 = vadd.f32 %v2327, %v2923
    %v3127 = vadd.f32 %v2328, %v2928
    %v3128 = vadd.f32 %v2329, %v2933
    %v3129 = vadd.f32 %v2330, %v2938
    %v3130 = vadd.f32 %v2331, %v2943
    %v3131 = vadd.f32 %v2332, %v2948
    %v3132 = vadd.f32 %v2333, %v2953
    %v3133 = vadd.f32 %v2334, %v2958
    %v3134 = vadd.f32 %v2335, %v2963
    %v3135 = vadd.f32 %v2336, %v2968
    %v3136 = vadd.f32 %v2337, %v2973
    %v3137 = vadd.f32 %v2338, %v2978
    %v3138 = vadd.f32 %v2339, %v2983
    %v3139 = vadd.f32 %v2340, %v2988
    %v3140 = vadd.f32 %v2341, %v2993
    %v3141 = vadd.f32 %v2342, %v2998
    %v3142 = vadd.f32 %v2343, %v3003
    %v3143 = vadd.f32 %v2344, %v3008
    %v3144 = vadd.f32 %v2345, %v3013
    %v3145 = vadd.f32 %v2346, %v3018
    %v3146 = vadd.f32 %v2347, %v3023
    %v3147 = vadd.f32 %v2348, %v3028
    %v3148 = vadd.f32 %v2349, %v3033
    %v3149 = vadd.f32 %v2350, %v3038
    %v3150 = vadd.f32 %v2351, %v3043
    %v3151 = vadd.f32 %v2352, %v3048
    %v3152 = vadd.f32 %v2353, %v3053
    %v3153 = vadd.f32 %v2354, %v3058
    %v3154 = vadd.f32 %v2355, %v3063
    %v3155 = vadd.f32 %v2356, %v3068
    %v3156 = vadd.f32 %v2357, %v3073
    %3157 = vst [vmem:[#allocation2] sm:$0xff] %v3076
    %3158 = vst [vmem:[#allocation2 + $0x8] sm:$0xff] %v3077
    %3159 = vst [vmem:[#allocation2 + $0x10] sm:$0xff] %v3078
    %3160 = vst [vmem:[#allocation2 + $0x18] sm:$0xff] %v3079
    %3161 = vst [vmem:[#allocation2 + $0x20] sm:$0xff] %v3080
    %3162 = vst [vmem:[#allocation2 + $0x28] sm:$0xff] %v3081
    %3163 = vst [vmem:[#allocation2 + $0x30] sm:$0xff] %v3082
    %3164 = vst [vmem:[#allocation2 + $0x38] sm:$0xff] %v3083
    %3165 = vst [vmem:[#allocation2 + $0x40] sm:$0xff] %v3084
    %3166 = vst [vmem:[#allocation2 + $0x48] sm:$0xff] %v3085
    %3167 = vst [vmem:[#allocation2 + $0x50] sm:$0xff] %v3086
    %3168 = vst [vmem:[#allocation2 + $0x58] sm:$0xff] %v3087
    %3169 = vst [vmem:[#allocation2 + $0x60] sm:$0xff] %v3088
    %3170 = vst [vmem:[#allocation2 + $0x68] sm:$0xff] %v3089
    %3171 = vst [vmem:[#allocation2 + $0x70] sm:$0xff] %v3090
    %3172 = vst [vmem:[#allocation2 + $0x78] sm:$0xff] %v3091
    %3173 = vst [vmem:[#allocation2 + $0x80] sm:$0xff] %v3092
    %3174 = vst [vmem:[#allocation2 + $0x88] sm:$0xff] %v3093
    %3175 = vst [vmem:[#allocation2 + $0x90] sm:$0xff] %v3094
    %3176 = vst [vmem:[#allocation2 + $0x98] sm:$0xff] %v3095
    %3177 = vst [vmem:[#allocation2 + $0xa0] sm:$0xff] %v3096
    %3178 = vst [vmem:[#allocation2 + $0xa8] sm:$0xff] %v3097
    %3179 = vst [vmem:[#allocation2 + $0xb0] sm:$0xff] %v3098
    %3180 = vst [vmem:[#allocation2 + $0xb8] sm:$0xff] %v3099
    %3181 = vst [vmem:[#allocation2 + $0xc0] sm:$0xff] %v3100
    %3182 = vst [vmem:[#allocation2 + $0xc8] sm:$0xff] %v3101
    %3183 = vst [vmem:[#allocation2 + $0xd0] sm:$0xff] %v3102
    %3184 = vst [vmem:[#allocation2 + $0xd8] sm:$0xff] %v3103
    %3185 = vst [vmem:[#allocation2 + $0xe0] sm:$0xff] %v3104
    %3186 = vst [vmem:[#allocation2 + $0xe8] sm:$0xff] %v3105
    %3187 = vst [vmem:[#allocation2 + $0xf0] sm:$0xff] %v3106
    %3188 = vst [vmem:[#allocation2 + $0xf8] sm:$0xff] %v3107
    %3189 = vst [vmem:[#allocation2 + $0x100] sm:$0xff] %v3108
    %3190 = vst [vmem:[#allocation2 + $0x108] sm:$0xff] %v3109
    %3191 = vst [vmem:[#allocation2 + $0x110] sm:$0xff] %v3110
    %3192 = vst [vmem:[#allocation2 + $0x118] sm:$0xff] %v3111
    %3193 = vst [vmem:[#allocation2 + $0x120] sm:$0xff] %v3112
    %3194 = vst [vmem:[#allocation2 + $0x128] sm:$0xff] %v3113
    %3195 = vst [vmem:[#allocation2 + $0x130] sm:$0xff] %v3114
    %3196 = vst [vmem:[#allocation2 + $0x138] sm:$0xff] %v3115
    %3197 = vst [vmem:[#allocation2 + $0x140] sm:$0xff] %v3116
    %3198 = vst [vmem:[#allocation2 + $0x148] sm:$0xff] %v3117
    %3199 = vst [vmem:[#allocation2 + $0x150] sm:$0xff] %v3118
    %3200 = vst [vmem:[#allocation2 + $0x158] sm:$0xff] %v3119
    %3201 = vst [vmem:[#allocation2 + $0x160] sm:$0xff] %v3120
    %3202 = vst [vmem:[#allocation2 + $0x168] sm:$0xff] %v3121
    %3203 = vst [vmem:[#allocation2 + $0x170] sm:$0xff] %v3122
    %3204 = vst [vmem:[#allocation2 + $0x178] sm:$0xff] %v3123
    %3205 = vst [vmem:[#allocation2 + $0x180] sm:$0xff] %v3124
    %3206 = vst [vmem:[#allocation2 + $0x188] sm:$0xff] %v3125
    %3207 = vst [vmem:[#allocation2 + $0x190] sm:$0xff] %v3126
    %3208 = vst [vmem:[#allocation2 + $0x198] sm:$0xff] %v3127
    %3209 = vst [vmem:[#allocation2 + $0x1a0] sm:$0xff] %v3128
    %3210 = vst [vmem:[#allocation2 + $0x1a8] sm:$0xff] %v3129
    %3211 = vst [vmem:[#allocation2 + $0x1b0] sm:$0xff] %v3130
    %3212 = vst [vmem:[#allocation2 + $0x1b8] sm:$0xff] %v3131
    %3213 = vst [vmem:[#allocation2 + $0x1c0] sm:$0xff] %v3132
    %3214 = vst [vmem:[#allocation2 + $0x1c8] sm:$0xff] %v3133
    %3215 = vst [vmem:[#allocation2 + $0x1d0] sm:$0xff] %v3134
    %3216 = vst [vmem:[#allocation2 + $0x1d8] sm:$0xff] %v3135
    %3217 = vst [vmem:[#allocation2 + $0x1e0] sm:$0xff] %v3136
    %3218 = vst [vmem:[#allocation2 + $0x1e8] sm:$0xff] %v3137
    %3219 = vst [vmem:[#allocation2 + $0x1f0] sm:$0xff] %v3138
    %3220 = vst [vmem:[#allocation2 + $0x1f8] sm:$0xff] %v3139
    %3221 = vst [vmem:[#allocation2 + $0x200] sm:$0xff] %v3140
    %3222 = vst [vmem:[#allocation2 + $0x208] sm:$0xff] %v3141
    %3223 = vst [vmem:[#allocation2 + $0x210] sm:$0xff] %v3142
    %3224 = vst [vmem:[#allocation2 + $0x218] sm:$0xff] %v3143
    %3225 = vst [vmem:[#allocation2 + $0x220] sm:$0xff] %v3144
    %3226 = vst [vmem:[#allocation2 + $0x228] sm:$0xff] %v3145
    %3227 = vst [vmem:[#allocation2 + $0x230] sm:$0xff] %v3146
    %3228 = vst [vmem:[#allocation2 + $0x238] sm:$0xff] %v3147
    %3229 = vst [vmem:[#allocation2 + $0x240] sm:$0xff] %v3148
    %3230 = vst [vmem:[#allocation2 + $0x248] sm:$0xff] %v3149
    %3231 = vst [vmem:[#allocation2 + $0x250] sm:$0xff] %v3150
    %3232 = vst [vmem:[#allocation2 + $0x258] sm:$0xff] %v3151
    %3233 = vst [vmem:[#allocation2 + $0x260] sm:$0xff] %v3152
    %3234 = vst [vmem:[#allocation2 + $0x268] sm:$0xff] %v3153
    %3235 = vst [vmem:[#allocation2 + $0x270] sm:$0xff] %v3154
    %3236 = vst [vmem:[#allocation2 + $0x278] sm:$0xff] %v3155
    %3237 = vst [vmem:[#allocation2 + $0x280] sm:$0xff] %v3156
    %v3238 = vld [vmem:[%s0 + $0x12] sm:$0xff]
    %v3239 = vld [vmem:[%s0 + $0x1a] sm:$0xff]
    %v3240 = vld [vmem:[%s0 + $0x22] sm:$0xff]
    %v3241 = vld [vmem:[%s0 + $0x2a] sm:$0xff]
    %v3242 = vld [vmem:[%s0 + $0x32] sm:$0xff]
    %v3243 = vld [vmem:[%s0 + $0x3a] sm:$0xff]
    %v3244 = vld [vmem:[%s0 + $0x42] sm:$0xff]
    %v3245 = vld [vmem:[%s0 + $0x4a] sm:$0xff]
    %v3246 = vld [vmem:[%s0 + $0x52] sm:$0xff]
    %v3247 = vld [vmem:[%s0 + $0x5a] sm:$0xff]
    %v3248 = vld [vmem:[%s0 + $0x62] sm:$0xff]
    %v3249 = vld [vmem:[%s0 + $0x6a] sm:$0xff]
    %v3250 = vld [vmem:[%s0 + $0x72] sm:$0xff]
    %v3251 = vld [vmem:[%s0 + $0x7a] sm:$0xff]
    %v3252 = vld [vmem:[%s0 + $0x82] sm:$0xff]
    %v3253 = vld [vmem:[%s0 + $0x8a] sm:$0xff]
    %v3254 = vld [vmem:[%s0 + $0x92] sm:$0xff]
    %v3255 = vld [vmem:[%s0 + $0x9a] sm:$0xff]
    %v3256 = vld [vmem:[%s0 + $0xa2] sm:$0xff]
    %v3257 = vld [vmem:[%s0 + $0xaa] sm:$0xff]
    %v3258 = vld [vmem:[%s0 + $0xb2] sm:$0xff]
    %v3259 = vld [vmem:[%s0 + $0xba] sm:$0xff]
    %v3260 = vld [vmem:[%s0 + $0xc2] sm:$0xff]
    %v3261 = vld [vmem:[%s0 + $0xca] sm:$0xff]
    %v3262 = vld [vmem:[%s0 + $0xd2] sm:$0xff]
    %v3263 = vld [vmem:[%s0 + $0xda] sm:$0xff]
    %v3264 = vld [vmem:[%s0 + $0xe2] sm:$0xff]
    %v3265 = vld [vmem:[%s0 + $0xea] sm:$0xff]
    %v3266 = vld [vmem:[%s0 + $0xf2] sm:$0xff]
    %v3267 = vld [vmem:[%s0 + $0xfa] sm:$0xff]
    %v3268 = vld [vmem:[%s0 + $0x102] sm:$0xff]
    %v3269 = vld [vmem:[%s0 + $0x10a] sm:$0xff]
    %v3270 = vld [vmem:[%s0 + $0x112] sm:$0xff]
    %v3271 = vld [vmem:[%s0 + $0x11a] sm:$0xff]
    %v3272 = vld [vmem:[%s0 + $0x122] sm:$0xff]
    %v3273 = vld [vmem:[%s0 + $0x12a] sm:$0xff]
    %v3274 = vld [vmem:[%s0 + $0x132] sm:$0xff]
    %v3275 = vld [vmem:[%s0 + $0x13a] sm:$0xff]
    %v3276 = vld [vmem:[%s0 + $0x142] sm:$0xff]
    %v3277 = vld [vmem:[%s0 + $0x14a] sm:$0xff]
    %v3278 = vld [vmem:[%s0 + $0x152] sm:$0xff]
    %v3279 = vld [vmem:[%s0 + $0x15a] sm:$0xff]
    %v3280 = vld [vmem:[%s0 + $0x162] sm:$0xff]
    %v3281 = vld [vmem:[%s0 + $0x16a] sm:$0xff]
    %v3282 = vld [vmem:[%s0 + $0x172] sm:$0xff]
    %v3283 = vld [vmem:[%s0 + $0x17a] sm:$0xff]
    %v3284 = vld [vmem:[%s0 + $0x182] sm:$0xff]
    %v3285 = vld [vmem:[%s0 + $0x18a] sm:$0xff]
    %v3286 = vld [vmem:[%s0 + $0x192] sm:$0xff]
    %v3287 = vld [vmem:[%s0 + $0x19a] sm:$0xff]
    %v3288 = vld [vmem:[%s0 + $0x1a2] sm:$0xff]
    %v3289 = vld [vmem:[%s0 + $0x1aa] sm:$0xff]
    %v3290 = vld [vmem:[%s0 + $0x1b2] sm:$0xff]
    %v3291 = vld [vmem:[%s0 + $0x1ba] sm:$0xff]
    %v3292 = vld [vmem:[%s0 + $0x1c2] sm:$0xff]
    %v3293 = vld [vmem:[%s0 + $0x1ca] sm:$0xff]
    %v3294 = vld [vmem:[%s0 + $0x1d2] sm:$0xff]
    %v3295 = vld [vmem:[%s0 + $0x1da] sm:$0xff]
    %v3296 = vld [vmem:[%s0 + $0x1e2] sm:$0xff]
    %v3297 = vld [vmem:[%s0 + $0x1ea] sm:$0xff]
    %v3298 = vld [vmem:[%s0 + $0x1f2] sm:$0xff]
    %v3299 = vld [vmem:[%s0 + $0x1fa] sm:$0xff]
    %v3300 = vld [vmem:[%s0 + $0x202] sm:$0xff]
    %v3301 = vld [vmem:[%s0 + $0x20a] sm:$0xff]
    %v3302 = vld [vmem:[%s0 + $0x212] sm:$0xff]
    %v3303 = vld [vmem:[%s0 + $0x21a] sm:$0xff]
    %v3304 = vld [vmem:[%s0 + $0x222] sm:$0xff]
    %v3305 = vld [vmem:[%s0 + $0x22a] sm:$0xff]
    %v3306 = vld [vmem:[%s0 + $0x232] sm:$0xff]
    %v3307 = vld [vmem:[%s0 + $0x23a] sm:$0xff]
    %v3308 = vld [vmem:[%s0 + $0x242] sm:$0xff]
    %v3309 = vld [vmem:[%s0 + $0x24a] sm:$0xff]
    %v3310 = vld [vmem:[%s0 + $0x252] sm:$0xff]
    %v3311 = vld [vmem:[%s0 + $0x25a] sm:$0xff]
    %v3312 = vld [vmem:[%s0 + $0x262] sm:$0xff]
    %v3313 = vld [vmem:[%s0 + $0x26a] sm:$0xff]
    %v3314 = vld [vmem:[%s0 + $0x272] sm:$0xff]
    %v3315 = vld [vmem:[%s0 + $0x27a] sm:$0xff]
    %v3316 = vld [vmem:[%s0 + $0x282] sm:$0xff]
    %v3317 = vld [vmem:[%s0 + $0x28a] sm:$0xff]
    %v3318 = vld [vmem:[%s0 + $0x292] sm:$0xff]
    %v3319 = vld [vmem:[#allocation2] sm:$0xff]
    %v3320 = vld [vmem:[#allocation2 + $0x8] sm:$0xff]
    %v3321 = vld [vmem:[#allocation2 + $0x10] sm:$0xff]
    %v3322 = vld [vmem:[#allocation2 + $0x18] sm:$0xff]
    %v3323 = vld [vmem:[#allocation2 + $0x20] sm:$0xff]
    %v3324 = vld [vmem:[#allocation2 + $0x28] sm:$0xff]
    %v3325 = vld [vmem:[#allocation2 + $0x30] sm:$0xff]
    %v3326 = vld [vmem:[#allocation2 + $0x38] sm:$0xff]
    %v3327 = vld [vmem:[#allocation2 + $0x40] sm:$0xff]
    %v3328 = vld [vmem:[#allocation2 + $0x48] sm:$0xff]
    %v3329 = vld [vmem:[#allocation2 + $0x50] sm:$0xff]
    %v3330 = vld [vmem:[#allocation2 + $0x58] sm:$0xff]
    %v3331 = vld [vmem:[#allocation2 + $0x60] sm:$0xff]
    %v3332 = vld [vmem:[#allocation2 + $0x68] sm:$0xff]
    %v3333 = vld [vmem:[#allocation2 + $0x70] sm:$0xff]
    %v3334 = vld [vmem:[#allocation2 + $0x78] sm:$0xff]
    %v3335 = vld [vmem:[#allocation2 + $0x80] sm:$0xff]
    %v3336 = vld [vmem:[#allocation2 + $0x88] sm:$0xff]
    %v3337 = vld [vmem:[#allocation2 + $0x90] sm:$0xff]
    %v3338 = vld [vmem:[#allocation2 + $0x98] sm:$0xff]
    %v3339 = vld [vmem:[#allocation2 + $0xa0] sm:$0xff]
    %v3340 = vld [vmem:[#allocation2 + $0xa8] sm:$0xff]
    %v3341 = vld [vmem:[#allocation2 + $0xb0] sm:$0xff]
    %v3342 = vld [vmem:[#allocation2 + $0xb8] sm:$0xff]
    %v3343 = vld [vmem:[#allocation2 + $0xc0] sm:$0xff]
    %v3344 = vld [vmem:[#allocation2 + $0xc8] sm:$0xff]
    %v3345 = vld [vmem:[#allocation2 + $0xd0] sm:$0xff]
    %v3346 = vld [vmem:[#allocation2 + $0xd8] sm:$0xff]
    %v3347 = vld [vmem:[#allocation2 + $0xe0] sm:$0xff]
    %v3348 = vld [vmem:[#allocation2 + $0xe8] sm:$0xff]
    %v3349 = vld [vmem:[#allocation2 + $0xf0] sm:$0xff]
    %v3350 = vld [vmem:[#allocation2 + $0xf8] sm:$0xff]
    %v3351 = vld [vmem:[#allocation2 + $0x100] sm:$0xff]
    %v3352 = vld [vmem:[#allocation2 + $0x108] sm:$0xff]
    %v3353 = vld [vmem:[#allocation2 + $0x110] sm:$0xff]
    %v3354 = vld [vmem:[#allocation2 + $0x118] sm:$0xff]
    %v3355 = vld [vmem:[#allocation2 + $0x120] sm:$0xff]
    %v3356 = vld [vmem:[#allocation2 + $0x128] sm:$0xff]
    %v3357 = vld [vmem:[#allocation2 + $0x130] sm:$0xff]
    %v3358 = vld [vmem:[#allocation2 + $0x138] sm:$0xff]
    %v3359 = vld [vmem:[#allocation2 + $0x140] sm:$0xff]
    %v3360 = vld [vmem:[#allocation2 + $0x148] sm:$0xff]
    %v3361 = vld [vmem:[#allocation2 + $0x150] sm:$0xff]
    %v3362 = vld [vmem:[#allocation2 + $0x158] sm:$0xff]
    %v3363 = vld [vmem:[#allocation2 + $0x160] sm:$0xff]
    %v3364 = vld [vmem:[#allocation2 + $0x168] sm:$0xff]
    %v3365 = vld [vmem:[#allocation2 + $0x170] sm:$0xff]
    %v3366 = vld [vmem:[#allocation2 + $0x178] sm:$0xff]
    %v3367 = vld [vmem:[#allocation2 + $0x180] sm:$0xff]
    %v3368 = vld [vmem:[#allocation2 + $0x188] sm:$0xff]
    %v3369 = vld [vmem:[#allocation2 + $0x190] sm:$0xff]
    %v3370 = vld [vmem:[#allocation2 + $0x198] sm:$0xff]
    %v3371 = vld [vmem:[#allocation2 + $0x1a0] sm:$0xff]
    %v3372 = vld [vmem:[#allocation2 + $0x1a8] sm:$0xff]
    %v3373 = vld [vmem:[#allocation2 + $0x1b0] sm:$0xff]
    %v3374 = vld [vmem:[#allocation2 + $0x1b8] sm:$0xff]
    %v3375 = vld [vmem:[#allocation2 + $0x1c0] sm:$0xff]
    %v3376 = vld [vmem:[#allocation2 + $0x1c8] sm:$0xff]
    %v3377 = vld [vmem:[#allocation2 + $0x1d0] sm:$0xff]
    %v3378 = vld [vmem:[#allocation2 + $0x1d8] sm:$0xff]
    %v3379 = vld [vmem:[#allocation2 + $0x1e0] sm:$0xff]
    %v3380 = vld [vmem:[#allocation2 + $0x1e8] sm:$0xff]
    %v3381 = vld [vmem:[#allocation2 + $0x1f0] sm:$0xff]
    %v3382 = vld [vmem:[#allocation2 + $0x1f8] sm:$0xff]
    %v3383 = vld [vmem:[#allocation2 + $0x200] sm:$0xff]
    %v3384 = vld [vmem:[#allocation2 + $0x208] sm:$0xff]
    %v3385 = vld [vmem:[#allocation2 + $0x210] sm:$0xff]
    %v3386 = vld [vmem:[#allocation2 + $0x218] sm:$0xff]
    %v3387 = vld [vmem:[#allocation2 + $0x220] sm:$0xff]
    %v3388 = vld [vmem:[#allocation2 + $0x228] sm:$0xff]
    %v3389 = vld [vmem:[#allocation2 + $0x230] sm:$0xff]
    %v3390 = vld [vmem:[#allocation2 + $0x238] sm:$0xff]
    %v3391 = vld [vmem:[#allocation2 + $0x240] sm:$0xff]
    %v3392 = vld [vmem:[#allocation2 + $0x248] sm:$0xff]
    %v3393 = vld [vmem:[#allocation2 + $0x250] sm:$0xff]
    %v3394 = vld [vmem:[#allocation2 + $0x258] sm:$0xff]
    %v3395 = vld [vmem:[#allocation2 + $0x260] sm:$0xff]
    %v3396 = vld [vmem:[#allocation2 + $0x268] sm:$0xff]
    %v3397 = vld [vmem:[#allocation2 + $0x270] sm:$0xff]
    %v3398 = vld [vmem:[#allocation2 + $0x278] sm:$0xff]
    %v3399 = vld [vmem:[#allocation2 + $0x280] sm:$0xff]
    %s3400 = scalar_lea.vmem %s1, 12
    %v3401 = vld [vmem:[%s3400] sm:$0xf]
    %v3403 = vsel %vm274, %v3238, 0
    %v3406 = vsel %vm274, %v3239, 0
    %v3409 = vsel %vm274, %v3240, 0
    %v3412 = vsel %vm274, %v3241, 0
    %v3415 = vsel %vm274, %v3242, 0
    %v3418 = vsel %vm274, %v3243, 0
    %v3421 = vsel %vm274, %v3244, 0
    %v3424 = vsel %vm274, %v3245, 0
    %v3427 = vsel %vm274, %v3246, 0
    %v3430 = vsel %vm274, %v3247, 0
    %v3433 = vsel %vm274, %v3248, 0
    %v3436 = vsel %vm274, %v3249, 0
    %v3439 = vsel %vm274, %v3250, 0
    %v3442 = vsel %vm274, %v3251, 0
    %v3445 = vsel %vm274, %v3252, 0
    %v3448 = vsel %vm274, %v3253, 0
    %v3451 = vsel %vm274, %v3254, 0
    %v3454 = vsel %vm274, %v3255, 0
    %v3457 = vsel %vm274, %v3256, 0
    %v3460 = vsel %vm274, %v3257, 0
    %v3463 = vsel %vm274, %v3258, 0
    %v3466 = vsel %vm274, %v3259, 0
    %v3469 = vsel %vm274, %v3260, 0
    %v3472 = vsel %vm274, %v3261, 0
    %v3475 = vsel %vm274, %v3262, 0
    %v3478 = vsel %vm274, %v3263, 0
    %v3481 = vsel %vm274, %v3264, 0
    %v3484 = vsel %vm274, %v3265, 0
    %v3487 = vsel %vm274, %v3266, 0
    %v3490 = vsel %vm274, %v3267, 0
    %v3493 = vsel %vm274, %v3268, 0
    %v3496 = vsel %vm274, %v3269, 0
    %v3499 = vsel %vm274, %v3270, 0
    %v3502 = vsel %vm274, %v3271, 0
    %v3505 = vsel %vm274, %v3272, 0
    %v3508 = vsel %vm274, %v3273, 0
    %v3511 = vsel %vm274, %v3274, 0
    %v3514 = vsel %vm274, %v3275, 0
    %v3517 = vsel %vm274, %v3276, 0
    %v3520 = vsel %vm274, %v3277, 0
    %v3523 = vsel %vm274, %v3278, 0
    %v3526 = vsel %vm274, %v3279, 0
    %v3529 = vsel %vm274, %v3280, 0
    %v3532 = vsel %vm274, %v3281, 0
    %v3535 = vsel %vm274, %v3282, 0
    %v3538 = vsel %vm274, %v3283, 0
    %v3541 = vsel %vm274, %v3284, 0
    %v3544 = vsel %vm274, %v3285, 0
    %v3547 = vsel %vm274, %v3286, 0
    %v3550 = vsel %vm274, %v3287, 0
    %v3553 = vsel %vm274, %v3288, 0
    %v3556 = vsel %vm274, %v3289, 0
    %v3559 = vsel %vm274, %v3290, 0
    %v3562 = vsel %vm274, %v3291, 0
    %v3565 = vsel %vm274, %v3292, 0
    %v3568 = vsel %vm274, %v3293, 0
    %v3571 = vsel %vm274, %v3294, 0
    %v3574 = vsel %vm274, %v3295, 0
    %v3577 = vsel %vm274, %v3296, 0
    %v3580 = vsel %vm274, %v3297, 0
    %v3583 = vsel %vm274, %v3298, 0
    %v3586 = vsel %vm274, %v3299, 0
    %v3589 = vsel %vm274, %v3300, 0
    %v3592 = vsel %vm274, %v3301, 0
    %v3595 = vsel %vm274, %v3302, 0
    %v3598 = vsel %vm274, %v3303, 0
    %v3601 = vsel %vm274, %v3304, 0
    %v3604 = vsel %vm274, %v3305, 0
    %v3607 = vsel %vm274, %v3306, 0
    %v3610 = vsel %vm274, %v3307, 0
    %v3613 = vsel %vm274, %v3308, 0
    %v3616 = vsel %vm274, %v3309, 0
    %v3619 = vsel %vm274, %v3310, 0
    %v3622 = vsel %vm274, %v3311, 0
    %v3625 = vsel %vm274, %v3312, 0
    %v3628 = vsel %vm274, %v3313, 0
    %v3631 = vsel %vm274, %v3314, 0
    %v3634 = vsel %vm274, %v3315, 0
    %v3637 = vsel %vm274, %v3316, 0
    %v3640 = vsel %vm274, %v3317, 0
    %v3643 = vsel %vm274, %v3318, 0
    %v3646 = vsel %vm518, %v3401, 0
    %3648 = vmatprep.subr.mxu0 0.0
    %3649 = vmatpush1.msra.mxu0 %v3646
    %3650 = vmatprep.subr.mxu0 0.0
    %3651 = vmatpush1.msra.mxu0 0.0
    %3652 = vmatprep.subr.mxu0 0.0
    %3653 = vmatpush1.msra.mxu0 0.0
    %3654 = vmatprep.subr.mxu0 0.0
    %3655 = vmatpush1.msra.mxu0 0.0
    %3656 = vmatprep.subr.mxu0 0.0
    %3657 = vmatpush1.msra.mxu0 0.0
    %3658 = vmatprep.subr.mxu0 0.0
    %3659 = vmatpush1.msra.mxu0 0.0
    %3660 = vmatprep.subr.mxu0 0.0
    %3661 = vmatpush1.msra.mxu0 0.0
    %3662 = vmatprep.subr.mxu0 0.0
    %3663 = vmatpush1.msra.mxu0 0.0
    %3664 = vmatprep.subr.mxu0 0.0
    %3665 = vmatpush1.msra.mxu0 0.0
    %3666 = vmatprep.subr.mxu0 0.0
    %3667 = vmatpush1.msra.mxu0 0.0
    %3668 = vmatprep.subr.mxu0 0.0
    %3669 = vmatpush1.msra.mxu0 0.0
    %3670 = vmatprep.subr.mxu0 0.0
    %3671 = vmatpush1.msra.mxu0 0.0
    %3672 = vmatprep.subr.mxu0 0.0
    %3673 = vmatpush1.msra.mxu0 0.0
    %3674 = vmatprep.subr.mxu0 0.0
    %3675 = vmatpush1.msra.mxu0 0.0
    %3676 = vmatprep.subr.mxu0 0.0
    %3677 = vmatpush1.msra.mxu0 0.0
    %3678 = vmatprep.subr.mxu0 0.0
    %3679 = vmatpush1.msra.mxu0 0.0
    %3680 = vmatprep.subr.mxu0 0.0
    %3681 = vmatpush1.msra.mxu0 0.0
    %3682 = vmatprep.subr.mxu0 0.0
    %3683 = vmatpush1.msra.mxu0 0.0
    %3684 = vmatprep.subr.mxu0 0.0
    %3685 = vmatpush1.msra.mxu0 0.0
    %3686 = vmatprep.subr.mxu0 0.0
    %3687 = vmatpush1.msra.mxu0 0.0
    %3688 = vmatprep.subr.mxu0 0.0
    %3689 = vmatpush1.msra.mxu0 0.0
    %3690 = vmatprep.subr.mxu0 0.0
    %3691 = vmatpush1.msra.mxu0 0.0
    %3692 = vmatprep.subr.mxu0 0.0
    %3693 = vmatpush1.msra.mxu0 0.0
    %3694 = vmatprep.subr.mxu0 0.0
    %3695 = vmatpush1.msra.mxu0 0.0
    %3696 = vmatprep.subr.mxu0 0.0
    %3697 = vmatpush1.msra.mxu0 0.0
    %3698 = vmatprep.subr.mxu0 0.0
    %3699 = vmatpush1.msra.mxu0 0.0
    %3700 = vmatprep.subr.mxu0 0.0
    %3701 = vmatpush1.msra.mxu0 0.0
    %3702 = vmatprep.subr.mxu0 0.0
    %3703 = vmatpush1.msra.mxu0 0.0
    %3704 = vmatprep.subr.mxu0 0.0
    %3705 = vmatpush1.msra.mxu0 0.0
    %3706 = vmatprep.subr.mxu0 0.0
    %3707 = vmatpush1.msra.mxu0 0.0
    %3708 = vmatprep.subr.mxu0 0.0
    %3709 = vmatpush1.msra.mxu0 0.0
    %3710 = vmatprep.subr.mxu0 0.0
    %3711 = vmatpush1.msra.mxu0 0.0
    %3712 = vmatprep.mubr.f32.mxu0 0.0
    %3713 = vmatmul.mubr.f32.gmra.mrb[0].mxu0 %v3403
    %v3714 = vpop.f32.mrb[0].mxu0
    %v3715 = vadd.f32 0.0, %v3714
    %v3716 = vpop.f32.mrb[0].mxu0
    %3717 = vmatprep.mubr.f32.mxu0 0.0
    %3718 = vmatmul.mubr.f32.gmra.mrb[0].mxu0 %v3406
    %v3719 = vpop.f32.mrb[0].mxu0
    %v3720 = vadd.f32 0.0, %v3719
    %v3721 = vpop.f32.mrb[0].mxu0
    %3722 = vmatprep.mubr.f32.mxu0 0.0
    %3723 = vmatmul.mubr.f32.gmra.mrb[0].mxu0 %v3409
    %v3724 = vpop.f32.mrb[0].mxu0
    %v3725 = vadd.f32 0.0, %v3724
    %v3726 = vpop.f32.mrb[0].mxu0
    %3727 = vmatprep.mubr.f32.mxu0 0.0
    %3728 = vmatmul.mubr.f32.gmra.mrb[0].mxu0 %v3412
    %v3729 = vpop.f32.mrb[0].mxu0
    %v3730 = vadd.f32 0.0, %v3729
    %v3731 = vpop.f32.mrb[0].mxu0
    %3732 = vmatprep.mubr.f32.mxu0 0.0
    %3733 = vmatmul.mubr.f32.gmra.mrb[0].mxu0 %v3415
    %v3734 = vpop.f32.mrb[0].mxu0
    %v3735 = vadd.f32 0.0, %v3734
    %v3736 = vpop.f32.mrb[0].mxu0
    %3737 = vmatprep.mubr.f32.mxu0 0.0
    %3738 = vmatmul.mubr.f32.gmra.mrb[0].mxu0 %v3418
    %v3739 = vpop.f32.mrb[0].mxu0
    %v3740 = vadd.f32 0.0, %v3739
    %v3741 = vpop.f32.mrb[0].mxu0
    %3742 = vmatprep.mubr.f32.mxu0 0.0
    %3743 = vmatmul.mubr.f32.gmra.mrb[0].mxu0 %v3421
    %v3744 = vpop.f32.mrb[0].mxu0
    %v3745 = vadd.f32 0.0, %v3744
    %v3746 = vpop.f32.mrb[0].mxu0
    %3747 = vmatprep.mubr.f32.mxu0 0.0
    %3748 = vmatmul.mubr.f32.gmra.mrb[0].mxu0 %v3424
    %v3749 = vpop.f32.mrb[0].mxu0
    %v3750 = vadd.f32 0.0, %v3749
    %v3751 = vpop.f32.mrb[0].mxu0
    %3752 = vmatprep.mubr.f32.mxu0 0.0
    %3753 = vmatmul.mubr.f32.gmra.mrb[0].mxu0 %v3427
    %v3754 = vpop.f32.mrb[0].mxu0
    %v3755 = vadd.f32 0.0, %v3754
    %v3756 = vpop.f32.mrb[0].mxu0
    %3757 = vmatprep.mubr.f32.mxu0 0.0
    %3758 = vmatmul.mubr.f32.gmra.mrb[0].mxu0 %v3430
    %v3759 = vpop.f32.mrb[0].mxu0
    %v3760 = vadd.f32 0.0, %v3759
    %v3761 = vpop.f32.mrb[0].mxu0
    %3762 = vmatprep.mubr.f32.mxu0 0.0
    %3763 = vmatmul.mubr.f32.gmra.mrb[0].mxu0 %v3433
    %v3764 = vpop.f32.mrb[0].mxu0
    %v3765 = vadd.f32 0.0, %v3764
    %v3766 = vpop.f32.mrb[0].mxu0
    %3767 = vmatprep.mubr.f32.mxu0 0.0
    %3768 = vmatmul.mubr.f32.gmra.mrb[0].mxu0 %v3436
    %v3769 = vpop.f32.mrb[0].mxu0
    %v3770 = vadd.f32 0.0, %v3769
    %v3771 = vpop.f32.mrb[0].mxu0
    %3772 = vmatprep.mubr.f32.mxu0 0.0
    %3773 = vmatmul.mubr.f32.gmra.mrb[0].mxu0 %v3439
    %v3774 = vpop.f32.mrb[0].mxu0
    %v3775 = vadd.f32 0.0, %v3774
    %v3776 = vpop.f32.mrb[0].mxu0
    %3777 = vmatprep.mubr.f32.mxu0 0.0
    %3778 = vmatmul.mubr.f32.gmra.mrb[0].mxu0 %v3442
    %v3779 = vpop.f32.mrb[0].mxu0
    %v3780 = vadd.f32 0.0, %v3779
    %v3781 = vpop.f32.mrb[0].mxu0
    %3782 = vmatprep.mubr.f32.mxu0 0.0
    %3783 = vmatmul.mubr.f32.gmra.mrb[0].mxu0 %v3445
    %v3784 = vpop.f32.mrb[0].mxu0
    %v3785 = vadd.f32 0.0, %v3784
    %v3786 = vpop.f32.mrb[0].mxu0
    %3787 = vmatprep.mubr.f32.mxu0 0.0
    %3788 = vmatmul.mubr.f32.gmra.mrb[0].mxu0 %v3448
    %v3789 = vpop.f32.mrb[0].mxu0
    %v3790 = vadd.f32 0.0, %v3789
    %v3791 = vpop.f32.mrb[0].mxu0
    %3792 = vmatprep.mubr.f32.mxu0 0.0
    %3793 = vmatmul.mubr.f32.gmra.mrb[0].mxu0 %v3451
    %v3794 = vpop.f32.mrb[0].mxu0
    %v3795 = vadd.f32 0.0, %v3794
    %v3796 = vpop.f32.mrb[0].mxu0
    %3797 = vmatprep.mubr.f32.mxu0 0.0
    %3798 = vmatmul.mubr.f32.gmra.mrb[0].mxu0 %v3454
    %v3799 = vpop.f32.mrb[0].mxu0
    %v3800 = vadd.f32 0.0, %v3799
    %v3801 = vpop.f32.mrb[0].mxu0
    %3802 = vmatprep.mubr.f32.mxu0 0.0
    %3803 = vmatmul.mubr.f32.gmra.mrb[0].mxu0 %v3457
    %v3804 = vpop.f32.mrb[0].mxu0
    %v3805 = vadd.f32 0.0, %v3804
    %v3806 = vpop.f32.mrb[0].mxu0
    %3807 = vmatprep.mubr.f32.mxu0 0.0
    %3808 = vmatmul.mubr.f32.gmra.mrb[0].mxu0 %v3460
    %v3809 = vpop.f32.mrb[0].mxu0
    %v3810 = vadd.f32 0.0, %v3809
    %v3811 = vpop.f32.mrb[0].mxu0
    %3812 = vmatprep.mubr.f32.mxu0 0.0
    %3813 = vmatmul.mubr.f32.gmra.mrb[0].mxu0 %v3463
    %v3814 = vpop.f32.mrb[0].mxu0
    %v3815 = vadd.f32 0.0, %v3814
    %v3816 = vpop.f32.mrb[0].mxu0
    %3817 = vmatprep.mubr.f32.mxu0 0.0
    %3818 = vmatmul.mubr.f32.gmra.mrb[0].mxu0 %v3466
    %v3819 = vpop.f32.mrb[0].mxu0
    %v3820 = vadd.f32 0.0, %v3819
    %v3821 = vpop.f32.mrb[0].mxu0
    %3822 = vmatprep.mubr.f32.mxu0 0.0
    %3823 = vmatmul.mubr.f32.gmra.mrb[0].mxu0 %v3469
    %v3824 = vpop.f32.mrb[0].mxu0
    %v3825 = vadd.f32 0.0, %v3824
    %v3826 = vpop.f32.mrb[0].mxu0
    %3827 = vmatprep.mubr.f32.mxu0 0.0
    %3828 = vmatmul.mubr.f32.gmra.mrb[0].mxu0 %v3472
    %v3829 = vpop.f32.mrb[0].mxu0
    %v3830 = vadd.f32 0.0, %v3829
    %v3831 = vpop.f32.mrb[0].mxu0
    %3832 = vmatprep.mubr.f32.mxu0 0.0
    %3833 = vmatmul.mubr.f32.gmra.mrb[0].mxu0 %v3475
    %v3834 = vpop.f32.mrb[0].mxu0
    %v3835 = vadd.f32 0.0, %v3834
    %v3836 = vpop.f32.mrb[0].mxu0
    %3837 = vmatprep.mubr.f32.mxu0 0.0
    %3838 = vmatmul.mubr.f32.gmra.mrb[0].mxu0 %v3478
    %v3839 = vpop.f32.mrb[0].mxu0
    %v3840 = vadd.f32 0.0, %v3839
    %v3841 = vpop.f32.mrb[0].mxu0
    %3842 = vmatprep.mubr.f32.mxu0 0.0
    %3843 = vmatmul.mubr.f32.gmra.mrb[0].mxu0 %v3481
    %v3844 = vpop.f32.mrb[0].mxu0
    %v3845 = vadd.f32 0.0, %v3844
    %v3846 = vpop.f32.mrb[0].mxu0
    %3847 = vmatprep.mubr.f32.mxu0 0.0
    %3848 = vmatmul.mubr.f32.gmra.mrb[0].mxu0 %v3484
    %v3849 = vpop.f32.mrb[0].mxu0
    %v3850 = vadd.f32 0.0, %v3849
    %v3851 = vpop.f32.mrb[0].mxu0
    %3852 = vmatprep.mubr.f32.mxu0 0.0
    %3853 = vmatmul.mubr.f32.gmra.mrb[0].mxu0 %v3487
    %v3854 = vpop.f32.mrb[0].mxu0
    %v3855 = vadd.f32 0.0, %v3854
    %v3856 = vpop.f32.mrb[0].mxu0
    %3857 = vmatprep.mubr.f32.mxu0 0.0
    %3858 = vmatmul.mubr.f32.gmra.mrb[0].mxu0 %v3490
    %v3859 = vpop.f32.mrb[0].mxu0
    %v3860 = vadd.f32 0.0, %v3859
    %v3861 = vpop.f32.mrb[0].mxu0
    %3862 = vmatprep.mubr.f32.mxu0 0.0
    %3863 = vmatmul.mubr.f32.gmra.mrb[0].mxu0 %v3493
    %v3864 = vpop.f32.mrb[0].mxu0
    %v3865 = vadd.f32 0.0, %v3864
    %v3866 = vpop.f32.mrb[0].mxu0
    %3867 = vmatprep.mubr.f32.mxu0 0.0
    %3868 = vmatmul.mubr.f32.gmra.mrb[0].mxu0 %v3496
    %v3869 = vpop.f32.mrb[0].mxu0
    %v3870 = vadd.f32 0.0, %v3869
    %v3871 = vpop.f32.mrb[0].mxu0
    %3872 = vmatprep.mubr.f32.mxu0 0.0
    %3873 = vmatmul.mubr.f32.gmra.mrb[0].mxu0 %v3499
    %v3874 = vpop.f32.mrb[0].mxu0
    %v3875 = vadd.f32 0.0, %v3874
    %v3876 = vpop.f32.mrb[0].mxu0
    %3877 = vmatprep.mubr.f32.mxu0 0.0
    %3878 = vmatmul.mubr.f32.gmra.mrb[0].mxu0 %v3502
    %v3879 = vpop.f32.mrb[0].mxu0
    %v3880 = vadd.f32 0.0, %v3879
    %v3881 = vpop.f32.mrb[0].mxu0
    %3882 = vmatprep.mubr.f32.mxu0 0.0
    %3883 = vmatmul.mubr.f32.gmra.mrb[0].mxu0 %v3505
    %v3884 = vpop.f32.mrb[0].mxu0
    %v3885 = vadd.f32 0.0, %v3884
    %v3886 = vpop.f32.mrb[0].mxu0
    %3887 = vmatprep.mubr.f32.mxu0 0.0
    %3888 = vmatmul.mubr.f32.gmra.mrb[0].mxu0 %v3508
    %v3889 = vpop.f32.mrb[0].mxu0
    %v3890 = vadd.f32 0.0, %v3889
    %v3891 = vpop.f32.mrb[0].mxu0
    %3892 = vmatprep.mubr.f32.mxu0 0.0
    %3893 = vmatmul.mubr.f32.gmra.mrb[0].mxu0 %v3511
    %v3894 = vpop.f32.mrb[0].mxu0
    %v3895 = vadd.f32 0.0, %v3894
    %v3896 = vpop.f32.mrb[0].mxu0
    %3897 = vmatprep.mubr.f32.mxu0 0.0
    %3898 = vmatmul.mubr.f32.gmra.mrb[0].mxu0 %v3514
    %v3899 = vpop.f32.mrb[0].mxu0
    %v3900 = vadd.f32 0.0, %v3899
    %v3901 = vpop.f32.mrb[0].mxu0
    %3902 = vmatprep.mubr.f32.mxu0 0.0
    %3903 = vmatmul.mubr.f32.gmra.mrb[0].mxu0 %v3517
    %v3904 = vpop.f32.mrb[0].mxu0
    %v3905 = vadd.f32 0.0, %v3904
    %v3906 = vpop.f32.mrb[0].mxu0
    %3907 = vmatprep.mubr.f32.mxu0 0.0
    %3908 = vmatmul.mubr.f32.gmra.mrb[0].mxu0 %v3520
    %v3909 = vpop.f32.mrb[0].mxu0
    %v3910 = vadd.f32 0.0, %v3909
    %v3911 = vpop.f32.mrb[0].mxu0
    %3912 = vmatprep.mubr.f32.mxu0 0.0
    %3913 = vmatmul.mubr.f32.gmra.mrb[0].mxu0 %v3523
    %v3914 = vpop.f32.mrb[0].mxu0
    %v3915 = vadd.f32 0.0, %v3914
    %v3916 = vpop.f32.mrb[0].mxu0
    %3917 = vmatprep.mubr.f32.mxu0 0.0
    %3918 = vmatmul.mubr.f32.gmra.mrb[0].mxu0 %v3526
    %v3919 = vpop.f32.mrb[0].mxu0
    %v3920 = vadd.f32 0.0, %v3919
    %v3921 = vpop.f32.mrb[0].mxu0
    %3922 = vmatprep.mubr.f32.mxu0 0.0
    %3923 = vmatmul.mubr.f32.gmra.mrb[0].mxu0 %v3529
    %v3924 = vpop.f32.mrb[0].mxu0
    %v3925 = vadd.f32 0.0, %v3924
    %v3926 = vpop.f32.mrb[0].mxu0
    %3927 = vmatprep.mubr.f32.mxu0 0.0
    %3928 = vmatmul.mubr.f32.gmra.mrb[0].mxu0 %v3532
    %v3929 = vpop.f32.mrb[0].mxu0
    %v3930 = vadd.f32 0.0, %v3929
    %v3931 = vpop.f32.mrb[0].mxu0
    %3932 = vmatprep.mubr.f32.mxu0 0.0
    %3933 = vmatmul.mubr.f32.gmra.mrb[0].mxu0 %v3535
    %v3934 = vpop.f32.mrb[0].mxu0
    %v3935 = vadd.f32 0.0, %v3934
    %v3936 = vpop.f32.mrb[0].mxu0
    %3937 = vmatprep.mubr.f32.mxu0 0.0
    %3938 = vmatmul.mubr.f32.gmra.mrb[0].mxu0 %v3538
    %v3939 = vpop.f32.mrb[0].mxu0
    %v3940 = vadd.f32 0.0, %v3939
    %v3941 = vpop.f32.mrb[0].mxu0
    %3942 = vmatprep.mubr.f32.mxu0 0.0
    %3943 = vmatmul.mubr.f32.gmra.mrb[0].mxu0 %v3541
    %v3944 = vpop.f32.mrb[0].mxu0
    %v3945 = vadd.f32 0.0, %v3944
    %v3946 = vpop.f32.mrb[0].mxu0
    %3947 = vmatprep.mubr.f32.mxu0 0.0
    %3948 = vmatmul.mubr.f32.gmra.mrb[0].mxu0 %v3544
    %v3949 = vpop.f32.mrb[0].mxu0
    %v3950 = vadd.f32 0.0, %v3949
    %v3951 = vpop.f32.mrb[0].mxu0
    %3952 = vmatprep.mubr.f32.mxu0 0.0
    %3953 = vmatmul.mubr.f32.gmra.mrb[0].mxu0 %v3547
    %v3954 = vpop.f32.mrb[0].mxu0
    %v3955 = vadd.f32 0.0, %v3954
    %v3956 = vpop.f32.mrb[0].mxu0
    %3957 = vmatprep.mubr.f32.mxu0 0.0
    %3958 = vmatmul.mubr.f32.gmra.mrb[0].mxu0 %v3550
    %v3959 = vpop.f32.mrb[0].mxu0
    %v3960 = vadd.f32 0.0, %v3959
    %v3961 = vpop.f32.mrb[0].mxu0
    %3962 = vmatprep.mubr.f32.mxu0 0.0
    %3963 = vmatmul.mubr.f32.gmra.mrb[0].mxu0 %v3553
    %v3964 = vpop.f32.mrb[0].mxu0
    %v3965 = vadd.f32 0.0, %v3964
    %v3966 = vpop.f32.mrb[0].mxu0
    %3967 = vmatprep.mubr.f32.mxu0 0.0
    %3968 = vmatmul.mubr.f32.gmra.mrb[0].mxu0 %v3556
    %v3969 = vpop.f32.mrb[0].mxu0
    %v3970 = vadd.f32 0.0, %v3969
    %v3971 = vpop.f32.mrb[0].mxu0
    %3972 = vmatprep.mubr.f32.mxu0 0.0
    %3973 = vmatmul.mubr.f32.gmra.mrb[0].mxu0 %v3559
    %v3974 = vpop.f32.mrb[0].mxu0
    %v3975 = vadd.f32 0.0, %v3974
    %v3976 = vpop.f32.mrb[0].mxu0
    %3977 = vmatprep.mubr.f32.mxu0 0.0
    %3978 = vmatmul.mubr.f32.gmra.mrb[0].mxu0 %v3562
    %v3979 = vpop.f32.mrb[0].mxu0
    %v3980 = vadd.f32 0.0, %v3979
    %v3981 = vpop.f32.mrb[0].mxu0
    %3982 = vmatprep.mubr.f32.mxu0 0.0
    %3983 = vmatmul.mubr.f32.gmra.mrb[0].mxu0 %v3565
    %v3984 = vpop.f32.mrb[0].mxu0
    %v3985 = vadd.f32 0.0, %v3984
    %v3986 = vpop.f32.mrb[0].mxu0
    %3987 = vmatprep.mubr.f32.mxu0 0.0
    %3988 = vmatmul.mubr.f32.gmra.mrb[0].mxu0 %v3568
    %v3989 = vpop.f32.mrb[0].mxu0
    %v3990 = vadd.f32 0.0, %v3989
    %v3991 = vpop.f32.mrb[0].mxu0
    %3992 = vmatprep.mubr.f32.mxu0 0.0
    %3993 = vmatmul.mubr.f32.gmra.mrb[0].mxu0 %v3571
    %v3994 = vpop.f32.mrb[0].mxu0
    %v3995 = vadd.f32 0.0, %v3994
    %v3996 = vpop.f32.mrb[0].mxu0
    %3997 = vmatprep.mubr.f32.mxu0 0.0
    %3998 = vmatmul.mubr.f32.gmra.mrb[0].mxu0 %v3574
    %v3999 = vpop.f32.mrb[0].mxu0
    %v4000 = vadd.f32 0.0, %v3999
    %v4001 = vpop.f32.mrb[0].mxu0
    %4002 = vmatprep.mubr.f32.mxu0 0.0
    %4003 = vmatmul.mubr.f32.gmra.mrb[0].mxu0 %v3577
    %v4004 = vpop.f32.mrb[0].mxu0
    %v4005 = vadd.f32 0.0, %v4004
    %v4006 = vpop.f32.mrb[0].mxu0
    %4007 = vmatprep.mubr.f32.mxu0 0.0
    %4008 = vmatmul.mubr.f32.gmra.mrb[0].mxu0 %v3580
    %v4009 = vpop.f32.mrb[0].mxu0
    %v4010 = vadd.f32 0.0, %v4009
    %v4011 = vpop.f32.mrb[0].mxu0
    %4012 = vmatprep.mubr.f32.mxu0 0.0
    %4013 = vmatmul.mubr.f32.gmra.mrb[0].mxu0 %v3583
    %v4014 = vpop.f32.mrb[0].mxu0
    %v4015 = vadd.f32 0.0, %v4014
    %v4016 = vpop.f32.mrb[0].mxu0
    %4017 = vmatprep.mubr.f32.mxu0 0.0
    %4018 = vmatmul.mubr.f32.gmra.mrb[0].mxu0 %v3586
    %v4019 = vpop.f32.mrb[0].mxu0
    %v4020 = vadd.f32 0.0, %v4019
    %v4021 = vpop.f32.mrb[0].mxu0
    %4022 = vmatprep.mubr.f32.mxu0 0.0
    %4023 = vmatmul.mubr.f32.gmra.mrb[0].mxu0 %v3589
    %v4024 = vpop.f32.mrb[0].mxu0
    %v4025 = vadd.f32 0.0, %v4024
    %v4026 = vpop.f32.mrb[0].mxu0
    %4027 = vmatprep.mubr.f32.mxu0 0.0
    %4028 = vmatmul.mubr.f32.gmra.mrb[0].mxu0 %v3592
    %v4029 = vpop.f32.mrb[0].mxu0
    %v4030 = vadd.f32 0.0, %v4029
    %v4031 = vpop.f32.mrb[0].mxu0
    %4032 = vmatprep.mubr.f32.mxu0 0.0
    %4033 = vmatmul.mubr.f32.gmra.mrb[0].mxu0 %v3595
    %v4034 = vpop.f32.mrb[0].mxu0
    %v4035 = vadd.f32 0.0, %v4034
    %v4036 = vpop.f32.mrb[0].mxu0
    %4037 = vmatprep.mubr.f32.mxu0 0.0
    %4038 = vmatmul.mubr.f32.gmra.mrb[0].mxu0 %v3598
    %v4039 = vpop.f32.mrb[0].mxu0
    %v4040 = vadd.f32 0.0, %v4039
    %v4041 = vpop.f32.mrb[0].mxu0
    %4042 = vmatprep.mubr.f32.mxu0 0.0
    %4043 = vmatmul.mubr.f32.gmra.mrb[0].mxu0 %v3601
    %v4044 = vpop.f32.mrb[0].mxu0
    %v4045 = vadd.f32 0.0, %v4044
    %v4046 = vpop.f32.mrb[0].mxu0
    %4047 = vmatprep.mubr.f32.mxu0 0.0
    %4048 = vmatmul.mubr.f32.gmra.mrb[0].mxu0 %v3604
    %v4049 = vpop.f32.mrb[0].mxu0
    %v4050 = vadd.f32 0.0, %v4049
    %v4051 = vpop.f32.mrb[0].mxu0
    %4052 = vmatprep.mubr.f32.mxu0 0.0
    %4053 = vmatmul.mubr.f32.gmra.mrb[0].mxu0 %v3607
    %v4054 = vpop.f32.mrb[0].mxu0
    %v4055 = vadd.f32 0.0, %v4054
    %v4056 = vpop.f32.mrb[0].mxu0
    %4057 = vmatprep.mubr.f32.mxu0 0.0
    %4058 = vmatmul.mubr.f32.gmra.mrb[0].mxu0 %v3610
    %v4059 = vpop.f32.mrb[0].mxu0
    %v4060 = vadd.f32 0.0, %v4059
    %v4061 = vpop.f32.mrb[0].mxu0
    %4062 = vmatprep.mubr.f32.mxu0 0.0
    %4063 = vmatmul.mubr.f32.gmra.mrb[0].mxu0 %v3613
    %v4064 = vpop.f32.mrb[0].mxu0
    %v4065 = vadd.f32 0.0, %v4064
    %v4066 = vpop.f32.mrb[0].mxu0
    %4067 = vmatprep.mubr.f32.mxu0 0.0
    %4068 = vmatmul.mubr.f32.gmra.mrb[0].mxu0 %v3616
    %v4069 = vpop.f32.mrb[0].mxu0
    %v4070 = vadd.f32 0.0, %v4069
    %v4071 = vpop.f32.mrb[0].mxu0
    %4072 = vmatprep.mubr.f32.mxu0 0.0
    %4073 = vmatmul.mubr.f32.gmra.mrb[0].mxu0 %v3619
    %v4074 = vpop.f32.mrb[0].mxu0
    %v4075 = vadd.f32 0.0, %v4074
    %v4076 = vpop.f32.mrb[0].mxu0
    %4077 = vmatprep.mubr.f32.mxu0 0.0
    %4078 = vmatmul.mubr.f32.gmra.mrb[0].mxu0 %v3622
    %v4079 = vpop.f32.mrb[0].mxu0
    %v4080 = vadd.f32 0.0, %v4079
    %v4081 = vpop.f32.mrb[0].mxu0
    %4082 = vmatprep.mubr.f32.mxu0 0.0
    %4083 = vmatmul.mubr.f32.gmra.mrb[0].mxu0 %v3625
    %v4084 = vpop.f32.mrb[0].mxu0
    %v4085 = vadd.f32 0.0, %v4084
    %v4086 = vpop.f32.mrb[0].mxu0
    %4087 = vmatprep.mubr.f32.mxu0 0.0
    %4088 = vmatmul.mubr.f32.gmra.mrb[0].mxu0 %v3628
    %v4089 = vpop.f32.mrb[0].mxu0
    %v4090 = vadd.f32 0.0, %v4089
    %v4091 = vpop.f32.mrb[0].mxu0
    %4092 = vmatprep.mubr.f32.mxu0 0.0
    %4093 = vmatmul.mubr.f32.gmra.mrb[0].mxu0 %v3631
    %v4094 = vpop.f32.mrb[0].mxu0
    %v4095 = vadd.f32 0.0, %v4094
    %v4096 = vpop.f32.mrb[0].mxu0
    %4097 = vmatprep.mubr.f32.mxu0 0.0
    %4098 = vmatmul.mubr.f32.gmra.mrb[0].mxu0 %v3634
    %v4099 = vpop.f32.mrb[0].mxu0
    %v4100 = vadd.f32 0.0, %v4099
    %v4101 = vpop.f32.mrb[0].mxu0
    %4102 = vmatprep.mubr.f32.mxu0 0.0
    %4103 = vmatmul.mubr.f32.gmra.mrb[0].mxu0 %v3637
    %v4104 = vpop.f32.mrb[0].mxu0
    %v4105 = vadd.f32 0.0, %v4104
    %v4106 = vpop.f32.mrb[0].mxu0
    %4107 = vmatprep.mubr.f32.mxu0 0.0
    %4108 = vmatmul.mubr.f32.gmra.mrb[0].mxu0 %v3640
    %v4109 = vpop.f32.mrb[0].mxu0
    %v4110 = vadd.f32 0.0, %v4109
    %v4111 = vpop.f32.mrb[0].mxu0
    %4112 = vmatprep.mubr.f32.mxu0 0.0
    %4113 = vmatmul.mubr.f32.gmra.mrb[0].mxu0 %v3643
    %v4114 = vpop.f32.mrb[0].mxu0
    %v4115 = vadd.f32 0.0, %v4114
    %v4116 = vpop.f32.mrb[0].mxu0
    %4117 = vdwg.mxu0
    %v4118 = vadd.f32 %v3319, %v3715
    %v4119 = vadd.f32 %v3320, %v3720
    %v4120 = vadd.f32 %v3321, %v3725
    %v4121 = vadd.f32 %v3322, %v3730
    %v4122 = vadd.f32 %v3323, %v3735
    %v4123 = vadd.f32 %v3324, %v3740
    %v4124 = vadd.f32 %v3325, %v3745
    %v4125 = vadd.f32 %v3326, %v3750
    %v4126 = vadd.f32 %v3327, %v3755
    %v4127 = vadd.f32 %v3328, %v3760
    %v4128 = vadd.f32 %v3329, %v3765
    %v4129 = vadd.f32 %v3330, %v3770
    %v4130 = vadd.f32 %v3331, %v3775
    %v4131 = vadd.f32 %v3332, %v3780
    %v4132 = vadd.f32 %v3333, %v3785
    %v4133 = vadd.f32 %v3334, %v3790
    %v4134 = vadd.f32 %v3335, %v3795
    %v4135 = vadd.f32 %v3336, %v3800
    %v4136 = vadd.f32 %v3337, %v3805
    %v4137 = vadd.f32 %v3338, %v3810
    %v4138 = vadd.f32 %v3339, %v3815
    %v4139 = vadd.f32 %v3340, %v3820
    %v4140 = vadd.f32 %v3341, %v3825
    %v4141 = vadd.f32 %v3342, %v3830
    %v4142 = vadd.f32 %v3343, %v3835
    %v4143 = vadd.f32 %v3344, %v3840
    %v4144 = vadd.f32 %v3345, %v3845
    %v4145 = vadd.f32 %v3346, %v3850
    %v4146 = vadd.f32 %v3347, %v3855
    %v4147 = vadd.f32 %v3348, %v3860
    %v4148 = vadd.f32 %v3349, %v3865
    %v4149 = vadd.f32 %v3350, %v3870
    %v4150 = vadd.f32 %v3351, %v3875
    %v4151 = vadd.f32 %v3352, %v3880
    %v4152 = vadd.f32 %v3353, %v3885
    %v4153 = vadd.f32 %v3354, %v3890
    %v4154 = vadd.f32 %v3355, %v3895
    %v4155 = vadd.f32 %v3356, %v3900
    %v4156 = vadd.f32 %v3357, %v3905
    %v4157 = vadd.f32 %v3358, %v3910
    %v4158 = vadd.f32 %v3359, %v3915
    %v4159 = vadd.f32 %v3360, %v3920
    %v4160 = vadd.f32 %v3361, %v3925
    %v4161 = vadd.f32 %v3362, %v3930
    %v4162 = vadd.f32 %v3363, %v3935
    %v4163 = vadd.f32 %v3364, %v3940
    %v4164 = vadd.f32 %v3365, %v3945
    %v4165 = vadd.f32 %v3366, %v3950
    %v4166 = vadd.f32 %v3367, %v3955
    %v4167 = vadd.f32 %v3368, %v3960
    %v4168 = vadd.f32 %v3369, %v3965
    %v4169 = vadd.f32 %v3370, %v3970
    %v4170 = vadd.f32 %v3371, %v3975
    %v4171 = vadd.f32 %v3372, %v3980
    %v4172 = vadd.f32 %v3373, %v3985
    %v4173 = vadd.f32 %v3374, %v3990
    %v4174 = vadd.f32 %v3375, %v3995
    %v4175 = vadd.f32 %v3376, %v4000
    %v4176 = vadd.f32 %v3377, %v4005
    %v4177 = vadd.f32 %v3378, %v4010
    %v4178 = vadd.f32 %v3379, %v4015
    %v4179 = vadd.f32 %v3380, %v4020
    %v4180 = vadd.f32 %v3381, %v4025
    %v4181 = vadd.f32 %v3382, %v4030
    %v4182 = vadd.f32 %v3383, %v4035
    %v4183 = vadd.f32 %v3384, %v4040
    %v4184 = vadd.f32 %v3385, %v4045
    %v4185 = vadd.f32 %v3386, %v4050
    %v4186 = vadd.f32 %v3387, %v4055
    %v4187 = vadd.f32 %v3388, %v4060
    %v4188 = vadd.f32 %v3389, %v4065
    %v4189 = vadd.f32 %v3390, %v4070
    %v4190 = vadd.f32 %v3391, %v4075
    %v4191 = vadd.f32 %v3392, %v4080
    %v4192 = vadd.f32 %v3393, %v4085
    %v4193 = vadd.f32 %v3394, %v4090
    %v4194 = vadd.f32 %v3395, %v4095
    %v4195 = vadd.f32 %v3396, %v4100
    %v4196 = vadd.f32 %v3397, %v4105
    %v4197 = vadd.f32 %v3398, %v4110
    %v4198 = vadd.f32 %v3399, %v4115
    %4199 = vst [vmem:[#allocation2] sm:$0xff] %v4118
    %4200 = vst [vmem:[#allocation2 + $0x8] sm:$0xff] %v4119
    %4201 = vst [vmem:[#allocation2 + $0x10] sm:$0xff] %v4120
    %4202 = vst [vmem:[#allocation2 + $0x18] sm:$0xff] %v4121
    %4203 = vst [vmem:[#allocation2 + $0x20] sm:$0xff] %v4122
    %4204 = vst [vmem:[#allocation2 + $0x28] sm:$0xff] %v4123
    %4205 = vst [vmem:[#allocation2 + $0x30] sm:$0xff] %v4124
    %4206 = vst [vmem:[#allocation2 + $0x38] sm:$0xff] %v4125
    %4207 = vst [vmem:[#allocation2 + $0x40] sm:$0xff] %v4126
    %4208 = vst [vmem:[#allocation2 + $0x48] sm:$0xff] %v4127
    %4209 = vst [vmem:[#allocation2 + $0x50] sm:$0xff] %v4128
    %4210 = vst [vmem:[#allocation2 + $0x58] sm:$0xff] %v4129
    %4211 = vst [vmem:[#allocation2 + $0x60] sm:$0xff] %v4130
    %4212 = vst [vmem:[#allocation2 + $0x68] sm:$0xff] %v4131
    %4213 = vst [vmem:[#allocation2 + $0x70] sm:$0xff] %v4132
    %4214 = vst [vmem:[#allocation2 + $0x78] sm:$0xff] %v4133
    %4215 = vst [vmem:[#allocation2 + $0x80] sm:$0xff] %v4134
    %4216 = vst [vmem:[#allocation2 + $0x88] sm:$0xff] %v4135
    %4217 = vst [vmem:[#allocation2 + $0x90] sm:$0xff] %v4136
    %4218 = vst [vmem:[#allocation2 + $0x98] sm:$0xff] %v4137
    %4219 = vst [vmem:[#allocation2 + $0xa0] sm:$0xff] %v4138
    %4220 = vst [vmem:[#allocation2 + $0xa8] sm:$0xff] %v4139
    %4221 = vst [vmem:[#allocation2 + $0xb0] sm:$0xff] %v4140
    %4222 = vst [vmem:[#allocation2 + $0xb8] sm:$0xff] %v4141
    %4223 = vst [vmem:[#allocation2 + $0xc0] sm:$0xff] %v4142
    %4224 = vst [vmem:[#allocation2 + $0xc8] sm:$0xff] %v4143
    %4225 = vst [vmem:[#allocation2 + $0xd0] sm:$0xff] %v4144
    %4226 = vst [vmem:[#allocation2 + $0xd8] sm:$0xff] %v4145
    %4227 = vst [vmem:[#allocation2 + $0xe0] sm:$0xff] %v4146
    %4228 = vst [vmem:[#allocation2 + $0xe8] sm:$0xff] %v4147
    %4229 = vst [vmem:[#allocation2 + $0xf0] sm:$0xff] %v4148
    %4230 = vst [vmem:[#allocation2 + $0xf8] sm:$0xff] %v4149
    %4231 = vst [vmem:[#allocation2 + $0x100] sm:$0xff] %v4150
    %4232 = vst [vmem:[#allocation2 + $0x108] sm:$0xff] %v4151
    %4233 = vst [vmem:[#allocation2 + $0x110] sm:$0xff] %v4152
    %4234 = vst [vmem:[#allocation2 + $0x118] sm:$0xff] %v4153
    %4235 = vst [vmem:[#allocation2 + $0x120] sm:$0xff] %v4154
    %4236 = vst [vmem:[#allocation2 + $0x128] sm:$0xff] %v4155
    %4237 = vst [vmem:[#allocation2 + $0x130] sm:$0xff] %v4156
    %4238 = vst [vmem:[#allocation2 + $0x138] sm:$0xff] %v4157
    %4239 = vst [vmem:[#allocation2 + $0x140] sm:$0xff] %v4158
    %4240 = vst [vmem:[#allocation2 + $0x148] sm:$0xff] %v4159
    %4241 = vst [vmem:[#allocation2 + $0x150] sm:$0xff] %v4160
    %4242 = vst [vmem:[#allocation2 + $0x158] sm:$0xff] %v4161
    %4243 = vst [vmem:[#allocation2 + $0x160] sm:$0xff] %v4162
    %4244 = vst [vmem:[#allocation2 + $0x168] sm:$0xff] %v4163
    %4245 = vst [vmem:[#allocation2 + $0x170] sm:$0xff] %v4164
    %4246 = vst [vmem:[#allocation2 + $0x178] sm:$0xff] %v4165
    %4247 = vst [vmem:[#allocation2 + $0x180] sm:$0xff] %v4166
    %4248 = vst [vmem:[#allocation2 + $0x188] sm:$0xff] %v4167
    %4249 = vst [vmem:[#allocation2 + $0x190] sm:$0xff] %v4168
    %4250 = vst [vmem:[#allocation2 + $0x198] sm:$0xff] %v4169
    %4251 = vst [vmem:[#allocation2 + $0x1a0] sm:$0xff] %v4170
    %4252 = vst [vmem:[#allocation2 + $0x1a8] sm:$0xff] %v4171
    %4253 = vst [vmem:[#allocation2 + $0x1b0] sm:$0xff] %v4172
    %4254 = vst [vmem:[#allocation2 + $0x1b8] sm:$0xff] %v4173
    %4255 = vst [vmem:[#allocation2 + $0x1c0] sm:$0xff] %v4174
    %4256 = vst [vmem:[#allocation2 + $0x1c8] sm:$0xff] %v4175
    %4257 = vst [vmem:[#allocation2 + $0x1d0] sm:$0xff] %v4176
    %4258 = vst [vmem:[#allocation2 + $0x1d8] sm:$0xff] %v4177
    %4259 = vst [vmem:[#allocation2 + $0x1e0] sm:$0xff] %v4178
    %4260 = vst [vmem:[#allocation2 + $0x1e8] sm:$0xff] %v4179
    %4261 = vst [vmem:[#allocation2 + $0x1f0] sm:$0xff] %v4180
    %4262 = vst [vmem:[#allocation2 + $0x1f8] sm:$0xff] %v4181
    %4263 = vst [vmem:[#allocation2 + $0x200] sm:$0xff] %v4182
    %4264 = vst [vmem:[#allocation2 + $0x208] sm:$0xff] %v4183
    %4265 = vst [vmem:[#allocation2 + $0x210] sm:$0xff] %v4184
    %4266 = vst [vmem:[#allocation2 + $0x218] sm:$0xff] %v4185
    %4267 = vst [vmem:[#allocation2 + $0x220] sm:$0xff] %v4186
    %4268 = vst [vmem:[#allocation2 + $0x228] sm:$0xff] %v4187
    %4269 = vst [vmem:[#allocation2 + $0x230] sm:$0xff] %v4188
    %4270 = vst [vmem:[#allocation2 + $0x238] sm:$0xff] %v4189
    %4271 = vst [vmem:[#allocation2 + $0x240] sm:$0xff] %v4190
    %4272 = vst [vmem:[#allocation2 + $0x248] sm:$0xff] %v4191
    %4273 = vst [vmem:[#allocation2 + $0x250] sm:$0xff] %v4192
    %4274 = vst [vmem:[#allocation2 + $0x258] sm:$0xff] %v4193
    %4275 = vst [vmem:[#allocation2 + $0x260] sm:$0xff] %v4194
    %4276 = vst [vmem:[#allocation2 + $0x268] sm:$0xff] %v4195
    %4277 = vst [vmem:[#allocation2 + $0x270] sm:$0xff] %v4196
    %4278 = vst [vmem:[#allocation2 + $0x278] sm:$0xff] %v4197
    %4279 = vst [vmem:[#allocation2 + $0x280] sm:$0xff] %v4198
    %v4280 = vld [vmem:[%s0 + $0x13] sm:$0xff]
    %v4281 = vld [vmem:[%s0 + $0x1b] sm:$0xff]
    %v4282 = vld [vmem:[%s0 + $0x23] sm:$0xff]
    %v4283 = vld [vmem:[%s0 + $0x2b] sm:$0xff]
    %v4284 = vld [vmem:[%s0 + $0x33] sm:$0xff]
    %v4285 = vld [vmem:[%s0 + $0x3b] sm:$0xff]
    %v4286 = vld [vmem:[%s0 + $0x43] sm:$0xff]
    %v4287 = vld [vmem:[%s0 + $0x4b] sm:$0xff]
    %v4288 = vld [vmem:[%s0 + $0x53] sm:$0xff]
    %v4289 = vld [vmem:[%s0 + $0x5b] sm:$0xff]
    %v4290 = vld [vmem:[%s0 + $0x63] sm:$0xff]
    %v4291 = vld [vmem:[%s0 + $0x6b] sm:$0xff]
    %v4292 = vld [vmem:[%s0 + $0x73] sm:$0xff]
    %v4293 = vld [vmem:[%s0 + $0x7b] sm:$0xff]
    %v4294 = vld [vmem:[%s0 + $0x83] sm:$0xff]
    %v4295 = vld [vmem:[%s0 + $0x8b] sm:$0xff]
    %v4296 = vld [vmem:[%s0 + $0x93] sm:$0xff]
    %v4297 = vld [vmem:[%s0 + $0x9b] sm:$0xff]
    %v4298 = vld [vmem:[%s0 + $0xa3] sm:$0xff]
    %v4299 = vld [vmem:[%s0 + $0xab] sm:$0xff]
    %v4300 = vld [vmem:[%s0 + $0xb3] sm:$0xff]
    %v4301 = vld [vmem:[%s0 + $0xbb] sm:$0xff]
    %v4302 = vld [vmem:[%s0 + $0xc3] sm:$0xff]
    %v4303 = vld [vmem:[%s0 + $0xcb] sm:$0xff]
    %v4304 = vld [vmem:[%s0 + $0xd3] sm:$0xff]
    %v4305 = vld [vmem:[%s0 + $0xdb] sm:$0xff]
    %v4306 = vld [vmem:[%s0 + $0xe3] sm:$0xff]
    %v4307 = vld [vmem:[%s0 + $0xeb] sm:$0xff]
    %v4308 = vld [vmem:[%s0 + $0xf3] sm:$0xff]
    %v4309 = vld [vmem:[%s0 + $0xfb] sm:$0xff]
    %v4310 = vld [vmem:[%s0 + $0x103] sm:$0xff]
    %v4311 = vld [vmem:[%s0 + $0x10b] sm:$0xff]
    %v4312 = vld [vmem:[%s0 + $0x113] sm:$0xff]
    %v4313 = vld [vmem:[%s0 + $0x11b] sm:$0xff]
    %v4314 = vld [vmem:[%s0 + $0x123] sm:$0xff]
    %v4315 = vld [vmem:[%s0 + $0x12b] sm:$0xff]
    %v4316 = vld [vmem:[%s0 + $0x133] sm:$0xff]
    %v4317 = vld [vmem:[%s0 + $0x13b] sm:$0xff]
    %v4318 = vld [vmem:[%s0 + $0x143] sm:$0xff]
    %v4319 = vld [vmem:[%s0 + $0x14b] sm:$0xff]
    %v4320 = vld [vmem:[%s0 + $0x153] sm:$0xff]
    %v4321 = vld [vmem:[%s0 + $0x15b] sm:$0xff]
    %v4322 = vld [vmem:[%s0 + $0x163] sm:$0xff]
    %v4323 = vld [vmem:[%s0 + $0x16b] sm:$0xff]
    %v4324 = vld [vmem:[%s0 + $0x173] sm:$0xff]
    %v4325 = vld [vmem:[%s0 + $0x17b] sm:$0xff]
    %v4326 = vld [vmem:[%s0 + $0x183] sm:$0xff]
    %v4327 = vld [vmem:[%s0 + $0x18b] sm:$0xff]
    %v4328 = vld [vmem:[%s0 + $0x193] sm:$0xff]
    %v4329 = vld [vmem:[%s0 + $0x19b] sm:$0xff]
    %v4330 = vld [vmem:[%s0 + $0x1a3] sm:$0xff]
    %v4331 = vld [vmem:[%s0 + $0x1ab] sm:$0xff]
    %v4332 = vld [vmem:[%s0 + $0x1b3] sm:$0xff]
    %v4333 = vld [vmem:[%s0 + $0x1bb] sm:$0xff]
    %v4334 = vld [vmem:[%s0 + $0x1c3] sm:$0xff]
    %v4335 = vld [vmem:[%s0 + $0x1cb] sm:$0xff]
    %v4336 = vld [vmem:[%s0 + $0x1d3] sm:$0xff]
    %v4337 = vld [vmem:[%s0 + $0x1db] sm:$0xff]
    %v4338 = vld [vmem:[%s0 + $0x1e3] sm:$0xff]
    %v4339 = vld [vmem:[%s0 + $0x1eb] sm:$0xff]
    %v4340 = vld [vmem:[%s0 + $0x1f3] sm:$0xff]
    %v4341 = vld [vmem:[%s0 + $0x1fb] sm:$0xff]
    %v4342 = vld [vmem:[%s0 + $0x203] sm:$0xff]
    %v4343 = vld [vmem:[%s0 + $0x20b] sm:$0xff]
    %v4344 = vld [vmem:[%s0 + $0x213] sm:$0xff]
    %v4345 = vld [vmem:[%s0 + $0x21b] sm:$0xff]
    %v4346 = vld [vmem:[%s0 + $0x223] sm:$0xff]
    %v4347 = vld [vmem:[%s0 + $0x22b] sm:$0xff]
    %v4348 = vld [vmem:[%s0 + $0x233] sm:$0xff]
    %v4349 = vld [vmem:[%s0 + $0x23b] sm:$0xff]
    %v4350 = vld [vmem:[%s0 + $0x243] sm:$0xff]
    %v4351 = vld [vmem:[%s0 + $0x24b] sm:$0xff]
    %v4352 = vld [vmem:[%s0 + $0x253] sm:$0xff]
    %v4353 = vld [vmem:[%s0 + $0x25b] sm:$0xff]
    %v4354 = vld [vmem:[%s0 + $0x263] sm:$0xff]
    %v4355 = vld [vmem:[%s0 + $0x26b] sm:$0xff]
    %v4356 = vld [vmem:[%s0 + $0x273] sm:$0xff]
    %v4357 = vld [vmem:[%s0 + $0x27b] sm:$0xff]
    %v4358 = vld [vmem:[%s0 + $0x283] sm:$0xff]
    %v4359 = vld [vmem:[%s0 + $0x28b] sm:$0xff]
    %v4360 = vld [vmem:[%s0 + $0x293] sm:$0xff]
    %v4361 = vld [vmem:[#allocation2] sm:$0xff]
    %v4362 = vld [vmem:[#allocation2 + $0x8] sm:$0xff]
    %v4363 = vld [vmem:[#allocation2 + $0x10] sm:$0xff]
    %v4364 = vld [vmem:[#allocation2 + $0x18] sm:$0xff]
    %v4365 = vld [vmem:[#allocation2 + $0x20] sm:$0xff]
    %v4366 = vld [vmem:[#allocation2 + $0x28] sm:$0xff]
    %v4367 = vld [vmem:[#allocation2 + $0x30] sm:$0xff]
    %v4368 = vld [vmem:[#allocation2 + $0x38] sm:$0xff]
    %v4369 = vld [vmem:[#allocation2 + $0x40] sm:$0xff]
    %v4370 = vld [vmem:[#allocation2 + $0x48] sm:$0xff]
    %v4371 = vld [vmem:[#allocation2 + $0x50] sm:$0xff]
    %v4372 = vld [vmem:[#allocation2 + $0x58] sm:$0xff]
    %v4373 = vld [vmem:[#allocation2 + $0x60] sm:$0xff]
    %v4374 = vld [vmem:[#allocation2 + $0x68] sm:$0xff]
    %v4375 = vld [vmem:[#allocation2 + $0x70] sm:$0xff]
    %v4376 = vld [vmem:[#allocation2 + $0x78] sm:$0xff]
    %v4377 = vld [vmem:[#allocation2 + $0x80] sm:$0xff]
    %v4378 = vld [vmem:[#allocation2 + $0x88] sm:$0xff]
    %v4379 = vld [vmem:[#allocation2 + $0x90] sm:$0xff]
    %v4380 = vld [vmem:[#allocation2 + $0x98] sm:$0xff]
    %v4381 = vld [vmem:[#allocation2 + $0xa0] sm:$0xff]
    %v4382 = vld [vmem:[#allocation2 + $0xa8] sm:$0xff]
    %v4383 = vld [vmem:[#allocation2 + $0xb0] sm:$0xff]
    %v4384 = vld [vmem:[#allocation2 + $0xb8] sm:$0xff]
    %v4385 = vld [vmem:[#allocation2 + $0xc0] sm:$0xff]
    %v4386 = vld [vmem:[#allocation2 + $0xc8] sm:$0xff]
    %v4387 = vld [vmem:[#allocation2 + $0xd0] sm:$0xff]
    %v4388 = vld [vmem:[#allocation2 + $0xd8] sm:$0xff]
    %v4389 = vld [vmem:[#allocation2 + $0xe0] sm:$0xff]
    %v4390 = vld [vmem:[#allocation2 + $0xe8] sm:$0xff]
    %v4391 = vld [vmem:[#allocation2 + $0xf0] sm:$0xff]
    %v4392 = vld [vmem:[#allocation2 + $0xf8] sm:$0xff]
    %v4393 = vld [vmem:[#allocation2 + $0x100] sm:$0xff]
    %v4394 = vld [vmem:[#allocation2 + $0x108] sm:$0xff]
    %v4395 = vld [vmem:[#allocation2 + $0x110] sm:$0xff]
    %v4396 = vld [vmem:[#allocation2 + $0x118] sm:$0xff]
    %v4397 = vld [vmem:[#allocation2 + $0x120] sm:$0xff]
    %v4398 = vld [vmem:[#allocation2 + $0x128] sm:$0xff]
    %v4399 = vld [vmem:[#allocation2 + $0x130] sm:$0xff]
    %v4400 = vld [vmem:[#allocation2 + $0x138] sm:$0xff]
    %v4401 = vld [vmem:[#allocation2 + $0x140] sm:$0xff]
    %v4402 = vld [vmem:[#allocation2 + $0x148] sm:$0xff]
    %v4403 = vld [vmem:[#allocation2 + $0x150] sm:$0xff]
    %v4404 = vld [vmem:[#allocation2 + $0x158] sm:$0xff]
    %v4405 = vld [vmem:[#allocation2 + $0x160] sm:$0xff]
    %v4406 = vld [vmem:[#allocation2 + $0x168] sm:$0xff]
    %v4407 = vld [vmem:[#allocation2 + $0x170] sm:$0xff]
    %v4408 = vld [vmem:[#allocation2 + $0x178] sm:$0xff]
    %v4409 = vld [vmem:[#allocation2 + $0x180] sm:$0xff]
    %v4410 = vld [vmem:[#allocation2 + $0x188] sm:$0xff]
    %v4411 = vld [vmem:[#allocation2 + $0x190] sm:$0xff]
    %v4412 = vld [vmem:[#allocation2 + $0x198] sm:$0xff]
    %v4413 = vld [vmem:[#allocation2 + $0x1a0] sm:$0xff]
    %v4414 = vld [vmem:[#allocation2 + $0x1a8] sm:$0xff]
    %v4415 = vld [vmem:[#allocation2 + $0x1b0] sm:$0xff]
    %v4416 = vld [vmem:[#allocation2 + $0x1b8] sm:$0xff]
    %v4417 = vld [vmem:[#allocation2 + $0x1c0] sm:$0xff]
    %v4418 = vld [vmem:[#allocation2 + $0x1c8] sm:$0xff]
    %v4419 = vld [vmem:[#allocation2 + $0x1d0] sm:$0xff]
    %v4420 = vld [vmem:[#allocation2 + $0x1d8] sm:$0xff]
    %v4421 = vld [vmem:[#allocation2 + $0x1e0] sm:$0xff]
    %v4422 = vld [vmem:[#allocation2 + $0x1e8] sm:$0xff]
    %v4423 = vld [vmem:[#allocation2 + $0x1f0] sm:$0xff]
    %v4424 = vld [vmem:[#allocation2 + $0x1f8] sm:$0xff]
    %v4425 = vld [vmem:[#allocation2 + $0x200] sm:$0xff]
    %v4426 = vld [vmem:[#allocation2 + $0x208] sm:$0xff]
    %v4427 = vld [vmem:[#allocation2 + $0x210] sm:$0xff]
    %v4428 = vld [vmem:[#allocation2 + $0x218] sm:$0xff]
    %v4429 = vld [vmem:[#allocation2 + $0x220] sm:$0xff]
    %v4430 = vld [vmem:[#allocation2 + $0x228] sm:$0xff]
    %v4431 = vld [vmem:[#allocation2 + $0x230] sm:$0xff]
    %v4432 = vld [vmem:[#allocation2 + $0x238] sm:$0xff]
    %v4433 = vld [vmem:[#allocation2 + $0x240] sm:$0xff]
    %v4434 = vld [vmem:[#allocation2 + $0x248] sm:$0xff]
    %v4435 = vld [vmem:[#allocation2 + $0x250] sm:$0xff]
    %v4436 = vld [vmem:[#allocation2 + $0x258] sm:$0xff]
    %v4437 = vld [vmem:[#allocation2 + $0x260] sm:$0xff]
    %v4438 = vld [vmem:[#allocation2 + $0x268] sm:$0xff]
    %v4439 = vld [vmem:[#allocation2 + $0x270] sm:$0xff]
    %v4440 = vld [vmem:[#allocation2 + $0x278] sm:$0xff]
    %v4441 = vld [vmem:[#allocation2 + $0x280] sm:$0xff]
    %s4442 = scalar_lea.vmem %s1, 16
    %v4443 = vld [vmem:[%s4442] sm:$0xf]
    %v4445 = vsel %vm274, %v4280, 0
    %v4448 = vsel %vm274, %v4281, 0
    %v4451 = vsel %vm274, %v4282, 0
    %v4454 = vsel %vm274, %v4283, 0
    %v4457 = vsel %vm274, %v4284, 0
    %v4460 = vsel %vm274, %v4285, 0
    %v4463 = vsel %vm274, %v4286, 0
    %v4466 = vsel %vm274, %v4287, 0
    %v4469 = vsel %vm274, %v4288, 0
    %v4472 = vsel %vm274, %v4289, 0
    %v4475 = vsel %vm274, %v4290, 0
    %v4478 = vsel %vm274, %v4291, 0
    %v4481 = vsel %vm274, %v4292, 0
    %v4484 = vsel %vm274, %v4293, 0
    %v4487 = vsel %vm274, %v4294, 0
    %v4490 = vsel %vm274, %v4295, 0
    %v4493 = vsel %vm274, %v4296, 0
    %v4496 = vsel %vm274, %v4297, 0
    %v4499 = vsel %vm274, %v4298, 0
    %v4502 = vsel %vm274, %v4299, 0
    %v4505 = vsel %vm274, %v4300, 0
    %v4508 = vsel %vm274, %v4301, 0
    %v4511 = vsel %vm274, %v4302, 0
    %v4514 = vsel %vm274, %v4303, 0
    %v4517 = vsel %vm274, %v4304, 0
    %v4520 = vsel %vm274, %v4305, 0
    %v4523 = vsel %vm274, %v4306, 0
    %v4526 = vsel %vm274, %v4307, 0
    %v4529 = vsel %vm274, %v4308, 0
    %v4532 = vsel %vm274, %v4309, 0
    %v4535 = vsel %vm274, %v4310, 0
    %v4538 = vsel %vm274, %v4311, 0
    %v4541 = vsel %vm274, %v4312, 0
    %v4544 = vsel %vm274, %v4313, 0
    %v4547 = vsel %vm274, %v4314, 0
    %v4550 = vsel %vm274, %v4315, 0
    %v4553 = vsel %vm274, %v4316, 0
    %v4556 = vsel %vm274, %v4317, 0
    %v4559 = vsel %vm274, %v4318, 0
    %v4562 = vsel %vm274, %v4319, 0
    %v4565 = vsel %vm274, %v4320, 0
    %v4568 = vsel %vm274, %v4321, 0
    %v4571 = vsel %vm274, %v4322, 0
    %v4574 = vsel %vm274, %v4323, 0
    %v4577 = vsel %vm274, %v4324, 0
    %v4580 = vsel %vm274, %v4325, 0
    %v4583 = vsel %vm274, %v4326, 0
    %v4586 = vsel %vm274, %v4327, 0
    %v4589 = vsel %vm274, %v4328, 0
    %v4592 = vsel %vm274, %v4329, 0
    %v4595 = vsel %vm274, %v4330, 0
    %v4598 = vsel %vm274, %v4331, 0
    %v4601 = vsel %vm274, %v4332, 0
    %v4604 = vsel %vm274, %v4333, 0
    %v4607 = vsel %vm274, %v4334, 0
    %v4610 = vsel %vm274, %v4335, 0
    %v4613 = vsel %vm274, %v4336, 0
    %v4616 = vsel %vm274, %v4337, 0
    %v4619 = vsel %vm274, %v4338, 0
    %v4622 = vsel %vm274, %v4339, 0
    %v4625 = vsel %vm274, %v4340, 0
    %v4628 = vsel %vm274, %v4341, 0
    %v4631 = vsel %vm274, %v4342, 0
    %v4634 = vsel %vm274, %v4343, 0
    %v4637 = vsel %vm274, %v4344, 0
    %v4640 = vsel %vm274, %v4345, 0
    %v4643 = vsel %vm274, %v4346, 0
    %v4646 = vsel %vm274, %v4347, 0
    %v4649 = vsel %vm274, %v4348, 0
    %v4652 = vsel %vm274, %v4349, 0
    %v4655 = vsel %vm274, %v4350, 0
    %v4658 = vsel %vm274, %v4351, 0
    %v4661 = vsel %vm274, %v4352, 0
    %v4664 = vsel %vm274, %v4353, 0
    %v4667 = vsel %vm274, %v4354, 0
    %v4670 = vsel %vm274, %v4355, 0
    %v4673 = vsel %vm274, %v4356, 0
    %v4676 = vsel %vm274, %v4357, 0
    %v4679 = vsel %vm274, %v4358, 0
    %v4682 = vsel %vm274, %v4359, 0
    %v4685 = vsel %vm274, %v4360, 0
    %v4688 = vsel %vm518, %v4443, 0
    %4690 = vmatprep.subr.mxu0 0.0
    %4691 = vmatpush1.msra.mxu0 %v4688
    %4692 = vmatprep.subr.mxu0 0.0
    %4693 = vmatpush1.msra.mxu0 0.0
    %4694 = vmatprep.subr.mxu0 0.0
    %4695 = vmatpush1.msra.mxu0 0.0
    %4696 = vmatprep.subr.mxu0 0.0
    %4697 = vmatpush1.msra.mxu0 0.0
    %4698 = vmatprep.subr.mxu0 0.0
    %4699 = vmatpush1.msra.mxu0 0.0
    %4700 = vmatprep.subr.mxu0 0.0
    %4701 = vmatpush1.msra.mxu0 0.0
    %4702 = vmatprep.subr.mxu0 0.0
    %4703 = vmatpush1.msra.mxu0 0.0
    %4704 = vmatprep.subr.mxu0 0.0
    %4705 = vmatpush1.msra.mxu0 0.0
    %4706 = vmatprep.subr.mxu0 0.0
    %4707 = vmatpush1.msra.mxu0 0.0
    %4708 = vmatprep.subr.mxu0 0.0
    %4709 = vmatpush1.msra.mxu0 0.0
    %4710 = vmatprep.subr.mxu0 0.0
    %4711 = vmatpush1.msra.mxu0 0.0
    %4712 = vmatprep.subr.mxu0 0.0
    %4713 = vmatpush1.msra.mxu0 0.0
    %4714 = vmatprep.subr.mxu0 0.0
    %4715 = vmatpush1.msra.mxu0 0.0
    %4716 = vmatprep.subr.mxu0 0.0
    %4717 = vmatpush1.msra.mxu0 0.0
    %4718 = vmatprep.subr.mxu0 0.0
    %4719 = vmatpush1.msra.mxu0 0.0
    %4720 = vmatprep.subr.mxu0 0.0
    %4721 = vmatpush1.msra.mxu0 0.0
    %4722 = vmatprep.subr.mxu0 0.0
    %4723 = vmatpush1.msra.mxu0 0.0
    %4724 = vmatprep.subr.mxu0 0.0
    %4725 = vmatpush1.msra.mxu0 0.0
    %4726 = vmatprep.subr.mxu0 0.0
    %4727 = vmatpush1.msra.mxu0 0.0
    %4728 = vmatprep.subr.mxu0 0.0
    %4729 = vmatpush1.msra.mxu0 0.0
    %4730 = vmatprep.subr.mxu0 0.0
    %4731 = vmatpush1.msra.mxu0 0.0
    %4732 = vmatprep.subr.mxu0 0.0
    %4733 = vmatpush1.msra.mxu0 0.0
    %4734 = vmatprep.subr.mxu0 0.0
    %4735 = vmatpush1.msra.mxu0 0.0
    %4736 = vmatprep.subr.mxu0 0.0
    %4737 = vmatpush1.msra.mxu0 0.0
    %4738 = vmatprep.subr.mxu0 0.0
    %4739 = vmatpush1.msra.mxu0 0.0
    %4740 = vmatprep.subr.mxu0 0.0
    %4741 = vmatpush1.msra.mxu0 0.0
    %4742 = vmatprep.subr.mxu0 0.0
    %4743 = vmatpush1.msra.mxu0 0.0
    %4744 = vmatprep.subr.mxu0 0.0
    %4745 = vmatpush1.msra.mxu0 0.0
    %4746 = vmatprep.subr.mxu0 0.0
    %4747 = vmatpush1.msra.mxu0 0.0
    %4748 = vmatprep.subr.mxu0 0.0
    %4749 = vmatpush1.msra.mxu0 0.0
    %4750 = vmatprep.subr.mxu0 0.0
    %4751 = vmatpush1.msra.mxu0 0.0
    %4752 = vmatprep.subr.mxu0 0.0
    %4753 = vmatpush1.msra.mxu0 0.0
    %4754 = vmatprep.mubr.f32.mxu0 0.0
    %4755 = vmatmul.mubr.f32.gmra.mrb[0].mxu0 %v4445
    %v4756 = vpop.f32.mrb[0].mxu0
    %v4757 = vadd.f32 0.0, %v4756
    %v4758 = vpop.f32.mrb[0].mxu0
    %4759 = vmatprep.mubr.f32.mxu0 0.0
    %4760 = vmatmul.mubr.f32.gmra.mrb[0].mxu0 %v4448
    %v4761 = vpop.f32.mrb[0].mxu0
    %v4762 = vadd.f32 0.0, %v4761
    %v4763 = vpop.f32.mrb[0].mxu0
    %4764 = vmatprep.mubr.f32.mxu0 0.0
    %4765 = vmatmul.mubr.f32.gmra.mrb[0].mxu0 %v4451
    %v4766 = vpop.f32.mrb[0].mxu0
    %v4767 = vadd.f32 0.0, %v4766
    %v4768 = vpop.f32.mrb[0].mxu0
    %4769 = vmatprep.mubr.f32.mxu0 0.0
    %4770 = vmatmul.mubr.f32.gmra.mrb[0].mxu0 %v4454
    %v4771 = vpop.f32.mrb[0].mxu0
    %v4772 = vadd.f32 0.0, %v4771
    %v4773 = vpop.f32.mrb[0].mxu0
    %4774 = vmatprep.mubr.f32.mxu0 0.0
    %4775 = vmatmul.mubr.f32.gmra.mrb[0].mxu0 %v4457
    %v4776 = vpop.f32.mrb[0].mxu0
    %v4777 = vadd.f32 0.0, %v4776
    %v4778 = vpop.f32.mrb[0].mxu0
    %4779 = vmatprep.mubr.f32.mxu0 0.0
    %4780 = vmatmul.mubr.f32.gmra.mrb[0].mxu0 %v4460
    %v4781 = vpop.f32.mrb[0].mxu0
    %v4782 = vadd.f32 0.0, %v4781
    %v4783 = vpop.f32.mrb[0].mxu0
    %4784 = vmatprep.mubr.f32.mxu0 0.0
    %4785 = vmatmul.mubr.f32.gmra.mrb[0].mxu0 %v4463
    %v4786 = vpop.f32.mrb[0].mxu0
    %v4787 = vadd.f32 0.0, %v4786
    %v4788 = vpop.f32.mrb[0].mxu0
    %4789 = vmatprep.mubr.f32.mxu0 0.0
    %4790 = vmatmul.mubr.f32.gmra.mrb[0].mxu0 %v4466
    %v4791 = vpop.f32.mrb[0].mxu0
    %v4792 = vadd.f32 0.0, %v4791
    %v4793 = vpop.f32.mrb[0].mxu0
    %4794 = vmatprep.mubr.f32.mxu0 0.0
    %4795 = vmatmul.mubr.f32.gmra.mrb[0].mxu0 %v4469
    %v4796 = vpop.f32.mrb[0].mxu0
    %v4797 = vadd.f32 0.0, %v4796
    %v4798 = vpop.f32.mrb[0].mxu0
    %4799 = vmatprep.mubr.f32.mxu0 0.0
    %4800 = vmatmul.mubr.f32.gmra.mrb[0].mxu0 %v4472
    %v4801 = vpop.f32.mrb[0].mxu0
    %v4802 = vadd.f32 0.0, %v4801
    %v4803 = vpop.f32.mrb[0].mxu0
    %4804 = vmatprep.mubr.f32.mxu0 0.0
    %4805 = vmatmul.mubr.f32.gmra.mrb[0].mxu0 %v4475
    %v4806 = vpop.f32.mrb[0].mxu0
    %v4807 = vadd.f32 0.0, %v4806
    %v4808 = vpop.f32.mrb[0].mxu0
    %4809 = vmatprep.mubr.f32.mxu0 0.0
    %4810 = vmatmul.mubr.f32.gmra.mrb[0].mxu0 %v4478
    %v4811 = vpop.f32.mrb[0].mxu0
    %v4812 = vadd.f32 0.0, %v4811
    %v4813 = vpop.f32.mrb[0].mxu0
    %4814 = vmatprep.mubr.f32.mxu0 0.0
    %4815 = vmatmul.mubr.f32.gmra.mrb[0].mxu0 %v4481
    %v4816 = vpop.f32.mrb[0].mxu0
    %v4817 = vadd.f32 0.0, %v4816
    %v4818 = vpop.f32.mrb[0].mxu0
    %4819 = vmatprep.mubr.f32.mxu0 0.0
    %4820 = vmatmul.mubr.f32.gmra.mrb[0].mxu0 %v4484
    %v4821 = vpop.f32.mrb[0].mxu0
    %v4822 = vadd.f32 0.0, %v4821
    %v4823 = vpop.f32.mrb[0].mxu0
    %4824 = vmatprep.mubr.f32.mxu0 0.0
    %4825 = vmatmul.mubr.f32.gmra.mrb[0].mxu0 %v4487
    %v4826 = vpop.f32.mrb[0].mxu0
    %v4827 = vadd.f32 0.0, %v4826
    %v4828 = vpop.f32.mrb[0].mxu0
    %4829 = vmatprep.mubr.f32.mxu0 0.0
    %4830 = vmatmul.mubr.f32.gmra.mrb[0].mxu0 %v4490
    %v4831 = vpop.f32.mrb[0].mxu0
    %v4832 = vadd.f32 0.0, %v4831
    %v4833 = vpop.f32.mrb[0].mxu0
    %4834 = vmatprep.mubr.f32.mxu0 0.0
    %4835 = vmatmul.mubr.f32.gmra.mrb[0].mxu0 %v4493
    %v4836 = vpop.f32.mrb[0].mxu0
    %v4837 = vadd.f32 0.0, %v4836
    %v4838 = vpop.f32.mrb[0].mxu0
    %4839 = vmatprep.mubr.f32.mxu0 0.0
    %4840 = vmatmul.mubr.f32.gmra.mrb[0].mxu0 %v4496
    %v4841 = vpop.f32.mrb[0].mxu0
    %v4842 = vadd.f32 0.0, %v4841
    %v4843 = vpop.f32.mrb[0].mxu0
    %4844 = vmatprep.mubr.f32.mxu0 0.0
    %4845 = vmatmul.mubr.f32.gmra.mrb[0].mxu0 %v4499
    %v4846 = vpop.f32.mrb[0].mxu0
    %v4847 = vadd.f32 0.0, %v4846
    %v4848 = vpop.f32.mrb[0].mxu0
    %4849 = vmatprep.mubr.f32.mxu0 0.0
    %4850 = vmatmul.mubr.f32.gmra.mrb[0].mxu0 %v4502
    %v4851 = vpop.f32.mrb[0].mxu0
    %v4852 = vadd.f32 0.0, %v4851
    %v4853 = vpop.f32.mrb[0].mxu0
    %4854 = vmatprep.mubr.f32.mxu0 0.0
    %4855 = vmatmul.mubr.f32.gmra.mrb[0].mxu0 %v4505
    %v4856 = vpop.f32.mrb[0].mxu0
    %v4857 = vadd.f32 0.0, %v4856
    %v4858 = vpop.f32.mrb[0].mxu0
    %4859 = vmatprep.mubr.f32.mxu0 0.0
    %4860 = vmatmul.mubr.f32.gmra.mrb[0].mxu0 %v4508
    %v4861 = vpop.f32.mrb[0].mxu0
    %v4862 = vadd.f32 0.0, %v4861
    %v4863 = vpop.f32.mrb[0].mxu0
    %4864 = vmatprep.mubr.f32.mxu0 0.0
    %4865 = vmatmul.mubr.f32.gmra.mrb[0].mxu0 %v4511
    %v4866 = vpop.f32.mrb[0].mxu0
    %v4867 = vadd.f32 0.0, %v4866
    %v4868 = vpop.f32.mrb[0].mxu0
    %4869 = vmatprep.mubr.f32.mxu0 0.0
    %4870 = vmatmul.mubr.f32.gmra.mrb[0].mxu0 %v4514
    %v4871 = vpop.f32.mrb[0].mxu0
    %v4872 = vadd.f32 0.0, %v4871
    %v4873 = vpop.f32.mrb[0].mxu0
    %4874 = vmatprep.mubr.f32.mxu0 0.0
    %4875 = vmatmul.mubr.f32.gmra.mrb[0].mxu0 %v4517
    %v4876 = vpop.f32.mrb[0].mxu0
    %v4877 = vadd.f32 0.0, %v4876
    %v4878 = vpop.f32.mrb[0].mxu0
    %4879 = vmatprep.mubr.f32.mxu0 0.0
    %4880 = vmatmul.mubr.f32.gmra.mrb[0].mxu0 %v4520
    %v4881 = vpop.f32.mrb[0].mxu0
    %v4882 = vadd.f32 0.0, %v4881
    %v4883 = vpop.f32.mrb[0].mxu0
    %4884 = vmatprep.mubr.f32.mxu0 0.0
    %4885 = vmatmul.mubr.f32.gmra.mrb[0].mxu0 %v4523
    %v4886 = vpop.f32.mrb[0].mxu0
    %v4887 = vadd.f32 0.0, %v4886
    %v4888 = vpop.f32.mrb[0].mxu0
    %4889 = vmatprep.mubr.f32.mxu0 0.0
    %4890 = vmatmul.mubr.f32.gmra.mrb[0].mxu0 %v4526
    %v4891 = vpop.f32.mrb[0].mxu0
    %v4892 = vadd.f32 0.0, %v4891
    %v4893 = vpop.f32.mrb[0].mxu0
    %4894 = vmatprep.mubr.f32.mxu0 0.0
    %4895 = vmatmul.mubr.f32.gmra.mrb[0].mxu0 %v4529
    %v4896 = vpop.f32.mrb[0].mxu0
    %v4897 = vadd.f32 0.0, %v4896
    %v4898 = vpop.f32.mrb[0].mxu0
    %4899 = vmatprep.mubr.f32.mxu0 0.0
    %4900 = vmatmul.mubr.f32.gmra.mrb[0].mxu0 %v4532
    %v4901 = vpop.f32.mrb[0].mxu0
    %v4902 = vadd.f32 0.0, %v4901
    %v4903 = vpop.f32.mrb[0].mxu0
    %4904 = vmatprep.mubr.f32.mxu0 0.0
    %4905 = vmatmul.mubr.f32.gmra.mrb[0].mxu0 %v4535
    %v4906 = vpop.f32.mrb[0].mxu0
    %v4907 = vadd.f32 0.0, %v4906
    %v4908 = vpop.f32.mrb[0].mxu0
    %4909 = vmatprep.mubr.f32.mxu0 0.0
    %4910 = vmatmul.mubr.f32.gmra.mrb[0].mxu0 %v4538
    %v4911 = vpop.f32.mrb[0].mxu0
    %v4912 = vadd.f32 0.0, %v4911
    %v4913 = vpop.f32.mrb[0].mxu0
    %4914 = vmatprep.mubr.f32.mxu0 0.0
    %4915 = vmatmul.mubr.f32.gmra.mrb[0].mxu0 %v4541
    %v4916 = vpop.f32.mrb[0].mxu0
    %v4917 = vadd.f32 0.0, %v4916
    %v4918 = vpop.f32.mrb[0].mxu0
    %4919 = vmatprep.mubr.f32.mxu0 0.0
    %4920 = vmatmul.mubr.f32.gmra.mrb[0].mxu0 %v4544
    %v4921 = vpop.f32.mrb[0].mxu0
    %v4922 = vadd.f32 0.0, %v4921
    %v4923 = vpop.f32.mrb[0].mxu0
    %4924 = vmatprep.mubr.f32.mxu0 0.0
    %4925 = vmatmul.mubr.f32.gmra.mrb[0].mxu0 %v4547
    %v4926 = vpop.f32.mrb[0].mxu0
    %v4927 = vadd.f32 0.0, %v4926
    %v4928 = vpop.f32.mrb[0].mxu0
    %4929 = vmatprep.mubr.f32.mxu0 0.0
    %4930 = vmatmul.mubr.f32.gmra.mrb[0].mxu0 %v4550
    %v4931 = vpop.f32.mrb[0].mxu0
    %v4932 = vadd.f32 0.0, %v4931
    %v4933 = vpop.f32.mrb[0].mxu0
    %4934 = vmatprep.mubr.f32.mxu0 0.0
    %4935 = vmatmul.mubr.f32.gmra.mrb[0].mxu0 %v4553
    %v4936 = vpop.f32.mrb[0].mxu0
    %v4937 = vadd.f32 0.0, %v4936
    %v4938 = vpop.f32.mrb[0].mxu0
    %4939 = vmatprep.mubr.f32.mxu0 0.0
    %4940 = vmatmul.mubr.f32.gmra.mrb[0].mxu0 %v4556
    %v4941 = vpop.f32.mrb[0].mxu0
    %v4942 = vadd.f32 0.0, %v4941
    %v4943 = vpop.f32.mrb[0].mxu0
    %4944 = vmatprep.mubr.f32.mxu0 0.0
    %4945 = vmatmul.mubr.f32.gmra.mrb[0].mxu0 %v4559
    %v4946 = vpop.f32.mrb[0].mxu0
    %v4947 = vadd.f32 0.0, %v4946
    %v4948 = vpop.f32.mrb[0].mxu0
    %4949 = vmatprep.mubr.f32.mxu0 0.0
    %4950 = vmatmul.mubr.f32.gmra.mrb[0].mxu0 %v4562
    %v4951 = vpop.f32.mrb[0].mxu0
    %v4952 = vadd.f32 0.0, %v4951
    %v4953 = vpop.f32.mrb[0].mxu0
    %4954 = vmatprep.mubr.f32.mxu0 0.0
    %4955 = vmatmul.mubr.f32.gmra.mrb[0].mxu0 %v4565
    %v4956 = vpop.f32.mrb[0].mxu0
    %v4957 = vadd.f32 0.0, %v4956
    %v4958 = vpop.f32.mrb[0].mxu0
    %4959 = vmatprep.mubr.f32.mxu0 0.0
    %4960 = vmatmul.mubr.f32.gmra.mrb[0].mxu0 %v4568
    %v4961 = vpop.f32.mrb[0].mxu0
    %v4962 = vadd.f32 0.0, %v4961
    %v4963 = vpop.f32.mrb[0].mxu0
    %4964 = vmatprep.mubr.f32.mxu0 0.0
    %4965 = vmatmul.mubr.f32.gmra.mrb[0].mxu0 %v4571
    %v4966 = vpop.f32.mrb[0].mxu0
    %v4967 = vadd.f32 0.0, %v4966
    %v4968 = vpop.f32.mrb[0].mxu0
    %4969 = vmatprep.mubr.f32.mxu0 0.0
    %4970 = vmatmul.mubr.f32.gmra.mrb[0].mxu0 %v4574
    %v4971 = vpop.f32.mrb[0].mxu0
    %v4972 = vadd.f32 0.0, %v4971
    %v4973 = vpop.f32.mrb[0].mxu0
    %4974 = vmatprep.mubr.f32.mxu0 0.0
    %4975 = vmatmul.mubr.f32.gmra.mrb[0].mxu0 %v4577
    %v4976 = vpop.f32.mrb[0].mxu0
    %v4977 = vadd.f32 0.0, %v4976
    %v4978 = vpop.f32.mrb[0].mxu0
    %4979 = vmatprep.mubr.f32.mxu0 0.0
    %4980 = vmatmul.mubr.f32.gmra.mrb[0].mxu0 %v4580
    %v4981 = vpop.f32.mrb[0].mxu0
    %v4982 = vadd.f32 0.0, %v4981
    %v4983 = vpop.f32.mrb[0].mxu0
    %4984 = vmatprep.mubr.f32.mxu0 0.0
    %4985 = vmatmul.mubr.f32.gmra.mrb[0].mxu0 %v4583
    %v4986 = vpop.f32.mrb[0].mxu0
    %v4987 = vadd.f32 0.0, %v4986
    %v4988 = vpop.f32.mrb[0].mxu0
    %4989 = vmatprep.mubr.f32.mxu0 0.0
    %4990 = vmatmul.mubr.f32.gmra.mrb[0].mxu0 %v4586
    %v4991 = vpop.f32.mrb[0].mxu0
    %v4992 = vadd.f32 0.0, %v4991
    %v4993 = vpop.f32.mrb[0].mxu0
    %4994 = vmatprep.mubr.f32.mxu0 0.0
    %4995 = vmatmul.mubr.f32.gmra.mrb[0].mxu0 %v4589
    %v4996 = vpop.f32.mrb[0].mxu0
    %v4997 = vadd.f32 0.0, %v4996
    %v4998 = vpop.f32.mrb[0].mxu0
    %4999 = vmatprep.mubr.f32.mxu0 0.0
    %5000 = vmatmul.mubr.f32.gmra.mrb[0].mxu0 %v4592
    %v5001 = vpop.f32.mrb[0].mxu0
    %v5002 = vadd.f32 0.0, %v5001
    %v5003 = vpop.f32.mrb[0].mxu0
    %5004 = vmatprep.mubr.f32.mxu0 0.0
    %5005 = vmatmul.mubr.f32.gmra.mrb[0].mxu0 %v4595
    %v5006 = vpop.f32.mrb[0].mxu0
    %v5007 = vadd.f32 0.0, %v5006
    %v5008 = vpop.f32.mrb[0].mxu0
    %5009 = vmatprep.mubr.f32.mxu0 0.0
    %5010 = vmatmul.mubr.f32.gmra.mrb[0].mxu0 %v4598
    %v5011 = vpop.f32.mrb[0].mxu0
    %v5012 = vadd.f32 0.0, %v5011
    %v5013 = vpop.f32.mrb[0].mxu0
    %5014 = vmatprep.mubr.f32.mxu0 0.0
    %5015 = vmatmul.mubr.f32.gmra.mrb[0].mxu0 %v4601
    %v5016 = vpop.f32.mrb[0].mxu0
    %v5017 = vadd.f32 0.0, %v5016
    %v5018 = vpop.f32.mrb[0].mxu0
    %5019 = vmatprep.mubr.f32.mxu0 0.0
    %5020 = vmatmul.mubr.f32.gmra.mrb[0].mxu0 %v4604
    %v5021 = vpop.f32.mrb[0].mxu0
    %v5022 = vadd.f32 0.0, %v5021
    %v5023 = vpop.f32.mrb[0].mxu0
    %5024 = vmatprep.mubr.f32.mxu0 0.0
    %5025 = vmatmul.mubr.f32.gmra.mrb[0].mxu0 %v4607
    %v5026 = vpop.f32.mrb[0].mxu0
    %v5027 = vadd.f32 0.0, %v5026
    %v5028 = vpop.f32.mrb[0].mxu0
    %5029 = vmatprep.mubr.f32.mxu0 0.0
    %5030 = vmatmul.mubr.f32.gmra.mrb[0].mxu0 %v4610
    %v5031 = vpop.f32.mrb[0].mxu0
    %v5032 = vadd.f32 0.0, %v5031
    %v5033 = vpop.f32.mrb[0].mxu0
    %5034 = vmatprep.mubr.f32.mxu0 0.0
    %5035 = vmatmul.mubr.f32.gmra.mrb[0].mxu0 %v4613
    %v5036 = vpop.f32.mrb[0].mxu0
    %v5037 = vadd.f32 0.0, %v5036
    %v5038 = vpop.f32.mrb[0].mxu0
    %5039 = vmatprep.mubr.f32.mxu0 0.0
    %5040 = vmatmul.mubr.f32.gmra.mrb[0].mxu0 %v4616
    %v5041 = vpop.f32.mrb[0].mxu0
    %v5042 = vadd.f32 0.0, %v5041
    %v5043 = vpop.f32.mrb[0].mxu0
    %5044 = vmatprep.mubr.f32.mxu0 0.0
    %5045 = vmatmul.mubr.f32.gmra.mrb[0].mxu0 %v4619
    %v5046 = vpop.f32.mrb[0].mxu0
    %v5047 = vadd.f32 0.0, %v5046
    %v5048 = vpop.f32.mrb[0].mxu0
    %5049 = vmatprep.mubr.f32.mxu0 0.0
    %5050 = vmatmul.mubr.f32.gmra.mrb[0].mxu0 %v4622
    %v5051 = vpop.f32.mrb[0].mxu0
    %v5052 = vadd.f32 0.0, %v5051
    %v5053 = vpop.f32.mrb[0].mxu0
    %5054 = vmatprep.mubr.f32.mxu0 0.0
    %5055 = vmatmul.mubr.f32.gmra.mrb[0].mxu0 %v4625
    %v5056 = vpop.f32.mrb[0].mxu0
    %v5057 = vadd.f32 0.0, %v5056
    %v5058 = vpop.f32.mrb[0].mxu0
    %5059 = vmatprep.mubr.f32.mxu0 0.0
    %5060 = vmatmul.mubr.f32.gmra.mrb[0].mxu0 %v4628
    %v5061 = vpop.f32.mrb[0].mxu0
    %v5062 = vadd.f32 0.0, %v5061
    %v5063 = vpop.f32.mrb[0].mxu0
    %5064 = vmatprep.mubr.f32.mxu0 0.0
    %5065 = vmatmul.mubr.f32.gmra.mrb[0].mxu0 %v4631
    %v5066 = vpop.f32.mrb[0].mxu0
    %v5067 = vadd.f32 0.0, %v5066
    %v5068 = vpop.f32.mrb[0].mxu0
    %5069 = vmatprep.mubr.f32.mxu0 0.0
    %5070 = vmatmul.mubr.f32.gmra.mrb[0].mxu0 %v4634
    %v5071 = vpop.f32.mrb[0].mxu0
    %v5072 = vadd.f32 0.0, %v5071
    %v5073 = vpop.f32.mrb[0].mxu0
    %5074 = vmatprep.mubr.f32.mxu0 0.0
    %5075 = vmatmul.mubr.f32.gmra.mrb[0].mxu0 %v4637
    %v5076 = vpop.f32.mrb[0].mxu0
    %v5077 = vadd.f32 0.0, %v5076
    %v5078 = vpop.f32.mrb[0].mxu0
    %5079 = vmatprep.mubr.f32.mxu0 0.0
    %5080 = vmatmul.mubr.f32.gmra.mrb[0].mxu0 %v4640
    %v5081 = vpop.f32.mrb[0].mxu0
    %v5082 = vadd.f32 0.0, %v5081
    %v5083 = vpop.f32.mrb[0].mxu0
    %5084 = vmatprep.mubr.f32.mxu0 0.0
    %5085 = vmatmul.mubr.f32.gmra.mrb[0].mxu0 %v4643
    %v5086 = vpop.f32.mrb[0].mxu0
    %v5087 = vadd.f32 0.0, %v5086
    %v5088 = vpop.f32.mrb[0].mxu0
    %5089 = vmatprep.mubr.f32.mxu0 0.0
    %5090 = vmatmul.mubr.f32.gmra.mrb[0].mxu0 %v4646
    %v5091 = vpop.f32.mrb[0].mxu0
    %v5092 = vadd.f32 0.0, %v5091
    %v5093 = vpop.f32.mrb[0].mxu0
    %5094 = vmatprep.mubr.f32.mxu0 0.0
    %5095 = vmatmul.mubr.f32.gmra.mrb[0].mxu0 %v4649
    %v5096 = vpop.f32.mrb[0].mxu0
    %v5097 = vadd.f32 0.0, %v5096
    %v5098 = vpop.f32.mrb[0].mxu0
    %5099 = vmatprep.mubr.f32.mxu0 0.0
    %5100 = vmatmul.mubr.f32.gmra.mrb[0].mxu0 %v4652
    %v5101 = vpop.f32.mrb[0].mxu0
    %v5102 = vadd.f32 0.0, %v5101
    %v5103 = vpop.f32.mrb[0].mxu0
    %5104 = vmatprep.mubr.f32.mxu0 0.0
    %5105 = vmatmul.mubr.f32.gmra.mrb[0].mxu0 %v4655
    %v5106 = vpop.f32.mrb[0].mxu0
    %v5107 = vadd.f32 0.0, %v5106
    %v5108 = vpop.f32.mrb[0].mxu0
    %5109 = vmatprep.mubr.f32.mxu0 0.0
    %5110 = vmatmul.mubr.f32.gmra.mrb[0].mxu0 %v4658
    %v5111 = vpop.f32.mrb[0].mxu0
    %v5112 = vadd.f32 0.0, %v5111
    %v5113 = vpop.f32.mrb[0].mxu0
    %5114 = vmatprep.mubr.f32.mxu0 0.0
    %5115 = vmatmul.mubr.f32.gmra.mrb[0].mxu0 %v4661
    %v5116 = vpop.f32.mrb[0].mxu0
    %v5117 = vadd.f32 0.0, %v5116
    %v5118 = vpop.f32.mrb[0].mxu0
    %5119 = vmatprep.mubr.f32.mxu0 0.0
    %5120 = vmatmul.mubr.f32.gmra.mrb[0].mxu0 %v4664
    %v5121 = vpop.f32.mrb[0].mxu0
    %v5122 = vadd.f32 0.0, %v5121
    %v5123 = vpop.f32.mrb[0].mxu0
    %5124 = vmatprep.mubr.f32.mxu0 0.0
    %5125 = vmatmul.mubr.f32.gmra.mrb[0].mxu0 %v4667
    %v5126 = vpop.f32.mrb[0].mxu0
    %v5127 = vadd.f32 0.0, %v5126
    %v5128 = vpop.f32.mrb[0].mxu0
    %5129 = vmatprep.mubr.f32.mxu0 0.0
    %5130 = vmatmul.mubr.f32.gmra.mrb[0].mxu0 %v4670
    %v5131 = vpop.f32.mrb[0].mxu0
    %v5132 = vadd.f32 0.0, %v5131
    %v5133 = vpop.f32.mrb[0].mxu0
    %5134 = vmatprep.mubr.f32.mxu0 0.0
    %5135 = vmatmul.mubr.f32.gmra.mrb[0].mxu0 %v4673
    %v5136 = vpop.f32.mrb[0].mxu0
    %v5137 = vadd.f32 0.0, %v5136
    %v5138 = vpop.f32.mrb[0].mxu0
    %5139 = vmatprep.mubr.f32.mxu0 0.0
    %5140 = vmatmul.mubr.f32.gmra.mrb[0].mxu0 %v4676
    %v5141 = vpop.f32.mrb[0].mxu0
    %v5142 = vadd.f32 0.0, %v5141
    %v5143 = vpop.f32.mrb[0].mxu0
    %5144 = vmatprep.mubr.f32.mxu0 0.0
    %5145 = vmatmul.mubr.f32.gmra.mrb[0].mxu0 %v4679
    %v5146 = vpop.f32.mrb[0].mxu0
    %v5147 = vadd.f32 0.0, %v5146
    %v5148 = vpop.f32.mrb[0].mxu0
    %5149 = vmatprep.mubr.f32.mxu0 0.0
    %5150 = vmatmul.mubr.f32.gmra.mrb[0].mxu0 %v4682
    %v5151 = vpop.f32.mrb[0].mxu0
    %v5152 = vadd.f32 0.0, %v5151
    %v5153 = vpop.f32.mrb[0].mxu0
    %5154 = vmatprep.mubr.f32.mxu0 0.0
    %5155 = vmatmul.mubr.f32.gmra.mrb[0].mxu0 %v4685
    %v5156 = vpop.f32.mrb[0].mxu0
    %v5157 = vadd.f32 0.0, %v5156
    %v5158 = vpop.f32.mrb[0].mxu0
    %5159 = vdwg.mxu0
    %v5160 = vadd.f32 %v4361, %v4757
    %v5161 = vadd.f32 %v4362, %v4762
    %v5162 = vadd.f32 %v4363, %v4767
    %v5163 = vadd.f32 %v4364, %v4772
    %v5164 = vadd.f32 %v4365, %v4777
    %v5165 = vadd.f32 %v4366, %v4782
    %v5166 = vadd.f32 %v4367, %v4787
    %v5167 = vadd.f32 %v4368, %v4792
    %v5168 = vadd.f32 %v4369, %v4797
    %v5169 = vadd.f32 %v4370, %v4802
    %v5170 = vadd.f32 %v4371, %v4807
    %v5171 = vadd.f32 %v4372, %v4812
    %v5172 = vadd.f32 %v4373, %v4817
    %v5173 = vadd.f32 %v4374, %v4822
    %v5174 = vadd.f32 %v4375, %v4827
    %v5175 = vadd.f32 %v4376, %v4832
    %v5176 = vadd.f32 %v4377, %v4837
    %v5177 = vadd.f32 %v4378, %v4842
    %v5178 = vadd.f32 %v4379, %v4847
    %v5179 = vadd.f32 %v4380, %v4852
    %v5180 = vadd.f32 %v4381, %v4857
    %v5181 = vadd.f32 %v4382, %v4862
    %v5182 = vadd.f32 %v4383, %v4867
    %v5183 = vadd.f32 %v4384, %v4872
    %v5184 = vadd.f32 %v4385, %v4877
    %v5185 = vadd.f32 %v4386, %v4882
    %v5186 = vadd.f32 %v4387, %v4887
    %v5187 = vadd.f32 %v4388, %v4892
    %v5188 = vadd.f32 %v4389, %v4897
    %v5189 = vadd.f32 %v4390, %v4902
    %v5190 = vadd.f32 %v4391, %v4907
    %v5191 = vadd.f32 %v4392, %v4912
    %v5192 = vadd.f32 %v4393, %v4917
    %v5193 = vadd.f32 %v4394, %v4922
    %v5194 = vadd.f32 %v4395, %v4927
    %v5195 = vadd.f32 %v4396, %v4932
    %v5196 = vadd.f32 %v4397, %v4937
    %v5197 = vadd.f32 %v4398, %v4942
    %v5198 = vadd.f32 %v4399, %v4947
    %v5199 = vadd.f32 %v4400, %v4952
    %v5200 = vadd.f32 %v4401, %v4957
    %v5201 = vadd.f32 %v4402, %v4962
    %v5202 = vadd.f32 %v4403, %v4967
    %v5203 = vadd.f32 %v4404, %v4972
    %v5204 = vadd.f32 %v4405, %v4977
    %v5205 = vadd.f32 %v4406, %v4982
    %v5206 = vadd.f32 %v4407, %v4987
    %v5207 = vadd.f32 %v4408, %v4992
    %v5208 = vadd.f32 %v4409, %v4997
    %v5209 = vadd.f32 %v4410, %v5002
    %v5210 = vadd.f32 %v4411, %v5007
    %v5211 = vadd.f32 %v4412, %v5012
    %v5212 = vadd.f32 %v4413, %v5017
    %v5213 = vadd.f32 %v4414, %v5022
    %v5214 = vadd.f32 %v4415, %v5027
    %v5215 = vadd.f32 %v4416, %v5032
    %v5216 = vadd.f32 %v4417, %v5037
    %v5217 = vadd.f32 %v4418, %v5042
    %v5218 = vadd.f32 %v4419, %v5047
    %v5219 = vadd.f32 %v4420, %v5052
    %v5220 = vadd.f32 %v4421, %v5057
    %v5221 = vadd.f32 %v4422, %v5062
    %v5222 = vadd.f32 %v4423, %v5067
    %v5223 = vadd.f32 %v4424, %v5072
    %v5224 = vadd.f32 %v4425, %v5077
    %v5225 = vadd.f32 %v4426, %v5082
    %v5226 = vadd.f32 %v4427, %v5087
    %v5227 = vadd.f32 %v4428, %v5092
    %v5228 = vadd.f32 %v4429, %v5097
    %v5229 = vadd.f32 %v4430, %v5102
    %v5230 = vadd.f32 %v4431, %v5107
    %v5231 = vadd.f32 %v4432, %v5112
    %v5232 = vadd.f32 %v4433, %v5117
    %v5233 = vadd.f32 %v4434, %v5122
    %v5234 = vadd.f32 %v4435, %v5127
    %v5235 = vadd.f32 %v4436, %v5132
    %v5236 = vadd.f32 %v4437, %v5137
    %v5237 = vadd.f32 %v4438, %v5142
    %v5238 = vadd.f32 %v4439, %v5147
    %v5239 = vadd.f32 %v4440, %v5152
    %v5240 = vadd.f32 %v4441, %v5157
    %5241 = vst [vmem:[#allocation2] sm:$0xff] %v5160
    %5242 = vst [vmem:[#allocation2 + $0x8] sm:$0xff] %v5161
    %5243 = vst [vmem:[#allocation2 + $0x10] sm:$0xff] %v5162
    %5244 = vst [vmem:[#allocation2 + $0x18] sm:$0xff] %v5163
    %5245 = vst [vmem:[#allocation2 + $0x20] sm:$0xff] %v5164
    %5246 = vst [vmem:[#allocation2 + $0x28] sm:$0xff] %v5165
    %5247 = vst [vmem:[#allocation2 + $0x30] sm:$0xff] %v5166
    %5248 = vst [vmem:[#allocation2 + $0x38] sm:$0xff] %v5167
    %5249 = vst [vmem:[#allocation2 + $0x40] sm:$0xff] %v5168
    %5250 = vst [vmem:[#allocation2 + $0x48] sm:$0xff] %v5169
    %5251 = vst [vmem:[#allocation2 + $0x50] sm:$0xff] %v5170
    %5252 = vst [vmem:[#allocation2 + $0x58] sm:$0xff] %v5171
    %5253 = vst [vmem:[#allocation2 + $0x60] sm:$0xff] %v5172
    %5254 = vst [vmem:[#allocation2 + $0x68] sm:$0xff] %v5173
    %5255 = vst [vmem:[#allocation2 + $0x70] sm:$0xff] %v5174
    %5256 = vst [vmem:[#allocation2 + $0x78] sm:$0xff] %v5175
    %5257 = vst [vmem:[#allocation2 + $0x80] sm:$0xff] %v5176
    %5258 = vst [vmem:[#allocation2 + $0x88] sm:$0xff] %v5177
    %5259 = vst [vmem:[#allocation2 + $0x90] sm:$0xff] %v5178
    %5260 = vst [vmem:[#allocation2 + $0x98] sm:$0xff] %v5179
    %5261 = vst [vmem:[#allocation2 + $0xa0] sm:$0xff] %v5180
    %5262 = vst [vmem:[#allocation2 + $0xa8] sm:$0xff] %v5181
    %5263 = vst [vmem:[#allocation2 + $0xb0] sm:$0xff] %v5182
    %5264 = vst [vmem:[#allocation2 + $0xb8] sm:$0xff] %v5183
    %5265 = vst [vmem:[#allocation2 + $0xc0] sm:$0xff] %v5184
    %5266 = vst [vmem:[#allocation2 + $0xc8] sm:$0xff] %v5185
    %5267 = vst [vmem:[#allocation2 + $0xd0] sm:$0xff] %v5186
    %5268 = vst [vmem:[#allocation2 + $0xd8] sm:$0xff] %v5187
    %5269 = vst [vmem:[#allocation2 + $0xe0] sm:$0xff] %v5188
    %5270 = vst [vmem:[#allocation2 + $0xe8] sm:$0xff] %v5189
    %5271 = vst [vmem:[#allocation2 + $0xf0] sm:$0xff] %v5190
    %5272 = vst [vmem:[#allocation2 + $0xf8] sm:$0xff] %v5191
    %5273 = vst [vmem:[#allocation2 + $0x100] sm:$0xff] %v5192
    %5274 = vst [vmem:[#allocation2 + $0x108] sm:$0xff] %v5193
    %5275 = vst [vmem:[#allocation2 + $0x110] sm:$0xff] %v5194
    %5276 = vst [vmem:[#allocation2 + $0x118] sm:$0xff] %v5195
    %5277 = vst [vmem:[#allocation2 + $0x120] sm:$0xff] %v5196
    %5278 = vst [vmem:[#allocation2 + $0x128] sm:$0xff] %v5197
    %5279 = vst [vmem:[#allocation2 + $0x130] sm:$0xff] %v5198
    %5280 = vst [vmem:[#allocation2 + $0x138] sm:$0xff] %v5199
    %5281 = vst [vmem:[#allocation2 + $0x140] sm:$0xff] %v5200
    %5282 = vst [vmem:[#allocation2 + $0x148] sm:$0xff] %v5201
    %5283 = vst [vmem:[#allocation2 + $0x150] sm:$0xff] %v5202
    %5284 = vst [vmem:[#allocation2 + $0x158] sm:$0xff] %v5203
    %5285 = vst [vmem:[#allocation2 + $0x160] sm:$0xff] %v5204
    %5286 = vst [vmem:[#allocation2 + $0x168] sm:$0xff] %v5205
    %5287 = vst [vmem:[#allocation2 + $0x170] sm:$0xff] %v5206
    %5288 = vst [vmem:[#allocation2 + $0x178] sm:$0xff] %v5207
    %5289 = vst [vmem:[#allocation2 + $0x180] sm:$0xff] %v5208
    %5290 = vst [vmem:[#allocation2 + $0x188] sm:$0xff] %v5209
    %5291 = vst [vmem:[#allocation2 + $0x190] sm:$0xff] %v5210
    %5292 = vst [vmem:[#allocation2 + $0x198] sm:$0xff] %v5211
    %5293 = vst [vmem:[#allocation2 + $0x1a0] sm:$0xff] %v5212
    %5294 = vst [vmem:[#allocation2 + $0x1a8] sm:$0xff] %v5213
    %5295 = vst [vmem:[#allocation2 + $0x1b0] sm:$0xff] %v5214
    %5296 = vst [vmem:[#allocation2 + $0x1b8] sm:$0xff] %v5215
    %5297 = vst [vmem:[#allocation2 + $0x1c0] sm:$0xff] %v5216
    %5298 = vst [vmem:[#allocation2 + $0x1c8] sm:$0xff] %v5217
    %5299 = vst [vmem:[#allocation2 + $0x1d0] sm:$0xff] %v5218
    %5300 = vst [vmem:[#allocation2 + $0x1d8] sm:$0xff] %v5219
    %5301 = vst [vmem:[#allocation2 + $0x1e0] sm:$0xff] %v5220
    %5302 = vst [vmem:[#allocation2 + $0x1e8] sm:$0xff] %v5221
    %5303 = vst [vmem:[#allocation2 + $0x1f0] sm:$0xff] %v5222
    %5304 = vst [vmem:[#allocation2 + $0x1f8] sm:$0xff] %v5223
    %5305 = vst [vmem:[#allocation2 + $0x200] sm:$0xff] %v5224
    %5306 = vst [vmem:[#allocation2 + $0x208] sm:$0xff] %v5225
    %5307 = vst [vmem:[#allocation2 + $0x210] sm:$0xff] %v5226
    %5308 = vst [vmem:[#allocation2 + $0x218] sm:$0xff] %v5227
    %5309 = vst [vmem:[#allocation2 + $0x220] sm:$0xff] %v5228
    %5310 = vst [vmem:[#allocation2 + $0x228] sm:$0xff] %v5229
    %5311 = vst [vmem:[#allocation2 + $0x230] sm:$0xff] %v5230
    %5312 = vst [vmem:[#allocation2 + $0x238] sm:$0xff] %v5231
    %5313 = vst [vmem:[#allocation2 + $0x240] sm:$0xff] %v5232
    %5314 = vst [vmem:[#allocation2 + $0x248] sm:$0xff] %v5233
    %5315 = vst [vmem:[#allocation2 + $0x250] sm:$0xff] %v5234
    %5316 = vst [vmem:[#allocation2 + $0x258] sm:$0xff] %v5235
    %5317 = vst [vmem:[#allocation2 + $0x260] sm:$0xff] %v5236
    %5318 = vst [vmem:[#allocation2 + $0x268] sm:$0xff] %v5237
    %5319 = vst [vmem:[#allocation2 + $0x270] sm:$0xff] %v5238
    %5320 = vst [vmem:[#allocation2 + $0x278] sm:$0xff] %v5239
    %5321 = vst [vmem:[#allocation2 + $0x280] sm:$0xff] %v5240
    %v5322 = vld [vmem:[%s0 + $0x14] sm:$0xff]
    %v5323 = vld [vmem:[%s0 + $0x1c] sm:$0xff]
    %v5324 = vld [vmem:[%s0 + $0x24] sm:$0xff]
    %v5325 = vld [vmem:[%s0 + $0x2c] sm:$0xff]
    %v5326 = vld [vmem:[%s0 + $0x34] sm:$0xff]
    %v5327 = vld [vmem:[%s0 + $0x3c] sm:$0xff]
    %v5328 = vld [vmem:[%s0 + $0x44] sm:$0xff]
    %v5329 = vld [vmem:[%s0 + $0x4c] sm:$0xff]
    %v5330 = vld [vmem:[%s0 + $0x54] sm:$0xff]
    %v5331 = vld [vmem:[%s0 + $0x5c] sm:$0xff]
    %v5332 = vld [vmem:[%s0 + $0x64] sm:$0xff]
    %v5333 = vld [vmem:[%s0 + $0x6c] sm:$0xff]
    %v5334 = vld [vmem:[%s0 + $0x74] sm:$0xff]
    %v5335 = vld [vmem:[%s0 + $0x7c] sm:$0xff]
    %v5336 = vld [vmem:[%s0 + $0x84] sm:$0xff]
    %v5337 = vld [vmem:[%s0 + $0x8c] sm:$0xff]
    %v5338 = vld [vmem:[%s0 + $0x94] sm:$0xff]
    %v5339 = vld [vmem:[%s0 + $0x9c] sm:$0xff]
    %v5340 = vld [vmem:[%s0 + $0xa4] sm:$0xff]
    %v5341 = vld [vmem:[%s0 + $0xac] sm:$0xff]
    %v5342 = vld [vmem:[%s0 + $0xb4] sm:$0xff]
    %v5343 = vld [vmem:[%s0 + $0xbc] sm:$0xff]
    %v5344 = vld [vmem:[%s0 + $0xc4] sm:$0xff]
    %v5345 = vld [vmem:[%s0 + $0xcc] sm:$0xff]
    %v5346 = vld [vmem:[%s0 + $0xd4] sm:$0xff]
    %v5347 = vld [vmem:[%s0 + $0xdc] sm:$0xff]
    %v5348 = vld [vmem:[%s0 + $0xe4] sm:$0xff]
    %v5349 = vld [vmem:[%s0 + $0xec] sm:$0xff]
    %v5350 = vld [vmem:[%s0 + $0xf4] sm:$0xff]
    %v5351 = vld [vmem:[%s0 + $0xfc] sm:$0xff]
    %v5352 = vld [vmem:[%s0 + $0x104] sm:$0xff]
    %v5353 = vld [vmem:[%s0 + $0x10c] sm:$0xff]
    %v5354 = vld [vmem:[%s0 + $0x114] sm:$0xff]
    %v5355 = vld [vmem:[%s0 + $0x11c] sm:$0xff]
    %v5356 = vld [vmem:[%s0 + $0x124] sm:$0xff]
    %v5357 = vld [vmem:[%s0 + $0x12c] sm:$0xff]
    %v5358 = vld [vmem:[%s0 + $0x134] sm:$0xff]
    %v5359 = vld [vmem:[%s0 + $0x13c] sm:$0xff]
    %v5360 = vld [vmem:[%s0 + $0x144] sm:$0xff]
    %v5361 = vld [vmem:[%s0 + $0x14c] sm:$0xff]
    %v5362 = vld [vmem:[%s0 + $0x154] sm:$0xff]
    %v5363 = vld [vmem:[%s0 + $0x15c] sm:$0xff]
    %v5364 = vld [vmem:[%s0 + $0x164] sm:$0xff]
    %v5365 = vld [vmem:[%s0 + $0x16c] sm:$0xff]
    %v5366 = vld [vmem:[%s0 + $0x174] sm:$0xff]
    %v5367 = vld [vmem:[%s0 + $0x17c] sm:$0xff]
    %v5368 = vld [vmem:[%s0 + $0x184] sm:$0xff]
    %v5369 = vld [vmem:[%s0 + $0x18c] sm:$0xff]
    %v5370 = vld [vmem:[%s0 + $0x194] sm:$0xff]
    %v5371 = vld [vmem:[%s0 + $0x19c] sm:$0xff]
    %v5372 = vld [vmem:[%s0 + $0x1a4] sm:$0xff]
    %v5373 = vld [vmem:[%s0 + $0x1ac] sm:$0xff]
    %v5374 = vld [vmem:[%s0 + $0x1b4] sm:$0xff]
    %v5375 = vld [vmem:[%s0 + $0x1bc] sm:$0xff]
    %v5376 = vld [vmem:[%s0 + $0x1c4] sm:$0xff]
    %v5377 = vld [vmem:[%s0 + $0x1cc] sm:$0xff]
    %v5378 = vld [vmem:[%s0 + $0x1d4] sm:$0xff]
    %v5379 = vld [vmem:[%s0 + $0x1dc] sm:$0xff]
    %v5380 = vld [vmem:[%s0 + $0x1e4] sm:$0xff]
    %v5381 = vld [vmem:[%s0 + $0x1ec] sm:$0xff]
    %v5382 = vld [vmem:[%s0 + $0x1f4] sm:$0xff]
    %v5383 = vld [vmem:[%s0 + $0x1fc] sm:$0xff]
    %v5384 = vld [vmem:[%s0 + $0x204] sm:$0xff]
    %v5385 = vld [vmem:[%s0 + $0x20c] sm:$0xff]
    %v5386 = vld [vmem:[%s0 + $0x214] sm:$0xff]
    %v5387 = vld [vmem:[%s0 + $0x21c] sm:$0xff]
    %v5388 = vld [vmem:[%s0 + $0x224] sm:$0xff]
    %v5389 = vld [vmem:[%s0 + $0x22c] sm:$0xff]
    %v5390 = vld [vmem:[%s0 + $0x234] sm:$0xff]
    %v5391 = vld [vmem:[%s0 + $0x23c] sm:$0xff]
    %v5392 = vld [vmem:[%s0 + $0x244] sm:$0xff]
    %v5393 = vld [vmem:[%s0 + $0x24c] sm:$0xff]
    %v5394 = vld [vmem:[%s0 + $0x254] sm:$0xff]
    %v5395 = vld [vmem:[%s0 + $0x25c] sm:$0xff]
    %v5396 = vld [vmem:[%s0 + $0x264] sm:$0xff]
    %v5397 = vld [vmem:[%s0 + $0x26c] sm:$0xff]
    %v5398 = vld [vmem:[%s0 + $0x274] sm:$0xff]
    %v5399 = vld [vmem:[%s0 + $0x27c] sm:$0xff]
    %v5400 = vld [vmem:[%s0 + $0x284] sm:$0xff]
    %v5401 = vld [vmem:[%s0 + $0x28c] sm:$0xff]
    %v5402 = vld [vmem:[%s0 + $0x294] sm:$0xff]
    %v5403 = vld [vmem:[#allocation2] sm:$0xff]
    %v5404 = vld [vmem:[#allocation2 + $0x8] sm:$0xff]
    %v5405 = vld [vmem:[#allocation2 + $0x10] sm:$0xff]
    %v5406 = vld [vmem:[#allocation2 + $0x18] sm:$0xff]
    %v5407 = vld [vmem:[#allocation2 + $0x20] sm:$0xff]
    %v5408 = vld [vmem:[#allocation2 + $0x28] sm:$0xff]
    %v5409 = vld [vmem:[#allocation2 + $0x30] sm:$0xff]
    %v5410 = vld [vmem:[#allocation2 + $0x38] sm:$0xff]
    %v5411 = vld [vmem:[#allocation2 + $0x40] sm:$0xff]
    %v5412 = vld [vmem:[#allocation2 + $0x48] sm:$0xff]
    %v5413 = vld [vmem:[#allocation2 + $0x50] sm:$0xff]
    %v5414 = vld [vmem:[#allocation2 + $0x58] sm:$0xff]
    %v5415 = vld [vmem:[#allocation2 + $0x60] sm:$0xff]
    %v5416 = vld [vmem:[#allocation2 + $0x68] sm:$0xff]
    %v5417 = vld [vmem:[#allocation2 + $0x70] sm:$0xff]
    %v5418 = vld [vmem:[#allocation2 + $0x78] sm:$0xff]
    %v5419 = vld [vmem:[#allocation2 + $0x80] sm:$0xff]
    %v5420 = vld [vmem:[#allocation2 + $0x88] sm:$0xff]
    %v5421 = vld [vmem:[#allocation2 + $0x90] sm:$0xff]
    %v5422 = vld [vmem:[#allocation2 + $0x98] sm:$0xff]
    %v5423 = vld [vmem:[#allocation2 + $0xa0] sm:$0xff]
    %v5424 = vld [vmem:[#allocation2 + $0xa8] sm:$0xff]
    %v5425 = vld [vmem:[#allocation2 + $0xb0] sm:$0xff]
    %v5426 = vld [vmem:[#allocation2 + $0xb8] sm:$0xff]
    %v5427 = vld [vmem:[#allocation2 + $0xc0] sm:$0xff]
    %v5428 = vld [vmem:[#allocation2 + $0xc8] sm:$0xff]
    %v5429 = vld [vmem:[#allocation2 + $0xd0] sm:$0xff]
    %v5430 = vld [vmem:[#allocation2 + $0xd8] sm:$0xff]
    %v5431 = vld [vmem:[#allocation2 + $0xe0] sm:$0xff]
    %v5432 = vld [vmem:[#allocation2 + $0xe8] sm:$0xff]
    %v5433 = vld [vmem:[#allocation2 + $0xf0] sm:$0xff]
    %v5434 = vld [vmem:[#allocation2 + $0xf8] sm:$0xff]
    %v5435 = vld [vmem:[#allocation2 + $0x100] sm:$0xff]
    %v5436 = vld [vmem:[#allocation2 + $0x108] sm:$0xff]
    %v5437 = vld [vmem:[#allocation2 + $0x110] sm:$0xff]
    %v5438 = vld [vmem:[#allocation2 + $0x118] sm:$0xff]
    %v5439 = vld [vmem:[#allocation2 + $0x120] sm:$0xff]
    %v5440 = vld [vmem:[#allocation2 + $0x128] sm:$0xff]
    %v5441 = vld [vmem:[#allocation2 + $0x130] sm:$0xff]
    %v5442 = vld [vmem:[#allocation2 + $0x138] sm:$0xff]
    %v5443 = vld [vmem:[#allocation2 + $0x140] sm:$0xff]
    %v5444 = vld [vmem:[#allocation2 + $0x148] sm:$0xff]
    %v5445 = vld [vmem:[#allocation2 + $0x150] sm:$0xff]
    %v5446 = vld [vmem:[#allocation2 + $0x158] sm:$0xff]
    %v5447 = vld [vmem:[#allocation2 + $0x160] sm:$0xff]
    %v5448 = vld [vmem:[#allocation2 + $0x168] sm:$0xff]
    %v5449 = vld [vmem:[#allocation2 + $0x170] sm:$0xff]
    %v5450 = vld [vmem:[#allocation2 + $0x178] sm:$0xff]
    %v5451 = vld [vmem:[#allocation2 + $0x180] sm:$0xff]
    %v5452 = vld [vmem:[#allocation2 + $0x188] sm:$0xff]
    %v5453 = vld [vmem:[#allocation2 + $0x190] sm:$0xff]
    %v5454 = vld [vmem:[#allocation2 + $0x198] sm:$0xff]
    %v5455 = vld [vmem:[#allocation2 + $0x1a0] sm:$0xff]
    %v5456 = vld [vmem:[#allocation2 + $0x1a8] sm:$0xff]
    %v5457 = vld [vmem:[#allocation2 + $0x1b0] sm:$0xff]
    %v5458 = vld [vmem:[#allocation2 + $0x1b8] sm:$0xff]
    %v5459 = vld [vmem:[#allocation2 + $0x1c0] sm:$0xff]
    %v5460 = vld [vmem:[#allocation2 + $0x1c8] sm:$0xff]
    %v5461 = vld [vmem:[#allocation2 + $0x1d0] sm:$0xff]
    %v5462 = vld [vmem:[#allocation2 + $0x1d8] sm:$0xff]
    %v5463 = vld [vmem:[#allocation2 + $0x1e0] sm:$0xff]
    %v5464 = vld [vmem:[#allocation2 + $0x1e8] sm:$0xff]
    %v5465 = vld [vmem:[#allocation2 + $0x1f0] sm:$0xff]
    %v5466 = vld [vmem:[#allocation2 + $0x1f8] sm:$0xff]
    %v5467 = vld [vmem:[#allocation2 + $0x200] sm:$0xff]
    %v5468 = vld [vmem:[#allocation2 + $0x208] sm:$0xff]
    %v5469 = vld [vmem:[#allocation2 + $0x210] sm:$0xff]
    %v5470 = vld [vmem:[#allocation2 + $0x218] sm:$0xff]
    %v5471 = vld [vmem:[#allocation2 + $0x220] sm:$0xff]
    %v5472 = vld [vmem:[#allocation2 + $0x228] sm:$0xff]
    %v5473 = vld [vmem:[#allocation2 + $0x230] sm:$0xff]
    %v5474 = vld [vmem:[#allocation2 + $0x238] sm:$0xff]
    %v5475 = vld [vmem:[#allocation2 + $0x240] sm:$0xff]
    %v5476 = vld [vmem:[#allocation2 + $0x248] sm:$0xff]
    %v5477 = vld [vmem:[#allocation2 + $0x250] sm:$0xff]
    %v5478 = vld [vmem:[#allocation2 + $0x258] sm:$0xff]
    %v5479 = vld [vmem:[#allocation2 + $0x260] sm:$0xff]
    %v5480 = vld [vmem:[#allocation2 + $0x268] sm:$0xff]
    %v5481 = vld [vmem:[#allocation2 + $0x270] sm:$0xff]
    %v5482 = vld [vmem:[#allocation2 + $0x278] sm:$0xff]
    %v5483 = vld [vmem:[#allocation2 + $0x280] sm:$0xff]
    %s5484 = scalar_lea.vmem %s1, 20
    %v5485 = vld [vmem:[%s5484] sm:$0xf]
    %v5487 = vsel %vm274, %v5322, 0
    %v5490 = vsel %vm274, %v5323, 0
    %v5493 = vsel %vm274, %v5324, 0
    %v5496 = vsel %vm274, %v5325, 0
    %v5499 = vsel %vm274, %v5326, 0
    %v5502 = vsel %vm274, %v5327, 0
    %v5505 = vsel %vm274, %v5328, 0
    %v5508 = vsel %vm274, %v5329, 0
    %v5511 = vsel %vm274, %v5330, 0
    %v5514 = vsel %vm274, %v5331, 0
    %v5517 = vsel %vm274, %v5332, 0
    %v5520 = vsel %vm274, %v5333, 0
    %v5523 = vsel %vm274, %v5334, 0
    %v5526 = vsel %vm274, %v5335, 0
    %v5529 = vsel %vm274, %v5336, 0
    %v5532 = vsel %vm274, %v5337, 0
    %v5535 = vsel %vm274, %v5338, 0
    %v5538 = vsel %vm274, %v5339, 0
    %v5541 = vsel %vm274, %v5340, 0
    %v5544 = vsel %vm274, %v5341, 0
    %v5547 = vsel %vm274, %v5342, 0
    %v5550 = vsel %vm274, %v5343, 0
    %v5553 = vsel %vm274, %v5344, 0
    %v5556 = vsel %vm274, %v5345, 0
    %v5559 = vsel %vm274, %v5346, 0
    %v5562 = vsel %vm274, %v5347, 0
    %v5565 = vsel %vm274, %v5348, 0
    %v5568 = vsel %vm274, %v5349, 0
    %v5571 = vsel %vm274, %v5350, 0
    %v5574 = vsel %vm274, %v5351, 0
    %v5577 = vsel %vm274, %v5352, 0
    %v5580 = vsel %vm274, %v5353, 0
    %v5583 = vsel %vm274, %v5354, 0
    %v5586 = vsel %vm274, %v5355, 0
    %v5589 = vsel %vm274, %v5356, 0
    %v5592 = vsel %vm274, %v5357, 0
    %v5595 = vsel %vm274, %v5358, 0
    %v5598 = vsel %vm274, %v5359, 0
    %v5601 = vsel %vm274, %v5360, 0
    %v5604 = vsel %vm274, %v5361, 0
    %v5607 = vsel %vm274, %v5362, 0
    %v5610 = vsel %vm274, %v5363, 0
    %v5613 = vsel %vm274, %v5364, 0
    %v5616 = vsel %vm274, %v5365, 0
    %v5619 = vsel %vm274, %v5366, 0
    %v5622 = vsel %vm274, %v5367, 0
    %v5625 = vsel %vm274, %v5368, 0
    %v5628 = vsel %vm274, %v5369, 0
    %v5631 = vsel %vm274, %v5370, 0
    %v5634 = vsel %vm274, %v5371, 0
    %v5637 = vsel %vm274, %v5372, 0
    %v5640 = vsel %vm274, %v5373, 0
    %v5643 = vsel %vm274, %v5374, 0
    %v5646 = vsel %vm274, %v5375, 0
    %v5649 = vsel %vm274, %v5376, 0
    %v5652 = vsel %vm274, %v5377, 0
    %v5655 = vsel %vm274, %v5378, 0
    %v5658 = vsel %vm274, %v5379, 0
    %v5661 = vsel %vm274, %v5380, 0
    %v5664 = vsel %vm274, %v5381, 0
    %v5667 = vsel %vm274, %v5382, 0
    %v5670 = vsel %vm274, %v5383, 0
    %v5673 = vsel %vm274, %v5384, 0
    %v5676 = vsel %vm274, %v5385, 0
    %v5679 = vsel %vm274, %v5386, 0
    %v5682 = vsel %vm274, %v5387, 0
    %v5685 = vsel %vm274, %v5388, 0
    %v5688 = vsel %vm274, %v5389, 0
    %v5691 = vsel %vm274, %v5390, 0
    %v5694 = vsel %vm274, %v5391, 0
    %v5697 = vsel %vm274, %v5392, 0
    %v5700 = vsel %vm274, %v5393, 0
    %v5703 = vsel %vm274, %v5394, 0
    %v5706 = vsel %vm274, %v5395, 0
    %v5709 = vsel %vm274, %v5396, 0
    %v5712 = vsel %vm274, %v5397, 0
    %v5715 = vsel %vm274, %v5398, 0
    %v5718 = vsel %vm274, %v5399, 0
    %v5721 = vsel %vm274, %v5400, 0
    %v5724 = vsel %vm274, %v5401, 0
    %v5727 = vsel %vm274, %v5402, 0
    %v5730 = vsel %vm518, %v5485, 0
    %5732 = vmatprep.subr.mxu0 0.0
    %5733 = vmatpush1.msra.mxu0 %v5730
    %5734 = vmatprep.subr.mxu0 0.0
    %5735 = vmatpush1.msra.mxu0 0.0
    %5736 = vmatprep.subr.mxu0 0.0
    %5737 = vmatpush1.msra.mxu0 0.0
    %5738 = vmatprep.subr.mxu0 0.0
    %5739 = vmatpush1.msra.mxu0 0.0
    %5740 = vmatprep.subr.mxu0 0.0
    %5741 = vmatpush1.msra.mxu0 0.0
    %5742 = vmatprep.subr.mxu0 0.0
    %5743 = vmatpush1.msra.mxu0 0.0
    %5744 = vmatprep.subr.mxu0 0.0
    %5745 = vmatpush1.msra.mxu0 0.0
    %5746 = vmatprep.subr.mxu0 0.0
    %5747 = vmatpush1.msra.mxu0 0.0
    %5748 = vmatprep.subr.mxu0 0.0
    %5749 = vmatpush1.msra.mxu0 0.0
    %5750 = vmatprep.subr.mxu0 0.0
    %5751 = vmatpush1.msra.mxu0 0.0
    %5752 = vmatprep.subr.mxu0 0.0
    %5753 = vmatpush1.msra.mxu0 0.0
    %5754 = vmatprep.subr.mxu0 0.0
    %5755 = vmatpush1.msra.mxu0 0.0
    %5756 = vmatprep.subr.mxu0 0.0
    %5757 = vmatpush1.msra.mxu0 0.0
    %5758 = vmatprep.subr.mxu0 0.0
    %5759 = vmatpush1.msra.mxu0 0.0
    %5760 = vmatprep.subr.mxu0 0.0
    %5761 = vmatpush1.msra.mxu0 0.0
    %5762 = vmatprep.subr.mxu0 0.0
    %5763 = vmatpush1.msra.mxu0 0.0
    %5764 = vmatprep.subr.mxu0 0.0
    %5765 = vmatpush1.msra.mxu0 0.0
    %5766 = vmatprep.subr.mxu0 0.0
    %5767 = vmatpush1.msra.mxu0 0.0
    %5768 = vmatprep.subr.mxu0 0.0
    %5769 = vmatpush1.msra.mxu0 0.0
    %5770 = vmatprep.subr.mxu0 0.0
    %5771 = vmatpush1.msra.mxu0 0.0
    %5772 = vmatprep.subr.mxu0 0.0
    %5773 = vmatpush1.msra.mxu0 0.0
    %5774 = vmatprep.subr.mxu0 0.0
    %5775 = vmatpush1.msra.mxu0 0.0
    %5776 = vmatprep.subr.mxu0 0.0
    %5777 = vmatpush1.msra.mxu0 0.0
    %5778 = vmatprep.subr.mxu0 0.0
    %5779 = vmatpush1.msra.mxu0 0.0
    %5780 = vmatprep.subr.mxu0 0.0
    %5781 = vmatpush1.msra.mxu0 0.0
    %5782 = vmatprep.subr.mxu0 0.0
    %5783 = vmatpush1.msra.mxu0 0.0
    %5784 = vmatprep.subr.mxu0 0.0
    %5785 = vmatpush1.msra.mxu0 0.0
    %5786 = vmatprep.subr.mxu0 0.0
    %5787 = vmatpush1.msra.mxu0 0.0
    %5788 = vmatprep.subr.mxu0 0.0
    %5789 = vmatpush1.msra.mxu0 0.0
    %5790 = vmatprep.subr.mxu0 0.0
    %5791 = vmatpush1.msra.mxu0 0.0
    %5792 = vmatprep.subr.mxu0 0.0
    %5793 = vmatpush1.msra.mxu0 0.0
    %5794 = vmatprep.subr.mxu0 0.0
    %5795 = vmatpush1.msra.mxu0 0.0
    %5796 = vmatprep.mubr.f32.mxu0 0.0
    %5797 = vmatmul.mubr.f32.gmra.mrb[0].mxu0 %v5487
    %v5798 = vpop.f32.mrb[0].mxu0
    %v5799 = vadd.f32 0.0, %v5798
    %v5800 = vpop.f32.mrb[0].mxu0
    %5801 = vmatprep.mubr.f32.mxu0 0.0
    %5802 = vmatmul.mubr.f32.gmra.mrb[0].mxu0 %v5490
    %v5803 = vpop.f32.mrb[0].mxu0
    %v5804 = vadd.f32 0.0, %v5803
    %v5805 = vpop.f32.mrb[0].mxu0
    %5806 = vmatprep.mubr.f32.mxu0 0.0
    %5807 = vmatmul.mubr.f32.gmra.mrb[0].mxu0 %v5493
    %v5808 = vpop.f32.mrb[0].mxu0
    %v5809 = vadd.f32 0.0, %v5808
    %v5810 = vpop.f32.mrb[0].mxu0
    %5811 = vmatprep.mubr.f32.mxu0 0.0
    %5812 = vmatmul.mubr.f32.gmra.mrb[0].mxu0 %v5496
    %v5813 = vpop.f32.mrb[0].mxu0
    %v5814 = vadd.f32 0.0, %v5813
    %v5815 = vpop.f32.mrb[0].mxu0
    %5816 = vmatprep.mubr.f32.mxu0 0.0
    %5817 = vmatmul.mubr.f32.gmra.mrb[0].mxu0 %v5499
    %v5818 = vpop.f32.mrb[0].mxu0
    %v5819 = vadd.f32 0.0, %v5818
    %v5820 = vpop.f32.mrb[0].mxu0
    %5821 = vmatprep.mubr.f32.mxu0 0.0
    %5822 = vmatmul.mubr.f32.gmra.mrb[0].mxu0 %v5502
    %v5823 = vpop.f32.mrb[0].mxu0
    %v5824 = vadd.f32 0.0, %v5823
    %v5825 = vpop.f32.mrb[0].mxu0
    %5826 = vmatprep.mubr.f32.mxu0 0.0
    %5827 = vmatmul.mubr.f32.gmra.mrb[0].mxu0 %v5505
    %v5828 = vpop.f32.mrb[0].mxu0
    %v5829 = vadd.f32 0.0, %v5828
    %v5830 = vpop.f32.mrb[0].mxu0
    %5831 = vmatprep.mubr.f32.mxu0 0.0
    %5832 = vmatmul.mubr.f32.gmra.mrb[0].mxu0 %v5508
    %v5833 = vpop.f32.mrb[0].mxu0
    %v5834 = vadd.f32 0.0, %v5833
    %v5835 = vpop.f32.mrb[0].mxu0
    %5836 = vmatprep.mubr.f32.mxu0 0.0
    %5837 = vmatmul.mubr.f32.gmra.mrb[0].mxu0 %v5511
    %v5838 = vpop.f32.mrb[0].mxu0
    %v5839 = vadd.f32 0.0, %v5838
    %v5840 = vpop.f32.mrb[0].mxu0
    %5841 = vmatprep.mubr.f32.mxu0 0.0
    %5842 = vmatmul.mubr.f32.gmra.mrb[0].mxu0 %v5514
    %v5843 = vpop.f32.mrb[0].mxu0
    %v5844 = vadd.f32 0.0, %v5843
    %v5845 = vpop.f32.mrb[0].mxu0
    %5846 = vmatprep.mubr.f32.mxu0 0.0
    %5847 = vmatmul.mubr.f32.gmra.mrb[0].mxu0 %v5517
    %v5848 = vpop.f32.mrb[0].mxu0
    %v5849 = vadd.f32 0.0, %v5848
    %v5850 = vpop.f32.mrb[0].mxu0
    %5851 = vmatprep.mubr.f32.mxu0 0.0
    %5852 = vmatmul.mubr.f32.gmra.mrb[0].mxu0 %v5520
    %v5853 = vpop.f32.mrb[0].mxu0
    %v5854 = vadd.f32 0.0, %v5853
    %v5855 = vpop.f32.mrb[0].mxu0
    %5856 = vmatprep.mubr.f32.mxu0 0.0
    %5857 = vmatmul.mubr.f32.gmra.mrb[0].mxu0 %v5523
    %v5858 = vpop.f32.mrb[0].mxu0
    %v5859 = vadd.f32 0.0, %v5858
    %v5860 = vpop.f32.mrb[0].mxu0
    %5861 = vmatprep.mubr.f32.mxu0 0.0
    %5862 = vmatmul.mubr.f32.gmra.mrb[0].mxu0 %v5526
    %v5863 = vpop.f32.mrb[0].mxu0
    %v5864 = vadd.f32 0.0, %v5863
    %v5865 = vpop.f32.mrb[0].mxu0
    %5866 = vmatprep.mubr.f32.mxu0 0.0
    %5867 = vmatmul.mubr.f32.gmra.mrb[0].mxu0 %v5529
    %v5868 = vpop.f32.mrb[0].mxu0
    %v5869 = vadd.f32 0.0, %v5868
    %v5870 = vpop.f32.mrb[0].mxu0
    %5871 = vmatprep.mubr.f32.mxu0 0.0
    %5872 = vmatmul.mubr.f32.gmra.mrb[0].mxu0 %v5532
    %v5873 = vpop.f32.mrb[0].mxu0
    %v5874 = vadd.f32 0.0, %v5873
    %v5875 = vpop.f32.mrb[0].mxu0
    %5876 = vmatprep.mubr.f32.mxu0 0.0
    %5877 = vmatmul.mubr.f32.gmra.mrb[0].mxu0 %v5535
    %v5878 = vpop.f32.mrb[0].mxu0
    %v5879 = vadd.f32 0.0, %v5878
    %v5880 = vpop.f32.mrb[0].mxu0
    %5881 = vmatprep.mubr.f32.mxu0 0.0
    %5882 = vmatmul.mubr.f32.gmra.mrb[0].mxu0 %v5538
    %v5883 = vpop.f32.mrb[0].mxu0
    %v5884 = vadd.f32 0.0, %v5883
    %v5885 = vpop.f32.mrb[0].mxu0
    %5886 = vmatprep.mubr.f32.mxu0 0.0
    %5887 = vmatmul.mubr.f32.gmra.mrb[0].mxu0 %v5541
    %v5888 = vpop.f32.mrb[0].mxu0
    %v5889 = vadd.f32 0.0, %v5888
    %v5890 = vpop.f32.mrb[0].mxu0
    %5891 = vmatprep.mubr.f32.mxu0 0.0
    %5892 = vmatmul.mubr.f32.gmra.mrb[0].mxu0 %v5544
    %v5893 = vpop.f32.mrb[0].mxu0
    %v5894 = vadd.f32 0.0, %v5893
    %v5895 = vpop.f32.mrb[0].mxu0
    %5896 = vmatprep.mubr.f32.mxu0 0.0
    %5897 = vmatmul.mubr.f32.gmra.mrb[0].mxu0 %v5547
    %v5898 = vpop.f32.mrb[0].mxu0
    %v5899 = vadd.f32 0.0, %v5898
    %v5900 = vpop.f32.mrb[0].mxu0
    %5901 = vmatprep.mubr.f32.mxu0 0.0
    %5902 = vmatmul.mubr.f32.gmra.mrb[0].mxu0 %v5550
    %v5903 = vpop.f32.mrb[0].mxu0
    %v5904 = vadd.f32 0.0, %v5903
    %v5905 = vpop.f32.mrb[0].mxu0
    %5906 = vmatprep.mubr.f32.mxu0 0.0
    %5907 = vmatmul.mubr.f32.gmra.mrb[0].mxu0 %v5553
    %v5908 = vpop.f32.mrb[0].mxu0
    %v5909 = vadd.f32 0.0, %v5908
    %v5910 = vpop.f32.mrb[0].mxu0
    %5911 = vmatprep.mubr.f32.mxu0 0.0
    %5912 = vmatmul.mubr.f32.gmra.mrb[0].mxu0 %v5556
    %v5913 = vpop.f32.mrb[0].mxu0
    %v5914 = vadd.f32 0.0, %v5913
    %v5915 = vpop.f32.mrb[0].mxu0
    %5916 = vmatprep.mubr.f32.mxu0 0.0
    %5917 = vmatmul.mubr.f32.gmra.mrb[0].mxu0 %v5559
    %v5918 = vpop.f32.mrb[0].mxu0
    %v5919 = vadd.f32 0.0, %v5918
    %v5920 = vpop.f32.mrb[0].mxu0
    %5921 = vmatprep.mubr.f32.mxu0 0.0
    %5922 = vmatmul.mubr.f32.gmra.mrb[0].mxu0 %v5562
    %v5923 = vpop.f32.mrb[0].mxu0
    %v5924 = vadd.f32 0.0, %v5923
    %v5925 = vpop.f32.mrb[0].mxu0
    %5926 = vmatprep.mubr.f32.mxu0 0.0
    %5927 = vmatmul.mubr.f32.gmra.mrb[0].mxu0 %v5565
    %v5928 = vpop.f32.mrb[0].mxu0
    %v5929 = vadd.f32 0.0, %v5928
    %v5930 = vpop.f32.mrb[0].mxu0
    %5931 = vmatprep.mubr.f32.mxu0 0.0
    %5932 = vmatmul.mubr.f32.gmra.mrb[0].mxu0 %v5568
    %v5933 = vpop.f32.mrb[0].mxu0
    %v5934 = vadd.f32 0.0, %v5933
    %v5935 = vpop.f32.mrb[0].mxu0
    %5936 = vmatprep.mubr.f32.mxu0 0.0
    %5937 = vmatmul.mubr.f32.gmra.mrb[0].mxu0 %v5571
    %v5938 = vpop.f32.mrb[0].mxu0
    %v5939 = vadd.f32 0.0, %v5938
    %v5940 = vpop.f32.mrb[0].mxu0
    %5941 = vmatprep.mubr.f32.mxu0 0.0
    %5942 = vmatmul.mubr.f32.gmra.mrb[0].mxu0 %v5574
    %v5943 = vpop.f32.mrb[0].mxu0
    %v5944 = vadd.f32 0.0, %v5943
    %v5945 = vpop.f32.mrb[0].mxu0
    %5946 = vmatprep.mubr.f32.mxu0 0.0
    %5947 = vmatmul.mubr.f32.gmra.mrb[0].mxu0 %v5577
    %v5948 = vpop.f32.mrb[0].mxu0
    %v5949 = vadd.f32 0.0, %v5948
    %v5950 = vpop.f32.mrb[0].mxu0
    %5951 = vmatprep.mubr.f32.mxu0 0.0
    %5952 = vmatmul.mubr.f32.gmra.mrb[0].mxu0 %v5580
    %v5953 = vpop.f32.mrb[0].mxu0
    %v5954 = vadd.f32 0.0, %v5953
    %v5955 = vpop.f32.mrb[0].mxu0
    %5956 = vmatprep.mubr.f32.mxu0 0.0
    %5957 = vmatmul.mubr.f32.gmra.mrb[0].mxu0 %v5583
    %v5958 = vpop.f32.mrb[0].mxu0
    %v5959 = vadd.f32 0.0, %v5958
    %v5960 = vpop.f32.mrb[0].mxu0
    %5961 = vmatprep.mubr.f32.mxu0 0.0
    %5962 = vmatmul.mubr.f32.gmra.mrb[0].mxu0 %v5586
    %v5963 = vpop.f32.mrb[0].mxu0
    %v5964 = vadd.f32 0.0, %v5963
    %v5965 = vpop.f32.mrb[0].mxu0
    %5966 = vmatprep.mubr.f32.mxu0 0.0
    %5967 = vmatmul.mubr.f32.gmra.mrb[0].mxu0 %v5589
    %v5968 = vpop.f32.mrb[0].mxu0
    %v5969 = vadd.f32 0.0, %v5968
    %v5970 = vpop.f32.mrb[0].mxu0
    %5971 = vmatprep.mubr.f32.mxu0 0.0
    %5972 = vmatmul.mubr.f32.gmra.mrb[0].mxu0 %v5592
    %v5973 = vpop.f32.mrb[0].mxu0
    %v5974 = vadd.f32 0.0, %v5973
    %v5975 = vpop.f32.mrb[0].mxu0
    %5976 = vmatprep.mubr.f32.mxu0 0.0
    %5977 = vmatmul.mubr.f32.gmra.mrb[0].mxu0 %v5595
    %v5978 = vpop.f32.mrb[0].mxu0
    %v5979 = vadd.f32 0.0, %v5978
    %v5980 = vpop.f32.mrb[0].mxu0
    %5981 = vmatprep.mubr.f32.mxu0 0.0
    %5982 = vmatmul.mubr.f32.gmra.mrb[0].mxu0 %v5598
    %v5983 = vpop.f32.mrb[0].mxu0
    %v5984 = vadd.f32 0.0, %v5983
    %v5985 = vpop.f32.mrb[0].mxu0
    %5986 = vmatprep.mubr.f32.mxu0 0.0
    %5987 = vmatmul.mubr.f32.gmra.mrb[0].mxu0 %v5601
    %v5988 = vpop.f32.mrb[0].mxu0
    %v5989 = vadd.f32 0.0, %v5988
    %v5990 = vpop.f32.mrb[0].mxu0
    %5991 = vmatprep.mubr.f32.mxu0 0.0
    %5992 = vmatmul.mubr.f32.gmra.mrb[0].mxu0 %v5604
    %v5993 = vpop.f32.mrb[0].mxu0
    %v5994 = vadd.f32 0.0, %v5993
    %v5995 = vpop.f32.mrb[0].mxu0
    %5996 = vmatprep.mubr.f32.mxu0 0.0
    %5997 = vmatmul.mubr.f32.gmra.mrb[0].mxu0 %v5607
    %v5998 = vpop.f32.mrb[0].mxu0
    %v5999 = vadd.f32 0.0, %v5998
    %v6000 = vpop.f32.mrb[0].mxu0
    %6001 = vmatprep.mubr.f32.mxu0 0.0
    %6002 = vmatmul.mubr.f32.gmra.mrb[0].mxu0 %v5610
    %v6003 = vpop.f32.mrb[0].mxu0
    %v6004 = vadd.f32 0.0, %v6003
    %v6005 = vpop.f32.mrb[0].mxu0
    %6006 = vmatprep.mubr.f32.mxu0 0.0
    %6007 = vmatmul.mubr.f32.gmra.mrb[0].mxu0 %v5613
    %v6008 = vpop.f32.mrb[0].mxu0
    %v6009 = vadd.f32 0.0, %v6008
    %v6010 = vpop.f32.mrb[0].mxu0
    %6011 = vmatprep.mubr.f32.mxu0 0.0
    %6012 = vmatmul.mubr.f32.gmra.mrb[0].mxu0 %v5616
    %v6013 = vpop.f32.mrb[0].mxu0
    %v6014 = vadd.f32 0.0, %v6013
    %v6015 = vpop.f32.mrb[0].mxu0
    %6016 = vmatprep.mubr.f32.mxu0 0.0
    %6017 = vmatmul.mubr.f32.gmra.mrb[0].mxu0 %v5619
    %v6018 = vpop.f32.mrb[0].mxu0
    %v6019 = vadd.f32 0.0, %v6018
    %v6020 = vpop.f32.mrb[0].mxu0
    %6021 = vmatprep.mubr.f32.mxu0 0.0
    %6022 = vmatmul.mubr.f32.gmra.mrb[0].mxu0 %v5622
    %v6023 = vpop.f32.mrb[0].mxu0
    %v6024 = vadd.f32 0.0, %v6023
    %v6025 = vpop.f32.mrb[0].mxu0
    %6026 = vmatprep.mubr.f32.mxu0 0.0
    %6027 = vmatmul.mubr.f32.gmra.mrb[0].mxu0 %v5625
    %v6028 = vpop.f32.mrb[0].mxu0
    %v6029 = vadd.f32 0.0, %v6028
    %v6030 = vpop.f32.mrb[0].mxu0
    %6031 = vmatprep.mubr.f32.mxu0 0.0
    %6032 = vmatmul.mubr.f32.gmra.mrb[0].mxu0 %v5628
    %v6033 = vpop.f32.mrb[0].mxu0
    %v6034 = vadd.f32 0.0, %v6033
    %v6035 = vpop.f32.mrb[0].mxu0
    %6036 = vmatprep.mubr.f32.mxu0 0.0
    %6037 = vmatmul.mubr.f32.gmra.mrb[0].mxu0 %v5631
    %v6038 = vpop.f32.mrb[0].mxu0
    %v6039 = vadd.f32 0.0, %v6038
    %v6040 = vpop.f32.mrb[0].mxu0
    %6041 = vmatprep.mubr.f32.mxu0 0.0
    %6042 = vmatmul.mubr.f32.gmra.mrb[0].mxu0 %v5634
    %v6043 = vpop.f32.mrb[0].mxu0
    %v6044 = vadd.f32 0.0, %v6043
    %v6045 = vpop.f32.mrb[0].mxu0
    %6046 = vmatprep.mubr.f32.mxu0 0.0
    %6047 = vmatmul.mubr.f32.gmra.mrb[0].mxu0 %v5637
    %v6048 = vpop.f32.mrb[0].mxu0
    %v6049 = vadd.f32 0.0, %v6048
    %v6050 = vpop.f32.mrb[0].mxu0
    %6051 = vmatprep.mubr.f32.mxu0 0.0
    %6052 = vmatmul.mubr.f32.gmra.mrb[0].mxu0 %v5640
    %v6053 = vpop.f32.mrb[0].mxu0
    %v6054 = vadd.f32 0.0, %v6053
    %v6055 = vpop.f32.mrb[0].mxu0
    %6056 = vmatprep.mubr.f32.mxu0 0.0
    %6057 = vmatmul.mubr.f32.gmra.mrb[0].mxu0 %v5643
    %v6058 = vpop.f32.mrb[0].mxu0
    %v6059 = vadd.f32 0.0, %v6058
    %v6060 = vpop.f32.mrb[0].mxu0
    %6061 = vmatprep.mubr.f32.mxu0 0.0
    %6062 = vmatmul.mubr.f32.gmra.mrb[0].mxu0 %v5646
    %v6063 = vpop.f32.mrb[0].mxu0
    %v6064 = vadd.f32 0.0, %v6063
    %v6065 = vpop.f32.mrb[0].mxu0
    %6066 = vmatprep.mubr.f32.mxu0 0.0
    %6067 = vmatmul.mubr.f32.gmra.mrb[0].mxu0 %v5649
    %v6068 = vpop.f32.mrb[0].mxu0
    %v6069 = vadd.f32 0.0, %v6068
    %v6070 = vpop.f32.mrb[0].mxu0
    %6071 = vmatprep.mubr.f32.mxu0 0.0
    %6072 = vmatmul.mubr.f32.gmra.mrb[0].mxu0 %v5652
    %v6073 = vpop.f32.mrb[0].mxu0
    %v6074 = vadd.f32 0.0, %v6073
    %v6075 = vpop.f32.mrb[0].mxu0
    %6076 = vmatprep.mubr.f32.mxu0 0.0
    %6077 = vmatmul.mubr.f32.gmra.mrb[0].mxu0 %v5655
    %v6078 = vpop.f32.mrb[0].mxu0
    %v6079 = vadd.f32 0.0, %v6078
    %v6080 = vpop.f32.mrb[0].mxu0
    %6081 = vmatprep.mubr.f32.mxu0 0.0
    %6082 = vmatmul.mubr.f32.gmra.mrb[0].mxu0 %v5658
    %v6083 = vpop.f32.mrb[0].mxu0
    %v6084 = vadd.f32 0.0, %v6083
    %v6085 = vpop.f32.mrb[0].mxu0
    %6086 = vmatprep.mubr.f32.mxu0 0.0
    %6087 = vmatmul.mubr.f32.gmra.mrb[0].mxu0 %v5661
    %v6088 = vpop.f32.mrb[0].mxu0
    %v6089 = vadd.f32 0.0, %v6088
    %v6090 = vpop.f32.mrb[0].mxu0
    %6091 = vmatprep.mubr.f32.mxu0 0.0
    %6092 = vmatmul.mubr.f32.gmra.mrb[0].mxu0 %v5664
    %v6093 = vpop.f32.mrb[0].mxu0
    %v6094 = vadd.f32 0.0, %v6093
    %v6095 = vpop.f32.mrb[0].mxu0
    %6096 = vmatprep.mubr.f32.mxu0 0.0
    %6097 = vmatmul.mubr.f32.gmra.mrb[0].mxu0 %v5667
    %v6098 = vpop.f32.mrb[0].mxu0
    %v6099 = vadd.f32 0.0, %v6098
    %v6100 = vpop.f32.mrb[0].mxu0
    %6101 = vmatprep.mubr.f32.mxu0 0.0
    %6102 = vmatmul.mubr.f32.gmra.mrb[0].mxu0 %v5670
    %v6103 = vpop.f32.mrb[0].mxu0
    %v6104 = vadd.f32 0.0, %v6103
    %v6105 = vpop.f32.mrb[0].mxu0
    %6106 = vmatprep.mubr.f32.mxu0 0.0
    %6107 = vmatmul.mubr.f32.gmra.mrb[0].mxu0 %v5673
    %v6108 = vpop.f32.mrb[0].mxu0
    %v6109 = vadd.f32 0.0, %v6108
    %v6110 = vpop.f32.mrb[0].mxu0
    %6111 = vmatprep.mubr.f32.mxu0 0.0
    %6112 = vmatmul.mubr.f32.gmra.mrb[0].mxu0 %v5676
    %v6113 = vpop.f32.mrb[0].mxu0
    %v6114 = vadd.f32 0.0, %v6113
    %v6115 = vpop.f32.mrb[0].mxu0
    %6116 = vmatprep.mubr.f32.mxu0 0.0
    %6117 = vmatmul.mubr.f32.gmra.mrb[0].mxu0 %v5679
    %v6118 = vpop.f32.mrb[0].mxu0
    %v6119 = vadd.f32 0.0, %v6118
    %v6120 = vpop.f32.mrb[0].mxu0
    %6121 = vmatprep.mubr.f32.mxu0 0.0
    %6122 = vmatmul.mubr.f32.gmra.mrb[0].mxu0 %v5682
    %v6123 = vpop.f32.mrb[0].mxu0
    %v6124 = vadd.f32 0.0, %v6123
    %v6125 = vpop.f32.mrb[0].mxu0
    %6126 = vmatprep.mubr.f32.mxu0 0.0
    %6127 = vmatmul.mubr.f32.gmra.mrb[0].mxu0 %v5685
    %v6128 = vpop.f32.mrb[0].mxu0
    %v6129 = vadd.f32 0.0, %v6128
    %v6130 = vpop.f32.mrb[0].mxu0
    %6131 = vmatprep.mubr.f32.mxu0 0.0
    %6132 = vmatmul.mubr.f32.gmra.mrb[0].mxu0 %v5688
    %v6133 = vpop.f32.mrb[0].mxu0
    %v6134 = vadd.f32 0.0, %v6133
    %v6135 = vpop.f32.mrb[0].mxu0
    %6136 = vmatprep.mubr.f32.mxu0 0.0
    %6137 = vmatmul.mubr.f32.gmra.mrb[0].mxu0 %v5691
    %v6138 = vpop.f32.mrb[0].mxu0
    %v6139 = vadd.f32 0.0, %v6138
    %v6140 = vpop.f32.mrb[0].mxu0
    %6141 = vmatprep.mubr.f32.mxu0 0.0
    %6142 = vmatmul.mubr.f32.gmra.mrb[0].mxu0 %v5694
    %v6143 = vpop.f32.mrb[0].mxu0
    %v6144 = vadd.f32 0.0, %v6143
    %v6145 = vpop.f32.mrb[0].mxu0
    %6146 = vmatprep.mubr.f32.mxu0 0.0
    %6147 = vmatmul.mubr.f32.gmra.mrb[0].mxu0 %v5697
    %v6148 = vpop.f32.mrb[0].mxu0
    %v6149 = vadd.f32 0.0, %v6148
    %v6150 = vpop.f32.mrb[0].mxu0
    %6151 = vmatprep.mubr.f32.mxu0 0.0
    %6152 = vmatmul.mubr.f32.gmra.mrb[0].mxu0 %v5700
    %v6153 = vpop.f32.mrb[0].mxu0
    %v6154 = vadd.f32 0.0, %v6153
    %v6155 = vpop.f32.mrb[0].mxu0
    %6156 = vmatprep.mubr.f32.mxu0 0.0
    %6157 = vmatmul.mubr.f32.gmra.mrb[0].mxu0 %v5703
    %v6158 = vpop.f32.mrb[0].mxu0
    %v6159 = vadd.f32 0.0, %v6158
    %v6160 = vpop.f32.mrb[0].mxu0
    %6161 = vmatprep.mubr.f32.mxu0 0.0
    %6162 = vmatmul.mubr.f32.gmra.mrb[0].mxu0 %v5706
    %v6163 = vpop.f32.mrb[0].mxu0
    %v6164 = vadd.f32 0.0, %v6163
    %v6165 = vpop.f32.mrb[0].mxu0
    %6166 = vmatprep.mubr.f32.mxu0 0.0
    %6167 = vmatmul.mubr.f32.gmra.mrb[0].mxu0 %v5709
    %v6168 = vpop.f32.mrb[0].mxu0
    %v6169 = vadd.f32 0.0, %v6168
    %v6170 = vpop.f32.mrb[0].mxu0
    %6171 = vmatprep.mubr.f32.mxu0 0.0
    %6172 = vmatmul.mubr.f32.gmra.mrb[0].mxu0 %v5712
    %v6173 = vpop.f32.mrb[0].mxu0
    %v6174 = vadd.f32 0.0, %v6173
    %v6175 = vpop.f32.mrb[0].mxu0
    %6176 = vmatprep.mubr.f32.mxu0 0.0
    %6177 = vmatmul.mubr.f32.gmra.mrb[0].mxu0 %v5715
    %v6178 = vpop.f32.mrb[0].mxu0
    %v6179 = vadd.f32 0.0, %v6178
    %v6180 = vpop.f32.mrb[0].mxu0
    %6181 = vmatprep.mubr.f32.mxu0 0.0
    %6182 = vmatmul.mubr.f32.gmra.mrb[0].mxu0 %v5718
    %v6183 = vpop.f32.mrb[0].mxu0
    %v6184 = vadd.f32 0.0, %v6183
    %v6185 = vpop.f32.mrb[0].mxu0
    %6186 = vmatprep.mubr.f32.mxu0 0.0
    %6187 = vmatmul.mubr.f32.gmra.mrb[0].mxu0 %v5721
    %v6188 = vpop.f32.mrb[0].mxu0
    %v6189 = vadd.f32 0.0, %v6188
    %v6190 = vpop.f32.mrb[0].mxu0
    %6191 = vmatprep.mubr.f32.mxu0 0.0
    %6192 = vmatmul.mubr.f32.gmra.mrb[0].mxu0 %v5724
    %v6193 = vpop.f32.mrb[0].mxu0
    %v6194 = vadd.f32 0.0, %v6193
    %v6195 = vpop.f32.mrb[0].mxu0
    %6196 = vmatprep.mubr.f32.mxu0 0.0
    %6197 = vmatmul.mubr.f32.gmra.mrb[0].mxu0 %v5727
    %v6198 = vpop.f32.mrb[0].mxu0
    %v6199 = vadd.f32 0.0, %v6198
    %v6200 = vpop.f32.mrb[0].mxu0
    %6201 = vdwg.mxu0
    %v6202 = vadd.f32 %v5403, %v5799
    %v6203 = vadd.f32 %v5404, %v5804
    %v6204 = vadd.f32 %v5405, %v5809
    %v6205 = vadd.f32 %v5406, %v5814
    %v6206 = vadd.f32 %v5407, %v5819
    %v6207 = vadd.f32 %v5408, %v5824
    %v6208 = vadd.f32 %v5409, %v5829
    %v6209 = vadd.f32 %v5410, %v5834
    %v6210 = vadd.f32 %v5411, %v5839
    %v6211 = vadd.f32 %v5412, %v5844
    %v6212 = vadd.f32 %v5413, %v5849
    %v6213 = vadd.f32 %v5414, %v5854
    %v6214 = vadd.f32 %v5415, %v5859
    %v6215 = vadd.f32 %v5416, %v5864
    %v6216 = vadd.f32 %v5417, %v5869
    %v6217 = vadd.f32 %v5418, %v5874
    %v6218 = vadd.f32 %v5419, %v5879
    %v6219 = vadd.f32 %v5420, %v5884
    %v6220 = vadd.f32 %v5421, %v5889
    %v6221 = vadd.f32 %v5422, %v5894
    %v6222 = vadd.f32 %v5423, %v5899
    %v6223 = vadd.f32 %v5424, %v5904
    %v6224 = vadd.f32 %v5425, %v5909
    %v6225 = vadd.f32 %v5426, %v5914
    %v6226 = vadd.f32 %v5427, %v5919
    %v6227 = vadd.f32 %v5428, %v5924
    %v6228 = vadd.f32 %v5429, %v5929
    %v6229 = vadd.f32 %v5430, %v5934
    %v6230 = vadd.f32 %v5431, %v5939
    %v6231 = vadd.f32 %v5432, %v5944
    %v6232 = vadd.f32 %v5433, %v5949
    %v6233 = vadd.f32 %v5434, %v5954
    %v6234 = vadd.f32 %v5435, %v5959
    %v6235 = vadd.f32 %v5436, %v5964
    %v6236 = vadd.f32 %v5437, %v5969
    %v6237 = vadd.f32 %v5438, %v5974
    %v6238 = vadd.f32 %v5439, %v5979
    %v6239 = vadd.f32 %v5440, %v5984
    %v6240 = vadd.f32 %v5441, %v5989
    %v6241 = vadd.f32 %v5442, %v5994
    %v6242 = vadd.f32 %v5443, %v5999
    %v6243 = vadd.f32 %v5444, %v6004
    %v6244 = vadd.f32 %v5445, %v6009
    %v6245 = vadd.f32 %v5446, %v6014
    %v6246 = vadd.f32 %v5447, %v6019
    %v6247 = vadd.f32 %v5448, %v6024
    %v6248 = vadd.f32 %v5449, %v6029
    %v6249 = vadd.f32 %v5450, %v6034
    %v6250 = vadd.f32 %v5451, %v6039
    %v6251 = vadd.f32 %v5452, %v6044
    %v6252 = vadd.f32 %v5453, %v6049
    %v6253 = vadd.f32 %v5454, %v6054
    %v6254 = vadd.f32 %v5455, %v6059
    %v6255 = vadd.f32 %v5456, %v6064
    %v6256 = vadd.f32 %v5457, %v6069
    %v6257 = vadd.f32 %v5458, %v6074
    %v6258 = vadd.f32 %v5459, %v6079
    %v6259 = vadd.f32 %v5460, %v6084
    %v6260 = vadd.f32 %v5461, %v6089
    %v6261 = vadd.f32 %v5462, %v6094
    %v6262 = vadd.f32 %v5463, %v6099
    %v6263 = vadd.f32 %v5464, %v6104
    %v6264 = vadd.f32 %v5465, %v6109
    %v6265 = vadd.f32 %v5466, %v6114
    %v6266 = vadd.f32 %v5467, %v6119
    %v6267 = vadd.f32 %v5468, %v6124
    %v6268 = vadd.f32 %v5469, %v6129
    %v6269 = vadd.f32 %v5470, %v6134
    %v6270 = vadd.f32 %v5471, %v6139
    %v6271 = vadd.f32 %v5472, %v6144
    %v6272 = vadd.f32 %v5473, %v6149
    %v6273 = vadd.f32 %v5474, %v6154
    %v6274 = vadd.f32 %v5475, %v6159
    %v6275 = vadd.f32 %v5476, %v6164
    %v6276 = vadd.f32 %v5477, %v6169
    %v6277 = vadd.f32 %v5478, %v6174
    %v6278 = vadd.f32 %v5479, %v6179
    %v6279 = vadd.f32 %v5480, %v6184
    %v6280 = vadd.f32 %v5481, %v6189
    %v6281 = vadd.f32 %v5482, %v6194
    %v6282 = vadd.f32 %v5483, %v6199
    %6283 = vst [vmem:[#allocation2] sm:$0xff] %v6202
    %6284 = vst [vmem:[#allocation2 + $0x8] sm:$0xff] %v6203
    %6285 = vst [vmem:[#allocation2 + $0x10] sm:$0xff] %v6204
    %6286 = vst [vmem:[#allocation2 + $0x18] sm:$0xff] %v6205
    %6287 = vst [vmem:[#allocation2 + $0x20] sm:$0xff] %v6206
    %6288 = vst [vmem:[#allocation2 + $0x28] sm:$0xff] %v6207
    %6289 = vst [vmem:[#allocation2 + $0x30] sm:$0xff] %v6208
    %6290 = vst [vmem:[#allocation2 + $0x38] sm:$0xff] %v6209
    %6291 = vst [vmem:[#allocation2 + $0x40] sm:$0xff] %v6210
    %6292 = vst [vmem:[#allocation2 + $0x48] sm:$0xff] %v6211
    %6293 = vst [vmem:[#allocation2 + $0x50] sm:$0xff] %v6212
    %6294 = vst [vmem:[#allocation2 + $0x58] sm:$0xff] %v6213
    %6295 = vst [vmem:[#allocation2 + $0x60] sm:$0xff] %v6214
    %6296 = vst [vmem:[#allocation2 + $0x68] sm:$0xff] %v6215
    %6297 = vst [vmem:[#allocation2 + $0x70] sm:$0xff] %v6216
    %6298 = vst [vmem:[#allocation2 + $0x78] sm:$0xff] %v6217
    %6299 = vst [vmem:[#allocation2 + $0x80] sm:$0xff] %v6218
    %6300 = vst [vmem:[#allocation2 + $0x88] sm:$0xff] %v6219
    %6301 = vst [vmem:[#allocation2 + $0x90] sm:$0xff] %v6220
    %6302 = vst [vmem:[#allocation2 + $0x98] sm:$0xff] %v6221
    %6303 = vst [vmem:[#allocation2 + $0xa0] sm:$0xff] %v6222
    %6304 = vst [vmem:[#allocation2 + $0xa8] sm:$0xff] %v6223
    %6305 = vst [vmem:[#allocation2 + $0xb0] sm:$0xff] %v6224
    %6306 = vst [vmem:[#allocation2 + $0xb8] sm:$0xff] %v6225
    %6307 = vst [vmem:[#allocation2 + $0xc0] sm:$0xff] %v6226
    %6308 = vst [vmem:[#allocation2 + $0xc8] sm:$0xff] %v6227
    %6309 = vst [vmem:[#allocation2 + $0xd0] sm:$0xff] %v6228
    %6310 = vst [vmem:[#allocation2 + $0xd8] sm:$0xff] %v6229
    %6311 = vst [vmem:[#allocation2 + $0xe0] sm:$0xff] %v6230
    %6312 = vst [vmem:[#allocation2 + $0xe8] sm:$0xff] %v6231
    %6313 = vst [vmem:[#allocation2 + $0xf0] sm:$0xff] %v6232
    %6314 = vst [vmem:[#allocation2 + $0xf8] sm:$0xff] %v6233
    %6315 = vst [vmem:[#allocation2 + $0x100] sm:$0xff] %v6234
    %6316 = vst [vmem:[#allocation2 + $0x108] sm:$0xff] %v6235
    %6317 = vst [vmem:[#allocation2 + $0x110] sm:$0xff] %v6236
    %6318 = vst [vmem:[#allocation2 + $0x118] sm:$0xff] %v6237
    %6319 = vst [vmem:[#allocation2 + $0x120] sm:$0xff] %v6238
    %6320 = vst [vmem:[#allocation2 + $0x128] sm:$0xff] %v6239
    %6321 = vst [vmem:[#allocation2 + $0x130] sm:$0xff] %v6240
    %6322 = vst [vmem:[#allocation2 + $0x138] sm:$0xff] %v6241
    %6323 = vst [vmem:[#allocation2 + $0x140] sm:$0xff] %v6242
    %6324 = vst [vmem:[#allocation2 + $0x148] sm:$0xff] %v6243
    %6325 = vst [vmem:[#allocation2 + $0x150] sm:$0xff] %v6244
    %6326 = vst [vmem:[#allocation2 + $0x158] sm:$0xff] %v6245
    %6327 = vst [vmem:[#allocation2 + $0x160] sm:$0xff] %v6246
    %6328 = vst [vmem:[#allocation2 + $0x168] sm:$0xff] %v6247
    %6329 = vst [vmem:[#allocation2 + $0x170] sm:$0xff] %v6248
    %6330 = vst [vmem:[#allocation2 + $0x178] sm:$0xff] %v6249
    %6331 = vst [vmem:[#allocation2 + $0x180] sm:$0xff] %v6250
    %6332 = vst [vmem:[#allocation2 + $0x188] sm:$0xff] %v6251
    %6333 = vst [vmem:[#allocation2 + $0x190] sm:$0xff] %v6252
    %6334 = vst [vmem:[#allocation2 + $0x198] sm:$0xff] %v6253
    %6335 = vst [vmem:[#allocation2 + $0x1a0] sm:$0xff] %v6254
    %6336 = vst [vmem:[#allocation2 + $0x1a8] sm:$0xff] %v6255
    %6337 = vst [vmem:[#allocation2 + $0x1b0] sm:$0xff] %v6256
    %6338 = vst [vmem:[#allocation2 + $0x1b8] sm:$0xff] %v6257
    %6339 = vst [vmem:[#allocation2 + $0x1c0] sm:$0xff] %v6258
    %6340 = vst [vmem:[#allocation2 + $0x1c8] sm:$0xff] %v6259
    %6341 = vst [vmem:[#allocation2 + $0x1d0] sm:$0xff] %v6260
    %6342 = vst [vmem:[#allocation2 + $0x1d8] sm:$0xff] %v6261
    %6343 = vst [vmem:[#allocation2 + $0x1e0] sm:$0xff] %v6262
    %6344 = vst [vmem:[#allocation2 + $0x1e8] sm:$0xff] %v6263
    %6345 = vst [vmem:[#allocation2 + $0x1f0] sm:$0xff] %v6264
    %6346 = vst [vmem:[#allocation2 + $0x1f8] sm:$0xff] %v6265
    %6347 = vst [vmem:[#allocation2 + $0x200] sm:$0xff] %v6266
    %6348 = vst [vmem:[#allocation2 + $0x208] sm:$0xff] %v6267
    %6349 = vst [vmem:[#allocation2 + $0x210] sm:$0xff] %v6268
    %6350 = vst [vmem:[#allocation2 + $0x218] sm:$0xff] %v6269
    %6351 = vst [vmem:[#allocation2 + $0x220] sm:$0xff] %v6270
    %6352 = vst [vmem:[#allocation2 + $0x228] sm:$0xff] %v6271
    %6353 = vst [vmem:[#allocation2 + $0x230] sm:$0xff] %v6272
    %6354 = vst [vmem:[#allocation2 + $0x238] sm:$0xff] %v6273
    %6355 = vst [vmem:[#allocation2 + $0x240] sm:$0xff] %v6274
    %6356 = vst [vmem:[#allocation2 + $0x248] sm:$0xff] %v6275
    %6357 = vst [vmem:[#allocation2 + $0x250] sm:$0xff] %v6276
    %6358 = vst [vmem:[#allocation2 + $0x258] sm:$0xff] %v6277
    %6359 = vst [vmem:[#allocation2 + $0x260] sm:$0xff] %v6278
    %6360 = vst [vmem:[#allocation2 + $0x268] sm:$0xff] %v6279
    %6361 = vst [vmem:[#allocation2 + $0x270] sm:$0xff] %v6280
    %6362 = vst [vmem:[#allocation2 + $0x278] sm:$0xff] %v6281
    %6363 = vst [vmem:[#allocation2 + $0x280] sm:$0xff] %v6282
    %v6364 = vld [vmem:[%s0 + $0x24] sm:$0xff]
    %v6365 = vld [vmem:[%s0 + $0x2c] sm:$0xff]
    %v6366 = vld [vmem:[%s0 + $0x34] sm:$0xff]
    %v6367 = vld [vmem:[%s0 + $0x3c] sm:$0xff]
    %v6368 = vld [vmem:[%s0 + $0x44] sm:$0xff]
    %v6369 = vld [vmem:[%s0 + $0x4c] sm:$0xff]
    %v6370 = vld [vmem:[%s0 + $0x54] sm:$0xff]
    %v6371 = vld [vmem:[%s0 + $0x5c] sm:$0xff]
    %v6372 = vld [vmem:[%s0 + $0x64] sm:$0xff]
    %v6373 = vld [vmem:[%s0 + $0x6c] sm:$0xff]
    %v6374 = vld [vmem:[%s0 + $0x74] sm:$0xff]
    %v6375 = vld [vmem:[%s0 + $0x7c] sm:$0xff]
    %v6376 = vld [vmem:[%s0 + $0x84] sm:$0xff]
    %v6377 = vld [vmem:[%s0 + $0x8c] sm:$0xff]
    %v6378 = vld [vmem:[%s0 + $0x94] sm:$0xff]
    %v6379 = vld [vmem:[%s0 + $0x9c] sm:$0xff]
    %v6380 = vld [vmem:[%s0 + $0xa4] sm:$0xff]
    %v6381 = vld [vmem:[%s0 + $0xac] sm:$0xff]
    %v6382 = vld [vmem:[%s0 + $0xb4] sm:$0xff]
    %v6383 = vld [vmem:[%s0 + $0xbc] sm:$0xff]
    %v6384 = vld [vmem:[%s0 + $0xc4] sm:$0xff]
    %v6385 = vld [vmem:[%s0 + $0xcc] sm:$0xff]
    %v6386 = vld [vmem:[%s0 + $0xd4] sm:$0xff]
    %v6387 = vld [vmem:[%s0 + $0xdc] sm:$0xff]
    %v6388 = vld [vmem:[%s0 + $0xe4] sm:$0xff]
    %v6389 = vld [vmem:[%s0 + $0xec] sm:$0xff]
    %v6390 = vld [vmem:[%s0 + $0xf4] sm:$0xff]
    %v6391 = vld [vmem:[%s0 + $0xfc] sm:$0xff]
    %v6392 = vld [vmem:[%s0 + $0x104] sm:$0xff]
    %v6393 = vld [vmem:[%s0 + $0x10c] sm:$0xff]
    %v6394 = vld [vmem:[%s0 + $0x114] sm:$0xff]
    %v6395 = vld [vmem:[%s0 + $0x11c] sm:$0xff]
    %v6396 = vld [vmem:[%s0 + $0x124] sm:$0xff]
    %v6397 = vld [vmem:[%s0 + $0x12c] sm:$0xff]
    %v6398 = vld [vmem:[%s0 + $0x134] sm:$0xff]
    %v6399 = vld [vmem:[%s0 + $0x13c] sm:$0xff]
    %v6400 = vld [vmem:[%s0 + $0x144] sm:$0xff]
    %v6401 = vld [vmem:[%s0 + $0x14c] sm:$0xff]
    %v6402 = vld [vmem:[%s0 + $0x154] sm:$0xff]
    %v6403 = vld [vmem:[%s0 + $0x15c] sm:$0xff]
    %v6404 = vld [vmem:[%s0 + $0x164] sm:$0xff]
    %v6405 = vld [vmem:[%s0 + $0x16c] sm:$0xff]
    %v6406 = vld [vmem:[%s0 + $0x174] sm:$0xff]
    %v6407 = vld [vmem:[%s0 + $0x17c] sm:$0xff]
    %v6408 = vld [vmem:[%s0 + $0x184] sm:$0xff]
    %v6409 = vld [vmem:[%s0 + $0x18c] sm:$0xff]
    %v6410 = vld [vmem:[%s0 + $0x194] sm:$0xff]
    %v6411 = vld [vmem:[%s0 + $0x19c] sm:$0xff]
    %v6412 = vld [vmem:[%s0 + $0x1a4] sm:$0xff]
    %v6413 = vld [vmem:[%s0 + $0x1ac] sm:$0xff]
    %v6414 = vld [vmem:[%s0 + $0x1b4] sm:$0xff]
    %v6415 = vld [vmem:[%s0 + $0x1bc] sm:$0xff]
    %v6416 = vld [vmem:[%s0 + $0x1c4] sm:$0xff]
    %v6417 = vld [vmem:[%s0 + $0x1cc] sm:$0xff]
    %v6418 = vld [vmem:[%s0 + $0x1d4] sm:$0xff]
    %v6419 = vld [vmem:[%s0 + $0x1dc] sm:$0xff]
    %v6420 = vld [vmem:[%s0 + $0x1e4] sm:$0xff]
    %v6421 = vld [vmem:[%s0 + $0x1ec] sm:$0xff]
    %v6422 = vld [vmem:[%s0 + $0x1f4] sm:$0xff]
    %v6423 = vld [vmem:[%s0 + $0x1fc] sm:$0xff]
    %v6424 = vld [vmem:[%s0 + $0x204] sm:$0xff]
    %v6425 = vld [vmem:[%s0 + $0x20c] sm:$0xff]
    %v6426 = vld [vmem:[%s0 + $0x214] sm:$0xff]
    %v6427 = vld [vmem:[%s0 + $0x21c] sm:$0xff]
    %v6428 = vld [vmem:[%s0 + $0x224] sm:$0xff]
    %v6429 = vld [vmem:[%s0 + $0x22c] sm:$0xff]
    %v6430 = vld [vmem:[%s0 + $0x234] sm:$0xff]
    %v6431 = vld [vmem:[%s0 + $0x23c] sm:$0xff]
    %v6432 = vld [vmem:[%s0 + $0x244] sm:$0xff]
    %v6433 = vld [vmem:[%s0 + $0x24c] sm:$0xff]
    %v6434 = vld [vmem:[%s0 + $0x254] sm:$0xff]
    %v6435 = vld [vmem:[%s0 + $0x25c] sm:$0xff]
    %v6436 = vld [vmem:[%s0 + $0x264] sm:$0xff]
    %v6437 = vld [vmem:[%s0 + $0x26c] sm:$0xff]
    %v6438 = vld [vmem:[%s0 + $0x274] sm:$0xff]
    %v6439 = vld [vmem:[%s0 + $0x27c] sm:$0xff]
    %v6440 = vld [vmem:[%s0 + $0x284] sm:$0xff]
    %v6441 = vld [vmem:[%s0 + $0x28c] sm:$0xff]
    %v6442 = vld [vmem:[%s0 + $0x294] sm:$0xff]
    %v6443 = vld [vmem:[%s0 + $0x29c] sm:$0xff]
    %v6444 = vld [vmem:[%s0 + $0x2a4] sm:$0xff]
    %v6445 = vld [vmem:[#allocation2] sm:$0xff]
    %v6446 = vld [vmem:[#allocation2 + $0x8] sm:$0xff]
    %v6447 = vld [vmem:[#allocation2 + $0x10] sm:$0xff]
    %v6448 = vld [vmem:[#allocation2 + $0x18] sm:$0xff]
    %v6449 = vld [vmem:[#allocation2 + $0x20] sm:$0xff]
    %v6450 = vld [vmem:[#allocation2 + $0x28] sm:$0xff]
    %v6451 = vld [vmem:[#allocation2 + $0x30] sm:$0xff]
    %v6452 = vld [vmem:[#allocation2 + $0x38] sm:$0xff]
    %v6453 = vld [vmem:[#allocation2 + $0x40] sm:$0xff]
    %v6454 = vld [vmem:[#allocation2 + $0x48] sm:$0xff]
    %v6455 = vld [vmem:[#allocation2 + $0x50] sm:$0xff]
    %v6456 = vld [vmem:[#allocation2 + $0x58] sm:$0xff]
    %v6457 = vld [vmem:[#allocation2 + $0x60] sm:$0xff]
    %v6458 = vld [vmem:[#allocation2 + $0x68] sm:$0xff]
    %v6459 = vld [vmem:[#allocation2 + $0x70] sm:$0xff]
    %v6460 = vld [vmem:[#allocation2 + $0x78] sm:$0xff]
    %v6461 = vld [vmem:[#allocation2 + $0x80] sm:$0xff]
    %v6462 = vld [vmem:[#allocation2 + $0x88] sm:$0xff]
    %v6463 = vld [vmem:[#allocation2 + $0x90] sm:$0xff]
    %v6464 = vld [vmem:[#allocation2 + $0x98] sm:$0xff]
    %v6465 = vld [vmem:[#allocation2 + $0xa0] sm:$0xff]
    %v6466 = vld [vmem:[#allocation2 + $0xa8] sm:$0xff]
    %v6467 = vld [vmem:[#allocation2 + $0xb0] sm:$0xff]
    %v6468 = vld [vmem:[#allocation2 + $0xb8] sm:$0xff]
    %v6469 = vld [vmem:[#allocation2 + $0xc0] sm:$0xff]
    %v6470 = vld [vmem:[#allocation2 + $0xc8] sm:$0xff]
    %v6471 = vld [vmem:[#allocation2 + $0xd0] sm:$0xff]
    %v6472 = vld [vmem:[#allocation2 + $0xd8] sm:$0xff]
    %v6473 = vld [vmem:[#allocation2 + $0xe0] sm:$0xff]
    %v6474 = vld [vmem:[#allocation2 + $0xe8] sm:$0xff]
    %v6475 = vld [vmem:[#allocation2 + $0xf0] sm:$0xff]
    %v6476 = vld [vmem:[#allocation2 + $0xf8] sm:$0xff]
    %v6477 = vld [vmem:[#allocation2 + $0x100] sm:$0xff]
    %v6478 = vld [vmem:[#allocation2 + $0x108] sm:$0xff]
    %v6479 = vld [vmem:[#allocation2 + $0x110] sm:$0xff]
    %v6480 = vld [vmem:[#allocation2 + $0x118] sm:$0xff]
    %v6481 = vld [vmem:[#allocation2 + $0x120] sm:$0xff]
    %v6482 = vld [vmem:[#allocation2 + $0x128] sm:$0xff]
    %v6483 = vld [vmem:[#allocation2 + $0x130] sm:$0xff]
    %v6484 = vld [vmem:[#allocation2 + $0x138] sm:$0xff]
    %v6485 = vld [vmem:[#allocation2 + $0x140] sm:$0xff]
    %v6486 = vld [vmem:[#allocation2 + $0x148] sm:$0xff]
    %v6487 = vld [vmem:[#allocation2 + $0x150] sm:$0xff]
    %v6488 = vld [vmem:[#allocation2 + $0x158] sm:$0xff]
    %v6489 = vld [vmem:[#allocation2 + $0x160] sm:$0xff]
    %v6490 = vld [vmem:[#allocation2 + $0x168] sm:$0xff]
    %v6491 = vld [vmem:[#allocation2 + $0x170] sm:$0xff]
    %v6492 = vld [vmem:[#allocation2 + $0x178] sm:$0xff]
    %v6493 = vld [vmem:[#allocation2 + $0x180] sm:$0xff]
    %v6494 = vld [vmem:[#allocation2 + $0x188] sm:$0xff]
    %v6495 = vld [vmem:[#allocation2 + $0x190] sm:$0xff]
    %v6496 = vld [vmem:[#allocation2 + $0x198] sm:$0xff]
    %v6497 = vld [vmem:[#allocation2 + $0x1a0] sm:$0xff]
    %v6498 = vld [vmem:[#allocation2 + $0x1a8] sm:$0xff]
    %v6499 = vld [vmem:[#allocation2 + $0x1b0] sm:$0xff]
    %v6500 = vld [vmem:[#allocation2 + $0x1b8] sm:$0xff]
    %v6501 = vld [vmem:[#allocation2 + $0x1c0] sm:$0xff]
    %v6502 = vld [vmem:[#allocation2 + $0x1c8] sm:$0xff]
    %v6503 = vld [vmem:[#allocation2 + $0x1d0] sm:$0xff]
    %v6504 = vld [vmem:[#allocation2 + $0x1d8] sm:$0xff]
    %v6505 = vld [vmem:[#allocation2 + $0x1e0] sm:$0xff]
    %v6506 = vld [vmem:[#allocation2 + $0x1e8] sm:$0xff]
    %v6507 = vld [vmem:[#allocation2 + $0x1f0] sm:$0xff]
    %v6508 = vld [vmem:[#allocation2 + $0x1f8] sm:$0xff]
    %v6509 = vld [vmem:[#allocation2 + $0x200] sm:$0xff]
    %v6510 = vld [vmem:[#allocation2 + $0x208] sm:$0xff]
    %v6511 = vld [vmem:[#allocation2 + $0x210] sm:$0xff]
    %v6512 = vld [vmem:[#allocation2 + $0x218] sm:$0xff]
    %v6513 = vld [vmem:[#allocation2 + $0x220] sm:$0xff]
    %v6514 = vld [vmem:[#allocation2 + $0x228] sm:$0xff]
    %v6515 = vld [vmem:[#allocation2 + $0x230] sm:$0xff]
    %v6516 = vld [vmem:[#allocation2 + $0x238] sm:$0xff]
    %v6517 = vld [vmem:[#allocation2 + $0x240] sm:$0xff]
    %v6518 = vld [vmem:[#allocation2 + $0x248] sm:$0xff]
    %v6519 = vld [vmem:[#allocation2 + $0x250] sm:$0xff]
    %v6520 = vld [vmem:[#allocation2 + $0x258] sm:$0xff]
    %v6521 = vld [vmem:[#allocation2 + $0x260] sm:$0xff]
    %v6522 = vld [vmem:[#allocation2 + $0x268] sm:$0xff]
    %v6523 = vld [vmem:[#allocation2 + $0x270] sm:$0xff]
    %v6524 = vld [vmem:[#allocation2 + $0x278] sm:$0xff]
    %v6525 = vld [vmem:[#allocation2 + $0x280] sm:$0xff]
    %s6526 = scalar_lea.vmem %s1, 24
    %v6527 = vld [vmem:[%s6526] sm:$0xf]
    %v6529 = vsel %vm274, %v6364, 0
    %v6532 = vsel %vm274, %v6365, 0
    %v6535 = vsel %vm274, %v6366, 0
    %v6538 = vsel %vm274, %v6367, 0
    %v6541 = vsel %vm274, %v6368, 0
    %v6544 = vsel %vm274, %v6369, 0
    %v6547 = vsel %vm274, %v6370, 0
    %v6550 = vsel %vm274, %v6371, 0
    %v6553 = vsel %vm274, %v6372, 0
    %v6556 = vsel %vm274, %v6373, 0
    %v6559 = vsel %vm274, %v6374, 0
    %v6562 = vsel %vm274, %v6375, 0
    %v6565 = vsel %vm274, %v6376, 0
    %v6568 = vsel %vm274, %v6377, 0
    %v6571 = vsel %vm274, %v6378, 0
    %v6574 = vsel %vm274, %v6379, 0
    %v6577 = vsel %vm274, %v6380, 0
    %v6580 = vsel %vm274, %v6381, 0
    %v6583 = vsel %vm274, %v6382, 0
    %v6586 = vsel %vm274, %v6383, 0
    %v6589 = vsel %vm274, %v6384, 0
    %v6592 = vsel %vm274, %v6385, 0
    %v6595 = vsel %vm274, %v6386, 0
    %v6598 = vsel %vm274, %v6387, 0
    %v6601 = vsel %vm274, %v6388, 0
    %v6604 = vsel %vm274, %v6389, 0
    %v6607 = vsel %vm274, %v6390, 0
    %v6610 = vsel %vm274, %v6391, 0
    %v6613 = vsel %vm274, %v6392, 0
    %v6616 = vsel %vm274, %v6393, 0
    %v6619 = vsel %vm274, %v6394, 0
    %v6622 = vsel %vm274, %v6395, 0
    %v6625 = vsel %vm274, %v6396, 0
    %v6628 = vsel %vm274, %v6397, 0
    %v6631 = vsel %vm274, %v6398, 0
    %v6634 = vsel %vm274, %v6399, 0
    %v6637 = vsel %vm274, %v6400, 0
    %v6640 = vsel %vm274, %v6401, 0
    %v6643 = vsel %vm274, %v6402, 0
    %v6646 = vsel %vm274, %v6403, 0
    %v6649 = vsel %vm274, %v6404, 0
    %v6652 = vsel %vm274, %v6405, 0
    %v6655 = vsel %vm274, %v6406, 0
    %v6658 = vsel %vm274, %v6407, 0
    %v6661 = vsel %vm274, %v6408, 0
    %v6664 = vsel %vm274, %v6409, 0
    %v6667 = vsel %vm274, %v6410, 0
    %v6670 = vsel %vm274, %v6411, 0
    %v6673 = vsel %vm274, %v6412, 0
    %v6676 = vsel %vm274, %v6413, 0
    %v6679 = vsel %vm274, %v6414, 0
    %v6682 = vsel %vm274, %v6415, 0
    %v6685 = vsel %vm274, %v6416, 0
    %v6688 = vsel %vm274, %v6417, 0
    %v6691 = vsel %vm274, %v6418, 0
    %v6694 = vsel %vm274, %v6419, 0
    %v6697 = vsel %vm274, %v6420, 0
    %v6700 = vsel %vm274, %v6421, 0
    %v6703 = vsel %vm274, %v6422, 0
    %v6706 = vsel %vm274, %v6423, 0
    %v6709 = vsel %vm274, %v6424, 0
    %v6712 = vsel %vm274, %v6425, 0
    %v6715 = vsel %vm274, %v6426, 0
    %v6718 = vsel %vm274, %v6427, 0
    %v6721 = vsel %vm274, %v6428, 0
    %v6724 = vsel %vm274, %v6429, 0
    %v6727 = vsel %vm274, %v6430, 0
    %v6730 = vsel %vm274, %v6431, 0
    %v6733 = vsel %vm274, %v6432, 0
    %v6736 = vsel %vm274, %v6433, 0
    %v6739 = vsel %vm274, %v6434, 0
    %v6742 = vsel %vm274, %v6435, 0
    %v6745 = vsel %vm274, %v6436, 0
    %v6748 = vsel %vm274, %v6437, 0
    %v6751 = vsel %vm274, %v6438, 0
    %v6754 = vsel %vm274, %v6439, 0
    %v6757 = vsel %vm274, %v6440, 0
    %v6760 = vsel %vm274, %v6441, 0
    %v6763 = vsel %vm274, %v6442, 0
    %v6766 = vsel %vm274, %v6443, 0
    %v6769 = vsel %vm274, %v6444, 0
    %v6772 = vsel %vm518, %v6527, 0
    %6774 = vmatprep.subr.mxu0 0.0
    %6775 = vmatpush1.msra.mxu0 %v6772
    %6776 = vmatprep.subr.mxu0 0.0
    %6777 = vmatpush1.msra.mxu0 0.0
    %6778 = vmatprep.subr.mxu0 0.0
    %6779 = vmatpush1.msra.mxu0 0.0
    %6780 = vmatprep.subr.mxu0 0.0
    %6781 = vmatpush1.msra.mxu0 0.0
    %6782 = vmatprep.subr.mxu0 0.0
    %6783 = vmatpush1.msra.mxu0 0.0
    %6784 = vmatprep.subr.mxu0 0.0
    %6785 = vmatpush1.msra.mxu0 0.0
    %6786 = vmatprep.subr.mxu0 0.0
    %6787 = vmatpush1.msra.mxu0 0.0
    %6788 = vmatprep.subr.mxu0 0.0
    %6789 = vmatpush1.msra.mxu0 0.0
    %6790 = vmatprep.subr.mxu0 0.0
    %6791 = vmatpush1.msra.mxu0 0.0
    %6792 = vmatprep.subr.mxu0 0.0
    %6793 = vmatpush1.msra.mxu0 0.0
    %6794 = vmatprep.subr.mxu0 0.0
    %6795 = vmatpush1.msra.mxu0 0.0
    %6796 = vmatprep.subr.mxu0 0.0
    %6797 = vmatpush1.msra.mxu0 0.0
    %6798 = vmatprep.subr.mxu0 0.0
    %6799 = vmatpush1.msra.mxu0 0.0
    %6800 = vmatprep.subr.mxu0 0.0
    %6801 = vmatpush1.msra.mxu0 0.0
    %6802 = vmatprep.subr.mxu0 0.0
    %6803 = vmatpush1.msra.mxu0 0.0
    %6804 = vmatprep.subr.mxu0 0.0
    %6805 = vmatpush1.msra.mxu0 0.0
    %6806 = vmatprep.subr.mxu0 0.0
    %6807 = vmatpush1.msra.mxu0 0.0
    %6808 = vmatprep.subr.mxu0 0.0
    %6809 = vmatpush1.msra.mxu0 0.0
    %6810 = vmatprep.subr.mxu0 0.0
    %6811 = vmatpush1.msra.mxu0 0.0
    %6812 = vmatprep.subr.mxu0 0.0
    %6813 = vmatpush1.msra.mxu0 0.0
    %6814 = vmatprep.subr.mxu0 0.0
    %6815 = vmatpush1.msra.mxu0 0.0
    %6816 = vmatprep.subr.mxu0 0.0
    %6817 = vmatpush1.msra.mxu0 0.0
    %6818 = vmatprep.subr.mxu0 0.0
    %6819 = vmatpush1.msra.mxu0 0.0
    %6820 = vmatprep.subr.mxu0 0.0
    %6821 = vmatpush1.msra.mxu0 0.0
    %6822 = vmatprep.subr.mxu0 0.0
    %6823 = vmatpush1.msra.mxu0 0.0
    %6824 = vmatprep.subr.mxu0 0.0
    %6825 = vmatpush1.msra.mxu0 0.0
    %6826 = vmatprep.subr.mxu0 0.0
    %6827 = vmatpush1.msra.mxu0 0.0
    %6828 = vmatprep.subr.mxu0 0.0
    %6829 = vmatpush1.msra.mxu0 0.0
    %6830 = vmatprep.subr.mxu0 0.0
    %6831 = vmatpush1.msra.mxu0 0.0
    %6832 = vmatprep.subr.mxu0 0.0
    %6833 = vmatpush1.msra.mxu0 0.0
    %6834 = vmatprep.subr.mxu0 0.0
    %6835 = vmatpush1.msra.mxu0 0.0
    %6836 = vmatprep.subr.mxu0 0.0
    %6837 = vmatpush1.msra.mxu0 0.0
    %6838 = vmatprep.mubr.f32.mxu0 0.0
    %6839 = vmatmul.mubr.f32.gmra.mrb[0].mxu0 %v6529
    %v6840 = vpop.f32.mrb[0].mxu0
    %v6841 = vadd.f32 0.0, %v6840
    %v6842 = vpop.f32.mrb[0].mxu0
    %6843 = vmatprep.mubr.f32.mxu0 0.0
    %6844 = vmatmul.mubr.f32.gmra.mrb[0].mxu0 %v6532
    %v6845 = vpop.f32.mrb[0].mxu0
    %v6846 = vadd.f32 0.0, %v6845
    %v6847 = vpop.f32.mrb[0].mxu0
    %6848 = vmatprep.mubr.f32.mxu0 0.0
    %6849 = vmatmul.mubr.f32.gmra.mrb[0].mxu0 %v6535
    %v6850 = vpop.f32.mrb[0].mxu0
    %v6851 = vadd.f32 0.0, %v6850
    %v6852 = vpop.f32.mrb[0].mxu0
    %6853 = vmatprep.mubr.f32.mxu0 0.0
    %6854 = vmatmul.mubr.f32.gmra.mrb[0].mxu0 %v6538
    %v6855 = vpop.f32.mrb[0].mxu0
    %v6856 = vadd.f32 0.0, %v6855
    %v6857 = vpop.f32.mrb[0].mxu0
    %6858 = vmatprep.mubr.f32.mxu0 0.0
    %6859 = vmatmul.mubr.f32.gmra.mrb[0].mxu0 %v6541
    %v6860 = vpop.f32.mrb[0].mxu0
    %v6861 = vadd.f32 0.0, %v6860
    %v6862 = vpop.f32.mrb[0].mxu0
    %6863 = vmatprep.mubr.f32.mxu0 0.0
    %6864 = vmatmul.mubr.f32.gmra.mrb[0].mxu0 %v6544
    %v6865 = vpop.f32.mrb[0].mxu0
    %v6866 = vadd.f32 0.0, %v6865
    %v6867 = vpop.f32.mrb[0].mxu0
    %6868 = vmatprep.mubr.f32.mxu0 0.0
    %6869 = vmatmul.mubr.f32.gmra.mrb[0].mxu0 %v6547
    %v6870 = vpop.f32.mrb[0].mxu0
    %v6871 = vadd.f32 0.0, %v6870
    %v6872 = vpop.f32.mrb[0].mxu0
    %6873 = vmatprep.mubr.f32.mxu0 0.0
    %6874 = vmatmul.mubr.f32.gmra.mrb[0].mxu0 %v6550
    %v6875 = vpop.f32.mrb[0].mxu0
    %v6876 = vadd.f32 0.0, %v6875
    %v6877 = vpop.f32.mrb[0].mxu0
    %6878 = vmatprep.mubr.f32.mxu0 0.0
    %6879 = vmatmul.mubr.f32.gmra.mrb[0].mxu0 %v6553
    %v6880 = vpop.f32.mrb[0].mxu0
    %v6881 = vadd.f32 0.0, %v6880
    %v6882 = vpop.f32.mrb[0].mxu0
    %6883 = vmatprep.mubr.f32.mxu0 0.0
    %6884 = vmatmul.mubr.f32.gmra.mrb[0].mxu0 %v6556
    %v6885 = vpop.f32.mrb[0].mxu0
    %v6886 = vadd.f32 0.0, %v6885
    %v6887 = vpop.f32.mrb[0].mxu0
    %6888 = vmatprep.mubr.f32.mxu0 0.0
    %6889 = vmatmul.mubr.f32.gmra.mrb[0].mxu0 %v6559
    %v6890 = vpop.f32.mrb[0].mxu0
    %v6891 = vadd.f32 0.0, %v6890
    %v6892 = vpop.f32.mrb[0].mxu0
    %6893 = vmatprep.mubr.f32.mxu0 0.0
    %6894 = vmatmul.mubr.f32.gmra.mrb[0].mxu0 %v6562
    %v6895 = vpop.f32.mrb[0].mxu0
    %v6896 = vadd.f32 0.0, %v6895
    %v6897 = vpop.f32.mrb[0].mxu0
    %6898 = vmatprep.mubr.f32.mxu0 0.0
    %6899 = vmatmul.mubr.f32.gmra.mrb[0].mxu0 %v6565
    %v6900 = vpop.f32.mrb[0].mxu0
    %v6901 = vadd.f32 0.0, %v6900
    %v6902 = vpop.f32.mrb[0].mxu0
    %6903 = vmatprep.mubr.f32.mxu0 0.0
    %6904 = vmatmul.mubr.f32.gmra.mrb[0].mxu0 %v6568
    %v6905 = vpop.f32.mrb[0].mxu0
    %v6906 = vadd.f32 0.0, %v6905
    %v6907 = vpop.f32.mrb[0].mxu0
    %6908 = vmatprep.mubr.f32.mxu0 0.0
    %6909 = vmatmul.mubr.f32.gmra.mrb[0].mxu0 %v6571
    %v6910 = vpop.f32.mrb[0].mxu0
    %v6911 = vadd.f32 0.0, %v6910
    %v6912 = vpop.f32.mrb[0].mxu0
    %6913 = vmatprep.mubr.f32.mxu0 0.0
    %6914 = vmatmul.mubr.f32.gmra.mrb[0].mxu0 %v6574
    %v6915 = vpop.f32.mrb[0].mxu0
    %v6916 = vadd.f32 0.0, %v6915
    %v6917 = vpop.f32.mrb[0].mxu0
    %6918 = vmatprep.mubr.f32.mxu0 0.0
    %6919 = vmatmul.mubr.f32.gmra.mrb[0].mxu0 %v6577
    %v6920 = vpop.f32.mrb[0].mxu0
    %v6921 = vadd.f32 0.0, %v6920
    %v6922 = vpop.f32.mrb[0].mxu0
    %6923 = vmatprep.mubr.f32.mxu0 0.0
    %6924 = vmatmul.mubr.f32.gmra.mrb[0].mxu0 %v6580
    %v6925 = vpop.f32.mrb[0].mxu0
    %v6926 = vadd.f32 0.0, %v6925
    %v6927 = vpop.f32.mrb[0].mxu0
    %6928 = vmatprep.mubr.f32.mxu0 0.0
    %6929 = vmatmul.mubr.f32.gmra.mrb[0].mxu0 %v6583
    %v6930 = vpop.f32.mrb[0].mxu0
    %v6931 = vadd.f32 0.0, %v6930
    %v6932 = vpop.f32.mrb[0].mxu0
    %6933 = vmatprep.mubr.f32.mxu0 0.0
    %6934 = vmatmul.mubr.f32.gmra.mrb[0].mxu0 %v6586
    %v6935 = vpop.f32.mrb[0].mxu0
    %v6936 = vadd.f32 0.0, %v6935
    %v6937 = vpop.f32.mrb[0].mxu0
    %6938 = vmatprep.mubr.f32.mxu0 0.0
    %6939 = vmatmul.mubr.f32.gmra.mrb[0].mxu0 %v6589
    %v6940 = vpop.f32.mrb[0].mxu0
    %v6941 = vadd.f32 0.0, %v6940
    %v6942 = vpop.f32.mrb[0].mxu0
    %6943 = vmatprep.mubr.f32.mxu0 0.0
    %6944 = vmatmul.mubr.f32.gmra.mrb[0].mxu0 %v6592
    %v6945 = vpop.f32.mrb[0].mxu0
    %v6946 = vadd.f32 0.0, %v6945
    %v6947 = vpop.f32.mrb[0].mxu0
    %6948 = vmatprep.mubr.f32.mxu0 0.0
    %6949 = vmatmul.mubr.f32.gmra.mrb[0].mxu0 %v6595
    %v6950 = vpop.f32.mrb[0].mxu0
    %v6951 = vadd.f32 0.0, %v6950
    %v6952 = vpop.f32.mrb[0].mxu0
    %6953 = vmatprep.mubr.f32.mxu0 0.0
    %6954 = vmatmul.mubr.f32.gmra.mrb[0].mxu0 %v6598
    %v6955 = vpop.f32.mrb[0].mxu0
    %v6956 = vadd.f32 0.0, %v6955
    %v6957 = vpop.f32.mrb[0].mxu0
    %6958 = vmatprep.mubr.f32.mxu0 0.0
    %6959 = vmatmul.mubr.f32.gmra.mrb[0].mxu0 %v6601
    %v6960 = vpop.f32.mrb[0].mxu0
    %v6961 = vadd.f32 0.0, %v6960
    %v6962 = vpop.f32.mrb[0].mxu0
    %6963 = vmatprep.mubr.f32.mxu0 0.0
    %6964 = vmatmul.mubr.f32.gmra.mrb[0].mxu0 %v6604
    %v6965 = vpop.f32.mrb[0].mxu0
    %v6966 = vadd.f32 0.0, %v6965
    %v6967 = vpop.f32.mrb[0].mxu0
    %6968 = vmatprep.mubr.f32.mxu0 0.0
    %6969 = vmatmul.mubr.f32.gmra.mrb[0].mxu0 %v6607
    %v6970 = vpop.f32.mrb[0].mxu0
    %v6971 = vadd.f32 0.0, %v6970
    %v6972 = vpop.f32.mrb[0].mxu0
    %6973 = vmatprep.mubr.f32.mxu0 0.0
    %6974 = vmatmul.mubr.f32.gmra.mrb[0].mxu0 %v6610
    %v6975 = vpop.f32.mrb[0].mxu0
    %v6976 = vadd.f32 0.0, %v6975
    %v6977 = vpop.f32.mrb[0].mxu0
    %6978 = vmatprep.mubr.f32.mxu0 0.0
    %6979 = vmatmul.mubr.f32.gmra.mrb[0].mxu0 %v6613
    %v6980 = vpop.f32.mrb[0].mxu0
    %v6981 = vadd.f32 0.0, %v6980
    %v6982 = vpop.f32.mrb[0].mxu0
    %6983 = vmatprep.mubr.f32.mxu0 0.0
    %6984 = vmatmul.mubr.f32.gmra.mrb[0].mxu0 %v6616
    %v6985 = vpop.f32.mrb[0].mxu0
    %v6986 = vadd.f32 0.0, %v6985
    %v6987 = vpop.f32.mrb[0].mxu0
    %6988 = vmatprep.mubr.f32.mxu0 0.0
    %6989 = vmatmul.mubr.f32.gmra.mrb[0].mxu0 %v6619
    %v6990 = vpop.f32.mrb[0].mxu0
    %v6991 = vadd.f32 0.0, %v6990
    %v6992 = vpop.f32.mrb[0].mxu0
    %6993 = vmatprep.mubr.f32.mxu0 0.0
    %6994 = vmatmul.mubr.f32.gmra.mrb[0].mxu0 %v6622
    %v6995 = vpop.f32.mrb[0].mxu0
    %v6996 = vadd.f32 0.0, %v6995
    %v6997 = vpop.f32.mrb[0].mxu0
    %6998 = vmatprep.mubr.f32.mxu0 0.0
    %6999 = vmatmul.mubr.f32.gmra.mrb[0].mxu0 %v6625
    %v7000 = vpop.f32.mrb[0].mxu0
    %v7001 = vadd.f32 0.0, %v7000
    %v7002 = vpop.f32.mrb[0].mxu0
    %7003 = vmatprep.mubr.f32.mxu0 0.0
    %7004 = vmatmul.mubr.f32.gmra.mrb[0].mxu0 %v6628
    %v7005 = vpop.f32.mrb[0].mxu0
    %v7006 = vadd.f32 0.0, %v7005
    %v7007 = vpop.f32.mrb[0].mxu0
    %7008 = vmatprep.mubr.f32.mxu0 0.0
    %7009 = vmatmul.mubr.f32.gmra.mrb[0].mxu0 %v6631
    %v7010 = vpop.f32.mrb[0].mxu0
    %v7011 = vadd.f32 0.0, %v7010
    %v7012 = vpop.f32.mrb[0].mxu0
    %7013 = vmatprep.mubr.f32.mxu0 0.0
    %7014 = vmatmul.mubr.f32.gmra.mrb[0].mxu0 %v6634
    %v7015 = vpop.f32.mrb[0].mxu0
    %v7016 = vadd.f32 0.0, %v7015
    %v7017 = vpop.f32.mrb[0].mxu0
    %7018 = vmatprep.mubr.f32.mxu0 0.0
    %7019 = vmatmul.mubr.f32.gmra.mrb[0].mxu0 %v6637
    %v7020 = vpop.f32.mrb[0].mxu0
    %v7021 = vadd.f32 0.0, %v7020
    %v7022 = vpop.f32.mrb[0].mxu0
    %7023 = vmatprep.mubr.f32.mxu0 0.0
    %7024 = vmatmul.mubr.f32.gmra.mrb[0].mxu0 %v6640
    %v7025 = vpop.f32.mrb[0].mxu0
    %v7026 = vadd.f32 0.0, %v7025
    %v7027 = vpop.f32.mrb[0].mxu0
    %7028 = vmatprep.mubr.f32.mxu0 0.0
    %7029 = vmatmul.mubr.f32.gmra.mrb[0].mxu0 %v6643
    %v7030 = vpop.f32.mrb[0].mxu0
    %v7031 = vadd.f32 0.0, %v7030
    %v7032 = vpop.f32.mrb[0].mxu0
    %7033 = vmatprep.mubr.f32.mxu0 0.0
    %7034 = vmatmul.mubr.f32.gmra.mrb[0].mxu0 %v6646
    %v7035 = vpop.f32.mrb[0].mxu0
    %v7036 = vadd.f32 0.0, %v7035
    %v7037 = vpop.f32.mrb[0].mxu0
    %7038 = vmatprep.mubr.f32.mxu0 0.0
    %7039 = vmatmul.mubr.f32.gmra.mrb[0].mxu0 %v6649
    %v7040 = vpop.f32.mrb[0].mxu0
    %v7041 = vadd.f32 0.0, %v7040
    %v7042 = vpop.f32.mrb[0].mxu0
    %7043 = vmatprep.mubr.f32.mxu0 0.0
    %7044 = vmatmul.mubr.f32.gmra.mrb[0].mxu0 %v6652
    %v7045 = vpop.f32.mrb[0].mxu0
    %v7046 = vadd.f32 0.0, %v7045
    %v7047 = vpop.f32.mrb[0].mxu0
    %7048 = vmatprep.mubr.f32.mxu0 0.0
    %7049 = vmatmul.mubr.f32.gmra.mrb[0].mxu0 %v6655
    %v7050 = vpop.f32.mrb[0].mxu0
    %v7051 = vadd.f32 0.0, %v7050
    %v7052 = vpop.f32.mrb[0].mxu0
    %7053 = vmatprep.mubr.f32.mxu0 0.0
    %7054 = vmatmul.mubr.f32.gmra.mrb[0].mxu0 %v6658
    %v7055 = vpop.f32.mrb[0].mxu0
    %v7056 = vadd.f32 0.0, %v7055
    %v7057 = vpop.f32.mrb[0].mxu0
    %7058 = vmatprep.mubr.f32.mxu0 0.0
    %7059 = vmatmul.mubr.f32.gmra.mrb[0].mxu0 %v6661
    %v7060 = vpop.f32.mrb[0].mxu0
    %v7061 = vadd.f32 0.0, %v7060
    %v7062 = vpop.f32.mrb[0].mxu0
    %7063 = vmatprep.mubr.f32.mxu0 0.0
    %7064 = vmatmul.mubr.f32.gmra.mrb[0].mxu0 %v6664
    %v7065 = vpop.f32.mrb[0].mxu0
    %v7066 = vadd.f32 0.0, %v7065
    %v7067 = vpop.f32.mrb[0].mxu0
    %7068 = vmatprep.mubr.f32.mxu0 0.0
    %7069 = vmatmul.mubr.f32.gmra.mrb[0].mxu0 %v6667
    %v7070 = vpop.f32.mrb[0].mxu0
    %v7071 = vadd.f32 0.0, %v7070
    %v7072 = vpop.f32.mrb[0].mxu0
    %7073 = vmatprep.mubr.f32.mxu0 0.0
    %7074 = vmatmul.mubr.f32.gmra.mrb[0].mxu0 %v6670
    %v7075 = vpop.f32.mrb[0].mxu0
    %v7076 = vadd.f32 0.0, %v7075
    %v7077 = vpop.f32.mrb[0].mxu0
    %7078 = vmatprep.mubr.f32.mxu0 0.0
    %7079 = vmatmul.mubr.f32.gmra.mrb[0].mxu0 %v6673
    %v7080 = vpop.f32.mrb[0].mxu0
    %v7081 = vadd.f32 0.0, %v7080
    %v7082 = vpop.f32.mrb[0].mxu0
    %7083 = vmatprep.mubr.f32.mxu0 0.0
    %7084 = vmatmul.mubr.f32.gmra.mrb[0].mxu0 %v6676
    %v7085 = vpop.f32.mrb[0].mxu0
    %v7086 = vadd.f32 0.0, %v7085
    %v7087 = vpop.f32.mrb[0].mxu0
    %7088 = vmatprep.mubr.f32.mxu0 0.0
    %7089 = vmatmul.mubr.f32.gmra.mrb[0].mxu0 %v6679
    %v7090 = vpop.f32.mrb[0].mxu0
    %v7091 = vadd.f32 0.0, %v7090
    %v7092 = vpop.f32.mrb[0].mxu0
    %7093 = vmatprep.mubr.f32.mxu0 0.0
    %7094 = vmatmul.mubr.f32.gmra.mrb[0].mxu0 %v6682
    %v7095 = vpop.f32.mrb[0].mxu0
    %v7096 = vadd.f32 0.0, %v7095
    %v7097 = vpop.f32.mrb[0].mxu0
    %7098 = vmatprep.mubr.f32.mxu0 0.0
    %7099 = vmatmul.mubr.f32.gmra.mrb[0].mxu0 %v6685
    %v7100 = vpop.f32.mrb[0].mxu0
    %v7101 = vadd.f32 0.0, %v7100
    %v7102 = vpop.f32.mrb[0].mxu0
    %7103 = vmatprep.mubr.f32.mxu0 0.0
    %7104 = vmatmul.mubr.f32.gmra.mrb[0].mxu0 %v6688
    %v7105 = vpop.f32.mrb[0].mxu0
    %v7106 = vadd.f32 0.0, %v7105
    %v7107 = vpop.f32.mrb[0].mxu0
    %7108 = vmatprep.mubr.f32.mxu0 0.0
    %7109 = vmatmul.mubr.f32.gmra.mrb[0].mxu0 %v6691
    %v7110 = vpop.f32.mrb[0].mxu0
    %v7111 = vadd.f32 0.0, %v7110
    %v7112 = vpop.f32.mrb[0].mxu0
    %7113 = vmatprep.mubr.f32.mxu0 0.0
    %7114 = vmatmul.mubr.f32.gmra.mrb[0].mxu0 %v6694
    %v7115 = vpop.f32.mrb[0].mxu0
    %v7116 = vadd.f32 0.0, %v7115
    %v7117 = vpop.f32.mrb[0].mxu0
    %7118 = vmatprep.mubr.f32.mxu0 0.0
    %7119 = vmatmul.mubr.f32.gmra.mrb[0].mxu0 %v6697
    %v7120 = vpop.f32.mrb[0].mxu0
    %v7121 = vadd.f32 0.0, %v7120
    %v7122 = vpop.f32.mrb[0].mxu0
    %7123 = vmatprep.mubr.f32.mxu0 0.0
    %7124 = vmatmul.mubr.f32.gmra.mrb[0].mxu0 %v6700
    %v7125 = vpop.f32.mrb[0].mxu0
    %v7126 = vadd.f32 0.0, %v7125
    %v7127 = vpop.f32.mrb[0].mxu0
    %7128 = vmatprep.mubr.f32.mxu0 0.0
    %7129 = vmatmul.mubr.f32.gmra.mrb[0].mxu0 %v6703
    %v7130 = vpop.f32.mrb[0].mxu0
    %v7131 = vadd.f32 0.0, %v7130
    %v7132 = vpop.f32.mrb[0].mxu0
    %7133 = vmatprep.mubr.f32.mxu0 0.0
    %7134 = vmatmul.mubr.f32.gmra.mrb[0].mxu0 %v6706
    %v7135 = vpop.f32.mrb[0].mxu0
    %v7136 = vadd.f32 0.0, %v7135
    %v7137 = vpop.f32.mrb[0].mxu0
    %7138 = vmatprep.mubr.f32.mxu0 0.0
    %7139 = vmatmul.mubr.f32.gmra.mrb[0].mxu0 %v6709
    %v7140 = vpop.f32.mrb[0].mxu0
    %v7141 = vadd.f32 0.0, %v7140
    %v7142 = vpop.f32.mrb[0].mxu0
    %7143 = vmatprep.mubr.f32.mxu0 0.0
    %7144 = vmatmul.mubr.f32.gmra.mrb[0].mxu0 %v6712
    %v7145 = vpop.f32.mrb[0].mxu0
    %v7146 = vadd.f32 0.0, %v7145
    %v7147 = vpop.f32.mrb[0].mxu0
    %7148 = vmatprep.mubr.f32.mxu0 0.0
    %7149 = vmatmul.mubr.f32.gmra.mrb[0].mxu0 %v6715
    %v7150 = vpop.f32.mrb[0].mxu0
    %v7151 = vadd.f32 0.0, %v7150
    %v7152 = vpop.f32.mrb[0].mxu0
    %7153 = vmatprep.mubr.f32.mxu0 0.0
    %7154 = vmatmul.mubr.f32.gmra.mrb[0].mxu0 %v6718
    %v7155 = vpop.f32.mrb[0].mxu0
    %v7156 = vadd.f32 0.0, %v7155
    %v7157 = vpop.f32.mrb[0].mxu0
    %7158 = vmatprep.mubr.f32.mxu0 0.0
    %7159 = vmatmul.mubr.f32.gmra.mrb[0].mxu0 %v6721
    %v7160 = vpop.f32.mrb[0].mxu0
    %v7161 = vadd.f32 0.0, %v7160
    %v7162 = vpop.f32.mrb[0].mxu0
    %7163 = vmatprep.mubr.f32.mxu0 0.0
    %7164 = vmatmul.mubr.f32.gmra.mrb[0].mxu0 %v6724
    %v7165 = vpop.f32.mrb[0].mxu0
    %v7166 = vadd.f32 0.0, %v7165
    %v7167 = vpop.f32.mrb[0].mxu0
    %7168 = vmatprep.mubr.f32.mxu0 0.0
    %7169 = vmatmul.mubr.f32.gmra.mrb[0].mxu0 %v6727
    %v7170 = vpop.f32.mrb[0].mxu0
    %v7171 = vadd.f32 0.0, %v7170
    %v7172 = vpop.f32.mrb[0].mxu0
    %7173 = vmatprep.mubr.f32.mxu0 0.0
    %7174 = vmatmul.mubr.f32.gmra.mrb[0].mxu0 %v6730
    %v7175 = vpop.f32.mrb[0].mxu0
    %v7176 = vadd.f32 0.0, %v7175
    %v7177 = vpop.f32.mrb[0].mxu0
    %7178 = vmatprep.mubr.f32.mxu0 0.0
    %7179 = vmatmul.mubr.f32.gmra.mrb[0].mxu0 %v6733
    %v7180 = vpop.f32.mrb[0].mxu0
    %v7181 = vadd.f32 0.0, %v7180
    %v7182 = vpop.f32.mrb[0].mxu0
    %7183 = vmatprep.mubr.f32.mxu0 0.0
    %7184 = vmatmul.mubr.f32.gmra.mrb[0].mxu0 %v6736
    %v7185 = vpop.f32.mrb[0].mxu0
    %v7186 = vadd.f32 0.0, %v7185
    %v7187 = vpop.f32.mrb[0].mxu0
    %7188 = vmatprep.mubr.f32.mxu0 0.0
    %7189 = vmatmul.mubr.f32.gmra.mrb[0].mxu0 %v6739
    %v7190 = vpop.f32.mrb[0].mxu0
    %v7191 = vadd.f32 0.0, %v7190
    %v7192 = vpop.f32.mrb[0].mxu0
    %7193 = vmatprep.mubr.f32.mxu0 0.0
    %7194 = vmatmul.mubr.f32.gmra.mrb[0].mxu0 %v6742
    %v7195 = vpop.f32.mrb[0].mxu0
    %v7196 = vadd.f32 0.0, %v7195
    %v7197 = vpop.f32.mrb[0].mxu0
    %7198 = vmatprep.mubr.f32.mxu0 0.0
    %7199 = vmatmul.mubr.f32.gmra.mrb[0].mxu0 %v6745
    %v7200 = vpop.f32.mrb[0].mxu0
    %v7201 = vadd.f32 0.0, %v7200
    %v7202 = vpop.f32.mrb[0].mxu0
    %7203 = vmatprep.mubr.f32.mxu0 0.0
    %7204 = vmatmul.mubr.f32.gmra.mrb[0].mxu0 %v6748
    %v7205 = vpop.f32.mrb[0].mxu0
    %v7206 = vadd.f32 0.0, %v7205
    %v7207 = vpop.f32.mrb[0].mxu0
    %7208 = vmatprep.mubr.f32.mxu0 0.0
    %7209 = vmatmul.mubr.f32.gmra.mrb[0].mxu0 %v6751
    %v7210 = vpop.f32.mrb[0].mxu0
    %v7211 = vadd.f32 0.0, %v7210
    %v7212 = vpop.f32.mrb[0].mxu0
    %7213 = vmatprep.mubr.f32.mxu0 0.0
    %7214 = vmatmul.mubr.f32.gmra.mrb[0].mxu0 %v6754
    %v7215 = vpop.f32.mrb[0].mxu0
    %v7216 = vadd.f32 0.0, %v7215
    %v7217 = vpop.f32.mrb[0].mxu0
    %7218 = vmatprep.mubr.f32.mxu0 0.0
    %7219 = vmatmul.mubr.f32.gmra.mrb[0].mxu0 %v6757
    %v7220 = vpop.f32.mrb[0].mxu0
    %v7221 = vadd.f32 0.0, %v7220
    %v7222 = vpop.f32.mrb[0].mxu0
    %7223 = vmatprep.mubr.f32.mxu0 0.0
    %7224 = vmatmul.mubr.f32.gmra.mrb[0].mxu0 %v6760
    %v7225 = vpop.f32.mrb[0].mxu0
    %v7226 = vadd.f32 0.0, %v7225
    %v7227 = vpop.f32.mrb[0].mxu0
    %7228 = vmatprep.mubr.f32.mxu0 0.0
    %7229 = vmatmul.mubr.f32.gmra.mrb[0].mxu0 %v6763
    %v7230 = vpop.f32.mrb[0].mxu0
    %v7231 = vadd.f32 0.0, %v7230
    %v7232 = vpop.f32.mrb[0].mxu0
    %7233 = vmatprep.mubr.f32.mxu0 0.0
    %7234 = vmatmul.mubr.f32.gmra.mrb[0].mxu0 %v6766
    %v7235 = vpop.f32.mrb[0].mxu0
    %v7236 = vadd.f32 0.0, %v7235
    %v7237 = vpop.f32.mrb[0].mxu0
    %7238 = vmatprep.mubr.f32.mxu0 0.0
    %7239 = vmatmul.mubr.f32.gmra.mrb[0].mxu0 %v6769
    %v7240 = vpop.f32.mrb[0].mxu0
    %v7241 = vadd.f32 0.0, %v7240
    %v7242 = vpop.f32.mrb[0].mxu0
    %7243 = vdwg.mxu0
    %v7244 = vadd.f32 %v6445, %v6841
    %v7245 = vadd.f32 %v6446, %v6846
    %v7246 = vadd.f32 %v6447, %v6851
    %v7247 = vadd.f32 %v6448, %v6856
    %v7248 = vadd.f32 %v6449, %v6861
    %v7249 = vadd.f32 %v6450, %v6866
    %v7250 = vadd.f32 %v6451, %v6871
    %v7251 = vadd.f32 %v6452, %v6876
    %v7252 = vadd.f32 %v6453, %v6881
    %v7253 = vadd.f32 %v6454, %v6886
    %v7254 = vadd.f32 %v6455, %v6891
    %v7255 = vadd.f32 %v6456, %v6896
    %v7256 = vadd.f32 %v6457, %v6901
    %v7257 = vadd.f32 %v6458, %v6906
    %v7258 = vadd.f32 %v6459, %v6911
    %v7259 = vadd.f32 %v6460, %v6916
    %v7260 = vadd.f32 %v6461, %v6921
    %v7261 = vadd.f32 %v6462, %v6926
    %v7262 = vadd.f32 %v6463, %v6931
    %v7263 = vadd.f32 %v6464, %v6936
    %v7264 = vadd.f32 %v6465, %v6941
    %v7265 = vadd.f32 %v6466, %v6946
    %v7266 = vadd.f32 %v6467, %v6951
    %v7267 = vadd.f32 %v6468, %v6956
    %v7268 = vadd.f32 %v6469, %v6961
    %v7269 = vadd.f32 %v6470, %v6966
    %v7270 = vadd.f32 %v6471, %v6971
    %v7271 = vadd.f32 %v6472, %v6976
    %v7272 = vadd.f32 %v6473, %v6981
    %v7273 = vadd.f32 %v6474, %v6986
    %v7274 = vadd.f32 %v6475, %v6991
    %v7275 = vadd.f32 %v6476, %v6996
    %v7276 = vadd.f32 %v6477, %v7001
    %v7277 = vadd.f32 %v6478, %v7006
    %v7278 = vadd.f32 %v6479, %v7011
    %v7279 = vadd.f32 %v6480, %v7016
    %v7280 = vadd.f32 %v6481, %v7021
    %v7281 = vadd.f32 %v6482, %v7026
    %v7282 = vadd.f32 %v6483, %v7031
    %v7283 = vadd.f32 %v6484, %v7036
    %v7284 = vadd.f32 %v6485, %v7041
    %v7285 = vadd.f32 %v6486, %v7046
    %v7286 = vadd.f32 %v6487, %v7051
    %v7287 = vadd.f32 %v6488, %v7056
    %v7288 = vadd.f32 %v6489, %v7061
    %v7289 = vadd.f32 %v6490, %v7066
    %v7290 = vadd.f32 %v6491, %v7071
    %v7291 = vadd.f32 %v6492, %v7076
    %v7292 = vadd.f32 %v6493, %v7081
    %v7293 = vadd.f32 %v6494, %v7086
    %v7294 = vadd.f32 %v6495, %v7091
    %v7295 = vadd.f32 %v6496, %v7096
    %v7296 = vadd.f32 %v6497, %v7101
    %v7297 = vadd.f32 %v6498, %v7106
    %v7298 = vadd.f32 %v6499, %v7111
    %v7299 = vadd.f32 %v6500, %v7116
    %v7300 = vadd.f32 %v6501, %v7121
    %v7301 = vadd.f32 %v6502, %v7126
    %v7302 = vadd.f32 %v6503, %v7131
    %v7303 = vadd.f32 %v6504, %v7136
    %v7304 = vadd.f32 %v6505, %v7141
    %v7305 = vadd.f32 %v6506, %v7146
    %v7306 = vadd.f32 %v6507, %v7151
    %v7307 = vadd.f32 %v6508, %v7156
    %v7308 = vadd.f32 %v6509, %v7161
    %v7309 = vadd.f32 %v6510, %v7166
    %v7310 = vadd.f32 %v6511, %v7171
    %v7311 = vadd.f32 %v6512, %v7176
    %v7312 = vadd.f32 %v6513, %v7181
    %v7313 = vadd.f32 %v6514, %v7186
    %v7314 = vadd.f32 %v6515, %v7191
    %v7315 = vadd.f32 %v6516, %v7196
    %v7316 = vadd.f32 %v6517, %v7201
    %v7317 = vadd.f32 %v6518, %v7206
    %v7318 = vadd.f32 %v6519, %v7211
    %v7319 = vadd.f32 %v6520, %v7216
    %v7320 = vadd.f32 %v6521, %v7221
    %v7321 = vadd.f32 %v6522, %v7226
    %v7322 = vadd.f32 %v6523, %v7231
    %v7323 = vadd.f32 %v6524, %v7236
    %v7324 = vadd.f32 %v6525, %v7241
    %7325 = vst [vmem:[#allocation2] sm:$0xff] %v7244
    %7326 = vst [vmem:[#allocation2 + $0x8] sm:$0xff] %v7245
    %7327 = vst [vmem:[#allocation2 + $0x10] sm:$0xff] %v7246
    %7328 = vst [vmem:[#allocation2 + $0x18] sm:$0xff] %v7247
    %7329 = vst [vmem:[#allocation2 + $0x20] sm:$0xff] %v7248
    %7330 = vst [vmem:[#allocation2 + $0x28] sm:$0xff] %v7249
    %7331 = vst [vmem:[#allocation2 + $0x30] sm:$0xff] %v7250
    %7332 = vst [vmem:[#allocation2 + $0x38] sm:$0xff] %v7251
    %7333 = vst [vmem:[#allocation2 + $0x40] sm:$0xff] %v7252
    %7334 = vst [vmem:[#allocation2 + $0x48] sm:$0xff] %v7253
    %7335 = vst [vmem:[#allocation2 + $0x50] sm:$0xff] %v7254
    %7336 = vst [vmem:[#allocation2 + $0x58] sm:$0xff] %v7255
    %7337 = vst [vmem:[#allocation2 + $0x60] sm:$0xff] %v7256
    %7338 = vst [vmem:[#allocation2 + $0x68] sm:$0xff] %v7257
    %7339 = vst [vmem:[#allocation2 + $0x70] sm:$0xff] %v7258
    %7340 = vst [vmem:[#allocation2 + $0x78] sm:$0xff] %v7259
    %7341 = vst [vmem:[#allocation2 + $0x80] sm:$0xff] %v7260
    %7342 = vst [vmem:[#allocation2 + $0x88] sm:$0xff] %v7261
    %7343 = vst [vmem:[#allocation2 + $0x90] sm:$0xff] %v7262
    %7344 = vst [vmem:[#allocation2 + $0x98] sm:$0xff] %v7263
    %7345 = vst [vmem:[#allocation2 + $0xa0] sm:$0xff] %v7264
    %7346 = vst [vmem:[#allocation2 + $0xa8] sm:$0xff] %v7265
    %7347 = vst [vmem:[#allocation2 + $0xb0] sm:$0xff] %v7266
    %7348 = vst [vmem:[#allocation2 + $0xb8] sm:$0xff] %v7267
    %7349 = vst [vmem:[#allocation2 + $0xc0] sm:$0xff] %v7268
    %7350 = vst [vmem:[#allocation2 + $0xc8] sm:$0xff] %v7269
    %7351 = vst [vmem:[#allocation2 + $0xd0] sm:$0xff] %v7270
    %7352 = vst [vmem:[#allocation2 + $0xd8] sm:$0xff] %v7271
    %7353 = vst [vmem:[#allocation2 + $0xe0] sm:$0xff] %v7272
    %7354 = vst [vmem:[#allocation2 + $0xe8] sm:$0xff] %v7273
    %7355 = vst [vmem:[#allocation2 + $0xf0] sm:$0xff] %v7274
    %7356 = vst [vmem:[#allocation2 + $0xf8] sm:$0xff] %v7275
    %7357 = vst [vmem:[#allocation2 + $0x100] sm:$0xff] %v7276
    %7358 = vst [vmem:[#allocation2 + $0x108] sm:$0xff] %v7277
    %7359 = vst [vmem:[#allocation2 + $0x110] sm:$0xff] %v7278
    %7360 = vst [vmem:[#allocation2 + $0x118] sm:$0xff] %v7279
    %7361 = vst [vmem:[#allocation2 + $0x120] sm:$0xff] %v7280
    %7362 = vst [vmem:[#allocation2 + $0x128] sm:$0xff] %v7281
    %7363 = vst [vmem:[#allocation2 + $0x130] sm:$0xff] %v7282
    %7364 = vst [vmem:[#allocation2 + $0x138] sm:$0xff] %v7283
    %7365 = vst [vmem:[#allocation2 + $0x140] sm:$0xff] %v7284
    %7366 = vst [vmem:[#allocation2 + $0x148] sm:$0xff] %v7285
    %7367 = vst [vmem:[#allocation2 + $0x150] sm:$0xff] %v7286
    %7368 = vst [vmem:[#allocation2 + $0x158] sm:$0xff] %v7287
    %7369 = vst [vmem:[#allocation2 + $0x160] sm:$0xff] %v7288
    %7370 = vst [vmem:[#allocation2 + $0x168] sm:$0xff] %v7289
    %7371 = vst [vmem:[#allocation2 + $0x170] sm:$0xff] %v7290
    %7372 = vst [vmem:[#allocation2 + $0x178] sm:$0xff] %v7291
    %7373 = vst [vmem:[#allocation2 + $0x180] sm:$0xff] %v7292
    %7374 = vst [vmem:[#allocation2 + $0x188] sm:$0xff] %v7293
    %7375 = vst [vmem:[#allocation2 + $0x190] sm:$0xff] %v7294
    %7376 = vst [vmem:[#allocation2 + $0x198] sm:$0xff] %v7295
    %7377 = vst [vmem:[#allocation2 + $0x1a0] sm:$0xff] %v7296
    %7378 = vst [vmem:[#allocation2 + $0x1a8] sm:$0xff] %v7297
    %7379 = vst [vmem:[#allocation2 + $0x1b0] sm:$0xff] %v7298
    %7380 = vst [vmem:[#allocation2 + $0x1b8] sm:$0xff] %v7299
    %7381 = vst [vmem:[#allocation2 + $0x1c0] sm:$0xff] %v7300
    %7382 = vst [vmem:[#allocation2 + $0x1c8] sm:$0xff] %v7301
    %7383 = vst [vmem:[#allocation2 + $0x1d0] sm:$0xff] %v7302
    %7384 = vst [vmem:[#allocation2 + $0x1d8] sm:$0xff] %v7303
    %7385 = vst [vmem:[#allocation2 + $0x1e0] sm:$0xff] %v7304
    %7386 = vst [vmem:[#allocation2 + $0x1e8] sm:$0xff] %v7305
    %7387 = vst [vmem:[#allocation2 + $0x1f0] sm:$0xff] %v7306
    %7388 = vst [vmem:[#allocation2 + $0x1f8] sm:$0xff] %v7307
    %7389 = vst [vmem:[#allocation2 + $0x200] sm:$0xff] %v7308
    %7390 = vst [vmem:[#allocation2 + $0x208] sm:$0xff] %v7309
    %7391 = vst [vmem:[#allocation2 + $0x210] sm:$0xff] %v7310
    %7392 = vst [vmem:[#allocation2 + $0x218] sm:$0xff] %v7311
    %7393 = vst [vmem:[#allocation2 + $0x220] sm:$0xff] %v7312
    %7394 = vst [vmem:[#allocation2 + $0x228] sm:$0xff] %v7313
    %7395 = vst [vmem:[#allocation2 + $0x230] sm:$0xff] %v7314
    %7396 = vst [vmem:[#allocation2 + $0x238] sm:$0xff] %v7315
    %7397 = vst [vmem:[#allocation2 + $0x240] sm:$0xff] %v7316
    %7398 = vst [vmem:[#allocation2 + $0x248] sm:$0xff] %v7317
    %7399 = vst [vmem:[#allocation2 + $0x250] sm:$0xff] %v7318
    %7400 = vst [vmem:[#allocation2 + $0x258] sm:$0xff] %v7319
    %7401 = vst [vmem:[#allocation2 + $0x260] sm:$0xff] %v7320
    %7402 = vst [vmem:[#allocation2 + $0x268] sm:$0xff] %v7321
    %7403 = vst [vmem:[#allocation2 + $0x270] sm:$0xff] %v7322
    %7404 = vst [vmem:[#allocation2 + $0x278] sm:$0xff] %v7323
    %7405 = vst [vmem:[#allocation2 + $0x280] sm:$0xff] %v7324
    %v7406 = vld [vmem:[%s0 + $0x25] sm:$0xff]
    %v7407 = vld [vmem:[%s0 + $0x2d] sm:$0xff]
    %v7408 = vld [vmem:[%s0 + $0x35] sm:$0xff]
    %v7409 = vld [vmem:[%s0 + $0x3d] sm:$0xff]
    %v7410 = vld [vmem:[%s0 + $0x45] sm:$0xff]
    %v7411 = vld [vmem:[%s0 + $0x4d] sm:$0xff]
    %v7412 = vld [vmem:[%s0 + $0x55] sm:$0xff]
    %v7413 = vld [vmem:[%s0 + $0x5d] sm:$0xff]
    %v7414 = vld [vmem:[%s0 + $0x65] sm:$0xff]
    %v7415 = vld [vmem:[%s0 + $0x6d] sm:$0xff]
    %v7416 = vld [vmem:[%s0 + $0x75] sm:$0xff]
    %v7417 = vld [vmem:[%s0 + $0x7d] sm:$0xff]
    %v7418 = vld [vmem:[%s0 + $0x85] sm:$0xff]
    %v7419 = vld [vmem:[%s0 + $0x8d] sm:$0xff]
    %v7420 = vld [vmem:[%s0 + $0x95] sm:$0xff]
    %v7421 = vld [vmem:[%s0 + $0x9d] sm:$0xff]
    %v7422 = vld [vmem:[%s0 + $0xa5] sm:$0xff]
    %v7423 = vld [vmem:[%s0 + $0xad] sm:$0xff]
    %v7424 = vld [vmem:[%s0 + $0xb5] sm:$0xff]
    %v7425 = vld [vmem:[%s0 + $0xbd] sm:$0xff]
    %v7426 = vld [vmem:[%s0 + $0xc5] sm:$0xff]
    %v7427 = vld [vmem:[%s0 + $0xcd] sm:$0xff]
    %v7428 = vld [vmem:[%s0 + $0xd5] sm:$0xff]
    %v7429 = vld [vmem:[%s0 + $0xdd] sm:$0xff]
    %v7430 = vld [vmem:[%s0 + $0xe5] sm:$0xff]
    %v7431 = vld [vmem:[%s0 + $0xed] sm:$0xff]
    %v7432 = vld [vmem:[%s0 + $0xf5] sm:$0xff]
    %v7433 = vld [vmem:[%s0 + $0xfd] sm:$0xff]
    %v7434 = vld [vmem:[%s0 + $0x105] sm:$0xff]
    %v7435 = vld [vmem:[%s0 + $0x10d] sm:$0xff]
    %v7436 = vld [vmem:[%s0 + $0x115] sm:$0xff]
    %v7437 = vld [vmem:[%s0 + $0x11d] sm:$0xff]
    %v7438 = vld [vmem:[%s0 + $0x125] sm:$0xff]
    %v7439 = vld [vmem:[%s0 + $0x12d] sm:$0xff]
    %v7440 = vld [vmem:[%s0 + $0x135] sm:$0xff]
    %v7441 = vld [vmem:[%s0 + $0x13d] sm:$0xff]
    %v7442 = vld [vmem:[%s0 + $0x145] sm:$0xff]
    %v7443 = vld [vmem:[%s0 + $0x14d] sm:$0xff]
    %v7444 = vld [vmem:[%s0 + $0x155] sm:$0xff]
    %v7445 = vld [vmem:[%s0 + $0x15d] sm:$0xff]
    %v7446 = vld [vmem:[%s0 + $0x165] sm:$0xff]
    %v7447 = vld [vmem:[%s0 + $0x16d] sm:$0xff]
    %v7448 = vld [vmem:[%s0 + $0x175] sm:$0xff]
    %v7449 = vld [vmem:[%s0 + $0x17d] sm:$0xff]
    %v7450 = vld [vmem:[%s0 + $0x185] sm:$0xff]
    %v7451 = vld [vmem:[%s0 + $0x18d] sm:$0xff]
    %v7452 = vld [vmem:[%s0 + $0x195] sm:$0xff]
    %v7453 = vld [vmem:[%s0 + $0x19d] sm:$0xff]
    %v7454 = vld [vmem:[%s0 + $0x1a5] sm:$0xff]
    %v7455 = vld [vmem:[%s0 + $0x1ad] sm:$0xff]
    %v7456 = vld [vmem:[%s0 + $0x1b5] sm:$0xff]
    %v7457 = vld [vmem:[%s0 + $0x1bd] sm:$0xff]
    %v7458 = vld [vmem:[%s0 + $0x1c5] sm:$0xff]
    %v7459 = vld [vmem:[%s0 + $0x1cd] sm:$0xff]
    %v7460 = vld [vmem:[%s0 + $0x1d5] sm:$0xff]
    %v7461 = vld [vmem:[%s0 + $0x1dd] sm:$0xff]
    %v7462 = vld [vmem:[%s0 + $0x1e5] sm:$0xff]
    %v7463 = vld [vmem:[%s0 + $0x1ed] sm:$0xff]
    %v7464 = vld [vmem:[%s0 + $0x1f5] sm:$0xff]
    %v7465 = vld [vmem:[%s0 + $0x1fd] sm:$0xff]
    %v7466 = vld [vmem:[%s0 + $0x205] sm:$0xff]
    %v7467 = vld [vmem:[%s0 + $0x20d] sm:$0xff]
    %v7468 = vld [vmem:[%s0 + $0x215] sm:$0xff]
    %v7469 = vld [vmem:[%s0 + $0x21d] sm:$0xff]
    %v7470 = vld [vmem:[%s0 + $0x225] sm:$0xff]
    %v7471 = vld [vmem:[%s0 + $0x22d] sm:$0xff]
    %v7472 = vld [vmem:[%s0 + $0x235] sm:$0xff]
    %v7473 = vld [vmem:[%s0 + $0x23d] sm:$0xff]
    %v7474 = vld [vmem:[%s0 + $0x245] sm:$0xff]
    %v7475 = vld [vmem:[%s0 + $0x24d] sm:$0xff]
    %v7476 = vld [vmem:[%s0 + $0x255] sm:$0xff]
    %v7477 = vld [vmem:[%s0 + $0x25d] sm:$0xff]
    %v7478 = vld [vmem:[%s0 + $0x265] sm:$0xff]
    %v7479 = vld [vmem:[%s0 + $0x26d] sm:$0xff]
    %v7480 = vld [vmem:[%s0 + $0x275] sm:$0xff]
    %v7481 = vld [vmem:[%s0 + $0x27d] sm:$0xff]
    %v7482 = vld [vmem:[%s0 + $0x285] sm:$0xff]
    %v7483 = vld [vmem:[%s0 + $0x28d] sm:$0xff]
    %v7484 = vld [vmem:[%s0 + $0x295] sm:$0xff]
    %v7485 = vld [vmem:[%s0 + $0x29d] sm:$0xff]
    %v7486 = vld [vmem:[%s0 + $0x2a5] sm:$0xff]
    %v7487 = vld [vmem:[#allocation2] sm:$0xff]
    %v7488 = vld [vmem:[#allocation2 + $0x8] sm:$0xff]
    %v7489 = vld [vmem:[#allocation2 + $0x10] sm:$0xff]
    %v7490 = vld [vmem:[#allocation2 + $0x18] sm:$0xff]
    %v7491 = vld [vmem:[#allocation2 + $0x20] sm:$0xff]
    %v7492 = vld [vmem:[#allocation2 + $0x28] sm:$0xff]
    %v7493 = vld [vmem:[#allocation2 + $0x30] sm:$0xff]
    %v7494 = vld [vmem:[#allocation2 + $0x38] sm:$0xff]
    %v7495 = vld [vmem:[#allocation2 + $0x40] sm:$0xff]
    %v7496 = vld [vmem:[#allocation2 + $0x48] sm:$0xff]
    %v7497 = vld [vmem:[#allocation2 + $0x50] sm:$0xff]
    %v7498 = vld [vmem:[#allocation2 + $0x58] sm:$0xff]
    %v7499 = vld [vmem:[#allocation2 + $0x60] sm:$0xff]
    %v7500 = vld [vmem:[#allocation2 + $0x68] sm:$0xff]
    %v7501 = vld [vmem:[#allocation2 + $0x70] sm:$0xff]
    %v7502 = vld [vmem:[#allocation2 + $0x78] sm:$0xff]
    %v7503 = vld [vmem:[#allocation2 + $0x80] sm:$0xff]
    %v7504 = vld [vmem:[#allocation2 + $0x88] sm:$0xff]
    %v7505 = vld [vmem:[#allocation2 + $0x90] sm:$0xff]
    %v7506 = vld [vmem:[#allocation2 + $0x98] sm:$0xff]
    %v7507 = vld [vmem:[#allocation2 + $0xa0] sm:$0xff]
    %v7508 = vld [vmem:[#allocation2 + $0xa8] sm:$0xff]
    %v7509 = vld [vmem:[#allocation2 + $0xb0] sm:$0xff]
    %v7510 = vld [vmem:[#allocation2 + $0xb8] sm:$0xff]
    %v7511 = vld [vmem:[#allocation2 + $0xc0] sm:$0xff]
    %v7512 = vld [vmem:[#allocation2 + $0xc8] sm:$0xff]
    %v7513 = vld [vmem:[#allocation2 + $0xd0] sm:$0xff]
    %v7514 = vld [vmem:[#allocation2 + $0xd8] sm:$0xff]
    %v7515 = vld [vmem:[#allocation2 + $0xe0] sm:$0xff]
    %v7516 = vld [vmem:[#allocation2 + $0xe8] sm:$0xff]
    %v7517 = vld [vmem:[#allocation2 + $0xf0] sm:$0xff]
    %v7518 = vld [vmem:[#allocation2 + $0xf8] sm:$0xff]
    %v7519 = vld [vmem:[#allocation2 + $0x100] sm:$0xff]
    %v7520 = vld [vmem:[#allocation2 + $0x108] sm:$0xff]
    %v7521 = vld [vmem:[#allocation2 + $0x110] sm:$0xff]
    %v7522 = vld [vmem:[#allocation2 + $0x118] sm:$0xff]
    %v7523 = vld [vmem:[#allocation2 + $0x120] sm:$0xff]
    %v7524 = vld [vmem:[#allocation2 + $0x128] sm:$0xff]
    %v7525 = vld [vmem:[#allocation2 + $0x130] sm:$0xff]
    %v7526 = vld [vmem:[#allocation2 + $0x138] sm:$0xff]
    %v7527 = vld [vmem:[#allocation2 + $0x140] sm:$0xff]
    %v7528 = vld [vmem:[#allocation2 + $0x148] sm:$0xff]
    %v7529 = vld [vmem:[#allocation2 + $0x150] sm:$0xff]
    %v7530 = vld [vmem:[#allocation2 + $0x158] sm:$0xff]
    %v7531 = vld [vmem:[#allocation2 + $0x160] sm:$0xff]
    %v7532 = vld [vmem:[#allocation2 + $0x168] sm:$0xff]
    %v7533 = vld [vmem:[#allocation2 + $0x170] sm:$0xff]
    %v7534 = vld [vmem:[#allocation2 + $0x178] sm:$0xff]
    %v7535 = vld [vmem:[#allocation2 + $0x180] sm:$0xff]
    %v7536 = vld [vmem:[#allocation2 + $0x188] sm:$0xff]
    %v7537 = vld [vmem:[#allocation2 + $0x190] sm:$0xff]
    %v7538 = vld [vmem:[#allocation2 + $0x198] sm:$0xff]
    %v7539 = vld [vmem:[#allocation2 + $0x1a0] sm:$0xff]
    %v7540 = vld [vmem:[#allocation2 + $0x1a8] sm:$0xff]
    %v7541 = vld [vmem:[#allocation2 + $0x1b0] sm:$0xff]
    %v7542 = vld [vmem:[#allocation2 + $0x1b8] sm:$0xff]
    %v7543 = vld [vmem:[#allocation2 + $0x1c0] sm:$0xff]
    %v7544 = vld [vmem:[#allocation2 + $0x1c8] sm:$0xff]
    %v7545 = vld [vmem:[#allocation2 + $0x1d0] sm:$0xff]
    %v7546 = vld [vmem:[#allocation2 + $0x1d8] sm:$0xff]
    %v7547 = vld [vmem:[#allocation2 + $0x1e0] sm:$0xff]
    %v7548 = vld [vmem:[#allocation2 + $0x1e8] sm:$0xff]
    %v7549 = vld [vmem:[#allocation2 + $0x1f0] sm:$0xff]
    %v7550 = vld [vmem:[#allocation2 + $0x1f8] sm:$0xff]
    %v7551 = vld [vmem:[#allocation2 + $0x200] sm:$0xff]
    %v7552 = vld [vmem:[#allocation2 + $0x208] sm:$0xff]
    %v7553 = vld [vmem:[#allocation2 + $0x210] sm:$0xff]
    %v7554 = vld [vmem:[#allocation2 + $0x218] sm:$0xff]
    %v7555 = vld [vmem:[#allocation2 + $0x220] sm:$0xff]
    %v7556 = vld [vmem:[#allocation2 + $0x228] sm:$0xff]
    %v7557 = vld [vmem:[#allocation2 + $0x230] sm:$0xff]
    %v7558 = vld [vmem:[#allocation2 + $0x238] sm:$0xff]
    %v7559 = vld [vmem:[#allocation2 + $0x240] sm:$0xff]
    %v7560 = vld [vmem:[#allocation2 + $0x248] sm:$0xff]
    %v7561 = vld [vmem:[#allocation2 + $0x250] sm:$0xff]
    %v7562 = vld [vmem:[#allocation2 + $0x258] sm:$0xff]
    %v7563 = vld [vmem:[#allocation2 + $0x260] sm:$0xff]
    %v7564 = vld [vmem:[#allocation2 + $0x268] sm:$0xff]
    %v7565 = vld [vmem:[#allocation2 + $0x270] sm:$0xff]
    %v7566 = vld [vmem:[#allocation2 + $0x278] sm:$0xff]
    %v7567 = vld [vmem:[#allocation2 + $0x280] sm:$0xff]
    %s7568 = scalar_lea.vmem %s1, 28
    %v7569 = vld [vmem:[%s7568] sm:$0xf]
    %v7571 = vsel %vm274, %v7406, 0
    %v7574 = vsel %vm274, %v7407, 0
    %v7577 = vsel %vm274, %v7408, 0
    %v7580 = vsel %vm274, %v7409, 0
    %v7583 = vsel %vm274, %v7410, 0
    %v7586 = vsel %vm274, %v7411, 0
    %v7589 = vsel %vm274, %v7412, 0
    %v7592 = vsel %vm274, %v7413, 0
    %v7595 = vsel %vm274, %v7414, 0
    %v7598 = vsel %vm274, %v7415, 0
    %v7601 = vsel %vm274, %v7416, 0
    %v7604 = vsel %vm274, %v7417, 0
    %v7607 = vsel %vm274, %v7418, 0
    %v7610 = vsel %vm274, %v7419, 0
    %v7613 = vsel %vm274, %v7420, 0
    %v7616 = vsel %vm274, %v7421, 0
    %v7619 = vsel %vm274, %v7422, 0
    %v7622 = vsel %vm274, %v7423, 0
    %v7625 = vsel %vm274, %v7424, 0
    %v7628 = vsel %vm274, %v7425, 0
    %v7631 = vsel %vm274, %v7426, 0
    %v7634 = vsel %vm274, %v7427, 0
    %v7637 = vsel %vm274, %v7428, 0
    %v7640 = vsel %vm274, %v7429, 0
    %v7643 = vsel %vm274, %v7430, 0
    %v7646 = vsel %vm274, %v7431, 0
    %v7649 = vsel %vm274, %v7432, 0
    %v7652 = vsel %vm274, %v7433, 0
    %v7655 = vsel %vm274, %v7434, 0
    %v7658 = vsel %vm274, %v7435, 0
    %v7661 = vsel %vm274, %v7436, 0
    %v7664 = vsel %vm274, %v7437, 0
    %v7667 = vsel %vm274, %v7438, 0
    %v7670 = vsel %vm274, %v7439, 0
    %v7673 = vsel %vm274, %v7440, 0
    %v7676 = vsel %vm274, %v7441, 0
    %v7679 = vsel %vm274, %v7442, 0
    %v7682 = vsel %vm274, %v7443, 0
    %v7685 = vsel %vm274, %v7444, 0
    %v7688 = vsel %vm274, %v7445, 0
    %v7691 = vsel %vm274, %v7446, 0
    %v7694 = vsel %vm274, %v7447, 0
    %v7697 = vsel %vm274, %v7448, 0
    %v7700 = vsel %vm274, %v7449, 0
    %v7703 = vsel %vm274, %v7450, 0
    %v7706 = vsel %vm274, %v7451, 0
    %v7709 = vsel %vm274, %v7452, 0
    %v7712 = vsel %vm274, %v7453, 0
    %v7715 = vsel %vm274, %v7454, 0
    %v7718 = vsel %vm274, %v7455, 0
    %v7721 = vsel %vm274, %v7456, 0
    %v7724 = vsel %vm274, %v7457, 0
    %v7727 = vsel %vm274, %v7458, 0
    %v7730 = vsel %vm274, %v7459, 0
    %v7733 = vsel %vm274, %v7460, 0
    %v7736 = vsel %vm274, %v7461, 0
    %v7739 = vsel %vm274, %v7462, 0
    %v7742 = vsel %vm274, %v7463, 0
    %v7745 = vsel %vm274, %v7464, 0
    %v7748 = vsel %vm274, %v7465, 0
    %v7751 = vsel %vm274, %v7466, 0
    %v7754 = vsel %vm274, %v7467, 0
    %v7757 = vsel %vm274, %v7468, 0
    %v7760 = vsel %vm274, %v7469, 0
    %v7763 = vsel %vm274, %v7470, 0
    %v7766 = vsel %vm274, %v7471, 0
    %v7769 = vsel %vm274, %v7472, 0
    %v7772 = vsel %vm274, %v7473, 0
    %v7775 = vsel %vm274, %v7474, 0
    %v7778 = vsel %vm274, %v7475, 0
    %v7781 = vsel %vm274, %v7476, 0
    %v7784 = vsel %vm274, %v7477, 0
    %v7787 = vsel %vm274, %v7478, 0
    %v7790 = vsel %vm274, %v7479, 0
    %v7793 = vsel %vm274, %v7480, 0
    %v7796 = vsel %vm274, %v7481, 0
    %v7799 = vsel %vm274, %v7482, 0
    %v7802 = vsel %vm274, %v7483, 0
    %v7805 = vsel %vm274, %v7484, 0
    %v7808 = vsel %vm274, %v7485, 0
    %v7811 = vsel %vm274, %v7486, 0
    %v7814 = vsel %vm518, %v7569, 0
    %7816 = vmatprep.subr.mxu0 0.0
    %7817 = vmatpush1.msra.mxu0 %v7814
    %7818 = vmatprep.subr.mxu0 0.0
    %7819 = vmatpush1.msra.mxu0 0.0
    %7820 = vmatprep.subr.mxu0 0.0
    %7821 = vmatpush1.msra.mxu0 0.0
    %7822 = vmatprep.subr.mxu0 0.0
    %7823 = vmatpush1.msra.mxu0 0.0
    %7824 = vmatprep.subr.mxu0 0.0
    %7825 = vmatpush1.msra.mxu0 0.0
    %7826 = vmatprep.subr.mxu0 0.0
    %7827 = vmatpush1.msra.mxu0 0.0
    %7828 = vmatprep.subr.mxu0 0.0
    %7829 = vmatpush1.msra.mxu0 0.0
    %7830 = vmatprep.subr.mxu0 0.0
    %7831 = vmatpush1.msra.mxu0 0.0
    %7832 = vmatprep.subr.mxu0 0.0
    %7833 = vmatpush1.msra.mxu0 0.0
    %7834 = vmatprep.subr.mxu0 0.0
    %7835 = vmatpush1.msra.mxu0 0.0
    %7836 = vmatprep.subr.mxu0 0.0
    %7837 = vmatpush1.msra.mxu0 0.0
    %7838 = vmatprep.subr.mxu0 0.0
    %7839 = vmatpush1.msra.mxu0 0.0
    %7840 = vmatprep.subr.mxu0 0.0
    %7841 = vmatpush1.msra.mxu0 0.0
    %7842 = vmatprep.subr.mxu0 0.0
    %7843 = vmatpush1.msra.mxu0 0.0
    %7844 = vmatprep.subr.mxu0 0.0
    %7845 = vmatpush1.msra.mxu0 0.0
    %7846 = vmatprep.subr.mxu0 0.0
    %7847 = vmatpush1.msra.mxu0 0.0
    %7848 = vmatprep.subr.mxu0 0.0
    %7849 = vmatpush1.msra.mxu0 0.0
    %7850 = vmatprep.subr.mxu0 0.0
    %7851 = vmatpush1.msra.mxu0 0.0
    %7852 = vmatprep.subr.mxu0 0.0
    %7853 = vmatpush1.msra.mxu0 0.0
    %7854 = vmatprep.subr.mxu0 0.0
    %7855 = vmatpush1.msra.mxu0 0.0
    %7856 = vmatprep.subr.mxu0 0.0
    %7857 = vmatpush1.msra.mxu0 0.0
    %7858 = vmatprep.subr.mxu0 0.0
    %7859 = vmatpush1.msra.mxu0 0.0
    %7860 = vmatprep.subr.mxu0 0.0
    %7861 = vmatpush1.msra.mxu0 0.0
    %7862 = vmatprep.subr.mxu0 0.0
    %7863 = vmatpush1.msra.mxu0 0.0
    %7864 = vmatprep.subr.mxu0 0.0
    %7865 = vmatpush1.msra.mxu0 0.0
    %7866 = vmatprep.subr.mxu0 0.0
    %7867 = vmatpush1.msra.mxu0 0.0
    %7868 = vmatprep.subr.mxu0 0.0
    %7869 = vmatpush1.msra.mxu0 0.0
    %7870 = vmatprep.subr.mxu0 0.0
    %7871 = vmatpush1.msra.mxu0 0.0
    %7872 = vmatprep.subr.mxu0 0.0
    %7873 = vmatpush1.msra.mxu0 0.0
    %7874 = vmatprep.subr.mxu0 0.0
    %7875 = vmatpush1.msra.mxu0 0.0
    %7876 = vmatprep.subr.mxu0 0.0
    %7877 = vmatpush1.msra.mxu0 0.0
    %7878 = vmatprep.subr.mxu0 0.0
    %7879 = vmatpush1.msra.mxu0 0.0
    %7880 = vmatprep.mubr.f32.mxu0 0.0
    %7881 = vmatmul.mubr.f32.gmra.mrb[0].mxu0 %v7571
    %v7882 = vpop.f32.mrb[0].mxu0
    %v7883 = vadd.f32 0.0, %v7882
    %v7884 = vpop.f32.mrb[0].mxu0
    %7885 = vmatprep.mubr.f32.mxu0 0.0
    %7886 = vmatmul.mubr.f32.gmra.mrb[0].mxu0 %v7574
    %v7887 = vpop.f32.mrb[0].mxu0
    %v7888 = vadd.f32 0.0, %v7887
    %v7889 = vpop.f32.mrb[0].mxu0
    %7890 = vmatprep.mubr.f32.mxu0 0.0
    %7891 = vmatmul.mubr.f32.gmra.mrb[0].mxu0 %v7577
    %v7892 = vpop.f32.mrb[0].mxu0
    %v7893 = vadd.f32 0.0, %v7892
    %v7894 = vpop.f32.mrb[0].mxu0
    %7895 = vmatprep.mubr.f32.mxu0 0.0
    %7896 = vmatmul.mubr.f32.gmra.mrb[0].mxu0 %v7580
    %v7897 = vpop.f32.mrb[0].mxu0
    %v7898 = vadd.f32 0.0, %v7897
    %v7899 = vpop.f32.mrb[0].mxu0
    %7900 = vmatprep.mubr.f32.mxu0 0.0
    %7901 = vmatmul.mubr.f32.gmra.mrb[0].mxu0 %v7583
    %v7902 = vpop.f32.mrb[0].mxu0
    %v7903 = vadd.f32 0.0, %v7902
    %v7904 = vpop.f32.mrb[0].mxu0
    %7905 = vmatprep.mubr.f32.mxu0 0.0
    %7906 = vmatmul.mubr.f32.gmra.mrb[0].mxu0 %v7586
    %v7907 = vpop.f32.mrb[0].mxu0
    %v7908 = vadd.f32 0.0, %v7907
    %v7909 = vpop.f32.mrb[0].mxu0
    %7910 = vmatprep.mubr.f32.mxu0 0.0
    %7911 = vmatmul.mubr.f32.gmra.mrb[0].mxu0 %v7589
    %v7912 = vpop.f32.mrb[0].mxu0
    %v7913 = vadd.f32 0.0, %v7912
    %v7914 = vpop.f32.mrb[0].mxu0
    %7915 = vmatprep.mubr.f32.mxu0 0.0
    %7916 = vmatmul.mubr.f32.gmra.mrb[0].mxu0 %v7592
    %v7917 = vpop.f32.mrb[0].mxu0
    %v7918 = vadd.f32 0.0, %v7917
    %v7919 = vpop.f32.mrb[0].mxu0
    %7920 = vmatprep.mubr.f32.mxu0 0.0
    %7921 = vmatmul.mubr.f32.gmra.mrb[0].mxu0 %v7595
    %v7922 = vpop.f32.mrb[0].mxu0
    %v7923 = vadd.f32 0.0, %v7922
    %v7924 = vpop.f32.mrb[0].mxu0
    %7925 = vmatprep.mubr.f32.mxu0 0.0
    %7926 = vmatmul.mubr.f32.gmra.mrb[0].mxu0 %v7598
    %v7927 = vpop.f32.mrb[0].mxu0
    %v7928 = vadd.f32 0.0, %v7927
    %v7929 = vpop.f32.mrb[0].mxu0
    %7930 = vmatprep.mubr.f32.mxu0 0.0
    %7931 = vmatmul.mubr.f32.gmra.mrb[0].mxu0 %v7601
    %v7932 = vpop.f32.mrb[0].mxu0
    %v7933 = vadd.f32 0.0, %v7932
    %v7934 = vpop.f32.mrb[0].mxu0
    %7935 = vmatprep.mubr.f32.mxu0 0.0
    %7936 = vmatmul.mubr.f32.gmra.mrb[0].mxu0 %v7604
    %v7937 = vpop.f32.mrb[0].mxu0
    %v7938 = vadd.f32 0.0, %v7937
    %v7939 = vpop.f32.mrb[0].mxu0
    %7940 = vmatprep.mubr.f32.mxu0 0.0
    %7941 = vmatmul.mubr.f32.gmra.mrb[0].mxu0 %v7607
    %v7942 = vpop.f32.mrb[0].mxu0
    %v7943 = vadd.f32 0.0, %v7942
    %v7944 = vpop.f32.mrb[0].mxu0
    %7945 = vmatprep.mubr.f32.mxu0 0.0
    %7946 = vmatmul.mubr.f32.gmra.mrb[0].mxu0 %v7610
    %v7947 = vpop.f32.mrb[0].mxu0
    %v7948 = vadd.f32 0.0, %v7947
    %v7949 = vpop.f32.mrb[0].mxu0
    %7950 = vmatprep.mubr.f32.mxu0 0.0
    %7951 = vmatmul.mubr.f32.gmra.mrb[0].mxu0 %v7613
    %v7952 = vpop.f32.mrb[0].mxu0
    %v7953 = vadd.f32 0.0, %v7952
    %v7954 = vpop.f32.mrb[0].mxu0
    %7955 = vmatprep.mubr.f32.mxu0 0.0
    %7956 = vmatmul.mubr.f32.gmra.mrb[0].mxu0 %v7616
    %v7957 = vpop.f32.mrb[0].mxu0
    %v7958 = vadd.f32 0.0, %v7957
    %v7959 = vpop.f32.mrb[0].mxu0
    %7960 = vmatprep.mubr.f32.mxu0 0.0
    %7961 = vmatmul.mubr.f32.gmra.mrb[0].mxu0 %v7619
    %v7962 = vpop.f32.mrb[0].mxu0
    %v7963 = vadd.f32 0.0, %v7962
    %v7964 = vpop.f32.mrb[0].mxu0
    %7965 = vmatprep.mubr.f32.mxu0 0.0
    %7966 = vmatmul.mubr.f32.gmra.mrb[0].mxu0 %v7622
    %v7967 = vpop.f32.mrb[0].mxu0
    %v7968 = vadd.f32 0.0, %v7967
    %v7969 = vpop.f32.mrb[0].mxu0
    %7970 = vmatprep.mubr.f32.mxu0 0.0
    %7971 = vmatmul.mubr.f32.gmra.mrb[0].mxu0 %v7625
    %v7972 = vpop.f32.mrb[0].mxu0
    %v7973 = vadd.f32 0.0, %v7972
    %v7974 = vpop.f32.mrb[0].mxu0
    %7975 = vmatprep.mubr.f32.mxu0 0.0
    %7976 = vmatmul.mubr.f32.gmra.mrb[0].mxu0 %v7628
    %v7977 = vpop.f32.mrb[0].mxu0
    %v7978 = vadd.f32 0.0, %v7977
    %v7979 = vpop.f32.mrb[0].mxu0
    %7980 = vmatprep.mubr.f32.mxu0 0.0
    %7981 = vmatmul.mubr.f32.gmra.mrb[0].mxu0 %v7631
    %v7982 = vpop.f32.mrb[0].mxu0
    %v7983 = vadd.f32 0.0, %v7982
    %v7984 = vpop.f32.mrb[0].mxu0
    %7985 = vmatprep.mubr.f32.mxu0 0.0
    %7986 = vmatmul.mubr.f32.gmra.mrb[0].mxu0 %v7634
    %v7987 = vpop.f32.mrb[0].mxu0
    %v7988 = vadd.f32 0.0, %v7987
    %v7989 = vpop.f32.mrb[0].mxu0
    %7990 = vmatprep.mubr.f32.mxu0 0.0
    %7991 = vmatmul.mubr.f32.gmra.mrb[0].mxu0 %v7637
    %v7992 = vpop.f32.mrb[0].mxu0
    %v7993 = vadd.f32 0.0, %v7992
    %v7994 = vpop.f32.mrb[0].mxu0
    %7995 = vmatprep.mubr.f32.mxu0 0.0
    %7996 = vmatmul.mubr.f32.gmra.mrb[0].mxu0 %v7640
    %v7997 = vpop.f32.mrb[0].mxu0
    %v7998 = vadd.f32 0.0, %v7997
    %v7999 = vpop.f32.mrb[0].mxu0
    %8000 = vmatprep.mubr.f32.mxu0 0.0
    %8001 = vmatmul.mubr.f32.gmra.mrb[0].mxu0 %v7643
    %v8002 = vpop.f32.mrb[0].mxu0
    %v8003 = vadd.f32 0.0, %v8002
    %v8004 = vpop.f32.mrb[0].mxu0
    %8005 = vmatprep.mubr.f32.mxu0 0.0
    %8006 = vmatmul.mubr.f32.gmra.mrb[0].mxu0 %v7646
    %v8007 = vpop.f32.mrb[0].mxu0
    %v8008 = vadd.f32 0.0, %v8007
    %v8009 = vpop.f32.mrb[0].mxu0
    %8010 = vmatprep.mubr.f32.mxu0 0.0
    %8011 = vmatmul.mubr.f32.gmra.mrb[0].mxu0 %v7649
    %v8012 = vpop.f32.mrb[0].mxu0
    %v8013 = vadd.f32 0.0, %v8012
    %v8014 = vpop.f32.mrb[0].mxu0
    %8015 = vmatprep.mubr.f32.mxu0 0.0
    %8016 = vmatmul.mubr.f32.gmra.mrb[0].mxu0 %v7652
    %v8017 = vpop.f32.mrb[0].mxu0
    %v8018 = vadd.f32 0.0, %v8017
    %v8019 = vpop.f32.mrb[0].mxu0
    %8020 = vmatprep.mubr.f32.mxu0 0.0
    %8021 = vmatmul.mubr.f32.gmra.mrb[0].mxu0 %v7655
    %v8022 = vpop.f32.mrb[0].mxu0
    %v8023 = vadd.f32 0.0, %v8022
    %v8024 = vpop.f32.mrb[0].mxu0
    %8025 = vmatprep.mubr.f32.mxu0 0.0
    %8026 = vmatmul.mubr.f32.gmra.mrb[0].mxu0 %v7658
    %v8027 = vpop.f32.mrb[0].mxu0
    %v8028 = vadd.f32 0.0, %v8027
    %v8029 = vpop.f32.mrb[0].mxu0
    %8030 = vmatprep.mubr.f32.mxu0 0.0
    %8031 = vmatmul.mubr.f32.gmra.mrb[0].mxu0 %v7661
    %v8032 = vpop.f32.mrb[0].mxu0
    %v8033 = vadd.f32 0.0, %v8032
    %v8034 = vpop.f32.mrb[0].mxu0
    %8035 = vmatprep.mubr.f32.mxu0 0.0
    %8036 = vmatmul.mubr.f32.gmra.mrb[0].mxu0 %v7664
    %v8037 = vpop.f32.mrb[0].mxu0
    %v8038 = vadd.f32 0.0, %v8037
    %v8039 = vpop.f32.mrb[0].mxu0
    %8040 = vmatprep.mubr.f32.mxu0 0.0
    %8041 = vmatmul.mubr.f32.gmra.mrb[0].mxu0 %v7667
    %v8042 = vpop.f32.mrb[0].mxu0
    %v8043 = vadd.f32 0.0, %v8042
    %v8044 = vpop.f32.mrb[0].mxu0
    %8045 = vmatprep.mubr.f32.mxu0 0.0
    %8046 = vmatmul.mubr.f32.gmra.mrb[0].mxu0 %v7670
    %v8047 = vpop.f32.mrb[0].mxu0
    %v8048 = vadd.f32 0.0, %v8047
    %v8049 = vpop.f32.mrb[0].mxu0
    %8050 = vmatprep.mubr.f32.mxu0 0.0
    %8051 = vmatmul.mubr.f32.gmra.mrb[0].mxu0 %v7673
    %v8052 = vpop.f32.mrb[0].mxu0
    %v8053 = vadd.f32 0.0, %v8052
    %v8054 = vpop.f32.mrb[0].mxu0
    %8055 = vmatprep.mubr.f32.mxu0 0.0
    %8056 = vmatmul.mubr.f32.gmra.mrb[0].mxu0 %v7676
    %v8057 = vpop.f32.mrb[0].mxu0
    %v8058 = vadd.f32 0.0, %v8057
    %v8059 = vpop.f32.mrb[0].mxu0
    %8060 = vmatprep.mubr.f32.mxu0 0.0
    %8061 = vmatmul.mubr.f32.gmra.mrb[0].mxu0 %v7679
    %v8062 = vpop.f32.mrb[0].mxu0
    %v8063 = vadd.f32 0.0, %v8062
    %v8064 = vpop.f32.mrb[0].mxu0
    %8065 = vmatprep.mubr.f32.mxu0 0.0
    %8066 = vmatmul.mubr.f32.gmra.mrb[0].mxu0 %v7682
    %v8067 = vpop.f32.mrb[0].mxu0
    %v8068 = vadd.f32 0.0, %v8067
    %v8069 = vpop.f32.mrb[0].mxu0
    %8070 = vmatprep.mubr.f32.mxu0 0.0
    %8071 = vmatmul.mubr.f32.gmra.mrb[0].mxu0 %v7685
    %v8072 = vpop.f32.mrb[0].mxu0
    %v8073 = vadd.f32 0.0, %v8072
    %v8074 = vpop.f32.mrb[0].mxu0
    %8075 = vmatprep.mubr.f32.mxu0 0.0
    %8076 = vmatmul.mubr.f32.gmra.mrb[0].mxu0 %v7688
    %v8077 = vpop.f32.mrb[0].mxu0
    %v8078 = vadd.f32 0.0, %v8077
    %v8079 = vpop.f32.mrb[0].mxu0
    %8080 = vmatprep.mubr.f32.mxu0 0.0
    %8081 = vmatmul.mubr.f32.gmra.mrb[0].mxu0 %v7691
    %v8082 = vpop.f32.mrb[0].mxu0
    %v8083 = vadd.f32 0.0, %v8082
    %v8084 = vpop.f32.mrb[0].mxu0
    %8085 = vmatprep.mubr.f32.mxu0 0.0
    %8086 = vmatmul.mubr.f32.gmra.mrb[0].mxu0 %v7694
    %v8087 = vpop.f32.mrb[0].mxu0
    %v8088 = vadd.f32 0.0, %v8087
    %v8089 = vpop.f32.mrb[0].mxu0
    %8090 = vmatprep.mubr.f32.mxu0 0.0
    %8091 = vmatmul.mubr.f32.gmra.mrb[0].mxu0 %v7697
    %v8092 = vpop.f32.mrb[0].mxu0
    %v8093 = vadd.f32 0.0, %v8092
    %v8094 = vpop.f32.mrb[0].mxu0
    %8095 = vmatprep.mubr.f32.mxu0 0.0
    %8096 = vmatmul.mubr.f32.gmra.mrb[0].mxu0 %v7700
    %v8097 = vpop.f32.mrb[0].mxu0
    %v8098 = vadd.f32 0.0, %v8097
    %v8099 = vpop.f32.mrb[0].mxu0
    %8100 = vmatprep.mubr.f32.mxu0 0.0
    %8101 = vmatmul.mubr.f32.gmra.mrb[0].mxu0 %v7703
    %v8102 = vpop.f32.mrb[0].mxu0
    %v8103 = vadd.f32 0.0, %v8102
    %v8104 = vpop.f32.mrb[0].mxu0
    %8105 = vmatprep.mubr.f32.mxu0 0.0
    %8106 = vmatmul.mubr.f32.gmra.mrb[0].mxu0 %v7706
    %v8107 = vpop.f32.mrb[0].mxu0
    %v8108 = vadd.f32 0.0, %v8107
    %v8109 = vpop.f32.mrb[0].mxu0
    %8110 = vmatprep.mubr.f32.mxu0 0.0
    %8111 = vmatmul.mubr.f32.gmra.mrb[0].mxu0 %v7709
    %v8112 = vpop.f32.mrb[0].mxu0
    %v8113 = vadd.f32 0.0, %v8112
    %v8114 = vpop.f32.mrb[0].mxu0
    %8115 = vmatprep.mubr.f32.mxu0 0.0
    %8116 = vmatmul.mubr.f32.gmra.mrb[0].mxu0 %v7712
    %v8117 = vpop.f32.mrb[0].mxu0
    %v8118 = vadd.f32 0.0, %v8117
    %v8119 = vpop.f32.mrb[0].mxu0
    %8120 = vmatprep.mubr.f32.mxu0 0.0
    %8121 = vmatmul.mubr.f32.gmra.mrb[0].mxu0 %v7715
    %v8122 = vpop.f32.mrb[0].mxu0
    %v8123 = vadd.f32 0.0, %v8122
    %v8124 = vpop.f32.mrb[0].mxu0
    %8125 = vmatprep.mubr.f32.mxu0 0.0
    %8126 = vmatmul.mubr.f32.gmra.mrb[0].mxu0 %v7718
    %v8127 = vpop.f32.mrb[0].mxu0
    %v8128 = vadd.f32 0.0, %v8127
    %v8129 = vpop.f32.mrb[0].mxu0
    %8130 = vmatprep.mubr.f32.mxu0 0.0
    %8131 = vmatmul.mubr.f32.gmra.mrb[0].mxu0 %v7721
    %v8132 = vpop.f32.mrb[0].mxu0
    %v8133 = vadd.f32 0.0, %v8132
    %v8134 = vpop.f32.mrb[0].mxu0
    %8135 = vmatprep.mubr.f32.mxu0 0.0
    %8136 = vmatmul.mubr.f32.gmra.mrb[0].mxu0 %v7724
    %v8137 = vpop.f32.mrb[0].mxu0
    %v8138 = vadd.f32 0.0, %v8137
    %v8139 = vpop.f32.mrb[0].mxu0
    %8140 = vmatprep.mubr.f32.mxu0 0.0
    %8141 = vmatmul.mubr.f32.gmra.mrb[0].mxu0 %v7727
    %v8142 = vpop.f32.mrb[0].mxu0
    %v8143 = vadd.f32 0.0, %v8142
    %v8144 = vpop.f32.mrb[0].mxu0
    %8145 = vmatprep.mubr.f32.mxu0 0.0
    %8146 = vmatmul.mubr.f32.gmra.mrb[0].mxu0 %v7730
    %v8147 = vpop.f32.mrb[0].mxu0
    %v8148 = vadd.f32 0.0, %v8147
    %v8149 = vpop.f32.mrb[0].mxu0
    %8150 = vmatprep.mubr.f32.mxu0 0.0
    %8151 = vmatmul.mubr.f32.gmra.mrb[0].mxu0 %v7733
    %v8152 = vpop.f32.mrb[0].mxu0
    %v8153 = vadd.f32 0.0, %v8152
    %v8154 = vpop.f32.mrb[0].mxu0
    %8155 = vmatprep.mubr.f32.mxu0 0.0
    %8156 = vmatmul.mubr.f32.gmra.mrb[0].mxu0 %v7736
    %v8157 = vpop.f32.mrb[0].mxu0
    %v8158 = vadd.f32 0.0, %v8157
    %v8159 = vpop.f32.mrb[0].mxu0
    %8160 = vmatprep.mubr.f32.mxu0 0.0
    %8161 = vmatmul.mubr.f32.gmra.mrb[0].mxu0 %v7739
    %v8162 = vpop.f32.mrb[0].mxu0
    %v8163 = vadd.f32 0.0, %v8162
    %v8164 = vpop.f32.mrb[0].mxu0
    %8165 = vmatprep.mubr.f32.mxu0 0.0
    %8166 = vmatmul.mubr.f32.gmra.mrb[0].mxu0 %v7742
    %v8167 = vpop.f32.mrb[0].mxu0
    %v8168 = vadd.f32 0.0, %v8167
    %v8169 = vpop.f32.mrb[0].mxu0
    %8170 = vmatprep.mubr.f32.mxu0 0.0
    %8171 = vmatmul.mubr.f32.gmra.mrb[0].mxu0 %v7745
    %v8172 = vpop.f32.mrb[0].mxu0
    %v8173 = vadd.f32 0.0, %v8172
    %v8174 = vpop.f32.mrb[0].mxu0
    %8175 = vmatprep.mubr.f32.mxu0 0.0
    %8176 = vmatmul.mubr.f32.gmra.mrb[0].mxu0 %v7748
    %v8177 = vpop.f32.mrb[0].mxu0
    %v8178 = vadd.f32 0.0, %v8177
    %v8179 = vpop.f32.mrb[0].mxu0
    %8180 = vmatprep.mubr.f32.mxu0 0.0
    %8181 = vmatmul.mubr.f32.gmra.mrb[0].mxu0 %v7751
    %v8182 = vpop.f32.mrb[0].mxu0
    %v8183 = vadd.f32 0.0, %v8182
    %v8184 = vpop.f32.mrb[0].mxu0
    %8185 = vmatprep.mubr.f32.mxu0 0.0
    %8186 = vmatmul.mubr.f32.gmra.mrb[0].mxu0 %v7754
    %v8187 = vpop.f32.mrb[0].mxu0
    %v8188 = vadd.f32 0.0, %v8187
    %v8189 = vpop.f32.mrb[0].mxu0
    %8190 = vmatprep.mubr.f32.mxu0 0.0
    %8191 = vmatmul.mubr.f32.gmra.mrb[0].mxu0 %v7757
    %v8192 = vpop.f32.mrb[0].mxu0
    %v8193 = vadd.f32 0.0, %v8192
    %v8194 = vpop.f32.mrb[0].mxu0
    %8195 = vmatprep.mubr.f32.mxu0 0.0
    %8196 = vmatmul.mubr.f32.gmra.mrb[0].mxu0 %v7760
    %v8197 = vpop.f32.mrb[0].mxu0
    %v8198 = vadd.f32 0.0, %v8197
    %v8199 = vpop.f32.mrb[0].mxu0
    %8200 = vmatprep.mubr.f32.mxu0 0.0
    %8201 = vmatmul.mubr.f32.gmra.mrb[0].mxu0 %v7763
    %v8202 = vpop.f32.mrb[0].mxu0
    %v8203 = vadd.f32 0.0, %v8202
    %v8204 = vpop.f32.mrb[0].mxu0
    %8205 = vmatprep.mubr.f32.mxu0 0.0
    %8206 = vmatmul.mubr.f32.gmra.mrb[0].mxu0 %v7766
    %v8207 = vpop.f32.mrb[0].mxu0
    %v8208 = vadd.f32 0.0, %v8207
    %v8209 = vpop.f32.mrb[0].mxu0
    %8210 = vmatprep.mubr.f32.mxu0 0.0
    %8211 = vmatmul.mubr.f32.gmra.mrb[0].mxu0 %v7769
    %v8212 = vpop.f32.mrb[0].mxu0
    %v8213 = vadd.f32 0.0, %v8212
    %v8214 = vpop.f32.mrb[0].mxu0
    %8215 = vmatprep.mubr.f32.mxu0 0.0
    %8216 = vmatmul.mubr.f32.gmra.mrb[0].mxu0 %v7772
    %v8217 = vpop.f32.mrb[0].mxu0
    %v8218 = vadd.f32 0.0, %v8217
    %v8219 = vpop.f32.mrb[0].mxu0
    %8220 = vmatprep.mubr.f32.mxu0 0.0
    %8221 = vmatmul.mubr.f32.gmra.mrb[0].mxu0 %v7775
    %v8222 = vpop.f32.mrb[0].mxu0
    %v8223 = vadd.f32 0.0, %v8222
    %v8224 = vpop.f32.mrb[0].mxu0
    %8225 = vmatprep.mubr.f32.mxu0 0.0
    %8226 = vmatmul.mubr.f32.gmra.mrb[0].mxu0 %v7778
    %v8227 = vpop.f32.mrb[0].mxu0
    %v8228 = vadd.f32 0.0, %v8227
    %v8229 = vpop.f32.mrb[0].mxu0
    %8230 = vmatprep.mubr.f32.mxu0 0.0
    %8231 = vmatmul.mubr.f32.gmra.mrb[0].mxu0 %v7781
    %v8232 = vpop.f32.mrb[0].mxu0
    %v8233 = vadd.f32 0.0, %v8232
    %v8234 = vpop.f32.mrb[0].mxu0
    %8235 = vmatprep.mubr.f32.mxu0 0.0
    %8236 = vmatmul.mubr.f32.gmra.mrb[0].mxu0 %v7784
    %v8237 = vpop.f32.mrb[0].mxu0
    %v8238 = vadd.f32 0.0, %v8237
    %v8239 = vpop.f32.mrb[0].mxu0
    %8240 = vmatprep.mubr.f32.mxu0 0.0
    %8241 = vmatmul.mubr.f32.gmra.mrb[0].mxu0 %v7787
    %v8242 = vpop.f32.mrb[0].mxu0
    %v8243 = vadd.f32 0.0, %v8242
    %v8244 = vpop.f32.mrb[0].mxu0
    %8245 = vmatprep.mubr.f32.mxu0 0.0
    %8246 = vmatmul.mubr.f32.gmra.mrb[0].mxu0 %v7790
    %v8247 = vpop.f32.mrb[0].mxu0
    %v8248 = vadd.f32 0.0, %v8247
    %v8249 = vpop.f32.mrb[0].mxu0
    %8250 = vmatprep.mubr.f32.mxu0 0.0
    %8251 = vmatmul.mubr.f32.gmra.mrb[0].mxu0 %v7793
    %v8252 = vpop.f32.mrb[0].mxu0
    %v8253 = vadd.f32 0.0, %v8252
    %v8254 = vpop.f32.mrb[0].mxu0
    %8255 = vmatprep.mubr.f32.mxu0 0.0
    %8256 = vmatmul.mubr.f32.gmra.mrb[0].mxu0 %v7796
    %v8257 = vpop.f32.mrb[0].mxu0
    %v8258 = vadd.f32 0.0, %v8257
    %v8259 = vpop.f32.mrb[0].mxu0
    %8260 = vmatprep.mubr.f32.mxu0 0.0
    %8261 = vmatmul.mubr.f32.gmra.mrb[0].mxu0 %v7799
    %v8262 = vpop.f32.mrb[0].mxu0
    %v8263 = vadd.f32 0.0, %v8262
    %v8264 = vpop.f32.mrb[0].mxu0
    %8265 = vmatprep.mubr.f32.mxu0 0.0
    %8266 = vmatmul.mubr.f32.gmra.mrb[0].mxu0 %v7802
    %v8267 = vpop.f32.mrb[0].mxu0
    %v8268 = vadd.f32 0.0, %v8267
    %v8269 = vpop.f32.mrb[0].mxu0
    %8270 = vmatprep.mubr.f32.mxu0 0.0
    %8271 = vmatmul.mubr.f32.gmra.mrb[0].mxu0 %v7805
    %v8272 = vpop.f32.mrb[0].mxu0
    %v8273 = vadd.f32 0.0, %v8272
    %v8274 = vpop.f32.mrb[0].mxu0
    %8275 = vmatprep.mubr.f32.mxu0 0.0
    %8276 = vmatmul.mubr.f32.gmra.mrb[0].mxu0 %v7808
    %v8277 = vpop.f32.mrb[0].mxu0
    %v8278 = vadd.f32 0.0, %v8277
    %v8279 = vpop.f32.mrb[0].mxu0
    %8280 = vmatprep.mubr.f32.mxu0 0.0
    %8281 = vmatmul.mubr.f32.gmra.mrb[0].mxu0 %v7811
    %v8282 = vpop.f32.mrb[0].mxu0
    %v8283 = vadd.f32 0.0, %v8282
    %v8284 = vpop.f32.mrb[0].mxu0
    %8285 = vdwg.mxu0
    %v8286 = vadd.f32 %v7487, %v7883
    %v8287 = vadd.f32 %v7488, %v7888
    %v8288 = vadd.f32 %v7489, %v7893
    %v8289 = vadd.f32 %v7490, %v7898
    %v8290 = vadd.f32 %v7491, %v7903
    %v8291 = vadd.f32 %v7492, %v7908
    %v8292 = vadd.f32 %v7493, %v7913
    %v8293 = vadd.f32 %v7494, %v7918
    %v8294 = vadd.f32 %v7495, %v7923
    %v8295 = vadd.f32 %v7496, %v7928
    %v8296 = vadd.f32 %v7497, %v7933
    %v8297 = vadd.f32 %v7498, %v7938
    %v8298 = vadd.f32 %v7499, %v7943
    %v8299 = vadd.f32 %v7500, %v7948
    %v8300 = vadd.f32 %v7501, %v7953
    %v8301 = vadd.f32 %v7502, %v7958
    %v8302 = vadd.f32 %v7503, %v7963
    %v8303 = vadd.f32 %v7504, %v7968
    %v8304 = vadd.f32 %v7505, %v7973
    %v8305 = vadd.f32 %v7506, %v7978
    %v8306 = vadd.f32 %v7507, %v7983
    %v8307 = vadd.f32 %v7508, %v7988
    %v8308 = vadd.f32 %v7509, %v7993
    %v8309 = vadd.f32 %v7510, %v7998
    %v8310 = vadd.f32 %v7511, %v8003
    %v8311 = vadd.f32 %v7512, %v8008
    %v8312 = vadd.f32 %v7513, %v8013
    %v8313 = vadd.f32 %v7514, %v8018
    %v8314 = vadd.f32 %v7515, %v8023
    %v8315 = vadd.f32 %v7516, %v8028
    %v8316 = vadd.f32 %v7517, %v8033
    %v8317 = vadd.f32 %v7518, %v8038
    %v8318 = vadd.f32 %v7519, %v8043
    %v8319 = vadd.f32 %v7520, %v8048
    %v8320 = vadd.f32 %v7521, %v8053
    %v8321 = vadd.f32 %v7522, %v8058
    %v8322 = vadd.f32 %v7523, %v8063
    %v8323 = vadd.f32 %v7524, %v8068
    %v8324 = vadd.f32 %v7525, %v8073
    %v8325 = vadd.f32 %v7526, %v8078
    %v8326 = vadd.f32 %v7527, %v8083
    %v8327 = vadd.f32 %v7528, %v8088
    %v8328 = vadd.f32 %v7529, %v8093
    %v8329 = vadd.f32 %v7530, %v8098
    %v8330 = vadd.f32 %v7531, %v8103
    %v8331 = vadd.f32 %v7532, %v8108
    %v8332 = vadd.f32 %v7533, %v8113
    %v8333 = vadd.f32 %v7534, %v8118
    %v8334 = vadd.f32 %v7535, %v8123
    %v8335 = vadd.f32 %v7536, %v8128
    %v8336 = vadd.f32 %v7537, %v8133
    %v8337 = vadd.f32 %v7538, %v8138
    %v8338 = vadd.f32 %v7539, %v8143
    %v8339 = vadd.f32 %v7540, %v8148
    %v8340 = vadd.f32 %v7541, %v8153
    %v8341 = vadd.f32 %v7542, %v8158
    %v8342 = vadd.f32 %v7543, %v8163
    %v8343 = vadd.f32 %v7544, %v8168
    %v8344 = vadd.f32 %v7545, %v8173
    %v8345 = vadd.f32 %v7546, %v8178
    %v8346 = vadd.f32 %v7547, %v8183
    %v8347 = vadd.f32 %v7548, %v8188
    %v8348 = vadd.f32 %v7549, %v8193
    %v8349 = vadd.f32 %v7550, %v8198
    %v8350 = vadd.f32 %v7551, %v8203
    %v8351 = vadd.f32 %v7552, %v8208
    %v8352 = vadd.f32 %v7553, %v8213
    %v8353 = vadd.f32 %v7554, %v8218
    %v8354 = vadd.f32 %v7555, %v8223
    %v8355 = vadd.f32 %v7556, %v8228
    %v8356 = vadd.f32 %v7557, %v8233
    %v8357 = vadd.f32 %v7558, %v8238
    %v8358 = vadd.f32 %v7559, %v8243
    %v8359 = vadd.f32 %v7560, %v8248
    %v8360 = vadd.f32 %v7561, %v8253
    %v8361 = vadd.f32 %v7562, %v8258
    %v8362 = vadd.f32 %v7563, %v8263
    %v8363 = vadd.f32 %v7564, %v8268
    %v8364 = vadd.f32 %v7565, %v8273
    %v8365 = vadd.f32 %v7566, %v8278
    %v8366 = vadd.f32 %v7567, %v8283
    %8367 = vst [vmem:[#allocation2] sm:$0xff] %v8286
    %8368 = vst [vmem:[#allocation2 + $0x8] sm:$0xff] %v8287
    %8369 = vst [vmem:[#allocation2 + $0x10] sm:$0xff] %v8288
    %8370 = vst [vmem:[#allocation2 + $0x18] sm:$0xff] %v8289
    %8371 = vst [vmem:[#allocation2 + $0x20] sm:$0xff] %v8290
    %8372 = vst [vmem:[#allocation2 + $0x28] sm:$0xff] %v8291
    %8373 = vst [vmem:[#allocation2 + $0x30] sm:$0xff] %v8292
    %8374 = vst [vmem:[#allocation2 + $0x38] sm:$0xff] %v8293
    %8375 = vst [vmem:[#allocation2 + $0x40] sm:$0xff] %v8294
    %8376 = vst [vmem:[#allocation2 + $0x48] sm:$0xff] %v8295
    %8377 = vst [vmem:[#allocation2 + $0x50] sm:$0xff] %v8296
    %8378 = vst [vmem:[#allocation2 + $0x58] sm:$0xff] %v8297
    %8379 = vst [vmem:[#allocation2 + $0x60] sm:$0xff] %v8298
    %8380 = vst [vmem:[#allocation2 + $0x68] sm:$0xff] %v8299
    %8381 = vst [vmem:[#allocation2 + $0x70] sm:$0xff] %v8300
    %8382 = vst [vmem:[#allocation2 + $0x78] sm:$0xff] %v8301
    %8383 = vst [vmem:[#allocation2 + $0x80] sm:$0xff] %v8302
    %8384 = vst [vmem:[#allocation2 + $0x88] sm:$0xff] %v8303
    %8385 = vst [vmem:[#allocation2 + $0x90] sm:$0xff] %v8304
    %8386 = vst [vmem:[#allocation2 + $0x98] sm:$0xff] %v8305
    %8387 = vst [vmem:[#allocation2 + $0xa0] sm:$0xff] %v8306
    %8388 = vst [vmem:[#allocation2 + $0xa8] sm:$0xff] %v8307
    %8389 = vst [vmem:[#allocation2 + $0xb0] sm:$0xff] %v8308
    %8390 = vst [vmem:[#allocation2 + $0xb8] sm:$0xff] %v8309
    %8391 = vst [vmem:[#allocation2 + $0xc0] sm:$0xff] %v8310
    %8392 = vst [vmem:[#allocation2 + $0xc8] sm:$0xff] %v8311
    %8393 = vst [vmem:[#allocation2 + $0xd0] sm:$0xff] %v8312
    %8394 = vst [vmem:[#allocation2 + $0xd8] sm:$0xff] %v8313
    %8395 = vst [vmem:[#allocation2 + $0xe0] sm:$0xff] %v8314
    %8396 = vst [vmem:[#allocation2 + $0xe8] sm:$0xff] %v8315
    %8397 = vst [vmem:[#allocation2 + $0xf0] sm:$0xff] %v8316
    %8398 = vst [vmem:[#allocation2 + $0xf8] sm:$0xff] %v8317
    %8399 = vst [vmem:[#allocation2 + $0x100] sm:$0xff] %v8318
    %8400 = vst [vmem:[#allocation2 + $0x108] sm:$0xff] %v8319
    %8401 = vst [vmem:[#allocation2 + $0x110] sm:$0xff] %v8320
    %8402 = vst [vmem:[#allocation2 + $0x118] sm:$0xff] %v8321
    %8403 = vst [vmem:[#allocation2 + $0x120] sm:$0xff] %v8322
    %8404 = vst [vmem:[#allocation2 + $0x128] sm:$0xff] %v8323
    %8405 = vst [vmem:[#allocation2 + $0x130] sm:$0xff] %v8324
    %8406 = vst [vmem:[#allocation2 + $0x138] sm:$0xff] %v8325
    %8407 = vst [vmem:[#allocation2 + $0x140] sm:$0xff] %v8326
    %8408 = vst [vmem:[#allocation2 + $0x148] sm:$0xff] %v8327
    %8409 = vst [vmem:[#allocation2 + $0x150] sm:$0xff] %v8328
    %8410 = vst [vmem:[#allocation2 + $0x158] sm:$0xff] %v8329
    %8411 = vst [vmem:[#allocation2 + $0x160] sm:$0xff] %v8330
    %8412 = vst [vmem:[#allocation2 + $0x168] sm:$0xff] %v8331
    %8413 = vst [vmem:[#allocation2 + $0x170] sm:$0xff] %v8332
    %8414 = vst [vmem:[#allocation2 + $0x178] sm:$0xff] %v8333
    %8415 = vst [vmem:[#allocation2 + $0x180] sm:$0xff] %v8334
    %8416 = vst [vmem:[#allocation2 + $0x188] sm:$0xff] %v8335
    %8417 = vst [vmem:[#allocation2 + $0x190] sm:$0xff] %v8336
    %8418 = vst [vmem:[#allocation2 + $0x198] sm:$0xff] %v8337
    %8419 = vst [vmem:[#allocation2 + $0x1a0] sm:$0xff] %v8338
    %8420 = vst [vmem:[#allocation2 + $0x1a8] sm:$0xff] %v8339
    %8421 = vst [vmem:[#allocation2 + $0x1b0] sm:$0xff] %v8340
    %8422 = vst [vmem:[#allocation2 + $0x1b8] sm:$0xff] %v8341
    %8423 = vst [vmem:[#allocation2 + $0x1c0] sm:$0xff] %v8342
    %8424 = vst [vmem:[#allocation2 + $0x1c8] sm:$0xff] %v8343
    %8425 = vst [vmem:[#allocation2 + $0x1d0] sm:$0xff] %v8344
    %8426 = vst [vmem:[#allocation2 + $0x1d8] sm:$0xff] %v8345
    %8427 = vst [vmem:[#allocation2 + $0x1e0] sm:$0xff] %v8346
    %8428 = vst [vmem:[#allocation2 + $0x1e8] sm:$0xff] %v8347
    %8429 = vst [vmem:[#allocation2 + $0x1f0] sm:$0xff] %v8348
    %8430 = vst [vmem:[#allocation2 + $0x1f8] sm:$0xff] %v8349
    %8431 = vst [vmem:[#allocation2 + $0x200] sm:$0xff] %v8350
    %8432 = vst [vmem:[#allocation2 + $0x208] sm:$0xff] %v8351
    %8433 = vst [vmem:[#allocation2 + $0x210] sm:$0xff] %v8352
    %8434 = vst [vmem:[#allocation2 + $0x218] sm:$0xff] %v8353
    %8435 = vst [vmem:[#allocation2 + $0x220] sm:$0xff] %v8354
    %8436 = vst [vmem:[#allocation2 + $0x228] sm:$0xff] %v8355
    %8437 = vst [vmem:[#allocation2 + $0x230] sm:$0xff] %v8356
    %8438 = vst [vmem:[#allocation2 + $0x238] sm:$0xff] %v8357
    %8439 = vst [vmem:[#allocation2 + $0x240] sm:$0xff] %v8358
    %8440 = vst [vmem:[#allocation2 + $0x248] sm:$0xff] %v8359
    %8441 = vst [vmem:[#allocation2 + $0x250] sm:$0xff] %v8360
    %8442 = vst [vmem:[#allocation2 + $0x258] sm:$0xff] %v8361
    %8443 = vst [vmem:[#allocation2 + $0x260] sm:$0xff] %v8362
    %8444 = vst [vmem:[#allocation2 + $0x268] sm:$0xff] %v8363
    %8445 = vst [vmem:[#allocation2 + $0x270] sm:$0xff] %v8364
    %8446 = vst [vmem:[#allocation2 + $0x278] sm:$0xff] %v8365
    %8447 = vst [vmem:[#allocation2 + $0x280] sm:$0xff] %v8366
    %v8448 = vld [vmem:[%s0 + $0x26] sm:$0xff]
    %v8449 = vld [vmem:[%s0 + $0x2e] sm:$0xff]
    %v8450 = vld [vmem:[%s0 + $0x36] sm:$0xff]
    %v8451 = vld [vmem:[%s0 + $0x3e] sm:$0xff]
    %v8452 = vld [vmem:[%s0 + $0x46] sm:$0xff]
    %v8453 = vld [vmem:[%s0 + $0x4e] sm:$0xff]
    %v8454 = vld [vmem:[%s0 + $0x56] sm:$0xff]
    %v8455 = vld [vmem:[%s0 + $0x5e] sm:$0xff]
    %v8456 = vld [vmem:[%s0 + $0x66] sm:$0xff]
    %v8457 = vld [vmem:[%s0 + $0x6e] sm:$0xff]
    %v8458 = vld [vmem:[%s0 + $0x76] sm:$0xff]
    %v8459 = vld [vmem:[%s0 + $0x7e] sm:$0xff]
    %v8460 = vld [vmem:[%s0 + $0x86] sm:$0xff]
    %v8461 = vld [vmem:[%s0 + $0x8e] sm:$0xff]
    %v8462 = vld [vmem:[%s0 + $0x96] sm:$0xff]
    %v8463 = vld [vmem:[%s0 + $0x9e] sm:$0xff]
    %v8464 = vld [vmem:[%s0 + $0xa6] sm:$0xff]
    %v8465 = vld [vmem:[%s0 + $0xae] sm:$0xff]
    %v8466 = vld [vmem:[%s0 + $0xb6] sm:$0xff]
    %v8467 = vld [vmem:[%s0 + $0xbe] sm:$0xff]
    %v8468 = vld [vmem:[%s0 + $0xc6] sm:$0xff]
    %v8469 = vld [vmem:[%s0 + $0xce] sm:$0xff]
    %v8470 = vld [vmem:[%s0 + $0xd6] sm:$0xff]
    %v8471 = vld [vmem:[%s0 + $0xde] sm:$0xff]
    %v8472 = vld [vmem:[%s0 + $0xe6] sm:$0xff]
    %v8473 = vld [vmem:[%s0 + $0xee] sm:$0xff]
    %v8474 = vld [vmem:[%s0 + $0xf6] sm:$0xff]
    %v8475 = vld [vmem:[%s0 + $0xfe] sm:$0xff]
    %v8476 = vld [vmem:[%s0 + $0x106] sm:$0xff]
    %v8477 = vld [vmem:[%s0 + $0x10e] sm:$0xff]
    %v8478 = vld [vmem:[%s0 + $0x116] sm:$0xff]
    %v8479 = vld [vmem:[%s0 + $0x11e] sm:$0xff]
    %v8480 = vld [vmem:[%s0 + $0x126] sm:$0xff]
    %v8481 = vld [vmem:[%s0 + $0x12e] sm:$0xff]
    %v8482 = vld [vmem:[%s0 + $0x136] sm:$0xff]
    %v8483 = vld [vmem:[%s0 + $0x13e] sm:$0xff]
    %v8484 = vld [vmem:[%s0 + $0x146] sm:$0xff]
    %v8485 = vld [vmem:[%s0 + $0x14e] sm:$0xff]
    %v8486 = vld [vmem:[%s0 + $0x156] sm:$0xff]
    %v8487 = vld [vmem:[%s0 + $0x15e] sm:$0xff]
    %v8488 = vld [vmem:[%s0 + $0x166] sm:$0xff]
    %v8489 = vld [vmem:[%s0 + $0x16e] sm:$0xff]
    %v8490 = vld [vmem:[%s0 + $0x176] sm:$0xff]
    %v8491 = vld [vmem:[%s0 + $0x17e] sm:$0xff]
    %v8492 = vld [vmem:[%s0 + $0x186] sm:$0xff]
    %v8493 = vld [vmem:[%s0 + $0x18e] sm:$0xff]
    %v8494 = vld [vmem:[%s0 + $0x196] sm:$0xff]
    %v8495 = vld [vmem:[%s0 + $0x19e] sm:$0xff]
    %v8496 = vld [vmem:[%s0 + $0x1a6] sm:$0xff]
    %v8497 = vld [vmem:[%s0 + $0x1ae] sm:$0xff]
    %v8498 = vld [vmem:[%s0 + $0x1b6] sm:$0xff]
    %v8499 = vld [vmem:[%s0 + $0x1be] sm:$0xff]
    %v8500 = vld [vmem:[%s0 + $0x1c6] sm:$0xff]
    %v8501 = vld [vmem:[%s0 + $0x1ce] sm:$0xff]
    %v8502 = vld [vmem:[%s0 + $0x1d6] sm:$0xff]
    %v8503 = vld [vmem:[%s0 + $0x1de] sm:$0xff]
    %v8504 = vld [vmem:[%s0 + $0x1e6] sm:$0xff]
    %v8505 = vld [vmem:[%s0 + $0x1ee] sm:$0xff]
    %v8506 = vld [vmem:[%s0 + $0x1f6] sm:$0xff]
    %v8507 = vld [vmem:[%s0 + $0x1fe] sm:$0xff]
    %v8508 = vld [vmem:[%s0 + $0x206] sm:$0xff]
    %v8509 = vld [vmem:[%s0 + $0x20e] sm:$0xff]
    %v8510 = vld [vmem:[%s0 + $0x216] sm:$0xff]
    %v8511 = vld [vmem:[%s0 + $0x21e] sm:$0xff]
    %v8512 = vld [vmem:[%s0 + $0x226] sm:$0xff]
    %v8513 = vld [vmem:[%s0 + $0x22e] sm:$0xff]
    %v8514 = vld [vmem:[%s0 + $0x236] sm:$0xff]
    %v8515 = vld [vmem:[%s0 + $0x23e] sm:$0xff]
    %v8516 = vld [vmem:[%s0 + $0x246] sm:$0xff]
    %v8517 = vld [vmem:[%s0 + $0x24e] sm:$0xff]
    %v8518 = vld [vmem:[%s0 + $0x256] sm:$0xff]
    %v8519 = vld [vmem:[%s0 + $0x25e] sm:$0xff]
    %v8520 = vld [vmem:[%s0 + $0x266] sm:$0xff]
    %v8521 = vld [vmem:[%s0 + $0x26e] sm:$0xff]
    %v8522 = vld [vmem:[%s0 + $0x276] sm:$0xff]
    %v8523 = vld [vmem:[%s0 + $0x27e] sm:$0xff]
    %v8524 = vld [vmem:[%s0 + $0x286] sm:$0xff]
    %v8525 = vld [vmem:[%s0 + $0x28e] sm:$0xff]
    %v8526 = vld [vmem:[%s0 + $0x296] sm:$0xff]
    %v8527 = vld [vmem:[%s0 + $0x29e] sm:$0xff]
    %v8528 = vld [vmem:[%s0 + $0x2a6] sm:$0xff]
    %v8529 = vld [vmem:[#allocation2] sm:$0xff]
    %v8530 = vld [vmem:[#allocation2 + $0x8] sm:$0xff]
    %v8531 = vld [vmem:[#allocation2 + $0x10] sm:$0xff]
    %v8532 = vld [vmem:[#allocation2 + $0x18] sm:$0xff]
    %v8533 = vld [vmem:[#allocation2 + $0x20] sm:$0xff]
    %v8534 = vld [vmem:[#allocation2 + $0x28] sm:$0xff]
    %v8535 = vld [vmem:[#allocation2 + $0x30] sm:$0xff]
    %v8536 = vld [vmem:[#allocation2 + $0x38] sm:$0xff]
    %v8537 = vld [vmem:[#allocation2 + $0x40] sm:$0xff]
    %v8538 = vld [vmem:[#allocation2 + $0x48] sm:$0xff]
    %v8539 = vld [vmem:[#allocation2 + $0x50] sm:$0xff]
    %v8540 = vld [vmem:[#allocation2 + $0x58] sm:$0xff]
    %v8541 = vld [vmem:[#allocation2 + $0x60] sm:$0xff]
    %v8542 = vld [vmem:[#allocation2 + $0x68] sm:$0xff]
    %v8543 = vld [vmem:[#allocation2 + $0x70] sm:$0xff]
    %v8544 = vld [vmem:[#allocation2 + $0x78] sm:$0xff]
    %v8545 = vld [vmem:[#allocation2 + $0x80] sm:$0xff]
    %v8546 = vld [vmem:[#allocation2 + $0x88] sm:$0xff]
    %v8547 = vld [vmem:[#allocation2 + $0x90] sm:$0xff]
    %v8548 = vld [vmem:[#allocation2 + $0x98] sm:$0xff]
    %v8549 = vld [vmem:[#allocation2 + $0xa0] sm:$0xff]
    %v8550 = vld [vmem:[#allocation2 + $0xa8] sm:$0xff]
    %v8551 = vld [vmem:[#allocation2 + $0xb0] sm:$0xff]
    %v8552 = vld [vmem:[#allocation2 + $0xb8] sm:$0xff]
    %v8553 = vld [vmem:[#allocation2 + $0xc0] sm:$0xff]
    %v8554 = vld [vmem:[#allocation2 + $0xc8] sm:$0xff]
    %v8555 = vld [vmem:[#allocation2 + $0xd0] sm:$0xff]
    %v8556 = vld [vmem:[#allocation2 + $0xd8] sm:$0xff]
    %v8557 = vld [vmem:[#allocation2 + $0xe0] sm:$0xff]
    %v8558 = vld [vmem:[#allocation2 + $0xe8] sm:$0xff]
    %v8559 = vld [vmem:[#allocation2 + $0xf0] sm:$0xff]
    %v8560 = vld [vmem:[#allocation2 + $0xf8] sm:$0xff]
    %v8561 = vld [vmem:[#allocation2 + $0x100] sm:$0xff]
    %v8562 = vld [vmem:[#allocation2 + $0x108] sm:$0xff]
    %v8563 = vld [vmem:[#allocation2 + $0x110] sm:$0xff]
    %v8564 = vld [vmem:[#allocation2 + $0x118] sm:$0xff]
    %v8565 = vld [vmem:[#allocation2 + $0x120] sm:$0xff]
    %v8566 = vld [vmem:[#allocation2 + $0x128] sm:$0xff]
    %v8567 = vld [vmem:[#allocation2 + $0x130] sm:$0xff]
    %v8568 = vld [vmem:[#allocation2 + $0x138] sm:$0xff]
    %v8569 = vld [vmem:[#allocation2 + $0x140] sm:$0xff]
    %v8570 = vld [vmem:[#allocation2 + $0x148] sm:$0xff]
    %v8571 = vld [vmem:[#allocation2 + $0x150] sm:$0xff]
    %v8572 = vld [vmem:[#allocation2 + $0x158] sm:$0xff]
    %v8573 = vld [vmem:[#allocation2 + $0x160] sm:$0xff]
    %v8574 = vld [vmem:[#allocation2 + $0x168] sm:$0xff]
    %v8575 = vld [vmem:[#allocation2 + $0x170] sm:$0xff]
    %v8576 = vld [vmem:[#allocation2 + $0x178] sm:$0xff]
    %v8577 = vld [vmem:[#allocation2 + $0x180] sm:$0xff]
    %v8578 = vld [vmem:[#allocation2 + $0x188] sm:$0xff]
    %v8579 = vld [vmem:[#allocation2 + $0x190] sm:$0xff]
    %v8580 = vld [vmem:[#allocation2 + $0x198] sm:$0xff]
    %v8581 = vld [vmem:[#allocation2 + $0x1a0] sm:$0xff]
    %v8582 = vld [vmem:[#allocation2 + $0x1a8] sm:$0xff]
    %v8583 = vld [vmem:[#allocation2 + $0x1b0] sm:$0xff]
    %v8584 = vld [vmem:[#allocation2 + $0x1b8] sm:$0xff]
    %v8585 = vld [vmem:[#allocation2 + $0x1c0] sm:$0xff]
    %v8586 = vld [vmem:[#allocation2 + $0x1c8] sm:$0xff]
    %v8587 = vld [vmem:[#allocation2 + $0x1d0] sm:$0xff]
    %v8588 = vld [vmem:[#allocation2 + $0x1d8] sm:$0xff]
    %v8589 = vld [vmem:[#allocation2 + $0x1e0] sm:$0xff]
    %v8590 = vld [vmem:[#allocation2 + $0x1e8] sm:$0xff]
    %v8591 = vld [vmem:[#allocation2 + $0x1f0] sm:$0xff]
    %v8592 = vld [vmem:[#allocation2 + $0x1f8] sm:$0xff]
    %v8593 = vld [vmem:[#allocation2 + $0x200] sm:$0xff]
    %v8594 = vld [vmem:[#allocation2 + $0x208] sm:$0xff]
    %v8595 = vld [vmem:[#allocation2 + $0x210] sm:$0xff]
    %v8596 = vld [vmem:[#allocation2 + $0x218] sm:$0xff]
    %v8597 = vld [vmem:[#allocation2 + $0x220] sm:$0xff]
    %v8598 = vld [vmem:[#allocation2 + $0x228] sm:$0xff]
    %v8599 = vld [vmem:[#allocation2 + $0x230] sm:$0xff]
    %v8600 = vld [vmem:[#allocation2 + $0x238] sm:$0xff]
    %v8601 = vld [vmem:[#allocation2 + $0x240] sm:$0xff]
    %v8602 = vld [vmem:[#allocation2 + $0x248] sm:$0xff]
    %v8603 = vld [vmem:[#allocation2 + $0x250] sm:$0xff]
    %v8604 = vld [vmem:[#allocation2 + $0x258] sm:$0xff]
    %v8605 = vld [vmem:[#allocation2 + $0x260] sm:$0xff]
    %v8606 = vld [vmem:[#allocation2 + $0x268] sm:$0xff]
    %v8607 = vld [vmem:[#allocation2 + $0x270] sm:$0xff]
    %v8608 = vld [vmem:[#allocation2 + $0x278] sm:$0xff]
    %v8609 = vld [vmem:[#allocation2 + $0x280] sm:$0xff]
    %s8610 = scalar_lea.vmem %s1, 32
    %v8611 = vld [vmem:[%s8610] sm:$0xf]
    %v8613 = vsel %vm274, %v8448, 0
    %v8616 = vsel %vm274, %v8449, 0
    %v8619 = vsel %vm274, %v8450, 0
    %v8622 = vsel %vm274, %v8451, 0
    %v8625 = vsel %vm274, %v8452, 0
    %v8628 = vsel %vm274, %v8453, 0
    %v8631 = vsel %vm274, %v8454, 0
    %v8634 = vsel %vm274, %v8455, 0
    %v8637 = vsel %vm274, %v8456, 0
    %v8640 = vsel %vm274, %v8457, 0
    %v8643 = vsel %vm274, %v8458, 0
    %v8646 = vsel %vm274, %v8459, 0
    %v8649 = vsel %vm274, %v8460, 0
    %v8652 = vsel %vm274, %v8461, 0
    %v8655 = vsel %vm274, %v8462, 0
    %v8658 = vsel %vm274, %v8463, 0
    %v8661 = vsel %vm274, %v8464, 0
    %v8664 = vsel %vm274, %v8465, 0
    %v8667 = vsel %vm274, %v8466, 0
    %v8670 = vsel %vm274, %v8467, 0
    %v8673 = vsel %vm274, %v8468, 0
    %v8676 = vsel %vm274, %v8469, 0
    %v8679 = vsel %vm274, %v8470, 0
    %v8682 = vsel %vm274, %v8471, 0
    %v8685 = vsel %vm274, %v8472, 0
    %v8688 = vsel %vm274, %v8473, 0
    %v8691 = vsel %vm274, %v8474, 0
    %v8694 = vsel %vm274, %v8475, 0
    %v8697 = vsel %vm274, %v8476, 0
    %v8700 = vsel %vm274, %v8477, 0
    %v8703 = vsel %vm274, %v8478, 0
    %v8706 = vsel %vm274, %v8479, 0
    %v8709 = vsel %vm274, %v8480, 0
    %v8712 = vsel %vm274, %v8481, 0
    %v8715 = vsel %vm274, %v8482, 0
    %v8718 = vsel %vm274, %v8483, 0
    %v8721 = vsel %vm274, %v8484, 0
    %v8724 = vsel %vm274, %v8485, 0
    %v8727 = vsel %vm274, %v8486, 0
    %v8730 = vsel %vm274, %v8487, 0
    %v8733 = vsel %vm274, %v8488, 0
    %v8736 = vsel %vm274, %v8489, 0
    %v8739 = vsel %vm274, %v8490, 0
    %v8742 = vsel %vm274, %v8491, 0
    %v8745 = vsel %vm274, %v8492, 0
    %v8748 = vsel %vm274, %v8493, 0
    %v8751 = vsel %vm274, %v8494, 0
    %v8754 = vsel %vm274, %v8495, 0
    %v8757 = vsel %vm274, %v8496, 0
    %v8760 = vsel %vm274, %v8497, 0
    %v8763 = vsel %vm274, %v8498, 0
    %v8766 = vsel %vm274, %v8499, 0
    %v8769 = vsel %vm274, %v8500, 0
    %v8772 = vsel %vm274, %v8501, 0
    %v8775 = vsel %vm274, %v8502, 0
    %v8778 = vsel %vm274, %v8503, 0
    %v8781 = vsel %vm274, %v8504, 0
    %v8784 = vsel %vm274, %v8505, 0
    %v8787 = vsel %vm274, %v8506, 0
    %v8790 = vsel %vm274, %v8507, 0
    %v8793 = vsel %vm274, %v8508, 0
    %v8796 = vsel %vm274, %v8509, 0
    %v8799 = vsel %vm274, %v8510, 0
    %v8802 = vsel %vm274, %v8511, 0
    %v8805 = vsel %vm274, %v8512, 0
    %v8808 = vsel %vm274, %v8513, 0
    %v8811 = vsel %vm274, %v8514, 0
    %v8814 = vsel %vm274, %v8515, 0
    %v8817 = vsel %vm274, %v8516, 0
    %v8820 = vsel %vm274, %v8517, 0
    %v8823 = vsel %vm274, %v8518, 0
    %v8826 = vsel %vm274, %v8519, 0
    %v8829 = vsel %vm274, %v8520, 0
    %v8832 = vsel %vm274, %v8521, 0
    %v8835 = vsel %vm274, %v8522, 0
    %v8838 = vsel %vm274, %v8523, 0
    %v8841 = vsel %vm274, %v8524, 0
    %v8844 = vsel %vm274, %v8525, 0
    %v8847 = vsel %vm274, %v8526, 0
    %v8850 = vsel %vm274, %v8527, 0
    %v8853 = vsel %vm274, %v8528, 0
    %v8856 = vsel %vm518, %v8611, 0
    %8858 = vmatprep.subr.mxu0 0.0
    %8859 = vmatpush1.msra.mxu0 %v8856
    %8860 = vmatprep.subr.mxu0 0.0
    %8861 = vmatpush1.msra.mxu0 0.0
    %8862 = vmatprep.subr.mxu0 0.0
    %8863 = vmatpush1.msra.mxu0 0.0
    %8864 = vmatprep.subr.mxu0 0.0
    %8865 = vmatpush1.msra.mxu0 0.0
    %8866 = vmatprep.subr.mxu0 0.0
    %8867 = vmatpush1.msra.mxu0 0.0
    %8868 = vmatprep.subr.mxu0 0.0
    %8869 = vmatpush1.msra.mxu0 0.0
    %8870 = vmatprep.subr.mxu0 0.0
    %8871 = vmatpush1.msra.mxu0 0.0
    %8872 = vmatprep.subr.mxu0 0.0
    %8873 = vmatpush1.msra.mxu0 0.0
    %8874 = vmatprep.subr.mxu0 0.0
    %8875 = vmatpush1.msra.mxu0 0.0
    %8876 = vmatprep.subr.mxu0 0.0
    %8877 = vmatpush1.msra.mxu0 0.0
    %8878 = vmatprep.subr.mxu0 0.0
    %8879 = vmatpush1.msra.mxu0 0.0
    %8880 = vmatprep.subr.mxu0 0.0
    %8881 = vmatpush1.msra.mxu0 0.0
    %8882 = vmatprep.subr.mxu0 0.0
    %8883 = vmatpush1.msra.mxu0 0.0
    %8884 = vmatprep.subr.mxu0 0.0
    %8885 = vmatpush1.msra.mxu0 0.0
    %8886 = vmatprep.subr.mxu0 0.0
    %8887 = vmatpush1.msra.mxu0 0.0
    %8888 = vmatprep.subr.mxu0 0.0
    %8889 = vmatpush1.msra.mxu0 0.0
    %8890 = vmatprep.subr.mxu0 0.0
    %8891 = vmatpush1.msra.mxu0 0.0
    %8892 = vmatprep.subr.mxu0 0.0
    %8893 = vmatpush1.msra.mxu0 0.0
    %8894 = vmatprep.subr.mxu0 0.0
    %8895 = vmatpush1.msra.mxu0 0.0
    %8896 = vmatprep.subr.mxu0 0.0
    %8897 = vmatpush1.msra.mxu0 0.0
    %8898 = vmatprep.subr.mxu0 0.0
    %8899 = vmatpush1.msra.mxu0 0.0
    %8900 = vmatprep.subr.mxu0 0.0
    %8901 = vmatpush1.msra.mxu0 0.0
    %8902 = vmatprep.subr.mxu0 0.0
    %8903 = vmatpush1.msra.mxu0 0.0
    %8904 = vmatprep.subr.mxu0 0.0
    %8905 = vmatpush1.msra.mxu0 0.0
    %8906 = vmatprep.subr.mxu0 0.0
    %8907 = vmatpush1.msra.mxu0 0.0
    %8908 = vmatprep.subr.mxu0 0.0
    %8909 = vmatpush1.msra.mxu0 0.0
    %8910 = vmatprep.subr.mxu0 0.0
    %8911 = vmatpush1.msra.mxu0 0.0
    %8912 = vmatprep.subr.mxu0 0.0
    %8913 = vmatpush1.msra.mxu0 0.0
    %8914 = vmatprep.subr.mxu0 0.0
    %8915 = vmatpush1.msra.mxu0 0.0
    %8916 = vmatprep.subr.mxu0 0.0
    %8917 = vmatpush1.msra.mxu0 0.0
    %8918 = vmatprep.subr.mxu0 0.0
    %8919 = vmatpush1.msra.mxu0 0.0
    %8920 = vmatprep.subr.mxu0 0.0
    %8921 = vmatpush1.msra.mxu0 0.0
    %8922 = vmatprep.mubr.f32.mxu0 0.0
    %8923 = vmatmul.mubr.f32.gmra.mrb[0].mxu0 %v8613
    %v8924 = vpop.f32.mrb[0].mxu0
    %v8925 = vadd.f32 0.0, %v8924
    %v8926 = vpop.f32.mrb[0].mxu0
    %8927 = vmatprep.mubr.f32.mxu0 0.0
    %8928 = vmatmul.mubr.f32.gmra.mrb[0].mxu0 %v8616
    %v8929 = vpop.f32.mrb[0].mxu0
    %v8930 = vadd.f32 0.0, %v8929
    %v8931 = vpop.f32.mrb[0].mxu0
    %8932 = vmatprep.mubr.f32.mxu0 0.0
    %8933 = vmatmul.mubr.f32.gmra.mrb[0].mxu0 %v8619
    %v8934 = vpop.f32.mrb[0].mxu0
    %v8935 = vadd.f32 0.0, %v8934
    %v8936 = vpop.f32.mrb[0].mxu0
    %8937 = vmatprep.mubr.f32.mxu0 0.0
    %8938 = vmatmul.mubr.f32.gmra.mrb[0].mxu0 %v8622
    %v8939 = vpop.f32.mrb[0].mxu0
    %v8940 = vadd.f32 0.0, %v8939
    %v8941 = vpop.f32.mrb[0].mxu0
    %8942 = vmatprep.mubr.f32.mxu0 0.0
    %8943 = vmatmul.mubr.f32.gmra.mrb[0].mxu0 %v8625
    %v8944 = vpop.f32.mrb[0].mxu0
    %v8945 = vadd.f32 0.0, %v8944
    %v8946 = vpop.f32.mrb[0].mxu0
    %8947 = vmatprep.mubr.f32.mxu0 0.0
    %8948 = vmatmul.mubr.f32.gmra.mrb[0].mxu0 %v8628
    %v8949 = vpop.f32.mrb[0].mxu0
    %v8950 = vadd.f32 0.0, %v8949
    %v8951 = vpop.f32.mrb[0].mxu0
    %8952 = vmatprep.mubr.f32.mxu0 0.0
    %8953 = vmatmul.mubr.f32.gmra.mrb[0].mxu0 %v8631
    %v8954 = vpop.f32.mrb[0].mxu0
    %v8955 = vadd.f32 0.0, %v8954
    %v8956 = vpop.f32.mrb[0].mxu0
    %8957 = vmatprep.mubr.f32.mxu0 0.0
    %8958 = vmatmul.mubr.f32.gmra.mrb[0].mxu0 %v8634
    %v8959 = vpop.f32.mrb[0].mxu0
    %v8960 = vadd.f32 0.0, %v8959
    %v8961 = vpop.f32.mrb[0].mxu0
    %8962 = vmatprep.mubr.f32.mxu0 0.0
    %8963 = vmatmul.mubr.f32.gmra.mrb[0].mxu0 %v8637
    %v8964 = vpop.f32.mrb[0].mxu0
    %v8965 = vadd.f32 0.0, %v8964
    %v8966 = vpop.f32.mrb[0].mxu0
    %8967 = vmatprep.mubr.f32.mxu0 0.0
    %8968 = vmatmul.mubr.f32.gmra.mrb[0].mxu0 %v8640
    %v8969 = vpop.f32.mrb[0].mxu0
    %v8970 = vadd.f32 0.0, %v8969
    %v8971 = vpop.f32.mrb[0].mxu0
    %8972 = vmatprep.mubr.f32.mxu0 0.0
    %8973 = vmatmul.mubr.f32.gmra.mrb[0].mxu0 %v8643
    %v8974 = vpop.f32.mrb[0].mxu0
    %v8975 = vadd.f32 0.0, %v8974
    %v8976 = vpop.f32.mrb[0].mxu0
    %8977 = vmatprep.mubr.f32.mxu0 0.0
    %8978 = vmatmul.mubr.f32.gmra.mrb[0].mxu0 %v8646
    %v8979 = vpop.f32.mrb[0].mxu0
    %v8980 = vadd.f32 0.0, %v8979
    %v8981 = vpop.f32.mrb[0].mxu0
    %8982 = vmatprep.mubr.f32.mxu0 0.0
    %8983 = vmatmul.mubr.f32.gmra.mrb[0].mxu0 %v8649
    %v8984 = vpop.f32.mrb[0].mxu0
    %v8985 = vadd.f32 0.0, %v8984
    %v8986 = vpop.f32.mrb[0].mxu0
    %8987 = vmatprep.mubr.f32.mxu0 0.0
    %8988 = vmatmul.mubr.f32.gmra.mrb[0].mxu0 %v8652
    %v8989 = vpop.f32.mrb[0].mxu0
    %v8990 = vadd.f32 0.0, %v8989
    %v8991 = vpop.f32.mrb[0].mxu0
    %8992 = vmatprep.mubr.f32.mxu0 0.0
    %8993 = vmatmul.mubr.f32.gmra.mrb[0].mxu0 %v8655
    %v8994 = vpop.f32.mrb[0].mxu0
    %v8995 = vadd.f32 0.0, %v8994
    %v8996 = vpop.f32.mrb[0].mxu0
    %8997 = vmatprep.mubr.f32.mxu0 0.0
    %8998 = vmatmul.mubr.f32.gmra.mrb[0].mxu0 %v8658
    %v8999 = vpop.f32.mrb[0].mxu0
    %v9000 = vadd.f32 0.0, %v8999
    %v9001 = vpop.f32.mrb[0].mxu0
    %9002 = vmatprep.mubr.f32.mxu0 0.0
    %9003 = vmatmul.mubr.f32.gmra.mrb[0].mxu0 %v8661
    %v9004 = vpop.f32.mrb[0].mxu0
    %v9005 = vadd.f32 0.0, %v9004
    %v9006 = vpop.f32.mrb[0].mxu0
    %9007 = vmatprep.mubr.f32.mxu0 0.0
    %9008 = vmatmul.mubr.f32.gmra.mrb[0].mxu0 %v8664
    %v9009 = vpop.f32.mrb[0].mxu0
    %v9010 = vadd.f32 0.0, %v9009
    %v9011 = vpop.f32.mrb[0].mxu0
    %9012 = vmatprep.mubr.f32.mxu0 0.0
    %9013 = vmatmul.mubr.f32.gmra.mrb[0].mxu0 %v8667
    %v9014 = vpop.f32.mrb[0].mxu0
    %v9015 = vadd.f32 0.0, %v9014
    %v9016 = vpop.f32.mrb[0].mxu0
    %9017 = vmatprep.mubr.f32.mxu0 0.0
    %9018 = vmatmul.mubr.f32.gmra.mrb[0].mxu0 %v8670
    %v9019 = vpop.f32.mrb[0].mxu0
    %v9020 = vadd.f32 0.0, %v9019
    %v9021 = vpop.f32.mrb[0].mxu0
    %9022 = vmatprep.mubr.f32.mxu0 0.0
    %9023 = vmatmul.mubr.f32.gmra.mrb[0].mxu0 %v8673
    %v9024 = vpop.f32.mrb[0].mxu0
    %v9025 = vadd.f32 0.0, %v9024
    %v9026 = vpop.f32.mrb[0].mxu0
    %9027 = vmatprep.mubr.f32.mxu0 0.0
    %9028 = vmatmul.mubr.f32.gmra.mrb[0].mxu0 %v8676
    %v9029 = vpop.f32.mrb[0].mxu0
    %v9030 = vadd.f32 0.0, %v9029
    %v9031 = vpop.f32.mrb[0].mxu0
    %9032 = vmatprep.mubr.f32.mxu0 0.0
    %9033 = vmatmul.mubr.f32.gmra.mrb[0].mxu0 %v8679
    %v9034 = vpop.f32.mrb[0].mxu0
    %v9035 = vadd.f32 0.0, %v9034
    %v9036 = vpop.f32.mrb[0].mxu0
    %9037 = vmatprep.mubr.f32.mxu0 0.0
    %9038 = vmatmul.mubr.f32.gmra.mrb[0].mxu0 %v8682
    %v9039 = vpop.f32.mrb[0].mxu0
    %v9040 = vadd.f32 0.0, %v9039
    %v9041 = vpop.f32.mrb[0].mxu0
    %9042 = vmatprep.mubr.f32.mxu0 0.0
    %9043 = vmatmul.mubr.f32.gmra.mrb[0].mxu0 %v8685
    %v9044 = vpop.f32.mrb[0].mxu0
    %v9045 = vadd.f32 0.0, %v9044
    %v9046 = vpop.f32.mrb[0].mxu0
    %9047 = vmatprep.mubr.f32.mxu0 0.0
    %9048 = vmatmul.mubr.f32.gmra.mrb[0].mxu0 %v8688
    %v9049 = vpop.f32.mrb[0].mxu0
    %v9050 = vadd.f32 0.0, %v9049
    %v9051 = vpop.f32.mrb[0].mxu0
    %9052 = vmatprep.mubr.f32.mxu0 0.0
    %9053 = vmatmul.mubr.f32.gmra.mrb[0].mxu0 %v8691
    %v9054 = vpop.f32.mrb[0].mxu0
    %v9055 = vadd.f32 0.0, %v9054
    %v9056 = vpop.f32.mrb[0].mxu0
    %9057 = vmatprep.mubr.f32.mxu0 0.0
    %9058 = vmatmul.mubr.f32.gmra.mrb[0].mxu0 %v8694
    %v9059 = vpop.f32.mrb[0].mxu0
    %v9060 = vadd.f32 0.0, %v9059
    %v9061 = vpop.f32.mrb[0].mxu0
    %9062 = vmatprep.mubr.f32.mxu0 0.0
    %9063 = vmatmul.mubr.f32.gmra.mrb[0].mxu0 %v8697
    %v9064 = vpop.f32.mrb[0].mxu0
    %v9065 = vadd.f32 0.0, %v9064
    %v9066 = vpop.f32.mrb[0].mxu0
    %9067 = vmatprep.mubr.f32.mxu0 0.0
    %9068 = vmatmul.mubr.f32.gmra.mrb[0].mxu0 %v8700
    %v9069 = vpop.f32.mrb[0].mxu0
    %v9070 = vadd.f32 0.0, %v9069
    %v9071 = vpop.f32.mrb[0].mxu0
    %9072 = vmatprep.mubr.f32.mxu0 0.0
    %9073 = vmatmul.mubr.f32.gmra.mrb[0].mxu0 %v8703
    %v9074 = vpop.f32.mrb[0].mxu0
    %v9075 = vadd.f32 0.0, %v9074
    %v9076 = vpop.f32.mrb[0].mxu0
    %9077 = vmatprep.mubr.f32.mxu0 0.0
    %9078 = vmatmul.mubr.f32.gmra.mrb[0].mxu0 %v8706
    %v9079 = vpop.f32.mrb[0].mxu0
    %v9080 = vadd.f32 0.0, %v9079
    %v9081 = vpop.f32.mrb[0].mxu0
    %9082 = vmatprep.mubr.f32.mxu0 0.0
    %9083 = vmatmul.mubr.f32.gmra.mrb[0].mxu0 %v8709
    %v9084 = vpop.f32.mrb[0].mxu0
    %v9085 = vadd.f32 0.0, %v9084
    %v9086 = vpop.f32.mrb[0].mxu0
    %9087 = vmatprep.mubr.f32.mxu0 0.0
    %9088 = vmatmul.mubr.f32.gmra.mrb[0].mxu0 %v8712
    %v9089 = vpop.f32.mrb[0].mxu0
    %v9090 = vadd.f32 0.0, %v9089
    %v9091 = vpop.f32.mrb[0].mxu0
    %9092 = vmatprep.mubr.f32.mxu0 0.0
    %9093 = vmatmul.mubr.f32.gmra.mrb[0].mxu0 %v8715
    %v9094 = vpop.f32.mrb[0].mxu0
    %v9095 = vadd.f32 0.0, %v9094
    %v9096 = vpop.f32.mrb[0].mxu0
    %9097 = vmatprep.mubr.f32.mxu0 0.0
    %9098 = vmatmul.mubr.f32.gmra.mrb[0].mxu0 %v8718
    %v9099 = vpop.f32.mrb[0].mxu0
    %v9100 = vadd.f32 0.0, %v9099
    %v9101 = vpop.f32.mrb[0].mxu0
    %9102 = vmatprep.mubr.f32.mxu0 0.0
    %9103 = vmatmul.mubr.f32.gmra.mrb[0].mxu0 %v8721
    %v9104 = vpop.f32.mrb[0].mxu0
    %v9105 = vadd.f32 0.0, %v9104
    %v9106 = vpop.f32.mrb[0].mxu0
    %9107 = vmatprep.mubr.f32.mxu0 0.0
    %9108 = vmatmul.mubr.f32.gmra.mrb[0].mxu0 %v8724
    %v9109 = vpop.f32.mrb[0].mxu0
    %v9110 = vadd.f32 0.0, %v9109
    %v9111 = vpop.f32.mrb[0].mxu0
    %9112 = vmatprep.mubr.f32.mxu0 0.0
    %9113 = vmatmul.mubr.f32.gmra.mrb[0].mxu0 %v8727
    %v9114 = vpop.f32.mrb[0].mxu0
    %v9115 = vadd.f32 0.0, %v9114
    %v9116 = vpop.f32.mrb[0].mxu0
    %9117 = vmatprep.mubr.f32.mxu0 0.0
    %9118 = vmatmul.mubr.f32.gmra.mrb[0].mxu0 %v8730
    %v9119 = vpop.f32.mrb[0].mxu0
    %v9120 = vadd.f32 0.0, %v9119
    %v9121 = vpop.f32.mrb[0].mxu0
    %9122 = vmatprep.mubr.f32.mxu0 0.0
    %9123 = vmatmul.mubr.f32.gmra.mrb[0].mxu0 %v8733
    %v9124 = vpop.f32.mrb[0].mxu0
    %v9125 = vadd.f32 0.0, %v9124
    %v9126 = vpop.f32.mrb[0].mxu0
    %9127 = vmatprep.mubr.f32.mxu0 0.0
    %9128 = vmatmul.mubr.f32.gmra.mrb[0].mxu0 %v8736
    %v9129 = vpop.f32.mrb[0].mxu0
    %v9130 = vadd.f32 0.0, %v9129
    %v9131 = vpop.f32.mrb[0].mxu0
    %9132 = vmatprep.mubr.f32.mxu0 0.0
    %9133 = vmatmul.mubr.f32.gmra.mrb[0].mxu0 %v8739
    %v9134 = vpop.f32.mrb[0].mxu0
    %v9135 = vadd.f32 0.0, %v9134
    %v9136 = vpop.f32.mrb[0].mxu0
    %9137 = vmatprep.mubr.f32.mxu0 0.0
    %9138 = vmatmul.mubr.f32.gmra.mrb[0].mxu0 %v8742
    %v9139 = vpop.f32.mrb[0].mxu0
    %v9140 = vadd.f32 0.0, %v9139
    %v9141 = vpop.f32.mrb[0].mxu0
    %9142 = vmatprep.mubr.f32.mxu0 0.0
    %9143 = vmatmul.mubr.f32.gmra.mrb[0].mxu0 %v8745
    %v9144 = vpop.f32.mrb[0].mxu0
    %v9145 = vadd.f32 0.0, %v9144
    %v9146 = vpop.f32.mrb[0].mxu0
    %9147 = vmatprep.mubr.f32.mxu0 0.0
    %9148 = vmatmul.mubr.f32.gmra.mrb[0].mxu0 %v8748
    %v9149 = vpop.f32.mrb[0].mxu0
    %v9150 = vadd.f32 0.0, %v9149
    %v9151 = vpop.f32.mrb[0].mxu0
    %9152 = vmatprep.mubr.f32.mxu0 0.0
    %9153 = vmatmul.mubr.f32.gmra.mrb[0].mxu0 %v8751
    %v9154 = vpop.f32.mrb[0].mxu0
    %v9155 = vadd.f32 0.0, %v9154
    %v9156 = vpop.f32.mrb[0].mxu0
    %9157 = vmatprep.mubr.f32.mxu0 0.0
    %9158 = vmatmul.mubr.f32.gmra.mrb[0].mxu0 %v8754
    %v9159 = vpop.f32.mrb[0].mxu0
    %v9160 = vadd.f32 0.0, %v9159
    %v9161 = vpop.f32.mrb[0].mxu0
    %9162 = vmatprep.mubr.f32.mxu0 0.0
    %9163 = vmatmul.mubr.f32.gmra.mrb[0].mxu0 %v8757
    %v9164 = vpop.f32.mrb[0].mxu0
    %v9165 = vadd.f32 0.0, %v9164
    %v9166 = vpop.f32.mrb[0].mxu0
    %9167 = vmatprep.mubr.f32.mxu0 0.0
    %9168 = vmatmul.mubr.f32.gmra.mrb[0].mxu0 %v8760
    %v9169 = vpop.f32.mrb[0].mxu0
    %v9170 = vadd.f32 0.0, %v9169
    %v9171 = vpop.f32.mrb[0].mxu0
    %9172 = vmatprep.mubr.f32.mxu0 0.0
    %9173 = vmatmul.mubr.f32.gmra.mrb[0].mxu0 %v8763
    %v9174 = vpop.f32.mrb[0].mxu0
    %v9175 = vadd.f32 0.0, %v9174
    %v9176 = vpop.f32.mrb[0].mxu0
    %9177 = vmatprep.mubr.f32.mxu0 0.0
    %9178 = vmatmul.mubr.f32.gmra.mrb[0].mxu0 %v8766
    %v9179 = vpop.f32.mrb[0].mxu0
    %v9180 = vadd.f32 0.0, %v9179
    %v9181 = vpop.f32.mrb[0].mxu0
    %9182 = vmatprep.mubr.f32.mxu0 0.0
    %9183 = vmatmul.mubr.f32.gmra.mrb[0].mxu0 %v8769
    %v9184 = vpop.f32.mrb[0].mxu0
    %v9185 = vadd.f32 0.0, %v9184
    %v9186 = vpop.f32.mrb[0].mxu0
    %9187 = vmatprep.mubr.f32.mxu0 0.0
    %9188 = vmatmul.mubr.f32.gmra.mrb[0].mxu0 %v8772
    %v9189 = vpop.f32.mrb[0].mxu0
    %v9190 = vadd.f32 0.0, %v9189
    %v9191 = vpop.f32.mrb[0].mxu0
    %9192 = vmatprep.mubr.f32.mxu0 0.0
    %9193 = vmatmul.mubr.f32.gmra.mrb[0].mxu0 %v8775
    %v9194 = vpop.f32.mrb[0].mxu0
    %v9195 = vadd.f32 0.0, %v9194
    %v9196 = vpop.f32.mrb[0].mxu0
    %9197 = vmatprep.mubr.f32.mxu0 0.0
    %9198 = vmatmul.mubr.f32.gmra.mrb[0].mxu0 %v8778
    %v9199 = vpop.f32.mrb[0].mxu0
    %v9200 = vadd.f32 0.0, %v9199
    %v9201 = vpop.f32.mrb[0].mxu0
    %9202 = vmatprep.mubr.f32.mxu0 0.0
    %9203 = vmatmul.mubr.f32.gmra.mrb[0].mxu0 %v8781
    %v9204 = vpop.f32.mrb[0].mxu0
    %v9205 = vadd.f32 0.0, %v9204
    %v9206 = vpop.f32.mrb[0].mxu0
    %9207 = vmatprep.mubr.f32.mxu0 0.0
    %9208 = vmatmul.mubr.f32.gmra.mrb[0].mxu0 %v8784
    %v9209 = vpop.f32.mrb[0].mxu0
    %v9210 = vadd.f32 0.0, %v9209
    %v9211 = vpop.f32.mrb[0].mxu0
    %9212 = vmatprep.mubr.f32.mxu0 0.0
    %9213 = vmatmul.mubr.f32.gmra.mrb[0].mxu0 %v8787
    %v9214 = vpop.f32.mrb[0].mxu0
    %v9215 = vadd.f32 0.0, %v9214
    %v9216 = vpop.f32.mrb[0].mxu0
    %9217 = vmatprep.mubr.f32.mxu0 0.0
    %9218 = vmatmul.mubr.f32.gmra.mrb[0].mxu0 %v8790
    %v9219 = vpop.f32.mrb[0].mxu0
    %v9220 = vadd.f32 0.0, %v9219
    %v9221 = vpop.f32.mrb[0].mxu0
    %9222 = vmatprep.mubr.f32.mxu0 0.0
    %9223 = vmatmul.mubr.f32.gmra.mrb[0].mxu0 %v8793
    %v9224 = vpop.f32.mrb[0].mxu0
    %v9225 = vadd.f32 0.0, %v9224
    %v9226 = vpop.f32.mrb[0].mxu0
    %9227 = vmatprep.mubr.f32.mxu0 0.0
    %9228 = vmatmul.mubr.f32.gmra.mrb[0].mxu0 %v8796
    %v9229 = vpop.f32.mrb[0].mxu0
    %v9230 = vadd.f32 0.0, %v9229
    %v9231 = vpop.f32.mrb[0].mxu0
    %9232 = vmatprep.mubr.f32.mxu0 0.0
    %9233 = vmatmul.mubr.f32.gmra.mrb[0].mxu0 %v8799
    %v9234 = vpop.f32.mrb[0].mxu0
    %v9235 = vadd.f32 0.0, %v9234
    %v9236 = vpop.f32.mrb[0].mxu0
    %9237 = vmatprep.mubr.f32.mxu0 0.0
    %9238 = vmatmul.mubr.f32.gmra.mrb[0].mxu0 %v8802
    %v9239 = vpop.f32.mrb[0].mxu0
    %v9240 = vadd.f32 0.0, %v9239
    %v9241 = vpop.f32.mrb[0].mxu0
    %9242 = vmatprep.mubr.f32.mxu0 0.0
    %9243 = vmatmul.mubr.f32.gmra.mrb[0].mxu0 %v8805
    %v9244 = vpop.f32.mrb[0].mxu0
    %v9245 = vadd.f32 0.0, %v9244
    %v9246 = vpop.f32.mrb[0].mxu0
    %9247 = vmatprep.mubr.f32.mxu0 0.0
    %9248 = vmatmul.mubr.f32.gmra.mrb[0].mxu0 %v8808
    %v9249 = vpop.f32.mrb[0].mxu0
    %v9250 = vadd.f32 0.0, %v9249
    %v9251 = vpop.f32.mrb[0].mxu0
    %9252 = vmatprep.mubr.f32.mxu0 0.0
    %9253 = vmatmul.mubr.f32.gmra.mrb[0].mxu0 %v8811
    %v9254 = vpop.f32.mrb[0].mxu0
    %v9255 = vadd.f32 0.0, %v9254
    %v9256 = vpop.f32.mrb[0].mxu0
    %9257 = vmatprep.mubr.f32.mxu0 0.0
    %9258 = vmatmul.mubr.f32.gmra.mrb[0].mxu0 %v8814
    %v9259 = vpop.f32.mrb[0].mxu0
    %v9260 = vadd.f32 0.0, %v9259
    %v9261 = vpop.f32.mrb[0].mxu0
    %9262 = vmatprep.mubr.f32.mxu0 0.0
    %9263 = vmatmul.mubr.f32.gmra.mrb[0].mxu0 %v8817
    %v9264 = vpop.f32.mrb[0].mxu0
    %v9265 = vadd.f32 0.0, %v9264
    %v9266 = vpop.f32.mrb[0].mxu0
    %9267 = vmatprep.mubr.f32.mxu0 0.0
    %9268 = vmatmul.mubr.f32.gmra.mrb[0].mxu0 %v8820
    %v9269 = vpop.f32.mrb[0].mxu0
    %v9270 = vadd.f32 0.0, %v9269
    %v9271 = vpop.f32.mrb[0].mxu0
    %9272 = vmatprep.mubr.f32.mxu0 0.0
    %9273 = vmatmul.mubr.f32.gmra.mrb[0].mxu0 %v8823
    %v9274 = vpop.f32.mrb[0].mxu0
    %v9275 = vadd.f32 0.0, %v9274
    %v9276 = vpop.f32.mrb[0].mxu0
    %9277 = vmatprep.mubr.f32.mxu0 0.0
    %9278 = vmatmul.mubr.f32.gmra.mrb[0].mxu0 %v8826
    %v9279 = vpop.f32.mrb[0].mxu0
    %v9280 = vadd.f32 0.0, %v9279
    %v9281 = vpop.f32.mrb[0].mxu0
    %9282 = vmatprep.mubr.f32.mxu0 0.0
    %9283 = vmatmul.mubr.f32.gmra.mrb[0].mxu0 %v8829
    %v9284 = vpop.f32.mrb[0].mxu0
    %v9285 = vadd.f32 0.0, %v9284
    %v9286 = vpop.f32.mrb[0].mxu0
    %9287 = vmatprep.mubr.f32.mxu0 0.0
    %9288 = vmatmul.mubr.f32.gmra.mrb[0].mxu0 %v8832
    %v9289 = vpop.f32.mrb[0].mxu0
    %v9290 = vadd.f32 0.0, %v9289
    %v9291 = vpop.f32.mrb[0].mxu0
    %9292 = vmatprep.mubr.f32.mxu0 0.0
    %9293 = vmatmul.mubr.f32.gmra.mrb[0].mxu0 %v8835
    %v9294 = vpop.f32.mrb[0].mxu0
    %v9295 = vadd.f32 0.0, %v9294
    %v9296 = vpop.f32.mrb[0].mxu0
    %9297 = vmatprep.mubr.f32.mxu0 0.0
    %9298 = vmatmul.mubr.f32.gmra.mrb[0].mxu0 %v8838
    %v9299 = vpop.f32.mrb[0].mxu0
    %v9300 = vadd.f32 0.0, %v9299
    %v9301 = vpop.f32.mrb[0].mxu0
    %9302 = vmatprep.mubr.f32.mxu0 0.0
    %9303 = vmatmul.mubr.f32.gmra.mrb[0].mxu0 %v8841
    %v9304 = vpop.f32.mrb[0].mxu0
    %v9305 = vadd.f32 0.0, %v9304
    %v9306 = vpop.f32.mrb[0].mxu0
    %9307 = vmatprep.mubr.f32.mxu0 0.0
    %9308 = vmatmul.mubr.f32.gmra.mrb[0].mxu0 %v8844
    %v9309 = vpop.f32.mrb[0].mxu0
    %v9310 = vadd.f32 0.0, %v9309
    %v9311 = vpop.f32.mrb[0].mxu0
    %9312 = vmatprep.mubr.f32.mxu0 0.0
    %9313 = vmatmul.mubr.f32.gmra.mrb[0].mxu0 %v8847
    %v9314 = vpop.f32.mrb[0].mxu0
    %v9315 = vadd.f32 0.0, %v9314
    %v9316 = vpop.f32.mrb[0].mxu0
    %9317 = vmatprep.mubr.f32.mxu0 0.0
    %9318 = vmatmul.mubr.f32.gmra.mrb[0].mxu0 %v8850
    %v9319 = vpop.f32.mrb[0].mxu0
    %v9320 = vadd.f32 0.0, %v9319
    %v9321 = vpop.f32.mrb[0].mxu0
    %9322 = vmatprep.mubr.f32.mxu0 0.0
    %9323 = vmatmul.mubr.f32.gmra.mrb[0].mxu0 %v8853
    %v9324 = vpop.f32.mrb[0].mxu0
    %v9325 = vadd.f32 0.0, %v9324
    %v9326 = vpop.f32.mrb[0].mxu0
    %9327 = vdwg.mxu0
    %v9328 = vadd.f32 %v8529, %v8925
    %v9329 = vadd.f32 %v8530, %v8930
    %v9330 = vadd.f32 %v8531, %v8935
    %v9331 = vadd.f32 %v8532, %v8940
    %v9332 = vadd.f32 %v8533, %v8945
    %v9333 = vadd.f32 %v8534, %v8950
    %v9334 = vadd.f32 %v8535, %v8955
    %v9335 = vadd.f32 %v8536, %v8960
    %v9336 = vadd.f32 %v8537, %v8965
    %v9337 = vadd.f32 %v8538, %v8970
    %v9338 = vadd.f32 %v8539, %v8975
    %v9339 = vadd.f32 %v8540, %v8980
    %v9340 = vadd.f32 %v8541, %v8985
    %v9341 = vadd.f32 %v8542, %v8990
    %v9342 = vadd.f32 %v8543, %v8995
    %v9343 = vadd.f32 %v8544, %v9000
    %v9344 = vadd.f32 %v8545, %v9005
    %v9345 = vadd.f32 %v8546, %v9010
    %v9346 = vadd.f32 %v8547, %v9015
    %v9347 = vadd.f32 %v8548, %v9020
    %v9348 = vadd.f32 %v8549, %v9025
    %v9349 = vadd.f32 %v8550, %v9030
    %v9350 = vadd.f32 %v8551, %v9035
    %v9351 = vadd.f32 %v8552, %v9040
    %v9352 = vadd.f32 %v8553, %v9045
    %v9353 = vadd.f32 %v8554, %v9050
    %v9354 = vadd.f32 %v8555, %v9055
    %v9355 = vadd.f32 %v8556, %v9060
    %v9356 = vadd.f32 %v8557, %v9065
    %v9357 = vadd.f32 %v8558, %v9070
    %v9358 = vadd.f32 %v8559, %v9075
    %v9359 = vadd.f32 %v8560, %v9080
    %v9360 = vadd.f32 %v8561, %v9085
    %v9361 = vadd.f32 %v8562, %v9090
    %v9362 = vadd.f32 %v8563, %v9095
    %v9363 = vadd.f32 %v8564, %v9100
    %v9364 = vadd.f32 %v8565, %v9105
    %v9365 = vadd.f32 %v8566, %v9110
    %v9366 = vadd.f32 %v8567, %v9115
    %v9367 = vadd.f32 %v8568, %v9120
    %v9368 = vadd.f32 %v8569, %v9125
    %v9369 = vadd.f32 %v8570, %v9130
    %v9370 = vadd.f32 %v8571, %v9135
    %v9371 = vadd.f32 %v8572, %v9140
    %v9372 = vadd.f32 %v8573, %v9145
    %v9373 = vadd.f32 %v8574, %v9150
    %v9374 = vadd.f32 %v8575, %v9155
    %v9375 = vadd.f32 %v8576, %v9160
    %v9376 = vadd.f32 %v8577, %v9165
    %v9377 = vadd.f32 %v8578, %v9170
    %v9378 = vadd.f32 %v8579, %v9175
    %v9379 = vadd.f32 %v8580, %v9180
    %v9380 = vadd.f32 %v8581, %v9185
    %v9381 = vadd.f32 %v8582, %v9190
    %v9382 = vadd.f32 %v8583, %v9195
    %v9383 = vadd.f32 %v8584, %v9200
    %v9384 = vadd.f32 %v8585, %v9205
    %v9385 = vadd.f32 %v8586, %v9210
    %v9386 = vadd.f32 %v8587, %v9215
    %v9387 = vadd.f32 %v8588, %v9220
    %v9388 = vadd.f32 %v8589, %v9225
    %v9389 = vadd.f32 %v8590, %v9230
    %v9390 = vadd.f32 %v8591, %v9235
    %v9391 = vadd.f32 %v8592, %v9240
    %v9392 = vadd.f32 %v8593, %v9245
    %v9393 = vadd.f32 %v8594, %v9250
    %v9394 = vadd.f32 %v8595, %v9255
    %v9395 = vadd.f32 %v8596, %v9260
    %v9396 = vadd.f32 %v8597, %v9265
    %v9397 = vadd.f32 %v8598, %v9270
    %v9398 = vadd.f32 %v8599, %v9275
    %v9399 = vadd.f32 %v8600, %v9280
    %v9400 = vadd.f32 %v8601, %v9285
    %v9401 = vadd.f32 %v8602, %v9290
    %v9402 = vadd.f32 %v8603, %v9295
    %v9403 = vadd.f32 %v8604, %v9300
    %v9404 = vadd.f32 %v8605, %v9305
    %v9405 = vadd.f32 %v8606, %v9310
    %v9406 = vadd.f32 %v8607, %v9315
    %v9407 = vadd.f32 %v8608, %v9320
    %v9408 = vadd.f32 %v8609, %v9325
    %9409 = vst [vmem:[#allocation2] sm:$0xff] %v9328
    %9410 = vst [vmem:[#allocation2 + $0x8] sm:$0xff] %v9329
    %9411 = vst [vmem:[#allocation2 + $0x10] sm:$0xff] %v9330
    %9412 = vst [vmem:[#allocation2 + $0x18] sm:$0xff] %v9331
    %9413 = vst [vmem:[#allocation2 + $0x20] sm:$0xff] %v9332
    %9414 = vst [vmem:[#allocation2 + $0x28] sm:$0xff] %v9333
    %9415 = vst [vmem:[#allocation2 + $0x30] sm:$0xff] %v9334
    %9416 = vst [vmem:[#allocation2 + $0x38] sm:$0xff] %v9335
    %9417 = vst [vmem:[#allocation2 + $0x40] sm:$0xff] %v9336
    %9418 = vst [vmem:[#allocation2 + $0x48] sm:$0xff] %v9337
    %9419 = vst [vmem:[#allocation2 + $0x50] sm:$0xff] %v9338
    %9420 = vst [vmem:[#allocation2 + $0x58] sm:$0xff] %v9339
    %9421 = vst [vmem:[#allocation2 + $0x60] sm:$0xff] %v9340
    %9422 = vst [vmem:[#allocation2 + $0x68] sm:$0xff] %v9341
    %9423 = vst [vmem:[#allocation2 + $0x70] sm:$0xff] %v9342
    %9424 = vst [vmem:[#allocation2 + $0x78] sm:$0xff] %v9343
    %9425 = vst [vmem:[#allocation2 + $0x80] sm:$0xff] %v9344
    %9426 = vst [vmem:[#allocation2 + $0x88] sm:$0xff] %v9345
    %9427 = vst [vmem:[#allocation2 + $0x90] sm:$0xff] %v9346
    %9428 = vst [vmem:[#allocation2 + $0x98] sm:$0xff] %v9347
    %9429 = vst [vmem:[#allocation2 + $0xa0] sm:$0xff] %v9348
    %9430 = vst [vmem:[#allocation2 + $0xa8] sm:$0xff] %v9349
    %9431 = vst [vmem:[#allocation2 + $0xb0] sm:$0xff] %v9350
    %9432 = vst [vmem:[#allocation2 + $0xb8] sm:$0xff] %v9351
    %9433 = vst [vmem:[#allocation2 + $0xc0] sm:$0xff] %v9352
    %9434 = vst [vmem:[#allocation2 + $0xc8] sm:$0xff] %v9353
    %9435 = vst [vmem:[#allocation2 + $0xd0] sm:$0xff] %v9354
    %9436 = vst [vmem:[#allocation2 + $0xd8] sm:$0xff] %v9355
    %9437 = vst [vmem:[#allocation2 + $0xe0] sm:$0xff] %v9356
    %9438 = vst [vmem:[#allocation2 + $0xe8] sm:$0xff] %v9357
    %9439 = vst [vmem:[#allocation2 + $0xf0] sm:$0xff] %v9358
    %9440 = vst [vmem:[#allocation2 + $0xf8] sm:$0xff] %v9359
    %9441 = vst [vmem:[#allocation2 + $0x100] sm:$0xff] %v9360
    %9442 = vst [vmem:[#allocation2 + $0x108] sm:$0xff] %v9361
    %9443 = vst [vmem:[#allocation2 + $0x110] sm:$0xff] %v9362
    %9444 = vst [vmem:[#allocation2 + $0x118] sm:$0xff] %v9363
    %9445 = vst [vmem:[#allocation2 + $0x120] sm:$0xff] %v9364
    %9446 = vst [vmem:[#allocation2 + $0x128] sm:$0xff] %v9365
    %9447 = vst [vmem:[#allocation2 + $0x130] sm:$0xff] %v9366
    %9448 = vst [vmem:[#allocation2 + $0x138] sm:$0xff] %v9367
    %9449 = vst [vmem:[#allocation2 + $0x140] sm:$0xff] %v9368
    %9450 = vst [vmem:[#allocation2 + $0x148] sm:$0xff] %v9369
    %9451 = vst [vmem:[#allocation2 + $0x150] sm:$0xff] %v9370
    %9452 = vst [vmem:[#allocation2 + $0x158] sm:$0xff] %v9371
    %9453 = vst [vmem:[#allocation2 + $0x160] sm:$0xff] %v9372
    %9454 = vst [vmem:[#allocation2 + $0x168] sm:$0xff] %v9373
    %9455 = vst [vmem:[#allocation2 + $0x170] sm:$0xff] %v9374
    %9456 = vst [vmem:[#allocation2 + $0x178] sm:$0xff] %v9375
    %9457 = vst [vmem:[#allocation2 + $0x180] sm:$0xff] %v9376
    %9458 = vst [vmem:[#allocation2 + $0x188] sm:$0xff] %v9377
    %9459 = vst [vmem:[#allocation2 + $0x190] sm:$0xff] %v9378
    %9460 = vst [vmem:[#allocation2 + $0x198] sm:$0xff] %v9379
    %9461 = vst [vmem:[#allocation2 + $0x1a0] sm:$0xff] %v9380
    %9462 = vst [vmem:[#allocation2 + $0x1a8] sm:$0xff] %v9381
    %9463 = vst [vmem:[#allocation2 + $0x1b0] sm:$0xff] %v9382
    %9464 = vst [vmem:[#allocation2 + $0x1b8] sm:$0xff] %v9383
    %9465 = vst [vmem:[#allocation2 + $0x1c0] sm:$0xff] %v9384
    %9466 = vst [vmem:[#allocation2 + $0x1c8] sm:$0xff] %v9385
    %9467 = vst [vmem:[#allocation2 + $0x1d0] sm:$0xff] %v9386
    %9468 = vst [vmem:[#allocation2 + $0x1d8] sm:$0xff] %v9387
    %9469 = vst [vmem:[#allocation2 + $0x1e0] sm:$0xff] %v9388
    %9470 = vst [vmem:[#allocation2 + $0x1e8] sm:$0xff] %v9389
    %9471 = vst [vmem:[#allocation2 + $0x1f0] sm:$0xff] %v9390
    %9472 = vst [vmem:[#allocation2 + $0x1f8] sm:$0xff] %v9391
    %9473 = vst [vmem:[#allocation2 + $0x200] sm:$0xff] %v9392
    %9474 = vst [vmem:[#allocation2 + $0x208] sm:$0xff] %v9393
    %9475 = vst [vmem:[#allocation2 + $0x210] sm:$0xff] %v9394
    %9476 = vst [vmem:[#allocation2 + $0x218] sm:$0xff] %v9395
    %9477 = vst [vmem:[#allocation2 + $0x220] sm:$0xff] %v9396
    %9478 = vst [vmem:[#allocation2 + $0x228] sm:$0xff] %v9397
    %9479 = vst [vmem:[#allocation2 + $0x230] sm:$0xff] %v9398
    %9480 = vst [vmem:[#allocation2 + $0x238] sm:$0xff] %v9399
    %9481 = vst [vmem:[#allocation2 + $0x240] sm:$0xff] %v9400
    %9482 = vst [vmem:[#allocation2 + $0x248] sm:$0xff] %v9401
    %9483 = vst [vmem:[#allocation2 + $0x250] sm:$0xff] %v9402
    %9484 = vst [vmem:[#allocation2 + $0x258] sm:$0xff] %v9403
    %9485 = vst [vmem:[#allocation2 + $0x260] sm:$0xff] %v9404
    %9486 = vst [vmem:[#allocation2 + $0x268] sm:$0xff] %v9405
    %9487 = vst [vmem:[#allocation2 + $0x270] sm:$0xff] %v9406
    %9488 = vst [vmem:[#allocation2 + $0x278] sm:$0xff] %v9407
    %9489 = vst [vmem:[#allocation2 + $0x280] sm:$0xff] %v9408
    %v9490 = vld [vmem:[#allocation2] sm:$0xff]
    %v9491 = vld [vmem:[#allocation2 + $0x8] sm:$0xff]
    %v9492 = vld [vmem:[#allocation2 + $0x10] sm:$0xff]
    %v9493 = vld [vmem:[#allocation2 + $0x18] sm:$0xff]
    %v9494 = vld [vmem:[#allocation2 + $0x20] sm:$0xff]
    %v9495 = vld [vmem:[#allocation2 + $0x28] sm:$0xff]
    %v9496 = vld [vmem:[#allocation2 + $0x30] sm:$0xff]
    %v9497 = vld [vmem:[#allocation2 + $0x38] sm:$0xff]
    %v9498 = vld [vmem:[#allocation2 + $0x40] sm:$0xff]
    %v9499 = vld [vmem:[#allocation2 + $0x48] sm:$0xff]
    %v9500 = vld [vmem:[#allocation2 + $0x50] sm:$0xff]
    %v9501 = vld [vmem:[#allocation2 + $0x58] sm:$0xff]
    %v9502 = vld [vmem:[#allocation2 + $0x60] sm:$0xff]
    %v9503 = vld [vmem:[#allocation2 + $0x68] sm:$0xff]
    %v9504 = vld [vmem:[#allocation2 + $0x70] sm:$0xff]
    %v9505 = vld [vmem:[#allocation2 + $0x78] sm:$0xff]
    %v9506 = vld [vmem:[#allocation2 + $0x80] sm:$0xff]
    %v9507 = vld [vmem:[#allocation2 + $0x88] sm:$0xff]
    %v9508 = vld [vmem:[#allocation2 + $0x90] sm:$0xff]
    %v9509 = vld [vmem:[#allocation2 + $0x98] sm:$0xff]
    %v9510 = vld [vmem:[#allocation2 + $0xa0] sm:$0xff]
    %v9511 = vld [vmem:[#allocation2 + $0xa8] sm:$0xff]
    %v9512 = vld [vmem:[#allocation2 + $0xb0] sm:$0xff]
    %v9513 = vld [vmem:[#allocation2 + $0xb8] sm:$0xff]
    %v9514 = vld [vmem:[#allocation2 + $0xc0] sm:$0xff]
    %v9515 = vld [vmem:[#allocation2 + $0xc8] sm:$0xff]
    %v9516 = vld [vmem:[#allocation2 + $0xd0] sm:$0xff]
    %v9517 = vld [vmem:[#allocation2 + $0xd8] sm:$0xff]
    %v9518 = vld [vmem:[#allocation2 + $0xe0] sm:$0xff]
    %v9519 = vld [vmem:[#allocation2 + $0xe8] sm:$0xff]
    %v9520 = vld [vmem:[#allocation2 + $0xf0] sm:$0xff]
    %v9521 = vld [vmem:[#allocation2 + $0xf8] sm:$0xff]
    %v9522 = vld [vmem:[#allocation2 + $0x100] sm:$0xff]
    %v9523 = vld [vmem:[#allocation2 + $0x108] sm:$0xff]
    %v9524 = vld [vmem:[#allocation2 + $0x110] sm:$0xff]
    %v9525 = vld [vmem:[#allocation2 + $0x118] sm:$0xff]
    %v9526 = vld [vmem:[#allocation2 + $0x120] sm:$0xff]
    %v9527 = vld [vmem:[#allocation2 + $0x128] sm:$0xff]
    %v9528 = vld [vmem:[#allocation2 + $0x130] sm:$0xff]
    %v9529 = vld [vmem:[#allocation2 + $0x138] sm:$0xff]
    %v9530 = vld [vmem:[#allocation2 + $0x140] sm:$0xff]
    %v9531 = vld [vmem:[#allocation2 + $0x148] sm:$0xff]
    %v9532 = vld [vmem:[#allocation2 + $0x150] sm:$0xff]
    %v9533 = vld [vmem:[#allocation2 + $0x158] sm:$0xff]
    %v9534 = vld [vmem:[#allocation2 + $0x160] sm:$0xff]
    %v9535 = vld [vmem:[#allocation2 + $0x168] sm:$0xff]
    %v9536 = vld [vmem:[#allocation2 + $0x170] sm:$0xff]
    %v9537 = vld [vmem:[#allocation2 + $0x178] sm:$0xff]
    %v9538 = vld [vmem:[#allocation2 + $0x180] sm:$0xff]
    %v9539 = vld [vmem:[#allocation2 + $0x188] sm:$0xff]
    %v9540 = vld [vmem:[#allocation2 + $0x190] sm:$0xff]
    %v9541 = vld [vmem:[#allocation2 + $0x198] sm:$0xff]
    %v9542 = vld [vmem:[#allocation2 + $0x1a0] sm:$0xff]
    %v9543 = vld [vmem:[#allocation2 + $0x1a8] sm:$0xff]
    %v9544 = vld [vmem:[#allocation2 + $0x1b0] sm:$0xff]
    %v9545 = vld [vmem:[#allocation2 + $0x1b8] sm:$0xff]
    %v9546 = vld [vmem:[#allocation2 + $0x1c0] sm:$0xff]
    %v9547 = vld [vmem:[#allocation2 + $0x1c8] sm:$0xff]
    %v9548 = vld [vmem:[#allocation2 + $0x1d0] sm:$0xff]
    %v9549 = vld [vmem:[#allocation2 + $0x1d8] sm:$0xff]
    %v9550 = vld [vmem:[#allocation2 + $0x1e0] sm:$0xff]
    %v9551 = vld [vmem:[#allocation2 + $0x1e8] sm:$0xff]
    %v9552 = vld [vmem:[#allocation2 + $0x1f0] sm:$0xff]
    %v9553 = vld [vmem:[#allocation2 + $0x1f8] sm:$0xff]
    %v9554 = vld [vmem:[#allocation2 + $0x200] sm:$0xff]
    %v9555 = vld [vmem:[#allocation2 + $0x208] sm:$0xff]
    %v9556 = vld [vmem:[#allocation2 + $0x210] sm:$0xff]
    %v9557 = vld [vmem:[#allocation2 + $0x218] sm:$0xff]
    %v9558 = vld [vmem:[#allocation2 + $0x220] sm:$0xff]
    %v9559 = vld [vmem:[#allocation2 + $0x228] sm:$0xff]
    %v9560 = vld [vmem:[#allocation2 + $0x230] sm:$0xff]
    %v9561 = vld [vmem:[#allocation2 + $0x238] sm:$0xff]
    %v9562 = vld [vmem:[#allocation2 + $0x240] sm:$0xff]
    %v9563 = vld [vmem:[#allocation2 + $0x248] sm:$0xff]
    %v9564 = vld [vmem:[#allocation2 + $0x250] sm:$0xff]
    %v9565 = vld [vmem:[#allocation2 + $0x258] sm:$0xff]
    %v9566 = vld [vmem:[#allocation2 + $0x260] sm:$0xff]
    %v9567 = vld [vmem:[#allocation2 + $0x268] sm:$0xff]
    %v9568 = vld [vmem:[#allocation2 + $0x270] sm:$0xff]
    %v9569 = vld [vmem:[#allocation2 + $0x278] sm:$0xff]
    %v9570 = vld [vmem:[#allocation2 + $0x280] sm:$0xff]
    %v9571 = vld [vmem:[%s2] sm:$0x1]
    %v9573 = vlaneseq
    %v9574 = vshrl.u32 %v9573, 7
    %v9575 = vsub.s32 0, %v9574
    %v9576 = vrot.slane %v9571, %v9575
    %v9578 = vadd.f32 %v9490, %v9576
    %v9579 = vadd.f32 %v9491, %v9576
    %v9580 = vadd.f32 %v9492, %v9576
    %v9581 = vadd.f32 %v9493, %v9576
    %v9582 = vadd.f32 %v9494, %v9576
    %v9583 = vadd.f32 %v9495, %v9576
    %v9584 = vadd.f32 %v9496, %v9576
    %v9585 = vadd.f32 %v9497, %v9576
    %v9586 = vadd.f32 %v9498, %v9576
    %v9587 = vadd.f32 %v9499, %v9576
    %v9588 = vadd.f32 %v9500, %v9576
    %v9589 = vadd.f32 %v9501, %v9576
    %v9590 = vadd.f32 %v9502, %v9576
    %v9591 = vadd.f32 %v9503, %v9576
    %v9592 = vadd.f32 %v9504, %v9576
    %v9593 = vadd.f32 %v9505, %v9576
    %v9594 = vadd.f32 %v9506, %v9576
    %v9595 = vadd.f32 %v9507, %v9576
    %v9596 = vadd.f32 %v9508, %v9576
    %v9597 = vadd.f32 %v9509, %v9576
    %v9598 = vadd.f32 %v9510, %v9576
    %v9599 = vadd.f32 %v9511, %v9576
    %v9600 = vadd.f32 %v9512, %v9576
    %v9601 = vadd.f32 %v9513, %v9576
    %v9602 = vadd.f32 %v9514, %v9576
    %v9603 = vadd.f32 %v9515, %v9576
    %v9604 = vadd.f32 %v9516, %v9576
    %v9605 = vadd.f32 %v9517, %v9576
    %v9606 = vadd.f32 %v9518, %v9576
    %v9607 = vadd.f32 %v9519, %v9576
    %v9608 = vadd.f32 %v9520, %v9576
    %v9609 = vadd.f32 %v9521, %v9576
    %v9610 = vadd.f32 %v9522, %v9576
    %v9611 = vadd.f32 %v9523, %v9576
    %v9612 = vadd.f32 %v9524, %v9576
    %v9613 = vadd.f32 %v9525, %v9576
    %v9614 = vadd.f32 %v9526, %v9576
    %v9615 = vadd.f32 %v9527, %v9576
    %v9616 = vadd.f32 %v9528, %v9576
    %v9617 = vadd.f32 %v9529, %v9576
    %v9618 = vadd.f32 %v9530, %v9576
    %v9619 = vadd.f32 %v9531, %v9576
    %v9620 = vadd.f32 %v9532, %v9576
    %v9621 = vadd.f32 %v9533, %v9576
    %v9622 = vadd.f32 %v9534, %v9576
    %v9623 = vadd.f32 %v9535, %v9576
    %v9624 = vadd.f32 %v9536, %v9576
    %v9625 = vadd.f32 %v9537, %v9576
    %v9626 = vadd.f32 %v9538, %v9576
    %v9627 = vadd.f32 %v9539, %v9576
    %v9628 = vadd.f32 %v9540, %v9576
    %v9629 = vadd.f32 %v9541, %v9576
    %v9630 = vadd.f32 %v9542, %v9576
    %v9631 = vadd.f32 %v9543, %v9576
    %v9632 = vadd.f32 %v9544, %v9576
    %v9633 = vadd.f32 %v9545, %v9576
    %v9634 = vadd.f32 %v9546, %v9576
    %v9635 = vadd.f32 %v9547, %v9576
    %v9636 = vadd.f32 %v9548, %v9576
    %v9637 = vadd.f32 %v9549, %v9576
    %v9638 = vadd.f32 %v9550, %v9576
    %v9639 = vadd.f32 %v9551, %v9576
    %v9640 = vadd.f32 %v9552, %v9576
    %v9641 = vadd.f32 %v9553, %v9576
    %v9642 = vadd.f32 %v9554, %v9576
    %v9643 = vadd.f32 %v9555, %v9576
    %v9644 = vadd.f32 %v9556, %v9576
    %v9645 = vadd.f32 %v9557, %v9576
    %v9646 = vadd.f32 %v9558, %v9576
    %v9647 = vadd.f32 %v9559, %v9576
    %v9648 = vadd.f32 %v9560, %v9576
    %v9649 = vadd.f32 %v9561, %v9576
    %v9650 = vadd.f32 %v9562, %v9576
    %v9651 = vadd.f32 %v9563, %v9576
    %v9652 = vadd.f32 %v9564, %v9576
    %v9653 = vadd.f32 %v9565, %v9576
    %v9654 = vadd.f32 %v9566, %v9576
    %v9655 = vadd.f32 %v9567, %v9576
    %v9656 = vadd.f32 %v9568, %v9576
    %v9657 = vadd.f32 %v9569, %v9576
    %v9658 = vadd.f32 %v9570, %v9576
    %v9659 = vmax.f32 %v9578, 0.0
    %v9660 = vmax.f32 %v9579, 0.0
    %v9661 = vmax.f32 %v9580, 0.0
    %v9662 = vmax.f32 %v9581, 0.0
    %v9663 = vmax.f32 %v9582, 0.0
    %v9664 = vmax.f32 %v9583, 0.0
    %v9665 = vmax.f32 %v9584, 0.0
    %v9666 = vmax.f32 %v9585, 0.0
    %v9667 = vmax.f32 %v9586, 0.0
    %v9668 = vmax.f32 %v9587, 0.0
    %v9669 = vmax.f32 %v9588, 0.0
    %v9670 = vmax.f32 %v9589, 0.0
    %v9671 = vmax.f32 %v9590, 0.0
    %v9672 = vmax.f32 %v9591, 0.0
    %v9673 = vmax.f32 %v9592, 0.0
    %v9674 = vmax.f32 %v9593, 0.0
    %v9675 = vmax.f32 %v9594, 0.0
    %v9676 = vmax.f32 %v9595, 0.0
    %v9677 = vmax.f32 %v9596, 0.0
    %v9678 = vmax.f32 %v9597, 0.0
    %v9679 = vmax.f32 %v9598, 0.0
    %v9680 = vmax.f32 %v9599, 0.0
    %v9681 = vmax.f32 %v9600, 0.0
    %v9682 = vmax.f32 %v9601, 0.0
    %v9683 = vmax.f32 %v9602, 0.0
    %v9684 = vmax.f32 %v9603, 0.0
    %v9685 = vmax.f32 %v9604, 0.0
    %v9686 = vmax.f32 %v9605, 0.0
    %v9687 = vmax.f32 %v9606, 0.0
    %v9688 = vmax.f32 %v9607, 0.0
    %v9689 = vmax.f32 %v9608, 0.0
    %v9690 = vmax.f32 %v9609, 0.0
    %v9691 = vmax.f32 %v9610, 0.0
    %v9692 = vmax.f32 %v9611, 0.0
    %v9693 = vmax.f32 %v9612, 0.0
    %v9694 = vmax.f32 %v9613, 0.0
    %v9695 = vmax.f32 %v9614, 0.0
    %v9696 = vmax.f32 %v9615, 0.0
    %v9697 = vmax.f32 %v9616, 0.0
    %v9698 = vmax.f32 %v9617, 0.0
    %v9699 = vmax.f32 %v9618, 0.0
    %v9700 = vmax.f32 %v9619, 0.0
    %v9701 = vmax.f32 %v9620, 0.0
    %v9702 = vmax.f32 %v9621, 0.0
    %v9703 = vmax.f32 %v9622, 0.0
    %v9704 = vmax.f32 %v9623, 0.0
    %v9705 = vmax.f32 %v9624, 0.0
    %v9706 = vmax.f32 %v9625, 0.0
    %v9707 = vmax.f32 %v9626, 0.0
    %v9708 = vmax.f32 %v9627, 0.0
    %v9709 = vmax.f32 %v9628, 0.0
    %v9710 = vmax.f32 %v9629, 0.0
    %v9711 = vmax.f32 %v9630, 0.0
    %v9712 = vmax.f32 %v9631, 0.0
    %v9713 = vmax.f32 %v9632, 0.0
    %v9714 = vmax.f32 %v9633, 0.0
    %v9715 = vmax.f32 %v9634, 0.0
    %v9716 = vmax.f32 %v9635, 0.0
    %v9717 = vmax.f32 %v9636, 0.0
    %v9718 = vmax.f32 %v9637, 0.0
    %v9719 = vmax.f32 %v9638, 0.0
    %v9720 = vmax.f32 %v9639, 0.0
    %v9721 = vmax.f32 %v9640, 0.0
    %v9722 = vmax.f32 %v9641, 0.0
    %v9723 = vmax.f32 %v9642, 0.0
    %v9724 = vmax.f32 %v9643, 0.0
    %v9725 = vmax.f32 %v9644, 0.0
    %v9726 = vmax.f32 %v9645, 0.0
    %v9727 = vmax.f32 %v9646, 0.0
    %v9728 = vmax.f32 %v9647, 0.0
    %v9729 = vmax.f32 %v9648, 0.0
    %v9730 = vmax.f32 %v9649, 0.0
    %v9731 = vmax.f32 %v9650, 0.0
    %v9732 = vmax.f32 %v9651, 0.0
    %v9733 = vmax.f32 %v9652, 0.0
    %v9734 = vmax.f32 %v9653, 0.0
    %v9735 = vmax.f32 %v9654, 0.0
    %v9736 = vmax.f32 %v9655, 0.0
    %v9737 = vmax.f32 %v9656, 0.0
    %v9738 = vmax.f32 %v9657, 0.0
    %v9739 = vmax.f32 %v9658, 0.0
    %v9740 = vld [vmem:[%s3] sm:$0xff]
    %v9741 = vld [vmem:[%s3 + $0x8] sm:$0xf]
    %v9744 = vcombine.high %v9740, %v9740
    %v9746 = vunpack.c.l.s4 1983009808
    %v9747 = vunpack.c.0.s8 %v9746
    %v9748 = vlaneseq
    %v9749 = vshrl.u32 %v9748, 7
    %v9750 = vsub.s32 %v9747, %v9749
    %v9751 = vrot.slane %v9740, %v9750
    %v9753 = vunpack.c.l.s4 1983009808
    %v9754 = vunpack.c.0.s8 %v9753
    %v9755 = vlaneseq
    %v9756 = vshrl.u32 %v9755, 7
    %v9757 = vsub.s32 %v9754, %v9756
    %v9758 = vrot.slane %v9744, %v9757
    %v9759 = vcombine.high %v9751, %v9751
    %v9760 = vcombine.high %v9758, %v9758
    %v9762 = vunpack.c.l.s4 1983009808
    %v9763 = vunpack.c.0.s8 %v9762
    %v9764 = vlaneseq
    %v9765 = vshrl.u32 %v9764, 7
    %v9766 = vsub.s32 %v9763, %v9765
    %v9767 = vrot.slane %v9741, %v9766
    %v9768 = vcombine.high %v9767, %v9767
    %vm9774 = vcmask 64512
    %v9775 = vsel %vm9774, %v9768, 0
    %9777 = vmatprep.subr.mxu0 0.0
    %9778 = vmatpush1.msra.mxu0 %v9659
    %9779 = vmatprep.subr.mxu0 0.0
    %9780 = vmatpush1.msra.mxu0 %v9660
    %9781 = vmatprep.subr.mxu0 0.0
    %9782 = vmatpush1.msra.mxu0 %v9661
    %9783 = vmatprep.subr.mxu0 0.0
    %9784 = vmatpush1.msra.mxu0 %v9662
    %9785 = vmatprep.subr.mxu0 0.0
    %9786 = vmatpush1.msra.mxu0 %v9663
    %9787 = vmatprep.subr.mxu0 0.0
    %9788 = vmatpush1.msra.mxu0 %v9664
    %9789 = vmatprep.subr.mxu0 0.0
    %9790 = vmatpush1.msra.mxu0 %v9665
    %9791 = vmatprep.subr.mxu0 0.0
    %9792 = vmatpush1.msra.mxu0 %v9666
    %9793 = vmatprep.subr.mxu0 0.0
    %9794 = vmatpush1.msra.mxu0 %v9667
    %9795 = vmatprep.subr.mxu0 0.0
    %9796 = vmatpush1.msra.mxu0 %v9668
    %9797 = vmatprep.subr.mxu0 0.0
    %9798 = vmatpush1.msra.mxu0 %v9669
    %9799 = vmatprep.subr.mxu0 0.0
    %9800 = vmatpush1.msra.mxu0 %v9670
    %9801 = vmatprep.subr.mxu0 0.0
    %9802 = vmatpush1.msra.mxu0 %v9671
    %9803 = vmatprep.subr.mxu0 0.0
    %9804 = vmatpush1.msra.mxu0 %v9672
    %9805 = vmatprep.subr.mxu0 0.0
    %9806 = vmatpush1.msra.mxu0 %v9673
    %9807 = vmatprep.subr.mxu0 0.0
    %9808 = vmatpush1.msra.mxu0 %v9674
    %9809 = vmatprep.subr.mxu0 0.0
    %9810 = vmatpush1.msra.mxu0 %v9675
    %9811 = vmatprep.subr.mxu0 0.0
    %9812 = vmatpush1.msra.mxu0 %v9676
    %9813 = vmatprep.subr.mxu0 0.0
    %9814 = vmatpush1.msra.mxu0 %v9677
    %9815 = vmatprep.subr.mxu0 0.0
    %9816 = vmatpush1.msra.mxu0 %v9678
    %9817 = vmatprep.subr.mxu0 0.0
    %9818 = vmatpush1.msra.mxu0 %v9679
    %9819 = vmatprep.subr.mxu0 0.0
    %9820 = vmatpush1.msra.mxu0 %v9680
    %9821 = vmatprep.subr.mxu0 0.0
    %9822 = vmatpush1.msra.mxu0 %v9681
    %9823 = vmatprep.subr.mxu0 0.0
    %9824 = vmatpush1.msra.mxu0 %v9682
    %9825 = vmatprep.subr.mxu0 0.0
    %9826 = vmatpush1.msra.mxu0 %v9683
    %9827 = vmatprep.subr.mxu0 0.0
    %9828 = vmatpush1.msra.mxu0 %v9684
    %9829 = vmatprep.subr.mxu0 0.0
    %9830 = vmatpush1.msra.mxu0 %v9685
    %9831 = vmatprep.subr.mxu0 0.0
    %9832 = vmatpush1.msra.mxu0 %v9686
    %9833 = vmatprep.subr.mxu0 0.0
    %9834 = vmatpush1.msra.mxu0 %v9687
    %9835 = vmatprep.subr.mxu0 0.0
    %9836 = vmatpush1.msra.mxu0 %v9688
    %9837 = vmatprep.subr.mxu0 0.0
    %9838 = vmatpush1.msra.mxu0 %v9689
    %9839 = vmatprep.subr.mxu0 0.0
    %9840 = vmatpush1.msra.mxu0 %v9690
    %9841 = vmatprep.mubr.f32.mxu0 %v9759
    %9842 = vmatmul.mubr.f32.gmra.mrb[0].mxu0 %v9751
    %v9843 = vpop.f32.mrb[0].mxu0
    %v9844 = vadd.f32 0.0, %v9843
    %v9845 = vpop.f32.mrb[0].mxu0
    %9846 = vdwg.mxu0
    %9847 = vmatprep.subr.mxu0 0.0
    %9848 = vmatpush1.msra.mxu0 %v9691
    %9849 = vmatprep.subr.mxu0 0.0
    %9850 = vmatpush1.msra.mxu0 %v9692
    %9851 = vmatprep.subr.mxu0 0.0
    %9852 = vmatpush1.msra.mxu0 %v9693
    %9853 = vmatprep.subr.mxu0 0.0
    %9854 = vmatpush1.msra.mxu0 %v9694
    %9855 = vmatprep.subr.mxu0 0.0
    %9856 = vmatpush1.msra.mxu0 %v9695
    %9857 = vmatprep.subr.mxu0 0.0
    %9858 = vmatpush1.msra.mxu0 %v9696
    %9859 = vmatprep.subr.mxu0 0.0
    %9860 = vmatpush1.msra.mxu0 %v9697
    %9861 = vmatprep.subr.mxu0 0.0
    %9862 = vmatpush1.msra.mxu0 %v9698
    %9863 = vmatprep.subr.mxu0 0.0
    %9864 = vmatpush1.msra.mxu0 %v9699
    %9865 = vmatprep.subr.mxu0 0.0
    %9866 = vmatpush1.msra.mxu0 %v9700
    %9867 = vmatprep.subr.mxu0 0.0
    %9868 = vmatpush1.msra.mxu0 %v9701
    %9869 = vmatprep.subr.mxu0 0.0
    %9870 = vmatpush1.msra.mxu0 %v9702
    %9871 = vmatprep.subr.mxu0 0.0
    %9872 = vmatpush1.msra.mxu0 %v9703
    %9873 = vmatprep.subr.mxu0 0.0
    %9874 = vmatpush1.msra.mxu0 %v9704
    %9875 = vmatprep.subr.mxu0 0.0
    %9876 = vmatpush1.msra.mxu0 %v9705
    %9877 = vmatprep.subr.mxu0 0.0
    %9878 = vmatpush1.msra.mxu0 %v9706
    %9879 = vmatprep.subr.mxu0 0.0
    %9880 = vmatpush1.msra.mxu0 %v9707
    %9881 = vmatprep.subr.mxu0 0.0
    %9882 = vmatpush1.msra.mxu0 %v9708
    %9883 = vmatprep.subr.mxu0 0.0
    %9884 = vmatpush1.msra.mxu0 %v9709
    %9885 = vmatprep.subr.mxu0 0.0
    %9886 = vmatpush1.msra.mxu0 %v9710
    %9887 = vmatprep.subr.mxu0 0.0
    %9888 = vmatpush1.msra.mxu0 %v9711
    %9889 = vmatprep.subr.mxu0 0.0
    %9890 = vmatpush1.msra.mxu0 %v9712
    %9891 = vmatprep.subr.mxu0 0.0
    %9892 = vmatpush1.msra.mxu0 %v9713
    %9893 = vmatprep.subr.mxu0 0.0
    %9894 = vmatpush1.msra.mxu0 %v9714
    %9895 = vmatprep.subr.mxu0 0.0
    %9896 = vmatpush1.msra.mxu0 %v9715
    %9897 = vmatprep.subr.mxu0 0.0
    %9898 = vmatpush1.msra.mxu0 %v9716
    %9899 = vmatprep.subr.mxu0 0.0
    %9900 = vmatpush1.msra.mxu0 %v9717
    %9901 = vmatprep.subr.mxu0 0.0
    %9902 = vmatpush1.msra.mxu0 %v9718
    %9903 = vmatprep.subr.mxu0 0.0
    %9904 = vmatpush1.msra.mxu0 %v9719
    %9905 = vmatprep.subr.mxu0 0.0
    %9906 = vmatpush1.msra.mxu0 %v9720
    %9907 = vmatprep.subr.mxu0 0.0
    %9908 = vmatpush1.msra.mxu0 %v9721
    %9909 = vmatprep.subr.mxu0 0.0
    %9910 = vmatpush1.msra.mxu0 %v9722
    %9911 = vmatprep.mubr.f32.mxu0 %v9760
    %9912 = vmatmul.mubr.f32.gmra.mrb[0].mxu0 %v9758
    %v9913 = vpop.f32.mrb[0].mxu0
    %v9914 = vadd.f32 %v9844, %v9913
    %v9915 = vpop.f32.mrb[0].mxu0
    %9916 = vdwg.mxu0
    %9917 = vmatprep.subr.mxu0 0.0
    %9918 = vmatpush1.msra.mxu0 %v9723
    %9919 = vmatprep.subr.mxu0 0.0
    %9920 = vmatpush1.msra.mxu0 %v9724
    %9921 = vmatprep.subr.mxu0 0.0
    %9922 = vmatpush1.msra.mxu0 %v9725
    %9923 = vmatprep.subr.mxu0 0.0
    %9924 = vmatpush1.msra.mxu0 %v9726
    %9925 = vmatprep.subr.mxu0 0.0
    %9926 = vmatpush1.msra.mxu0 %v9727
    %9927 = vmatprep.subr.mxu0 0.0
    %9928 = vmatpush1.msra.mxu0 %v9728
    %9929 = vmatprep.subr.mxu0 0.0
    %9930 = vmatpush1.msra.mxu0 %v9729
    %9931 = vmatprep.subr.mxu0 0.0
    %9932 = vmatpush1.msra.mxu0 %v9730
    %9933 = vmatprep.subr.mxu0 0.0
    %9934 = vmatpush1.msra.mxu0 %v9731
    %9935 = vmatprep.subr.mxu0 0.0
    %9936 = vmatpush1.msra.mxu0 %v9732
    %9937 = vmatprep.subr.mxu0 0.0
    %9938 = vmatpush1.msra.mxu0 %v9733
    %9939 = vmatprep.subr.mxu0 0.0
    %9940 = vmatpush1.msra.mxu0 %v9734
    %9941 = vmatprep.subr.mxu0 0.0
    %9942 = vmatpush1.msra.mxu0 %v9735
    %9943 = vmatprep.subr.mxu0 0.0
    %9944 = vmatpush1.msra.mxu0 %v9736
    %9945 = vmatprep.subr.mxu0 0.0
    %9946 = vmatpush1.msra.mxu0 %v9737
    %9947 = vmatprep.subr.mxu0 0.0
    %9948 = vmatpush1.msra.mxu0 %v9738
    %9949 = vmatprep.subr.mxu0 0.0
    %9950 = vmatpush1.msra.mxu0 %v9739
    %9951 = vmatprep.subr.mxu0 0.0
    %9952 = vmatpush1.msra.mxu0 0.0
    %9953 = vmatprep.subr.mxu0 0.0
    %9954 = vmatpush1.msra.mxu0 0.0
    %9955 = vmatprep.subr.mxu0 0.0
    %9956 = vmatpush1.msra.mxu0 0.0
    %9957 = vmatprep.subr.mxu0 0.0
    %9958 = vmatpush1.msra.mxu0 0.0
    %9959 = vmatprep.subr.mxu0 0.0
    %9960 = vmatpush1.msra.mxu0 0.0
    %9961 = vmatprep.subr.mxu0 0.0
    %9962 = vmatpush1.msra.mxu0 0.0
    %9963 = vmatprep.subr.mxu0 0.0
    %9964 = vmatpush1.msra.mxu0 0.0
    %9965 = vmatprep.subr.mxu0 0.0
    %9966 = vmatpush1.msra.mxu0 0.0
    %9967 = vmatprep.subr.mxu0 0.0
    %9968 = vmatpush1.msra.mxu0 0.0
    %9969 = vmatprep.subr.mxu0 0.0
    %9970 = vmatpush1.msra.mxu0 0.0
    %9971 = vmatprep.subr.mxu0 0.0
    %9972 = vmatpush1.msra.mxu0 0.0
    %9973 = vmatprep.subr.mxu0 0.0
    %9974 = vmatpush1.msra.mxu0 0.0
    %9975 = vmatprep.subr.mxu0 0.0
    %9976 = vmatpush1.msra.mxu0 0.0
    %9977 = vmatprep.subr.mxu0 0.0
    %9978 = vmatpush1.msra.mxu0 0.0
    %9979 = vmatprep.subr.mxu0 0.0
    %9980 = vmatpush1.msra.mxu0 0.0
    %9981 = vmatprep.mubr.f32.mxu0 %v9775
    %9982 = vmatmul.mubr.f32.gmra.mrb[0].mxu0 %v9767
    %v9983 = vpop.f32.mrb[0].mxu0
    %v9984 = vadd.f32 %v9914, %v9983
    %v9985 = vpop.f32.mrb[0].mxu0
    %9986 = vdwg.mxu0
    %v9987 = vld [vmem:[%s4] sm:$0xff]
    %v9988 = vld [vmem:[%s4 + $0x8] sm:$0xff]
    %v9989 = vld [vmem:[%s4 + $0x10] sm:$0xff]
    %v9990 = vld [vmem:[%s4 + $0x18] sm:$0xff]
    %v9991 = vld [vmem:[%s4 + $0x20] sm:$0xff]
    %v9992 = vld [vmem:[%s4 + $0x28] sm:$0xff]
    %v9993 = vld [vmem:[%s4 + $0x30] sm:$0xff]
    %v9994 = vld [vmem:[%s4 + $0x38] sm:$0xff]
    %v9995 = vld [vmem:[%s4 + $0x40] sm:$0xff]
    %v9996 = vld [vmem:[%s4 + $0x48] sm:$0xff]
    %v9997 = vld [vmem:[%s4 + $0x50] sm:$0xff]
    %v9998 = vld [vmem:[%s4 + $0x58] sm:$0xff]
    %v9999 = vld [vmem:[%s4 + $0x60] sm:$0xff]
    %v10000 = vld [vmem:[%s4 + $0x68] sm:$0xff]
    %v10001 = vld [vmem:[%s4 + $0x70] sm:$0xff]
    %v10002 = vld [vmem:[%s4 + $0x78] sm:$0xff]
    %v10003 = vld [vmem:[%s5] sm:$0x1]
    %v10005 = vlaneseq
    %v10006 = vshrl.u32 %v10005, 7
    %v10007 = vsub.s32 0, %v10006
    %v10008 = vrot.slane %v10003, %v10007
    %10010 = vmatprep.subr.mxu0 0.0
    %10011 = vmatpush1.msra.mxu0 %v9987
    %10012 = vmatprep.subr.mxu0 0.0
    %10013 = vmatpush1.msra.mxu0 %v9988
    %10014 = vmatprep.subr.mxu0 0.0
    %10015 = vmatpush1.msra.mxu0 %v9989
    %10016 = vmatprep.subr.mxu0 0.0
    %10017 = vmatpush1.msra.mxu0 %v9990
    %10018 = vmatprep.subr.mxu0 0.0
    %10019 = vmatpush1.msra.mxu0 %v9991
    %10020 = vmatprep.subr.mxu0 0.0
    %10021 = vmatpush1.msra.mxu0 %v9992
    %10022 = vmatprep.subr.mxu0 0.0
    %10023 = vmatpush1.msra.mxu0 %v9993
    %10024 = vmatprep.subr.mxu0 0.0
    %10025 = vmatpush1.msra.mxu0 %v9994
    %10026 = vmatprep.subr.mxu0 0.0
    %10027 = vmatpush1.msra.mxu0 %v9995
    %10028 = vmatprep.subr.mxu0 0.0
    %10029 = vmatpush1.msra.mxu0 %v9996
    %10030 = vmatprep.subr.mxu0 0.0
    %10031 = vmatpush1.msra.mxu0 %v9997
    %10032 = vmatprep.subr.mxu0 0.0
    %10033 = vmatpush1.msra.mxu0 %v9998
    %10034 = vmatprep.subr.mxu0 0.0
    %10035 = vmatpush1.msra.mxu0 %v9999
    %10036 = vmatprep.subr.mxu0 0.0
    %10037 = vmatpush1.msra.mxu0 %v10000
    %10038 = vmatprep.subr.mxu0 0.0
    %10039 = vmatpush1.msra.mxu0 %v10001
    %10040 = vmatprep.subr.mxu0 0.0
    %10041 = vmatpush1.msra.mxu0 %v10002
    %10042 = vmatprep.subr.mxu0 0.0
    %10043 = vmatpush1.msra.mxu0 0.0
    %10044 = vmatprep.subr.mxu0 0.0
    %10045 = vmatpush1.msra.mxu0 0.0
    %10046 = vmatprep.subr.mxu0 0.0
    %10047 = vmatpush1.msra.mxu0 0.0
    %10048 = vmatprep.subr.mxu0 0.0
    %10049 = vmatpush1.msra.mxu0 0.0
    %10050 = vmatprep.subr.mxu0 0.0
    %10051 = vmatpush1.msra.mxu0 0.0
    %10052 = vmatprep.subr.mxu0 0.0
    %10053 = vmatpush1.msra.mxu0 0.0
    %10054 = vmatprep.subr.mxu0 0.0
    %10055 = vmatpush1.msra.mxu0 0.0
    %10056 = vmatprep.subr.mxu0 0.0
    %10057 = vmatpush1.msra.mxu0 0.0
    %10058 = vmatprep.subr.mxu0 0.0
    %10059 = vmatpush1.msra.mxu0 0.0
    %10060 = vmatprep.subr.mxu0 0.0
    %10061 = vmatpush1.msra.mxu0 0.0
    %10062 = vmatprep.subr.mxu0 0.0
    %10063 = vmatpush1.msra.mxu0 0.0
    %10064 = vmatprep.subr.mxu0 0.0
    %10065 = vmatpush1.msra.mxu0 0.0
    %10066 = vmatprep.subr.mxu0 0.0
    %10067 = vmatpush1.msra.mxu0 0.0
    %10068 = vmatprep.subr.mxu0 0.0
    %10069 = vmatpush1.msra.mxu0 0.0
    %10070 = vmatprep.subr.mxu0 0.0
    %10071 = vmatpush1.msra.mxu0 0.0
    %10072 = vmatprep.subr.mxu0 0.0
    %10073 = vmatpush1.msra.mxu0 0.0
    %10074 = vmatprep.mubr.f32.mxu0 0.0
    %10075 = vmatmul.mubr.f32.gmra.mrb[0].mxu0 %v9984
    %v10076 = vpop.f32.mrb[0].mxu0
    %v10077 = vadd.f32 %v10008, %v10076
    %v10078 = vpop.f32.mrb[0].mxu0
    %10079 = vdwg.mxu0
    %v10080 = vmax.f32 %v10077, 0.0
    %v10081 = vld [vmem:[%s6] sm:$0xff]
    %v10082 = vld [vmem:[%s6 + $0x8] sm:$0xff]
    %v10083 = vld [vmem:[%s6 + $0x10] sm:$0xff]
    %v10084 = vld [vmem:[%s6 + $0x18] sm:$0xff]
    %v10085 = vld [vmem:[%s6 + $0x20] sm:$0xff]
    %v10086 = vld [vmem:[%s6 + $0x28] sm:$0xff]
    %v10087 = vld [vmem:[%s6 + $0x30] sm:$0xff]
    %v10088 = vld [vmem:[%s6 + $0x38] sm:$0xff]
    %v10089 = vld [vmem:[%s6 + $0x40] sm:$0xff]
    %v10090 = vld [vmem:[%s6 + $0x48] sm:$0xff]
    %v10091 = vld [vmem:[%s6 + $0x50] sm:$0xff]
    %v10092 = vld [vmem:[%s6 + $0x58] sm:$0xff]
    %v10093 = vld [vmem:[%s6 + $0x60] sm:$0xff]
    %v10094 = vld [vmem:[%s6 + $0x68] sm:$0xff]
    %v10095 = vld [vmem:[%s6 + $0x70] sm:$0xff]
    %v10096 = vld [vmem:[%s6 + $0x78] sm:$0xff]
    %v10097 = vld [vmem:[%s7] sm:$0x1]
    %v10099 = vlaneseq
    %v10100 = vshrl.u32 %v10099, 7
    %v10101 = vsub.s32 0, %v10100
    %v10102 = vrot.slane %v10097, %v10101
    %10104 = vmatprep.subr.mxu0 0.0
    %10105 = vmatpush1.msra.mxu0 %v10081
    %10106 = vmatprep.subr.mxu0 0.0
    %10107 = vmatpush1.msra.mxu0 %v10082
    %10108 = vmatprep.subr.mxu0 0.0
    %10109 = vmatpush1.msra.mxu0 %v10083
    %10110 = vmatprep.subr.mxu0 0.0
    %10111 = vmatpush1.msra.mxu0 %v10084
    %10112 = vmatprep.subr.mxu0 0.0
    %10113 = vmatpush1.msra.mxu0 %v10085
    %10114 = vmatprep.subr.mxu0 0.0
    %10115 = vmatpush1.msra.mxu0 %v10086
    %10116 = vmatprep.subr.mxu0 0.0
    %10117 = vmatpush1.msra.mxu0 %v10087
    %10118 = vmatprep.subr.mxu0 0.0
    %10119 = vmatpush1.msra.mxu0 %v10088
    %10120 = vmatprep.subr.mxu0 0.0
    %10121 = vmatpush1.msra.mxu0 %v10089
    %10122 = vmatprep.subr.mxu0 0.0
    %10123 = vmatpush1.msra.mxu0 %v10090
    %10124 = vmatprep.subr.mxu0 0.0
    %10125 = vmatpush1.msra.mxu0 %v10091
    %10126 = vmatprep.subr.mxu0 0.0
    %10127 = vmatpush1.msra.mxu0 %v10092
    %10128 = vmatprep.subr.mxu0 0.0
    %10129 = vmatpush1.msra.mxu0 %v10093
    %10130 = vmatprep.subr.mxu0 0.0
    %10131 = vmatpush1.msra.mxu0 %v10094
    %10132 = vmatprep.subr.mxu0 0.0
    %10133 = vmatpush1.msra.mxu0 %v10095
    %10134 = vmatprep.subr.mxu0 0.0
    %10135 = vmatpush1.msra.mxu0 %v10096
    %10136 = vmatprep.subr.mxu0 0.0
    %10137 = vmatpush1.msra.mxu0 0.0
    %10138 = vmatprep.subr.mxu0 0.0
    %10139 = vmatpush1.msra.mxu0 0.0
    %10140 = vmatprep.subr.mxu0 0.0
    %10141 = vmatpush1.msra.mxu0 0.0
    %10142 = vmatprep.subr.mxu0 0.0
    %10143 = vmatpush1.msra.mxu0 0.0
    %10144 = vmatprep.subr.mxu0 0.0
    %10145 = vmatpush1.msra.mxu0 0.0
    %10146 = vmatprep.subr.mxu0 0.0
    %10147 = vmatpush1.msra.mxu0 0.0
    %10148 = vmatprep.subr.mxu0 0.0
    %10149 = vmatpush1.msra.mxu0 0.0
    %10150 = vmatprep.subr.mxu0 0.0
    %10151 = vmatpush1.msra.mxu0 0.0
    %10152 = vmatprep.subr.mxu0 0.0
    %10153 = vmatpush1.msra.mxu0 0.0
    %10154 = vmatprep.subr.mxu0 0.0
    %10155 = vmatpush1.msra.mxu0 0.0
    %10156 = vmatprep.subr.mxu0 0.0
    %10157 = vmatpush1.msra.mxu0 0.0
    %10158 = vmatprep.subr.mxu0 0.0
    %10159 = vmatpush1.msra.mxu0 0.0
    %10160 = vmatprep.subr.mxu0 0.0
    %10161 = vmatpush1.msra.mxu0 0.0
    %10162 = vmatprep.subr.mxu0 0.0
    %10163 = vmatpush1.msra.mxu0 0.0
    %10164 = vmatprep.subr.mxu0 0.0
    %10165 = vmatpush1.msra.mxu0 0.0
    %10166 = vmatprep.subr.mxu0 0.0
    %10167 = vmatpush1.msra.mxu0 0.0
    %10168 = vmatprep.mubr.f32.mxu0 0.0
    %10169 = vmatmul.mubr.f32.gmra.mrb[0].mxu0 %v10080
    %v10170 = vpop.f32.mrb[0].mxu0
    %v10171 = vadd.f32 %v10102, %v10170
    %v10172 = vpop.f32.mrb[0].mxu0
    %10173 = vdwg.mxu0
    %vm10174 = vcmask 74752
    %10175 = vst.msk [vmem:[#allocation3] sm:$0x3] %vm10174, %v10171
    // Predicated region
    $region34: #{fmcib_enc_forward.1} parent=1 // pred_check
      _
    $region35: #{fmcib_enc_forward.1} parent=1 // pred_check_branch
      %10177 = sbr.rel (0) target = $region37
    $region36: #{fmcib_enc_forward.1} parent=1 // pred_region
      %s10179 = ssub.s32 32, 32
      %10180 = vsyncadd [#allocation4], %s10179
      %s10182 = sshll.u32 [#allocation3], 4
      %s10183 = int_to_ptr.vmem [resolvable:$true] %s10182
      %10185 = dma.vmem_to_hbm [thread:$0]  %s10183, 32, %s8, [#allocation4]
    $region37: #{fmcib_enc_forward.1} parent=1 // pred_fallthru
      _
    // Predicated region
    $region38: #{fmcib_enc_forward.1} parent=1 // pred_check
      _
    $region39: #{fmcib_enc_forward.1} parent=1 // pred_check_branch
      %10187 = sbr.rel (0) target = $region41
    $region40: #{fmcib_enc_forward.1} parent=1 // pred_region
      %10188 = dma.done [#allocation4], 32
    $region41: #{fmcib_enc_forward.1} parent=1 // pred_fallthru
      _
    %10189 = vsyncpa [#allocation4], 1

</llo_original>
